<compile_context>
chip_gen: v7x
topology: tpu7x:2x2x1
jax: 0.10.0
libtpu: 0.0.40
codegen_flags: <defaults>
</compile_context>

<pallas_src>
import jax
import jax.numpy as jnp
from jax.experimental import pallas as pl
from jax.experimental.pallas import tpu as pltpu

F32 = jnp.float32
BF16 = jnp.bfloat16


def _vmem_specs(n):
    return [pl.BlockSpec(memory_space=pltpu.MemorySpace.VMEM) for _ in range(n)]


# ----------------------------- Pallas kernels ------------------------------

def _percept_kernel(p1_ref, w1_ref, b1_ref, sel_ref, w2_ref, b2_ref, y2_ref):
    # conv1 as GEMM: (400,192)@(192,16), bf16 operands, f32 accumulation.
    y1 = jnp.dot(p1_ref[...], w1_ref[...], preferred_element_type=F32) + b1_ref[...]
    y1 = jnp.maximum(y1, 0.0).astype(BF16)                      # (400, 16)
    # conv2 via 16 one-hot row-selection matmuls (one per 4x4 kernel offset);
    # conv1's activation stays resident in VMEM (no HBM round-trip, no im2col).
    acc = jnp.zeros((81, 32), F32)
    for t in range(16):                                         # static unroll
        rows = jnp.dot(sel_ref[t], y1, preferred_element_type=F32)        # (81,400)@(400,16)
        acc = acc + jnp.dot(rows.astype(BF16), w2_ref[t],
                            preferred_element_type=F32)                   # (81,16)@(16,32)
    y2_ref[...] = jnp.maximum(acc + b2_ref[...], 0.0)           # (81, 32) f32


def _lstm_step(x_bf, h_bf, c, wih_ref, whh_ref, b_ref):
    # wih_ref/whh_ref: (4, D, D) stacked per PyTorch gate order (i, f, g, o);
    # gates come out as separate (1, D) values -> no cross-lane slicing.
    gates = []
    for k in range(4):
        gk = (jnp.dot(x_bf, wih_ref[k], preferred_element_type=F32)
              + jnp.dot(h_bf, whh_ref[k], preferred_element_type=F32)
              + b_ref[k])
        gates.append(gk)
    i = jax.nn.sigmoid(gates[0])
    f = jax.nn.sigmoid(gates[1])
    g = jnp.tanh(gates[2])
    o = jax.nn.sigmoid(gates[3])
    c_new = f * c + i * g
    h_new = o * jnp.tanh(c_new)
    return h_new, c_new


def _manager_kernel(flat_ref, pfc_w_ref, pfc_b_ref,
                    mfc_w_ref, mfc_b_ref,
                    h_ref, c_ref, wih_ref, whh_ref, b_ref,
                    v1w_ref, v1b_ref, v2w_ref, v2b_ref,
                    z_ref, state_ref, goal_ref, h_out_ref, c_out_ref, v_ref):
    # percept fc (fused here so percept_z is produced exactly once).
    z = jnp.dot(flat_ref[...], pfc_w_ref[...], preferred_element_type=F32) + pfc_b_ref[...]
    z = jnp.maximum(z, 0.0)
    z_ref[...] = z
    # manager fc
    xm = jnp.dot(z.astype(BF16), mfc_w_ref[...], preferred_element_type=F32) + mfc_b_ref[...]
    xm = jnp.maximum(xm, 0.0)
    state_ref[...] = xm
    # LSTM cell (gate math f32, MXU operands bf16)
    h_new, c_new = _lstm_step(xm.astype(BF16), h_ref[...].astype(BF16), c_ref[...],
                              wih_ref, whh_ref, b_ref)
    h_out_ref[...] = h_new
    c_out_ref[...] = c_new
    # value head (second layer as multiply + lane reduce: N=1 output)
    v1 = jnp.maximum(
        jnp.dot(h_new.astype(BF16), v1w_ref[...], preferred_element_type=F32) + v1b_ref[...],
        0.0)
    v_ref[...] = jnp.sum(v1 * v2w_ref[...], axis=1, keepdims=True) + v2b_ref[...]
    # L2-normalized goal; eps keeps the all-zero initial hidden state NaN-free.
    ssq = jnp.sum(h_new * h_new, axis=1, keepdims=True)
    goal_ref[...] = h_new * jax.lax.rsqrt(ssq + 1e-12)


def _worker_kernel(z_ref, h_ref, c_ref, wih_ref, whh_ref, b_ref,
                   v1w_ref, v1b_ref, v2w_ref, v2b_ref,
                   goal_ref, goals_ref, shift_ref, row0_ref,
                   gfc_w_ref, gfc_b_ref, rep_ref, seg_ref,
                   pol_ref, h_out_ref, c_out_ref, v_ref, goals_out_ref):
    # LSTM cell on the percept features.
    h_new, c_new = _lstm_step(z_ref[...].astype(BF16), h_ref[...].astype(BF16), c_ref[...],
                              wih_ref, whh_ref, b_ref)
    h_out_ref[...] = h_new
    c_out_ref[...] = c_new
    # value head
    v1 = jnp.maximum(
        jnp.dot(h_new.astype(BF16), v1w_ref[...], preferred_element_type=F32) + v1b_ref[...],
        0.0)
    v_ref[...] = jnp.sum(v1 * v2w_ref[...], axis=1, keepdims=True) + v2b_ref[...]

    # --- goals bookkeeping on the fixed-size (H, D) zero-padded buffer ------
    H = goals_ref.shape[0]
    goals_in = goals_ref[...]                       # (H, D)
    goal = goal_ref[...]                            # (1, D) normalized manager goal
    row0 = row0_ref[...]                            # (H, 1): 1.0 at row 0
    # "push front": row k <- old row k-1 (shift matrix), row 0 <- new goal
    pushed = jnp.dot(shift_ref[...], goals_in, preferred_element_type=F32) + goal * row0
    fresh = goal * row0                             # goals.sum()==0 branch: [goal]
    zero_flag = (jnp.sum(goals_in) == 0.0).astype(F32)          # matches `goals.sum() == 0`
    # buffer full (n == horizon): PyTorch keeps the last `horizon` entries of the
    # concat, i.e. the old buffer unchanged.
    full_flag = (jnp.sum(jnp.abs(goals_in[H - 1:H, :])) > 0.0).astype(F32)
    keep = full_flag * goals_in + (1.0 - full_flag) * pushed
    new_goals = zero_flag * fresh + (1.0 - zero_flag) * keep
    goals_out_ref[...] = new_goals

    # --- goal embedding + bmm-equivalent policy + softmax -------------------
    gsum = jnp.sum(new_goals, axis=0, keepdims=True)            # (1, D)
    ge = jnp.dot(gsum.astype(BF16), gfc_w_ref[...], preferred_element_type=F32) + gfc_b_ref[...]
    # logits[a] = sum_j hx[16a+j] * ge[j], done with constant replicate/segment
    # matrices so the softmax reduction stays on the lane axis.
    ge_rep = jnp.dot(ge, rep_ref[...], preferred_element_type=F32)        # (1, D) = ge[k % 16]
    logits = jnp.dot(h_new * ge_rep, seg_ref[...], preferred_element_type=F32)  # (1, A)
    m = jnp.max(logits, axis=1, keepdims=True)
    e = jnp.exp(logits - m)
    pol_ref[...] = e / jnp.sum(e, axis=1, keepdims=True)


# ------------------------------ call wrappers -------------------------------

def percept_conv(p1, w1, b1, sel, w2, b2):
    return pl.pallas_call(
        _percept_kernel,
        out_shape=jax.ShapeDtypeStruct((81, 32), F32),
        in_specs=_vmem_specs(6),
        out_specs=pl.BlockSpec(memory_space=pltpu.MemorySpace.VMEM),
    )(p1, w1, b1, sel, w2, b2)


def manager_call(flat, hx, cx, p):
    D = hx.shape[1]
    return pl.pallas_call(
        _manager_kernel,
        out_shape=(jax.ShapeDtypeStruct((1, D), F32),   # percept_z
                   jax.ShapeDtypeStruct((1, D), F32),   # state
                   jax.ShapeDtypeStruct((1, D), F32),   # goal (normalized)
                   jax.ShapeDtypeStruct((1, D), F32),   # hx
                   jax.ShapeDtypeStruct((1, D), F32),   # cx
                   jax.ShapeDtypeStruct((1, 1), F32)),  # value
        in_specs=_vmem_specs(14),
        out_specs=tuple(_vmem_specs(6)),
    )(flat, p["p_fc_w"], p["p_fc_b"], p["m_fc_w"], p["m_fc_b"],
      hx, cx, p["m_wih"], p["m_whh"], p["m_b"],
      p["m_v1_w"], p["m_v1_b"], p["m_v2_w"], p["m_v2_b"])


def worker_call(z, hx, cx, goal, goals_hd, shift_m, row0, p):
    D = hx.shape[1]
    A = D // 16
    H = goals_hd.shape[0]
    return pl.pallas_call(
        _worker_kernel,
        out_shape=(jax.ShapeDtypeStruct((1, A), F32),   # policy
                   jax.ShapeDtypeStruct((1, D), F32),   # hx
                   jax.ShapeDtypeStruct((1, D), F32),   # cx
                   jax.ShapeDtypeStruct((1, 1), F32),   # value
                   jax.ShapeDtypeStruct((H, D), F32)),  # updated goals buffer
        in_specs=_vmem_specs(18),
        out_specs=tuple(_vmem_specs(5)),
    )(z, hx, cx, p["w_wih"], p["w_whh"], p["w_b"],
      p["w_v1_w"], p["w_v1_b"], p["w_v2_w"], p["w_v2_b"],
      goal, goals_hd, shift_m, row0,
      p["w_fc_w"], p["w_fc_b"], p["rep"], p["seg"])


# ------------------------------- JAX glue -----------------------------------

def im2col(x, k, s):
    """x: (1, C, H, W) NCHW -> (oh*ow, C*k*k) patches, columns in (C, kh, kw) order."""
    B, C, H, W = x.shape
    oh = (H - k) // s + 1
    ow = (W - k) // s + 1
    r_idx = (jnp.arange(oh) * s)[:, None] + jnp.arange(k)[None, :]
    c_idx = (jnp.arange(ow) * s)[:, None] + jnp.arange(k)[None, :]
    p = x[:, :, r_idx, :]              # (B, C, oh, k, W)
    p = p[:, :, :, :, c_idx]           # (B, C, oh, k, ow, k)
    p = p.transpose(0, 2, 4, 1, 3, 5)  # (B, oh, ow, C, k, k)
    return p.reshape(B * oh * ow, C * k * k)


@jax.jit
def fun_forward(params, x, m_lstm, w_lstm, goals):
    B = x.shape[0]
    assert B == 1, "policy bmm / goal-norm broadcast path implemented for batch 1"
    D = m_lstm[0].shape[1]
    H = goals.shape[-1]

    # --- percept (kernel 1) --------------------------------------------------
    p1 = im2col(x, 8, 4).astype(BF16)                     # (400, 192) glue gather
    y2 = percept_conv(p1, params["conv1_w"], params["conv1_b"],
                      params["sel"], params["conv2_w"], params["conv2_b"])
    flat = y2.reshape(1, -1).astype(BF16)                 # (1, 2592), (hw, c) order

    # --- manager (kernel 2, includes the percept fc) -------------------------
    z, state, goal, m_h, m_c, m_value = manager_call(flat, m_lstm[0], m_lstm[1], params)

    # --- worker (kernel 3, includes goals update + policy) -------------------
    goals_hd = jnp.transpose(goals[0])                    # (H, D)
    shift_m = jnp.eye(H, k=-1, dtype=F32)                 # row k <- row k-1
    row0 = (jnp.arange(H, dtype=jnp.int32) == 0).astype(F32).reshape(H, 1)
    policy, w_h, w_c, w_value, new_goals_hd = worker_call(
        z, w_lstm[0], w_lstm[1], goal, goals_hd, shift_m, row0, params)
    goals_out = jnp.transpose(new_goals_hd)[None, :, :]   # (1, D, H) zero-padded

    return (policy, goal, goals_out, (m_h, m_c), (w_h, w_c), m_value, w_value, state)


# --------------------------- parameter creation ------------------------------

def init_params(key, num_actions):
    D = num_actions * 16
    A = num_actions
    ks = jax.random.split(key, 32)
    n = lambda k, shape, s: s * jax.random.normal(k, shape, F32)
    p = {}
    # ---- Percept ----
    c1 = n(ks[0], (16, 3, 8, 8), 0.05)                 # PyTorch conv1.weight layout
    p["conv1_w"] = c1.reshape(16, -1).T.astype(BF16)   # (192, 16), (C,kh,kw) rows
    p["conv1_b"] = n(ks[1], (1, 16), 0.05)
    c2 = n(ks[2], (32, 16, 4, 4), 0.05)                # PyTorch conv2.weight layout
    # per 4x4 offset t = ky*4+kx: (Cin, Cout)
    p["conv2_w"] = jnp.transpose(c2, (2, 3, 1, 0)).reshape(16, 16, 32).astype(BF16)
    p["conv2_b"] = n(ks[3], (1, 32), 0.05)
    # constant one-hot row selectors implementing conv2's im2col inside the kernel
    sel = []
    oy = jnp.arange(9)
    ox = jnp.arange(9)
    for ky in range(4):
        for kx in range(4):
            r = ((2 * oy[:, None] + ky) * 20 + (2 * ox[None, :] + kx)).reshape(81)
            sel.append(jax.nn.one_hot(r, 400, dtype=F32))
    p["sel"] = jnp.stack(sel).astype(BF16)             # (16, 81, 400), exact 0/1 in bf16
    # percept fc: rows in (hw, c) order of the kernel's (81, 32) conv2 output
    # NOTE: loading real PyTorch fc weights requires permuting rows from (c*81+hw).
    p["p_fc_w"] = n(ks[4], (32 * 9 * 9, D), 0.02).astype(BF16)
    p["p_fc_b"] = n(ks[5], (1, D), 0.02)
    # ---- Manager ----
    p["m_fc_w"] = n(ks[6], (D, D), 0.05).astype(BF16)
    p["m_fc_b"] = n(ks[7], (1, D), 0.05)
    p["m_wih"] = n(ks[8], (4, D, D), 0.05).astype(BF16)   # per-gate (i,f,g,o) W_ih_k^T
    p["m_whh"] = n(ks[9], (4, D, D), 0.05).astype(BF16)   # per-gate W_hh_k^T
    p["m_b"] = jnp.zeros((4, 1, D), F32)                  # bias_ih + bias_hh (zero-filled)
    p["m_v1_w"] = n(ks[10], (D, 50), 0.05).astype(BF16)
    p["m_v1_b"] = n(ks[11], (1, 50), 0.05)
    p["m_v2_w"] = n(ks[12], (1, 50), 0.05)                # row-vector form of (50, 1)
    p["m_v2_b"] = n(ks[13], (1, 1), 0.05)
    # ---- Worker ----
    p["w_wih"] = n(ks[14], (4, D, D), 0.05).astype(BF16)
    p["w_whh"] = n(ks[15], (4, D, D), 0.05).astype(BF16)
    p["w_b"] = jnp.zeros((4, 1, D), F32)
    p["w_fc_w"] = n(ks[16], (D, 16), 0.05).astype(BF16)
    p["w_fc_b"] = n(ks[17], (1, 16), 0.05)
    p["w_v1_w"] = n(ks[18], (D, 50), 0.05).astype(BF16)
    p["w_v1_b"] = n(ks[19], (1, 50), 0.05)
    p["w_v2_w"] = n(ks[20], (1, 50), 0.05)
    p["w_v2_b"] = n(ks[21], (1, 1), 0.05)
    # constants for the in-kernel bmm+softmax policy head
    p["rep"] = jnp.tile(jnp.eye(16, dtype=F32), (1, A))       # (16, D): ge[k % 16]
    p["seg"] = jnp.repeat(jnp.eye(A, dtype=F32), 16, axis=0)  # (D, A): per-action segment sum
    return p


if __name__ == "__main__":
    num_actions = 4            # hidden dim D = 64
    horizon = 3
    D = num_actions * 16

    key = jax.random.PRNGKey(0)
    kp, kx, kg, kh = jax.random.split(key, 4)
    params = init_params(kp, num_actions)

    x = jax.random.normal(kx, (1, 3, 84, 84), F32)     # 84x84 forced by fc(32*9*9)
    kh1, kh2, kh3, kh4 = jax.random.split(kh, 4)
    m_lstm = (0.1 * jax.random.normal(kh1, (1, D), F32),
              0.1 * jax.random.normal(kh2, (1, D), F32))
    w_lstm = (0.1 * jax.random.normal(kh3, (1, D), F32),
              0.1 * jax.random.normal(kh4, (1, D), F32))
    goals = 0.1 * jax.random.normal(kg, (1, D, horizon), F32)   # non-zero -> concat branch

    out = fun_forward(params, x, m_lstm, w_lstm, goals)
    jax.block_until_ready(out)
    policy, goal, goals_out, m_lstm_o, w_lstm_o, m_value, w_value, m_state = out
    assert policy.shape == (1, num_actions)
    assert goal.shape == (1, D)
    assert goals_out.shape == (1, D, horizon)
    assert m_value.shape == (1, 1) and w_value.shape == (1, 1)
    assert m_state.shape == (1, D)
    assert bool(jnp.all(jnp.isfinite(policy)))
    assert abs(float(jnp.sum(policy)) - 1.0) < 1e-3

    # first-RL-step path: all-zero goals buffer exercises the `goals.sum() == 0`
    # branch and the eps-guarded L2 normalization without recompiling.
    out0 = fun_forward(params, x, m_lstm, w_lstm, jnp.zeros_like(goals))
    jax.block_until_ready(out0)
    assert out0[2].shape == (1, D, horizon)
    assert bool(jnp.all(jnp.isfinite(out0[0])))

    print("KERNEL_OK")
</pallas_src>

<mosaic_0001>
module attributes {stable_mosaic.version = 11 : i64} {
  func.func @_percept_kernel(%arg0: memref<400x192xbf16, #tpu.memory_space<vmem>>, %arg1: memref<192x16xbf16, #tpu.memory_space<vmem>>, %arg2: memref<1x16xf32, #tpu.memory_space<vmem>>, %arg3: memref<16x81x400xbf16, #tpu.memory_space<vmem>>, %arg4: memref<16x16x32xbf16, #tpu.memory_space<vmem>>, %arg5: memref<1x32xf32, #tpu.memory_space<vmem>>, %arg6: memref<81x32xf32, #tpu.memory_space<vmem>>) attributes {dimension_semantics = [], scalar_prefetch = 0 : i64, scratch_operands = 0 : i64, tpu.core_type = #tpu.core_type<tc>} {
    %c0 = arith.constant 0 : index
    %c0_0 = arith.constant 0 : index
    %0 = vector.load %arg0[%c0, %c0_0] : memref<400x192xbf16, #tpu.memory_space<vmem>>, vector<400x192xbf16>
    %c0_1 = arith.constant 0 : index
    %c0_2 = arith.constant 0 : index
    %1 = vector.load %arg1[%c0_1, %c0_2] : memref<192x16xbf16, #tpu.memory_space<vmem>>, vector<192x16xbf16>
    %cst = arith.constant dense<0.000000e+00> : vector<400x16xf32>
    %2 = tpu.matmul %0, %1, %cst {dimension_numbers = #tpu.dot_dimension_numbers<[1], [0], [0], [1], [0, 0, 1, 1], [], []>} : vector<400x192xbf16>, vector<192x16xbf16>, vector<400x16xf32> -> vector<400x16xf32>
    %c0_3 = arith.constant 0 : index
    %c0_4 = arith.constant 0 : index
    %3 = vector.load %arg2[%c0_3, %c0_4] : memref<1x16xf32, #tpu.memory_space<vmem>>, vector<1x16xf32>
    %4 = vector.broadcast %3 : vector<1x16xf32> to vector<400x16xf32>
    %5 = arith.addf %2, %4 : vector<400x16xf32>
    %cst_5 = arith.constant 0.000000e+00 : f32
    %6 = vector.broadcast %cst_5 : f32 to vector<400x16xf32>
    %7 = arith.maximumf %5, %6 : vector<400x16xf32>
    %8 = arith.truncf %7 : vector<400x16xf32> to vector<400x16xbf16>
    %cst_6 = arith.constant 0.000000e+00 : f32
    %9 = vector.broadcast %cst_6 : f32 to vector<81x32xf32>
    %c0_7 = arith.constant 0 : index
    %c0_8 = arith.constant 0 : index
    %c0_9 = arith.constant 0 : index
    %10 = vector.load %arg3[%c0_7, %c0_8, %c0_9] : memref<16x81x400xbf16, #tpu.memory_space<vmem>>, vector<1x81x400xbf16>
    %11 = vector.shape_cast %10 : vector<1x81x400xbf16> to vector<81x400xbf16>
    %cst_10 = arith.constant dense<0.000000e+00> : vector<81x16xf32>
    %12 = tpu.matmul %11, %8, %cst_10 {dimension_numbers = #tpu.dot_dimension_numbers<[1], [0], [0], [1], [0, 0, 1, 1], [], []>} : vector<81x400xbf16>, vector<400x16xbf16>, vector<81x16xf32> -> vector<81x16xf32>
    %13 = arith.truncf %12 : vector<81x16xf32> to vector<81x16xbf16>
    %c0_11 = arith.constant 0 : index
    %c0_12 = arith.constant 0 : index
    %c0_13 = arith.constant 0 : index
    %14 = vector.load %arg4[%c0_11, %c0_12, %c0_13] : memref<16x16x32xbf16, #tpu.memory_space<vmem>>, vector<1x16x32xbf16>
    %15 = vector.shape_cast %14 : vector<1x16x32xbf16> to vector<16x32xbf16>
    %cst_14 = arith.constant dense<0.000000e+00> : vector<81x32xf32>
    %16 = tpu.matmul %13, %15, %cst_14 {dimension_numbers = #tpu.dot_dimension_numbers<[1], [0], [0], [1], [0, 0, 1, 1], [], []>} : vector<81x16xbf16>, vector<16x32xbf16>, vector<81x32xf32> -> vector<81x32xf32>
    %17 = arith.addf %9, %16 : vector<81x32xf32>
    %c1 = arith.constant 1 : index
    %c0_15 = arith.constant 0 : index
    %c0_16 = arith.constant 0 : index
    %18 = vector.load %arg3[%c1, %c0_15, %c0_16] : memref<16x81x400xbf16, #tpu.memory_space<vmem>>, vector<1x81x400xbf16>
    %19 = vector.shape_cast %18 : vector<1x81x400xbf16> to vector<81x400xbf16>
    %cst_17 = arith.constant dense<0.000000e+00> : vector<81x16xf32>
    %20 = tpu.matmul %19, %8, %cst_17 {dimension_numbers = #tpu.dot_dimension_numbers<[1], [0], [0], [1], [0, 0, 1, 1], [], []>} : vector<81x400xbf16>, vector<400x16xbf16>, vector<81x16xf32> -> vector<81x16xf32>
    %21 = arith.truncf %20 : vector<81x16xf32> to vector<81x16xbf16>
    %c1_18 = arith.constant 1 : index
    %c0_19 = arith.constant 0 : index
    %c0_20 = arith.constant 0 : index
    %22 = vector.load %arg4[%c1_18, %c0_19, %c0_20] : memref<16x16x32xbf16, #tpu.memory_space<vmem>>, vector<1x16x32xbf16>
    %23 = vector.shape_cast %22 : vector<1x16x32xbf16> to vector<16x32xbf16>
    %cst_21 = arith.constant dense<0.000000e+00> : vector<81x32xf32>
    %24 = tpu.matmul %21, %23, %cst_21 {dimension_numbers = #tpu.dot_dimension_numbers<[1], [0], [0], [1], [0, 0, 1, 1], [], []>} : vector<81x16xbf16>, vector<16x32xbf16>, vector<81x32xf32> -> vector<81x32xf32>
    %25 = arith.addf %17, %24 : vector<81x32xf32>
    %c2 = arith.constant 2 : index
    %c0_22 = arith.constant 0 : index
    %c0_23 = arith.constant 0 : index
    %26 = vector.load %arg3[%c2, %c0_22, %c0_23] : memref<16x81x400xbf16, #tpu.memory_space<vmem>>, vector<1x81x400xbf16>
    %27 = vector.shape_cast %26 : vector<1x81x400xbf16> to vector<81x400xbf16>
    %cst_24 = arith.constant dense<0.000000e+00> : vector<81x16xf32>
    %28 = tpu.matmul %27, %8, %cst_24 {dimension_numbers = #tpu.dot_dimension_numbers<[1], [0], [0], [1], [0, 0, 1, 1], [], []>} : vector<81x400xbf16>, vector<400x16xbf16>, vector<81x16xf32> -> vector<81x16xf32>
    %29 = arith.truncf %28 : vector<81x16xf32> to vector<81x16xbf16>
    %c2_25 = arith.constant 2 : index
    %c0_26 = arith.constant 0 : index
    %c0_27 = arith.constant 0 : index
    %30 = vector.load %arg4[%c2_25, %c0_26, %c0_27] : memref<16x16x32xbf16, #tpu.memory_space<vmem>>, vector<1x16x32xbf16>
    %31 = vector.shape_cast %30 : vector<1x16x32xbf16> to vector<16x32xbf16>
    %cst_28 = arith.constant dense<0.000000e+00> : vector<81x32xf32>
    %32 = tpu.matmul %29, %31, %cst_28 {dimension_numbers = #tpu.dot_dimension_numbers<[1], [0], [0], [1], [0, 0, 1, 1], [], []>} : vector<81x16xbf16>, vector<16x32xbf16>, vector<81x32xf32> -> vector<81x32xf32>
    %33 = arith.addf %25, %32 : vector<81x32xf32>
    %c3 = arith.constant 3 : index
    %c0_29 = arith.constant 0 : index
    %c0_30 = arith.constant 0 : index
    %34 = vector.load %arg3[%c3, %c0_29, %c0_30] : memref<16x81x400xbf16, #tpu.memory_space<vmem>>, vector<1x81x400xbf16>
    %35 = vector.shape_cast %34 : vector<1x81x400xbf16> to vector<81x400xbf16>
    %cst_31 = arith.constant dense<0.000000e+00> : vector<81x16xf32>
    %36 = tpu.matmul %35, %8, %cst_31 {dimension_numbers = #tpu.dot_dimension_numbers<[1], [0], [0], [1], [0, 0, 1, 1], [], []>} : vector<81x400xbf16>, vector<400x16xbf16>, vector<81x16xf32> -> vector<81x16xf32>
    %37 = arith.truncf %36 : vector<81x16xf32> to vector<81x16xbf16>
    %c3_32 = arith.constant 3 : index
    %c0_33 = arith.constant 0 : index
    %c0_34 = arith.constant 0 : index
    %38 = vector.load %arg4[%c3_32, %c0_33, %c0_34] : memref<16x16x32xbf16, #tpu.memory_space<vmem>>, vector<1x16x32xbf16>
    %39 = vector.shape_cast %38 : vector<1x16x32xbf16> to vector<16x32xbf16>
    %cst_35 = arith.constant dense<0.000000e+00> : vector<81x32xf32>
    %40 = tpu.matmul %37, %39, %cst_35 {dimension_numbers = #tpu.dot_dimension_numbers<[1], [0], [0], [1], [0, 0, 1, 1], [], []>} : vector<81x16xbf16>, vector<16x32xbf16>, vector<81x32xf32> -> vector<81x32xf32>
    %41 = arith.addf %33, %40 : vector<81x32xf32>
    %c4 = arith.constant 4 : index
    %c0_36 = arith.constant 0 : index
    %c0_37 = arith.constant 0 : index
    %42 = vector.load %arg3[%c4, %c0_36, %c0_37] : memref<16x81x400xbf16, #tpu.memory_space<vmem>>, vector<1x81x400xbf16>
    %43 = vector.shape_cast %42 : vector<1x81x400xbf16> to vector<81x400xbf16>
    %cst_38 = arith.constant dense<0.000000e+00> : vector<81x16xf32>
    %44 = tpu.matmul %43, %8, %cst_38 {dimension_numbers = #tpu.dot_dimension_numbers<[1], [0], [0], [1], [0, 0, 1, 1], [], []>} : vector<81x400xbf16>, vector<400x16xbf16>, vector<81x16xf32> -> vector<81x16xf32>
    %45 = arith.truncf %44 : vector<81x16xf32> to vector<81x16xbf16>
    %c4_39 = arith.constant 4 : index
    %c0_40 = arith.constant 0 : index
    %c0_41 = arith.constant 0 : index
    %46 = vector.load %arg4[%c4_39, %c0_40, %c0_41] : memref<16x16x32xbf16, #tpu.memory_space<vmem>>, vector<1x16x32xbf16>
    %47 = vector.shape_cast %46 : vector<1x16x32xbf16> to vector<16x32xbf16>
    %cst_42 = arith.constant dense<0.000000e+00> : vector<81x32xf32>
    %48 = tpu.matmul %45, %47, %cst_42 {dimension_numbers = #tpu.dot_dimension_numbers<[1], [0], [0], [1], [0, 0, 1, 1], [], []>} : vector<81x16xbf16>, vector<16x32xbf16>, vector<81x32xf32> -> vector<81x32xf32>
    %49 = arith.addf %41, %48 : vector<81x32xf32>
    %c5 = arith.constant 5 : index
    %c0_43 = arith.constant 0 : index
    %c0_44 = arith.constant 0 : index
    %50 = vector.load %arg3[%c5, %c0_43, %c0_44] : memref<16x81x400xbf16, #tpu.memory_space<vmem>>, vector<1x81x400xbf16>
    %51 = vector.shape_cast %50 : vector<1x81x400xbf16> to vector<81x400xbf16>
    %cst_45 = arith.constant dense<0.000000e+00> : vector<81x16xf32>
    %52 = tpu.matmul %51, %8, %cst_45 {dimension_numbers = #tpu.dot_dimension_numbers<[1], [0], [0], [1], [0, 0, 1, 1], [], []>} : vector<81x400xbf16>, vector<400x16xbf16>, vector<81x16xf32> -> vector<81x16xf32>
    %53 = arith.truncf %52 : vector<81x16xf32> to vector<81x16xbf16>
    %c5_46 = arith.constant 5 : index
    %c0_47 = arith.constant 0 : index
    %c0_48 = arith.constant 0 : index
    %54 = vector.load %arg4[%c5_46, %c0_47, %c0_48] : memref<16x16x32xbf16, #tpu.memory_space<vmem>>, vector<1x16x32xbf16>
    %55 = vector.shape_cast %54 : vector<1x16x32xbf16> to vector<16x32xbf16>
    %cst_49 = arith.constant dense<0.000000e+00> : vector<81x32xf32>
    %56 = tpu.matmul %53, %55, %cst_49 {dimension_numbers = #tpu.dot_dimension_numbers<[1], [0], [0], [1], [0, 0, 1, 1], [], []>} : vector<81x16xbf16>, vector<16x32xbf16>, vector<81x32xf32> -> vector<81x32xf32>
    %57 = arith.addf %49, %56 : vector<81x32xf32>
    %c6 = arith.constant 6 : index
    %c0_50 = arith.constant 0 : index
    %c0_51 = arith.constant 0 : index
    %58 = vector.load %arg3[%c6, %c0_50, %c0_51] : memref<16x81x400xbf16, #tpu.memory_space<vmem>>, vector<1x81x400xbf16>
    %59 = vector.shape_cast %58 : vector<1x81x400xbf16> to vector<81x400xbf16>
    %cst_52 = arith.constant dense<0.000000e+00> : vector<81x16xf32>
    %60 = tpu.matmul %59, %8, %cst_52 {dimension_numbers = #tpu.dot_dimension_numbers<[1], [0], [0], [1], [0, 0, 1, 1], [], []>} : vector<81x400xbf16>, vector<400x16xbf16>, vector<81x16xf32> -> vector<81x16xf32>
    %61 = arith.truncf %60 : vector<81x16xf32> to vector<81x16xbf16>
    %c6_53 = arith.constant 6 : index
    %c0_54 = arith.constant 0 : index
    %c0_55 = arith.constant 0 : index
    %62 = vector.load %arg4[%c6_53, %c0_54, %c0_55] : memref<16x16x32xbf16, #tpu.memory_space<vmem>>, vector<1x16x32xbf16>
    %63 = vector.shape_cast %62 : vector<1x16x32xbf16> to vector<16x32xbf16>
    %cst_56 = arith.constant dense<0.000000e+00> : vector<81x32xf32>
    %64 = tpu.matmul %61, %63, %cst_56 {dimension_numbers = #tpu.dot_dimension_numbers<[1], [0], [0], [1], [0, 0, 1, 1], [], []>} : vector<81x16xbf16>, vector<16x32xbf16>, vector<81x32xf32> -> vector<81x32xf32>
    %65 = arith.addf %57, %64 : vector<81x32xf32>
    %c7 = arith.constant 7 : index
    %c0_57 = arith.constant 0 : index
    %c0_58 = arith.constant 0 : index
    %66 = vector.load %arg3[%c7, %c0_57, %c0_58] : memref<16x81x400xbf16, #tpu.memory_space<vmem>>, vector<1x81x400xbf16>
    %67 = vector.shape_cast %66 : vector<1x81x400xbf16> to vector<81x400xbf16>
    %cst_59 = arith.constant dense<0.000000e+00> : vector<81x16xf32>
    %68 = tpu.matmul %67, %8, %cst_59 {dimension_numbers = #tpu.dot_dimension_numbers<[1], [0], [0], [1], [0, 0, 1, 1], [], []>} : vector<81x400xbf16>, vector<400x16xbf16>, vector<81x16xf32> -> vector<81x16xf32>
    %69 = arith.truncf %68 : vector<81x16xf32> to vector<81x16xbf16>
    %c7_60 = arith.constant 7 : index
    %c0_61 = arith.constant 0 : index
    %c0_62 = arith.constant 0 : index
    %70 = vector.load %arg4[%c7_60, %c0_61, %c0_62] : memref<16x16x32xbf16, #tpu.memory_space<vmem>>, vector<1x16x32xbf16>
    %71 = vector.shape_cast %70 : vector<1x16x32xbf16> to vector<16x32xbf16>
    %cst_63 = arith.constant dense<0.000000e+00> : vector<81x32xf32>
    %72 = tpu.matmul %69, %71, %cst_63 {dimension_numbers = #tpu.dot_dimension_numbers<[1], [0], [0], [1], [0, 0, 1, 1], [], []>} : vector<81x16xbf16>, vector<16x32xbf16>, vector<81x32xf32> -> vector<81x32xf32>
    %73 = arith.addf %65, %72 : vector<81x32xf32>
    %c8 = arith.constant 8 : index
    %c0_64 = arith.constant 0 : index
    %c0_65 = arith.constant 0 : index
    %74 = vector.load %arg3[%c8, %c0_64, %c0_65] : memref<16x81x400xbf16, #tpu.memory_space<vmem>>, vector<1x81x400xbf16>
    %75 = vector.shape_cast %74 : vector<1x81x400xbf16> to vector<81x400xbf16>
    %cst_66 = arith.constant dense<0.000000e+00> : vector<81x16xf32>
    %76 = tpu.matmul %75, %8, %cst_66 {dimension_numbers = #tpu.dot_dimension_numbers<[1], [0], [0], [1], [0, 0, 1, 1], [], []>} : vector<81x400xbf16>, vector<400x16xbf16>, vector<81x16xf32> -> vector<81x16xf32>
    %77 = arith.truncf %76 : vector<81x16xf32> to vector<81x16xbf16>
    %c8_67 = arith.constant 8 : index
    %c0_68 = arith.constant 0 : index
    %c0_69 = arith.constant 0 : index
    %78 = vector.load %arg4[%c8_67, %c0_68, %c0_69] : memref<16x16x32xbf16, #tpu.memory_space<vmem>>, vector<1x16x32xbf16>
    %79 = vector.shape_cast %78 : vector<1x16x32xbf16> to vector<16x32xbf16>
    %cst_70 = arith.constant dense<0.000000e+00> : vector<81x32xf32>
    %80 = tpu.matmul %77, %79, %cst_70 {dimension_numbers = #tpu.dot_dimension_numbers<[1], [0], [0], [1], [0, 0, 1, 1], [], []>} : vector<81x16xbf16>, vector<16x32xbf16>, vector<81x32xf32> -> vector<81x32xf32>
    %81 = arith.addf %73, %80 : vector<81x32xf32>
    %c9 = arith.constant 9 : index
    %c0_71 = arith.constant 0 : index
    %c0_72 = arith.constant 0 : index
    %82 = vector.load %arg3[%c9, %c0_71, %c0_72] : memref<16x81x400xbf16, #tpu.memory_space<vmem>>, vector<1x81x400xbf16>
    %83 = vector.shape_cast %82 : vector<1x81x400xbf16> to vector<81x400xbf16>
    %cst_73 = arith.constant dense<0.000000e+00> : vector<81x16xf32>
    %84 = tpu.matmul %83, %8, %cst_73 {dimension_numbers = #tpu.dot_dimension_numbers<[1], [0], [0], [1], [0, 0, 1, 1], [], []>} : vector<81x400xbf16>, vector<400x16xbf16>, vector<81x16xf32> -> vector<81x16xf32>
    %85 = arith.truncf %84 : vector<81x16xf32> to vector<81x16xbf16>
    %c9_74 = arith.constant 9 : index
    %c0_75 = arith.constant 0 : index
    %c0_76 = arith.constant 0 : index
    %86 = vector.load %arg4[%c9_74, %c0_75, %c0_76] : memref<16x16x32xbf16, #tpu.memory_space<vmem>>, vector<1x16x32xbf16>
    %87 = vector.shape_cast %86 : vector<1x16x32xbf16> to vector<16x32xbf16>
    %cst_77 = arith.constant dense<0.000000e+00> : vector<81x32xf32>
    %88 = tpu.matmul %85, %87, %cst_77 {dimension_numbers = #tpu.dot_dimension_numbers<[1], [0], [0], [1], [0, 0, 1, 1], [], []>} : vector<81x16xbf16>, vector<16x32xbf16>, vector<81x32xf32> -> vector<81x32xf32>
    %89 = arith.addf %81, %88 : vector<81x32xf32>
    %c10 = arith.constant 10 : index
    %c0_78 = arith.constant 0 : index
    %c0_79 = arith.constant 0 : index
    %90 = vector.load %arg3[%c10, %c0_78, %c0_79] : memref<16x81x400xbf16, #tpu.memory_space<vmem>>, vector<1x81x400xbf16>
    %91 = vector.shape_cast %90 : vector<1x81x400xbf16> to vector<81x400xbf16>
    %cst_80 = arith.constant dense<0.000000e+00> : vector<81x16xf32>
    %92 = tpu.matmul %91, %8, %cst_80 {dimension_numbers = #tpu.dot_dimension_numbers<[1], [0], [0], [1], [0, 0, 1, 1], [], []>} : vector<81x400xbf16>, vector<400x16xbf16>, vector<81x16xf32> -> vector<81x16xf32>
    %93 = arith.truncf %92 : vector<81x16xf32> to vector<81x16xbf16>
    %c10_81 = arith.constant 10 : index
    %c0_82 = arith.constant 0 : index
    %c0_83 = arith.constant 0 : index
    %94 = vector.load %arg4[%c10_81, %c0_82, %c0_83] : memref<16x16x32xbf16, #tpu.memory_space<vmem>>, vector<1x16x32xbf16>
    %95 = vector.shape_cast %94 : vector<1x16x32xbf16> to vector<16x32xbf16>
    %cst_84 = arith.constant dense<0.000000e+00> : vector<81x32xf32>
    %96 = tpu.matmul %93, %95, %cst_84 {dimension_numbers = #tpu.dot_dimension_numbers<[1], [0], [0], [1], [0, 0, 1, 1], [], []>} : vector<81x16xbf16>, vector<16x32xbf16>, vector<81x32xf32> -> vector<81x32xf32>
    %97 = arith.addf %89, %96 : vector<81x32xf32>
    %c11 = arith.constant 11 : index
    %c0_85 = arith.constant 0 : index
    %c0_86 = arith.constant 0 : index
    %98 = vector.load %arg3[%c11, %c0_85, %c0_86] : memref<16x81x400xbf16, #tpu.memory_space<vmem>>, vector<1x81x400xbf16>
    %99 = vector.shape_cast %98 : vector<1x81x400xbf16> to vector<81x400xbf16>
    %cst_87 = arith.constant dense<0.000000e+00> : vector<81x16xf32>
    %100 = tpu.matmul %99, %8, %cst_87 {dimension_numbers = #tpu.dot_dimension_numbers<[1], [0], [0], [1], [0, 0, 1, 1], [], []>} : vector<81x400xbf16>, vector<400x16xbf16>, vector<81x16xf32> -> vector<81x16xf32>
    %101 = arith.truncf %100 : vector<81x16xf32> to vector<81x16xbf16>
    %c11_88 = arith.constant 11 : index
    %c0_89 = arith.constant 0 : index
    %c0_90 = arith.constant 0 : index
    %102 = vector.load %arg4[%c11_88, %c0_89, %c0_90] : memref<16x16x32xbf16, #tpu.memory_space<vmem>>, vector<1x16x32xbf16>
    %103 = vector.shape_cast %102 : vector<1x16x32xbf16> to vector<16x32xbf16>
    %cst_91 = arith.constant dense<0.000000e+00> : vector<81x32xf32>
    %104 = tpu.matmul %101, %103, %cst_91 {dimension_numbers = #tpu.dot_dimension_numbers<[1], [0], [0], [1], [0, 0, 1, 1], [], []>} : vector<81x16xbf16>, vector<16x32xbf16>, vector<81x32xf32> -> vector<81x32xf32>
    %105 = arith.addf %97, %104 : vector<81x32xf32>
    %c12 = arith.constant 12 : index
    %c0_92 = arith.constant 0 : index
    %c0_93 = arith.constant 0 : index
    %106 = vector.load %arg3[%c12, %c0_92, %c0_93] : memref<16x81x400xbf16, #tpu.memory_space<vmem>>, vector<1x81x400xbf16>
    %107 = vector.shape_cast %106 : vector<1x81x400xbf16> to vector<81x400xbf16>
    %cst_94 = arith.constant dense<0.000000e+00> : vector<81x16xf32>
    %108 = tpu.matmul %107, %8, %cst_94 {dimension_numbers = #tpu.dot_dimension_numbers<[1], [0], [0], [1], [0, 0, 1, 1], [], []>} : vector<81x400xbf16>, vector<400x16xbf16>, vector<81x16xf32> -> vector<81x16xf32>
    %109 = arith.truncf %108 : vector<81x16xf32> to vector<81x16xbf16>
    %c12_95 = arith.constant 12 : index
    %c0_96 = arith.constant 0 : index
    %c0_97 = arith.constant 0 : index
    %110 = vector.load %arg4[%c12_95, %c0_96, %c0_97] : memref<16x16x32xbf16, #tpu.memory_space<vmem>>, vector<1x16x32xbf16>
    %111 = vector.shape_cast %110 : vector<1x16x32xbf16> to vector<16x32xbf16>
    %cst_98 = arith.constant dense<0.000000e+00> : vector<81x32xf32>
    %112 = tpu.matmul %109, %111, %cst_98 {dimension_numbers = #tpu.dot_dimension_numbers<[1], [0], [0], [1], [0, 0, 1, 1], [], []>} : vector<81x16xbf16>, vector<16x32xbf16>, vector<81x32xf32> -> vector<81x32xf32>
    %113 = arith.addf %105, %112 : vector<81x32xf32>
    %c13 = arith.constant 13 : index
    %c0_99 = arith.constant 0 : index
    %c0_100 = arith.constant 0 : index
    %114 = vector.load %arg3[%c13, %c0_99, %c0_100] : memref<16x81x400xbf16, #tpu.memory_space<vmem>>, vector<1x81x400xbf16>
    %115 = vector.shape_cast %114 : vector<1x81x400xbf16> to vector<81x400xbf16>
    %cst_101 = arith.constant dense<0.000000e+00> : vector<81x16xf32>
    %116 = tpu.matmul %115, %8, %cst_101 {dimension_numbers = #tpu.dot_dimension_numbers<[1], [0], [0], [1], [0, 0, 1, 1], [], []>} : vector<81x400xbf16>, vector<400x16xbf16>, vector<81x16xf32> -> vector<81x16xf32>
    %117 = arith.truncf %116 : vector<81x16xf32> to vector<81x16xbf16>
    %c13_102 = arith.constant 13 : index
    %c0_103 = arith.constant 0 : index
    %c0_104 = arith.constant 0 : index
    %118 = vector.load %arg4[%c13_102, %c0_103, %c0_104] : memref<16x16x32xbf16, #tpu.memory_space<vmem>>, vector<1x16x32xbf16>
    %119 = vector.shape_cast %118 : vector<1x16x32xbf16> to vector<16x32xbf16>
    %cst_105 = arith.constant dense<0.000000e+00> : vector<81x32xf32>
    %120 = tpu.matmul %117, %119, %cst_105 {dimension_numbers = #tpu.dot_dimension_numbers<[1], [0], [0], [1], [0, 0, 1, 1], [], []>} : vector<81x16xbf16>, vector<16x32xbf16>, vector<81x32xf32> -> vector<81x32xf32>
    %121 = arith.addf %113, %120 : vector<81x32xf32>
    %c14 = arith.constant 14 : index
    %c0_106 = arith.constant 0 : index
    %c0_107 = arith.constant 0 : index
    %122 = vector.load %arg3[%c14, %c0_106, %c0_107] : memref<16x81x400xbf16, #tpu.memory_space<vmem>>, vector<1x81x400xbf16>
    %123 = vector.shape_cast %122 : vector<1x81x400xbf16> to vector<81x400xbf16>
    %cst_108 = arith.constant dense<0.000000e+00> : vector<81x16xf32>
    %124 = tpu.matmul %123, %8, %cst_108 {dimension_numbers = #tpu.dot_dimension_numbers<[1], [0], [0], [1], [0, 0, 1, 1], [], []>} : vector<81x400xbf16>, vector<400x16xbf16>, vector<81x16xf32> -> vector<81x16xf32>
    %125 = arith.truncf %124 : vector<81x16xf32> to vector<81x16xbf16>
    %c14_109 = arith.constant 14 : index
    %c0_110 = arith.constant 0 : index
    %c0_111 = arith.constant 0 : index
    %126 = vector.load %arg4[%c14_109, %c0_110, %c0_111] : memref<16x16x32xbf16, #tpu.memory_space<vmem>>, vector<1x16x32xbf16>
    %127 = vector.shape_cast %126 : vector<1x16x32xbf16> to vector<16x32xbf16>
    %cst_112 = arith.constant dense<0.000000e+00> : vector<81x32xf32>
    %128 = tpu.matmul %125, %127, %cst_112 {dimension_numbers = #tpu.dot_dimension_numbers<[1], [0], [0], [1], [0, 0, 1, 1], [], []>} : vector<81x16xbf16>, vector<16x32xbf16>, vector<81x32xf32> -> vector<81x32xf32>
    %129 = arith.addf %121, %128 : vector<81x32xf32>
    %c15 = arith.constant 15 : index
    %c0_113 = arith.constant 0 : index
    %c0_114 = arith.constant 0 : index
    %130 = vector.load %arg3[%c15, %c0_113, %c0_114] : memref<16x81x400xbf16, #tpu.memory_space<vmem>>, vector<1x81x400xbf16>
    %131 = vector.shape_cast %130 : vector<1x81x400xbf16> to vector<81x400xbf16>
    %cst_115 = arith.constant dense<0.000000e+00> : vector<81x16xf32>
    %132 = tpu.matmul %131, %8, %cst_115 {dimension_numbers = #tpu.dot_dimension_numbers<[1], [0], [0], [1], [0, 0, 1, 1], [], []>} : vector<81x400xbf16>, vector<400x16xbf16>, vector<81x16xf32> -> vector<81x16xf32>
    %133 = arith.truncf %132 : vector<81x16xf32> to vector<81x16xbf16>
    %c15_116 = arith.constant 15 : index
    %c0_117 = arith.constant 0 : index
    %c0_118 = arith.constant 0 : index
    %134 = vector.load %arg4[%c15_116, %c0_117, %c0_118] : memref<16x16x32xbf16, #tpu.memory_space<vmem>>, vector<1x16x32xbf16>
    %135 = vector.shape_cast %134 : vector<1x16x32xbf16> to vector<16x32xbf16>
    %cst_119 = arith.constant dense<0.000000e+00> : vector<81x32xf32>
    %136 = tpu.matmul %133, %135, %cst_119 {dimension_numbers = #tpu.dot_dimension_numbers<[1], [0], [0], [1], [0, 0, 1, 1], [], []>} : vector<81x16xbf16>, vector<16x32xbf16>, vector<81x32xf32> -> vector<81x32xf32>
    %137 = arith.addf %129, %136 : vector<81x32xf32>
    %c0_120 = arith.constant 0 : index
    %c0_121 = arith.constant 0 : index
    %138 = vector.load %arg5[%c0_120, %c0_121] : memref<1x32xf32, #tpu.memory_space<vmem>>, vector<1x32xf32>
    %139 = vector.broadcast %138 : vector<1x32xf32> to vector<81x32xf32>
    %140 = arith.addf %137, %139 : vector<81x32xf32>
    %cst_122 = arith.constant 0.000000e+00 : f32
    %141 = vector.broadcast %cst_122 : f32 to vector<81x32xf32>
    %142 = arith.maximumf %140, %141 : vector<81x32xf32>
    %c0_123 = arith.constant 0 : index
    %c0_124 = arith.constant 0 : index
    %143 = vector.load %arg6[%c0_123, %c0_124] : memref<81x32xf32, #tpu.memory_space<vmem>>, vector<81x32xf32>
    tpu.vector_store %arg6[%c0_123, %c0_124], %142 {strides = array<i32>} : memref<81x32xf32, #tpu.memory_space<vmem>>, vector<81x32xf32>,
    return
  }
}

module attributes {stable_mosaic.version = 11 : i64} {
  func.func @_manager_kernel(%arg0: memref<1x2592xbf16, #tpu.memory_space<vmem>>, %arg1: memref<2592x64xbf16, #tpu.memory_space<vmem>>, %arg2: memref<1x64xf32, #tpu.memory_space<vmem>>, %arg3: memref<64x64xbf16, #tpu.memory_space<vmem>>, %arg4: memref<1x64xf32, #tpu.memory_space<vmem>>, %arg5: memref<1x64xf32, #tpu.memory_space<vmem>>, %arg6: memref<1x64xf32, #tpu.memory_space<vmem>>, %arg7: memref<4x64x64xbf16, #tpu.memory_space<vmem>>, %arg8: memref<4x64x64xbf16, #tpu.memory_space<vmem>>, %arg9: memref<4x1x64xf32, #tpu.memory_space<vmem>>, %arg10: memref<64x50xbf16, #tpu.memory_space<vmem>>, %arg11: memref<1x50xf32, #tpu.memory_space<vmem>>, %arg12: memref<1x50xf32, #tpu.memory_space<vmem>>, %arg13: memref<1x1xf32, #tpu.memory_space<vmem>>, %arg14: memref<1x64xf32, #tpu.memory_space<vmem>>, %arg15: memref<1x64xf32, #tpu.memory_space<vmem>>, %arg16: memref<1x64xf32, #tpu.memory_space<vmem>>, %arg17: memref<1x64xf32, #tpu.memory_space<vmem>>, %arg18: memref<1x64xf32, #tpu.memory_space<vmem>>, %arg19: memref<1x1xf32, #tpu.memory_space<vmem>>) attributes {dimension_semantics = [], scalar_prefetch = 0 : i64, scratch_operands = 0 : i64, tpu.core_type = #tpu.core_type<tc>} {
    %c0 = arith.constant 0 : index
    %c0_0 = arith.constant 0 : index
    %0 = vector.load %arg0[%c0, %c0_0] : memref<1x2592xbf16, #tpu.memory_space<vmem>>, vector<1x2592xbf16>
    %c0_1 = arith.constant 0 : index
    %c0_2 = arith.constant 0 : index
    %1 = vector.load %arg1[%c0_1, %c0_2] : memref<2592x64xbf16, #tpu.memory_space<vmem>>, vector<2592x64xbf16>
    %cst = arith.constant dense<0.000000e+00> : vector<1x64xf32>
    %2 = tpu.matmul %0, %1, %cst {dimension_numbers = #tpu.dot_dimension_numbers<[1], [0], [0], [1], [0, 0, 1, 1], [], []>} : vector<1x2592xbf16>, vector<2592x64xbf16>, vector<1x64xf32> -> vector<1x64xf32>
    %c0_3 = arith.constant 0 : index
    %c0_4 = arith.constant 0 : index
    %3 = vector.load %arg2[%c0_3, %c0_4] : memref<1x64xf32, #tpu.memory_space<vmem>>, vector<1x64xf32>
    %4 = arith.addf %2, %3 : vector<1x64xf32>
    %cst_5 = arith.constant 0.000000e+00 : f32
    %5 = vector.broadcast %cst_5 : f32 to vector<1x64xf32>
    %6 = arith.maximumf %4, %5 : vector<1x64xf32>
    %c0_6 = arith.constant 0 : index
    %c0_7 = arith.constant 0 : index
    %7 = vector.load %arg14[%c0_6, %c0_7] : memref<1x64xf32, #tpu.memory_space<vmem>>, vector<1x64xf32>
    tpu.vector_store %arg14[%c0_6, %c0_7], %6 {strides = array<i32>} : memref<1x64xf32, #tpu.memory_space<vmem>>, vector<1x64xf32>,
    %8 = arith.truncf %6 : vector<1x64xf32> to vector<1x64xbf16>
    %c0_8 = arith.constant 0 : index
    %c0_9 = arith.constant 0 : index
    %9 = vector.load %arg3[%c0_8, %c0_9] : memref<64x64xbf16, #tpu.memory_space<vmem>>, vector<64x64xbf16>
    %cst_10 = arith.constant dense<0.000000e+00> : vector<1x64xf32>
    %10 = tpu.matmul %8, %9, %cst_10 {dimension_numbers = #tpu.dot_dimension_numbers<[1], [0], [0], [1], [0, 0, 1, 1], [], []>} : vector<1x64xbf16>, vector<64x64xbf16>, vector<1x64xf32> -> vector<1x64xf32>
    %c0_11 = arith.constant 0 : index
    %c0_12 = arith.constant 0 : index
    %11 = vector.load %arg4[%c0_11, %c0_12] : memref<1x64xf32, #tpu.memory_space<vmem>>, vector<1x64xf32>
    %12 = arith.addf %10, %11 : vector<1x64xf32>
    %cst_13 = arith.constant 0.000000e+00 : f32
    %13 = vector.broadcast %cst_13 : f32 to vector<1x64xf32>
    %14 = arith.maximumf %12, %13 : vector<1x64xf32>
    %c0_14 = arith.constant 0 : index
    %c0_15 = arith.constant 0 : index
    %15 = vector.load %arg15[%c0_14, %c0_15] : memref<1x64xf32, #tpu.memory_space<vmem>>, vector<1x64xf32>
    tpu.vector_store %arg15[%c0_14, %c0_15], %14 {strides = array<i32>} : memref<1x64xf32, #tpu.memory_space<vmem>>, vector<1x64xf32>,
    %16 = arith.truncf %14 : vector<1x64xf32> to vector<1x64xbf16>
    %c0_16 = arith.constant 0 : index
    %c0_17 = arith.constant 0 : index
    %17 = vector.load %arg5[%c0_16, %c0_17] : memref<1x64xf32, #tpu.memory_space<vmem>>, vector<1x64xf32>
    %18 = arith.truncf %17 : vector<1x64xf32> to vector<1x64xbf16>
    %c0_18 = arith.constant 0 : index
    %c0_19 = arith.constant 0 : index
    %19 = vector.load %arg6[%c0_18, %c0_19] : memref<1x64xf32, #tpu.memory_space<vmem>>, vector<1x64xf32>
    %c0_20 = arith.constant 0 : index
    %c0_21 = arith.constant 0 : index
    %c0_22 = arith.constant 0 : index
    %20 = vector.load %arg7[%c0_20, %c0_21, %c0_22] : memref<4x64x64xbf16, #tpu.memory_space<vmem>>, vector<1x64x64xbf16>
    %21 = vector.shape_cast %20 : vector<1x64x64xbf16> to vector<64x64xbf16>
    %cst_23 = arith.constant dense<0.000000e+00> : vector<1x64xf32>
    %22 = tpu.matmul %16, %21, %cst_23 {dimension_numbers = #tpu.dot_dimension_numbers<[1], [0], [0], [1], [0, 0, 1, 1], [], []>} : vector<1x64xbf16>, vector<64x64xbf16>, vector<1x64xf32> -> vector<1x64xf32>
    %c0_24 = arith.constant 0 : index
    %c0_25 = arith.constant 0 : index
    %c0_26 = arith.constant 0 : index
    %23 = vector.load %arg8[%c0_24, %c0_25, %c0_26] : memref<4x64x64xbf16, #tpu.memory_space<vmem>>, vector<1x64x64xbf16>
    %24 = vector.shape_cast %23 : vector<1x64x64xbf16> to vector<64x64xbf16>
    %cst_27 = arith.constant dense<0.000000e+00> : vector<1x64xf32>
    %25 = tpu.matmul %18, %24, %cst_27 {dimension_numbers = #tpu.dot_dimension_numbers<[1], [0], [0], [1], [0, 0, 1, 1], [], []>} : vector<1x64xbf16>, vector<64x64xbf16>, vector<1x64xf32> -> vector<1x64xf32>
    %26 = arith.addf %22, %25 : vector<1x64xf32>
    %c0_28 = arith.constant 0 : index
    %c0_29 = arith.constant 0 : index
    %c0_30 = arith.constant 0 : index
    %27 = vector.load %arg9[%c0_28, %c0_29, %c0_30] : memref<4x1x64xf32, #tpu.memory_space<vmem>>, vector<1x1x64xf32>
    %28 = vector.shape_cast %27 : vector<1x1x64xf32> to vector<1x64xf32>
    %29 = arith.addf %26, %28 : vector<1x64xf32>
    %c1 = arith.constant 1 : index
    %c0_31 = arith.constant 0 : index
    %c0_32 = arith.constant 0 : index
    %30 = vector.load %arg7[%c1, %c0_31, %c0_32] : memref<4x64x64xbf16, #tpu.memory_space<vmem>>, vector<1x64x64xbf16>
    %31 = vector.shape_cast %30 : vector<1x64x64xbf16> to vector<64x64xbf16>
    %cst_33 = arith.constant dense<0.000000e+00> : vector<1x64xf32>
    %32 = tpu.matmul %16, %31, %cst_33 {dimension_numbers = #tpu.dot_dimension_numbers<[1], [0], [0], [1], [0, 0, 1, 1], [], []>} : vector<1x64xbf16>, vector<64x64xbf16>, vector<1x64xf32> -> vector<1x64xf32>
    %c1_34 = arith.constant 1 : index
    %c0_35 = arith.constant 0 : index
    %c0_36 = arith.constant 0 : index
    %33 = vector.load %arg8[%c1_34, %c0_35, %c0_36] : memref<4x64x64xbf16, #tpu.memory_space<vmem>>, vector<1x64x64xbf16>
    %34 = vector.shape_cast %33 : vector<1x64x64xbf16> to vector<64x64xbf16>
    %cst_37 = arith.constant dense<0.000000e+00> : vector<1x64xf32>
    %35 = tpu.matmul %18, %34, %cst_37 {dimension_numbers = #tpu.dot_dimension_numbers<[1], [0], [0], [1], [0, 0, 1, 1], [], []>} : vector<1x64xbf16>, vector<64x64xbf16>, vector<1x64xf32> -> vector<1x64xf32>
    %36 = arith.addf %32, %35 : vector<1x64xf32>
    %c1_38 = arith.constant 1 : index
    %c0_39 = arith.constant 0 : index
    %c0_40 = arith.constant 0 : index
    %37 = vector.load %arg9[%c1_38, %c0_39, %c0_40] : memref<4x1x64xf32, #tpu.memory_space<vmem>>, vector<1x1x64xf32>
    %38 = vector.shape_cast %37 : vector<1x1x64xf32> to vector<1x64xf32>
    %39 = arith.addf %36, %38 : vector<1x64xf32>
    %c2 = arith.constant 2 : index
    %c0_41 = arith.constant 0 : index
    %c0_42 = arith.constant 0 : index
    %40 = vector.load %arg7[%c2, %c0_41, %c0_42] : memref<4x64x64xbf16, #tpu.memory_space<vmem>>, vector<1x64x64xbf16>
    %41 = vector.shape_cast %40 : vector<1x64x64xbf16> to vector<64x64xbf16>
    %cst_43 = arith.constant dense<0.000000e+00> : vector<1x64xf32>
    %42 = tpu.matmul %16, %41, %cst_43 {dimension_numbers = #tpu.dot_dimension_numbers<[1], [0], [0], [1], [0, 0, 1, 1], [], []>} : vector<1x64xbf16>, vector<64x64xbf16>, vector<1x64xf32> -> vector<1x64xf32>
    %c2_44 = arith.constant 2 : index
    %c0_45 = arith.constant 0 : index
    %c0_46 = arith.constant 0 : index
    %43 = vector.load %arg8[%c2_44, %c0_45, %c0_46] : memref<4x64x64xbf16, #tpu.memory_space<vmem>>, vector<1x64x64xbf16>
    %44 = vector.shape_cast %43 : vector<1x64x64xbf16> to vector<64x64xbf16>
    %cst_47 = arith.constant dense<0.000000e+00> : vector<1x64xf32>
    %45 = tpu.matmul %18, %44, %cst_47 {dimension_numbers = #tpu.dot_dimension_numbers<[1], [0], [0], [1], [0, 0, 1, 1], [], []>} : vector<1x64xbf16>, vector<64x64xbf16>, vector<1x64xf32> -> vector<1x64xf32>
    %46 = arith.addf %42, %45 : vector<1x64xf32>
    %c2_48 = arith.constant 2 : index
    %c0_49 = arith.constant 0 : index
    %c0_50 = arith.constant 0 : index
    %47 = vector.load %arg9[%c2_48, %c0_49, %c0_50] : memref<4x1x64xf32, #tpu.memory_space<vmem>>, vector<1x1x64xf32>
    %48 = vector.shape_cast %47 : vector<1x1x64xf32> to vector<1x64xf32>
    %49 = arith.addf %46, %48 : vector<1x64xf32>
    %c3 = arith.constant 3 : index
    %c0_51 = arith.constant 0 : index
    %c0_52 = arith.constant 0 : index
    %50 = vector.load %arg7[%c3, %c0_51, %c0_52] : memref<4x64x64xbf16, #tpu.memory_space<vmem>>, vector<1x64x64xbf16>
    %51 = vector.shape_cast %50 : vector<1x64x64xbf16> to vector<64x64xbf16>
    %cst_53 = arith.constant dense<0.000000e+00> : vector<1x64xf32>
    %52 = tpu.matmul %16, %51, %cst_53 {dimension_numbers = #tpu.dot_dimension_numbers<[1], [0], [0], [1], [0, 0, 1, 1], [], []>} : vector<1x64xbf16>, vector<64x64xbf16>, vector<1x64xf32> -> vector<1x64xf32>
    %c3_54 = arith.constant 3 : index
    %c0_55 = arith.constant 0 : index
    %c0_56 = arith.constant 0 : index
    %53 = vector.load %arg8[%c3_54, %c0_55, %c0_56] : memref<4x64x64xbf16, #tpu.memory_space<vmem>>, vector<1x64x64xbf16>
    %54 = vector.shape_cast %53 : vector<1x64x64xbf16> to vector<64x64xbf16>
    %cst_57 = arith.constant dense<0.000000e+00> : vector<1x64xf32>
    %55 = tpu.matmul %18, %54, %cst_57 {dimension_numbers = #tpu.dot_dimension_numbers<[1], [0], [0], [1], [0, 0, 1, 1], [], []>} : vector<1x64xbf16>, vector<64x64xbf16>, vector<1x64xf32> -> vector<1x64xf32>
    %56 = arith.addf %52, %55 : vector<1x64xf32>
    %c3_58 = arith.constant 3 : index
    %c0_59 = arith.constant 0 : index
    %c0_60 = arith.constant 0 : index
    %57 = vector.load %arg9[%c3_58, %c0_59, %c0_60] : memref<4x1x64xf32, #tpu.memory_space<vmem>>, vector<1x1x64xf32>
    %58 = vector.shape_cast %57 : vector<1x1x64xf32> to vector<1x64xf32>
    %59 = arith.addf %56, %58 : vector<1x64xf32>
    %60 = arith.negf %29 : vector<1x64xf32>
    %61 = math.exp %60 : vector<1x64xf32>
    %cst_61 = arith.constant 1.000000e+00 : f32
    %62 = vector.broadcast %cst_61 : f32 to vector<1x64xf32>
    %63 = arith.addf %62, %61 : vector<1x64xf32>
    %64 = arith.divf %62, %63 : vector<1x64xf32>
    %65 = arith.negf %39 : vector<1x64xf32>
    %66 = math.exp %65 : vector<1x64xf32>
    %cst_62 = arith.constant 1.000000e+00 : f32
    %67 = vector.broadcast %cst_62 : f32 to vector<1x64xf32>
    %68 = arith.addf %67, %66 : vector<1x64xf32>
    %69 = arith.divf %67, %68 : vector<1x64xf32>
    %70 = math.tanh %49 : vector<1x64xf32>
    %71 = arith.negf %59 : vector<1x64xf32>
    %72 = math.exp %71 : vector<1x64xf32>
    %cst_63 = arith.constant 1.000000e+00 : f32
    %73 = vector.broadcast %cst_63 : f32 to vector<1x64xf32>
    %74 = arith.addf %73, %72 : vector<1x64xf32>
    %75 = arith.divf %73, %74 : vector<1x64xf32>
    %76 = arith.mulf %69, %19 : vector<1x64xf32>
    %77 = arith.mulf %64, %70 : vector<1x64xf32>
    %78 = arith.addf %76, %77 : vector<1x64xf32>
    %79 = math.tanh %78 : vector<1x64xf32>
    %80 = arith.mulf %75, %79 : vector<1x64xf32>
    %c0_64 = arith.constant 0 : index
    %c0_65 = arith.constant 0 : index
    %81 = vector.load %arg17[%c0_64, %c0_65] : memref<1x64xf32, #tpu.memory_space<vmem>>, vector<1x64xf32>
    tpu.vector_store %arg17[%c0_64, %c0_65], %80 {strides = array<i32>} : memref<1x64xf32, #tpu.memory_space<vmem>>, vector<1x64xf32>,
    %c0_66 = arith.constant 0 : index
    %c0_67 = arith.constant 0 : index
    %82 = vector.load %arg18[%c0_66, %c0_67] : memref<1x64xf32, #tpu.memory_space<vmem>>, vector<1x64xf32>
    tpu.vector_store %arg18[%c0_66, %c0_67], %78 {strides = array<i32>} : memref<1x64xf32, #tpu.memory_space<vmem>>, vector<1x64xf32>,
    %83 = arith.truncf %80 : vector<1x64xf32> to vector<1x64xbf16>
    %c0_68 = arith.constant 0 : index
    %c0_69 = arith.constant 0 : index
    %84 = vector.load %arg10[%c0_68, %c0_69] : memref<64x50xbf16, #tpu.memory_space<vmem>>, vector<64x50xbf16>
    %cst_70 = arith.constant dense<0.000000e+00> : vector<1x50xf32>
    %85 = tpu.matmul %83, %84, %cst_70 {dimension_numbers = #tpu.dot_dimension_numbers<[1], [0], [0], [1], [0, 0, 1, 1], [], []>} : vector<1x64xbf16>, vector<64x50xbf16>, vector<1x50xf32> -> vector<1x50xf32>
    %c0_71 = arith.constant 0 : index
    %c0_72 = arith.constant 0 : index
    %86 = vector.load %arg11[%c0_71, %c0_72] : memref<1x50xf32, #tpu.memory_space<vmem>>, vector<1x50xf32>
    %87 = arith.addf %85, %86 : vector<1x50xf32>
    %cst_73 = arith.constant 0.000000e+00 : f32
    %88 = vector.broadcast %cst_73 : f32 to vector<1x50xf32>
    %89 = arith.maximumf %87, %88 : vector<1x50xf32>
    %c0_74 = arith.constant 0 : index
    %c0_75 = arith.constant 0 : index
    %90 = vector.load %arg12[%c0_74, %c0_75] : memref<1x50xf32, #tpu.memory_space<vmem>>, vector<1x50xf32>
    %91 = arith.mulf %89, %90 : vector<1x50xf32>
    %cst_76 = arith.constant dense<0.000000e+00> : vector<1xf32>
    %92 = vector.multi_reduction <add>, %91, %cst_76 [1] : vector<1x50xf32> to vector<1xf32>
    %93 = vector.shape_cast %92 : vector<1xf32> to vector<1x1xf32>
    %c0_77 = arith.constant 0 : index
    %c0_78 = arith.constant 0 : index
    %94 = vector.load %arg13[%c0_77, %c0_78] : memref<1x1xf32, #tpu.memory_space<vmem>>, vector<1x1xf32>
    %95 = arith.addf %93, %94 : vector<1x1xf32>
    %c0_79 = arith.constant 0 : index
    %c0_80 = arith.constant 0 : index
    %96 = vector.load %arg19[%c0_79, %c0_80] : memref<1x1xf32, #tpu.memory_space<vmem>>, vector<1x1xf32>
    tpu.vector_store %arg19[%c0_79, %c0_80], %95 {strides = array<i32>} : memref<1x1xf32, #tpu.memory_space<vmem>>, vector<1x1xf32>,
    %97 = arith.mulf %80, %80 : vector<1x64xf32>
    %cst_81 = arith.constant dense<0.000000e+00> : vector<1xf32>
    %98 = vector.multi_reduction <add>, %97, %cst_81 [1] : vector<1x64xf32> to vector<1xf32>
    %99 = vector.shape_cast %98 : vector<1xf32> to vector<1x1xf32>
    %cst_82 = arith.constant 9.99999996E-13 : f32
    %100 = vector.broadcast %cst_82 : f32 to vector<1x1xf32>
    %101 = arith.addf %99, %100 : vector<1x1xf32>
    %102 = math.rsqrt %101 : vector<1x1xf32>
    %103 = vector.broadcast %102 : vector<1x1xf32> to vector<1x64xf32>
    %104 = arith.mulf %80, %103 : vector<1x64xf32>
    %c0_83 = arith.constant 0 : index
    %c0_84 = arith.constant 0 : index
    %105 = vector.load %arg16[%c0_83, %c0_84] : memref<1x64xf32, #tpu.memory_space<vmem>>, vector<1x64xf32>
    tpu.vector_store %arg16[%c0_83, %c0_84], %104 {strides = array<i32>} : memref<1x64xf32, #tpu.memory_space<vmem>>, vector<1x64xf32>,
    return
  }
}

module attributes {stable_mosaic.version = 11 : i64} {
  func.func @_worker_kernel(%arg0: memref<1x64xf32, #tpu.memory_space<vmem>>, %arg1: memref<1x64xf32, #tpu.memory_space<vmem>>, %arg2: memref<1x64xf32, #tpu.memory_space<vmem>>, %arg3: memref<4x64x64xbf16, #tpu.memory_space<vmem>>, %arg4: memref<4x64x64xbf16, #tpu.memory_space<vmem>>, %arg5: memref<4x1x64xf32, #tpu.memory_space<vmem>>, %arg6: memref<64x50xbf16, #tpu.memory_space<vmem>>, %arg7: memref<1x50xf32, #tpu.memory_space<vmem>>, %arg8: memref<1x50xf32, #tpu.memory_space<vmem>>, %arg9: memref<1x1xf32, #tpu.memory_space<vmem>>, %arg10: memref<1x64xf32, #tpu.memory_space<vmem>>, %arg11: memref<3x64xf32, #tpu.memory_space<vmem>>, %arg12: memref<3x3xf32, #tpu.memory_space<vmem>>, %arg13: memref<3x1xf32, #tpu.memory_space<vmem>>, %arg14: memref<64x16xbf16, #tpu.memory_space<vmem>>, %arg15: memref<1x16xf32, #tpu.memory_space<vmem>>, %arg16: memref<16x64xf32, #tpu.memory_space<vmem>>, %arg17: memref<64x4xf32, #tpu.memory_space<vmem>>, %arg18: memref<1x4xf32, #tpu.memory_space<vmem>>, %arg19: memref<1x64xf32, #tpu.memory_space<vmem>>, %arg20: memref<1x64xf32, #tpu.memory_space<vmem>>, %arg21: memref<1x1xf32, #tpu.memory_space<vmem>>, %arg22: memref<3x64xf32, #tpu.memory_space<vmem>>) attributes {dimension_semantics = [], scalar_prefetch = 0 : i64, scratch_operands = 0 : i64, tpu.core_type = #tpu.core_type<tc>} {
    %c0 = arith.constant 0 : index
    %c0_0 = arith.constant 0 : index
    %0 = vector.load %arg0[%c0, %c0_0] : memref<1x64xf32, #tpu.memory_space<vmem>>, vector<1x64xf32>
    %1 = arith.truncf %0 : vector<1x64xf32> to vector<1x64xbf16>
    %c0_1 = arith.constant 0 : index
    %c0_2 = arith.constant 0 : index
    %2 = vector.load %arg1[%c0_1, %c0_2] : memref<1x64xf32, #tpu.memory_space<vmem>>, vector<1x64xf32>
    %3 = arith.truncf %2 : vector<1x64xf32> to vector<1x64xbf16>
    %c0_3 = arith.constant 0 : index
    %c0_4 = arith.constant 0 : index
    %4 = vector.load %arg2[%c0_3, %c0_4] : memref<1x64xf32, #tpu.memory_space<vmem>>, vector<1x64xf32>
    %c0_5 = arith.constant 0 : index
    %c0_6 = arith.constant 0 : index
    %c0_7 = arith.constant 0 : index
    %5 = vector.load %arg3[%c0_5, %c0_6, %c0_7] : memref<4x64x64xbf16, #tpu.memory_space<vmem>>, vector<1x64x64xbf16>
    %6 = vector.shape_cast %5 : vector<1x64x64xbf16> to vector<64x64xbf16>
    %cst = arith.constant dense<0.000000e+00> : vector<1x64xf32>
    %7 = tpu.matmul %1, %6, %cst {dimension_numbers = #tpu.dot_dimension_numbers<[1], [0], [0], [1], [0, 0, 1, 1], [], []>} : vector<1x64xbf16>, vector<64x64xbf16>, vector<1x64xf32> -> vector<1x64xf32>
    %c0_8 = arith.constant 0 : index
    %c0_9 = arith.constant 0 : index
    %c0_10 = arith.constant 0 : index
    %8 = vector.load %arg4[%c0_8, %c0_9, %c0_10] : memref<4x64x64xbf16, #tpu.memory_space<vmem>>, vector<1x64x64xbf16>
    %9 = vector.shape_cast %8 : vector<1x64x64xbf16> to vector<64x64xbf16>
    %cst_11 = arith.constant dense<0.000000e+00> : vector<1x64xf32>
    %10 = tpu.matmul %3, %9, %cst_11 {dimension_numbers = #tpu.dot_dimension_numbers<[1], [0], [0], [1], [0, 0, 1, 1], [], []>} : vector<1x64xbf16>, vector<64x64xbf16>, vector<1x64xf32> -> vector<1x64xf32>
    %11 = arith.addf %7, %10 : vector<1x64xf32>
    %c0_12 = arith.constant 0 : index
    %c0_13 = arith.constant 0 : index
    %c0_14 = arith.constant 0 : index
    %12 = vector.load %arg5[%c0_12, %c0_13, %c0_14] : memref<4x1x64xf32, #tpu.memory_space<vmem>>, vector<1x1x64xf32>
    %13 = vector.shape_cast %12 : vector<1x1x64xf32> to vector<1x64xf32>
    %14 = arith.addf %11, %13 : vector<1x64xf32>
    %c1 = arith.constant 1 : index
    %c0_15 = arith.constant 0 : index
    %c0_16 = arith.constant 0 : index
    %15 = vector.load %arg3[%c1, %c0_15, %c0_16] : memref<4x64x64xbf16, #tpu.memory_space<vmem>>, vector<1x64x64xbf16>
    %16 = vector.shape_cast %15 : vector<1x64x64xbf16> to vector<64x64xbf16>
    %cst_17 = arith.constant dense<0.000000e+00> : vector<1x64xf32>
    %17 = tpu.matmul %1, %16, %cst_17 {dimension_numbers = #tpu.dot_dimension_numbers<[1], [0], [0], [1], [0, 0, 1, 1], [], []>} : vector<1x64xbf16>, vector<64x64xbf16>, vector<1x64xf32> -> vector<1x64xf32>
    %c1_18 = arith.constant 1 : index
    %c0_19 = arith.constant 0 : index
    %c0_20 = arith.constant 0 : index
    %18 = vector.load %arg4[%c1_18, %c0_19, %c0_20] : memref<4x64x64xbf16, #tpu.memory_space<vmem>>, vector<1x64x64xbf16>
    %19 = vector.shape_cast %18 : vector<1x64x64xbf16> to vector<64x64xbf16>
    %cst_21 = arith.constant dense<0.000000e+00> : vector<1x64xf32>
    %20 = tpu.matmul %3, %19, %cst_21 {dimension_numbers = #tpu.dot_dimension_numbers<[1], [0], [0], [1], [0, 0, 1, 1], [], []>} : vector<1x64xbf16>, vector<64x64xbf16>, vector<1x64xf32> -> vector<1x64xf32>
    %21 = arith.addf %17, %20 : vector<1x64xf32>
    %c1_22 = arith.constant 1 : index
    %c0_23 = arith.constant 0 : index
    %c0_24 = arith.constant 0 : index
    %22 = vector.load %arg5[%c1_22, %c0_23, %c0_24] : memref<4x1x64xf32, #tpu.memory_space<vmem>>, vector<1x1x64xf32>
    %23 = vector.shape_cast %22 : vector<1x1x64xf32> to vector<1x64xf32>
    %24 = arith.addf %21, %23 : vector<1x64xf32>
    %c2 = arith.constant 2 : index
    %c0_25 = arith.constant 0 : index
    %c0_26 = arith.constant 0 : index
    %25 = vector.load %arg3[%c2, %c0_25, %c0_26] : memref<4x64x64xbf16, #tpu.memory_space<vmem>>, vector<1x64x64xbf16>
    %26 = vector.shape_cast %25 : vector<1x64x64xbf16> to vector<64x64xbf16>
    %cst_27 = arith.constant dense<0.000000e+00> : vector<1x64xf32>
    %27 = tpu.matmul %1, %26, %cst_27 {dimension_numbers = #tpu.dot_dimension_numbers<[1], [0], [0], [1], [0, 0, 1, 1], [], []>} : vector<1x64xbf16>, vector<64x64xbf16>, vector<1x64xf32> -> vector<1x64xf32>
    %c2_28 = arith.constant 2 : index
    %c0_29 = arith.constant 0 : index
    %c0_30 = arith.constant 0 : index
    %28 = vector.load %arg4[%c2_28, %c0_29, %c0_30] : memref<4x64x64xbf16, #tpu.memory_space<vmem>>, vector<1x64x64xbf16>
    %29 = vector.shape_cast %28 : vector<1x64x64xbf16> to vector<64x64xbf16>
    %cst_31 = arith.constant dense<0.000000e+00> : vector<1x64xf32>
    %30 = tpu.matmul %3, %29, %cst_31 {dimension_numbers = #tpu.dot_dimension_numbers<[1], [0], [0], [1], [0, 0, 1, 1], [], []>} : vector<1x64xbf16>, vector<64x64xbf16>, vector<1x64xf32> -> vector<1x64xf32>
    %31 = arith.addf %27, %30 : vector<1x64xf32>
    %c2_32 = arith.constant 2 : index
    %c0_33 = arith.constant 0 : index
    %c0_34 = arith.constant 0 : index
    %32 = vector.load %arg5[%c2_32, %c0_33, %c0_34] : memref<4x1x64xf32, #tpu.memory_space<vmem>>, vector<1x1x64xf32>
    %33 = vector.shape_cast %32 : vector<1x1x64xf32> to vector<1x64xf32>
    %34 = arith.addf %31, %33 : vector<1x64xf32>
    %c3 = arith.constant 3 : index
    %c0_35 = arith.constant 0 : index
    %c0_36 = arith.constant 0 : index
    %35 = vector.load %arg3[%c3, %c0_35, %c0_36] : memref<4x64x64xbf16, #tpu.memory_space<vmem>>, vector<1x64x64xbf16>
    %36 = vector.shape_cast %35 : vector<1x64x64xbf16> to vector<64x64xbf16>
    %cst_37 = arith.constant dense<0.000000e+00> : vector<1x64xf32>
    %37 = tpu.matmul %1, %36, %cst_37 {dimension_numbers = #tpu.dot_dimension_numbers<[1], [0], [0], [1], [0, 0, 1, 1], [], []>} : vector<1x64xbf16>, vector<64x64xbf16>, vector<1x64xf32> -> vector<1x64xf32>
    %c3_38 = arith.constant 3 : index
    %c0_39 = arith.constant 0 : index
    %c0_40 = arith.constant 0 : index
    %38 = vector.load %arg4[%c3_38, %c0_39, %c0_40] : memref<4x64x64xbf16, #tpu.memory_space<vmem>>, vector<1x64x64xbf16>
    %39 = vector.shape_cast %38 : vector<1x64x64xbf16> to vector<64x64xbf16>
    %cst_41 = arith.constant dense<0.000000e+00> : vector<1x64xf32>
    %40 = tpu.matmul %3, %39, %cst_41 {dimension_numbers = #tpu.dot_dimension_numbers<[1], [0], [0], [1], [0, 0, 1, 1], [], []>} : vector<1x64xbf16>, vector<64x64xbf16>, vector<1x64xf32> -> vector<1x64xf32>
    %41 = arith.addf %37, %40 : vector<1x64xf32>
    %c3_42 = arith.constant 3 : index
    %c0_43 = arith.constant 0 : index
    %c0_44 = arith.constant 0 : index
    %42 = vector.load %arg5[%c3_42, %c0_43, %c0_44] : memref<4x1x64xf32, #tpu.memory_space<vmem>>, vector<1x1x64xf32>
    %43 = vector.shape_cast %42 : vector<1x1x64xf32> to vector<1x64xf32>
    %44 = arith.addf %41, %43 : vector<1x64xf32>
    %45 = arith.negf %14 : vector<1x64xf32>
    %46 = math.exp %45 : vector<1x64xf32>
    %cst_45 = arith.constant 1.000000e+00 : f32
    %47 = vector.broadcast %cst_45 : f32 to vector<1x64xf32>
    %48 = arith.addf %47, %46 : vector<1x64xf32>
    %49 = arith.divf %47, %48 : vector<1x64xf32>
    %50 = arith.negf %24 : vector<1x64xf32>
    %51 = math.exp %50 : vector<1x64xf32>
    %cst_46 = arith.constant 1.000000e+00 : f32
    %52 = vector.broadcast %cst_46 : f32 to vector<1x64xf32>
    %53 = arith.addf %52, %51 : vector<1x64xf32>
    %54 = arith.divf %52, %53 : vector<1x64xf32>
    %55 = math.tanh %34 : vector<1x64xf32>
    %56 = arith.negf %44 : vector<1x64xf32>
    %57 = math.exp %56 : vector<1x64xf32>
    %cst_47 = arith.constant 1.000000e+00 : f32
    %58 = vector.broadcast %cst_47 : f32 to vector<1x64xf32>
    %59 = arith.addf %58, %57 : vector<1x64xf32>
    %60 = arith.divf %58, %59 : vector<1x64xf32>
    %61 = arith.mulf %54, %4 : vector<1x64xf32>
    %62 = arith.mulf %49, %55 : vector<1x64xf32>
    %63 = arith.addf %61, %62 : vector<1x64xf32>
    %64 = math.tanh %63 : vector<1x64xf32>
    %65 = arith.mulf %60, %64 : vector<1x64xf32>
    %c0_48 = arith.constant 0 : index
    %c0_49 = arith.constant 0 : index
    %66 = vector.load %arg19[%c0_48, %c0_49] : memref<1x64xf32, #tpu.memory_space<vmem>>, vector<1x64xf32>
    tpu.vector_store %arg19[%c0_48, %c0_49], %65 {strides = array<i32>} : memref<1x64xf32, #tpu.memory_space<vmem>>, vector<1x64xf32>,
    %c0_50 = arith.constant 0 : index
    %c0_51 = arith.constant 0 : index
    %67 = vector.load %arg20[%c0_50, %c0_51] : memref<1x64xf32, #tpu.memory_space<vmem>>, vector<1x64xf32>
    tpu.vector_store %arg20[%c0_50, %c0_51], %63 {strides = array<i32>} : memref<1x64xf32, #tpu.memory_space<vmem>>, vector<1x64xf32>,
    %68 = arith.truncf %65 : vector<1x64xf32> to vector<1x64xbf16>
    %c0_52 = arith.constant 0 : index
    %c0_53 = arith.constant 0 : index
    %69 = vector.load %arg6[%c0_52, %c0_53] : memref<64x50xbf16, #tpu.memory_space<vmem>>, vector<64x50xbf16>
    %cst_54 = arith.constant dense<0.000000e+00> : vector<1x50xf32>
    %70 = tpu.matmul %68, %69, %cst_54 {dimension_numbers = #tpu.dot_dimension_numbers<[1], [0], [0], [1], [0, 0, 1, 1], [], []>} : vector<1x64xbf16>, vector<64x50xbf16>, vector<1x50xf32> -> vector<1x50xf32>
    %c0_55 = arith.constant 0 : index
    %c0_56 = arith.constant 0 : index
    %71 = vector.load %arg7[%c0_55, %c0_56] : memref<1x50xf32, #tpu.memory_space<vmem>>, vector<1x50xf32>
    %72 = arith.addf %70, %71 : vector<1x50xf32>
    %cst_57 = arith.constant 0.000000e+00 : f32
    %73 = vector.broadcast %cst_57 : f32 to vector<1x50xf32>
    %74 = arith.maximumf %72, %73 : vector<1x50xf32>
    %c0_58 = arith.constant 0 : index
    %c0_59 = arith.constant 0 : index
    %75 = vector.load %arg8[%c0_58, %c0_59] : memref<1x50xf32, #tpu.memory_space<vmem>>, vector<1x50xf32>
    %76 = arith.mulf %74, %75 : vector<1x50xf32>
    %cst_60 = arith.constant dense<0.000000e+00> : vector<1xf32>
    %77 = vector.multi_reduction <add>, %76, %cst_60 [1] : vector<1x50xf32> to vector<1xf32>
    %78 = vector.shape_cast %77 : vector<1xf32> to vector<1x1xf32>
    %c0_61 = arith.constant 0 : index
    %c0_62 = arith.constant 0 : index
    %79 = vector.load %arg9[%c0_61, %c0_62] : memref<1x1xf32, #tpu.memory_space<vmem>>, vector<1x1xf32>
    %80 = arith.addf %78, %79 : vector<1x1xf32>
    %c0_63 = arith.constant 0 : index
    %c0_64 = arith.constant 0 : index
    %81 = vector.load %arg21[%c0_63, %c0_64] : memref<1x1xf32, #tpu.memory_space<vmem>>, vector<1x1xf32>
    tpu.vector_store %arg21[%c0_63, %c0_64], %80 {strides = array<i32>} : memref<1x1xf32, #tpu.memory_space<vmem>>, vector<1x1xf32>,
    %c0_65 = arith.constant 0 : index
    %c0_66 = arith.constant 0 : index
    %82 = vector.load %arg11[%c0_65, %c0_66] : memref<3x64xf32, #tpu.memory_space<vmem>>, vector<3x64xf32>
    %c0_67 = arith.constant 0 : index
    %c0_68 = arith.constant 0 : index
    %83 = vector.load %arg10[%c0_67, %c0_68] : memref<1x64xf32, #tpu.memory_space<vmem>>, vector<1x64xf32>
    %c0_69 = arith.constant 0 : index
    %c0_70 = arith.constant 0 : index
    %84 = vector.load %arg13[%c0_69, %c0_70] : memref<3x1xf32, #tpu.memory_space<vmem>>, vector<3x1xf32>
    %c0_71 = arith.constant 0 : index
    %c0_72 = arith.constant 0 : index
    %85 = vector.load %arg12[%c0_71, %c0_72] : memref<3x3xf32, #tpu.memory_space<vmem>>, vector<3x3xf32>
    %cst_73 = arith.constant dense<0.000000e+00> : vector<3x64xf32>
    %86 = tpu.matmul %85, %82, %cst_73 {dimension_numbers = #tpu.dot_dimension_numbers<[1], [0], [0], [1], [0, 0, 1, 1], [], []>} : vector<3x3xf32>, vector<3x64xf32>, vector<3x64xf32> -> vector<3x64xf32>
    %87 = vector.broadcast %83 : vector<1x64xf32> to vector<3x64xf32>
    %88 = vector.broadcast %84 : vector<3x1xf32> to vector<3x64xf32>
    %89 = arith.mulf %87, %88 : vector<3x64xf32>
    %90 = arith.addf %86, %89 : vector<3x64xf32>
    %91 = vector.broadcast %83 : vector<1x64xf32> to vector<3x64xf32>
    %92 = vector.broadcast %84 : vector<3x1xf32> to vector<3x64xf32>
    %93 = arith.mulf %91, %92 : vector<3x64xf32>
    %94 = vector.shape_cast %82 : vector<3x64xf32> to vector<1x3x64xf32>
    %cst_74 = arith.constant dense<0.000000e+00> : vector<1xf32>
    %95 = vector.multi_reduction <add>, %94, %cst_74 [1, 2] : vector<1x3x64xf32> to vector<1xf32>
    %96 = vector.shape_cast %95 : vector<1xf32> to vector<1x1x1xf32>
    %97 = vector.extract %96[0, 0, 0] : f32 from vector<1x1x1xf32>
    %cst_75 = arith.constant 0.000000e+00 : f32
    %98 = arith.cmpf oeq, %97, %cst_75 : f32
    %99 = arith.extui %98 : i1 to i32
    %100 = arith.sitofp %99 : i32 to f32
    %101 = vector.extract_strided_slice %82 {offsets = [2, 0], sizes = [1, 64], strides = [1, 1]} : vector<3x64xf32> to vector<1x64xf32>
    %102 = math.absf %101 : vector<1x64xf32>
    %103 = vector.shape_cast %102 : vector<1x64xf32> to vector<1x1x64xf32>
    %cst_76 = arith.constant dense<0.000000e+00> : vector<1xf32>
    %104 = vector.multi_reduction <add>, %103, %cst_76 [1, 2] : vector<1x1x64xf32> to vector<1xf32>
    %105 = vector.shape_cast %104 : vector<1xf32> to vector<1x1x1xf32>
    %106 = vector.extract %105[0, 0, 0] : f32 from vector<1x1x1xf32>
    %cst_77 = arith.constant 0.000000e+00 : f32
    %107 = arith.cmpf ogt, %106, %cst_77 : f32
    %108 = arith.extui %107 : i1 to i32
    %109 = arith.sitofp %108 : i32 to f32
    %110 = vector.broadcast %109 : f32 to vector<3x64xf32>
    %111 = arith.mulf %110, %82 : vector<3x64xf32>
    %cst_78 = arith.constant 1.000000e+00 : f32
    %112 = arith.subf %cst_78, %109 : f32
    %113 = vector.broadcast %112 : f32 to vector<3x64xf32>
    %114 = arith.mulf %113, %90 : vector<3x64xf32>
    %115 = arith.addf %111, %114 : vector<3x64xf32>
    %116 = vector.broadcast %100 : f32 to vector<3x64xf32>
    %117 = arith.mulf %116, %93 : vector<3x64xf32>
    %cst_79 = arith.constant 1.000000e+00 : f32
    %118 = arith.subf %cst_79, %100 : f32
    %119 = vector.broadcast %118 : f32 to vector<3x64xf32>
    %120 = arith.mulf %119, %115 : vector<3x64xf32>
    %121 = arith.addf %117, %120 : vector<3x64xf32>
    %c0_80 = arith.constant 0 : index
    %c0_81 = arith.constant 0 : index
    %122 = vector.load %arg22[%c0_80, %c0_81] : memref<3x64xf32, #tpu.memory_space<vmem>>, vector<3x64xf32>
    tpu.vector_store %arg22[%c0_80, %c0_81], %121 {strides = array<i32>} : memref<3x64xf32, #tpu.memory_space<vmem>>, vector<3x64xf32>,
    %cst_82 = arith.constant dense<0.000000e+00> : vector<64xf32>
    %123 = vector.multi_reduction <add>, %121, %cst_82 [0] : vector<3x64xf32> to vector<64xf32>
    %124 = vector.shape_cast %123 : vector<64xf32> to vector<1x64xf32>
    %125 = arith.truncf %124 : vector<1x64xf32> to vector<1x64xbf16>
    %c0_83 = arith.constant 0 : index
    %c0_84 = arith.constant 0 : index
    %126 = vector.load %arg14[%c0_83, %c0_84] : memref<64x16xbf16, #tpu.memory_space<vmem>>, vector<64x16xbf16>
    %cst_85 = arith.constant dense<0.000000e+00> : vector<1x16xf32>
    %127 = tpu.matmul %125, %126, %cst_85 {dimension_numbers = #tpu.dot_dimension_numbers<[1], [0], [0], [1], [0, 0, 1, 1], [], []>} : vector<1x64xbf16>, vector<64x16xbf16>, vector<1x16xf32> -> vector<1x16xf32>
    %c0_86 = arith.constant 0 : index
    %c0_87 = arith.constant 0 : index
    %128 = vector.load %arg15[%c0_86, %c0_87] : memref<1x16xf32, #tpu.memory_space<vmem>>, vector<1x16xf32>
    %129 = arith.addf %127, %128 : vector<1x16xf32>
    %c0_88 = arith.constant 0 : index
    %c0_89 = arith.constant 0 : index
    %130 = vector.load %arg16[%c0_88, %c0_89] : memref<16x64xf32, #tpu.memory_space<vmem>>, vector<16x64xf32>
    %cst_90 = arith.constant dense<0.000000e+00> : vector<1x64xf32>
    %131 = tpu.matmul %129, %130, %cst_90 {dimension_numbers = #tpu.dot_dimension_numbers<[1], [0], [0], [1], [0, 0, 1, 1], [], []>} : vector<1x16xf32>, vector<16x64xf32>, vector<1x64xf32> -> vector<1x64xf32>
    %132 = arith.mulf %65, %131 : vector<1x64xf32>
    %c0_91 = arith.constant 0 : index
    %c0_92 = arith.constant 0 : index
    %133 = vector.load %arg17[%c0_91, %c0_92] : memref<64x4xf32, #tpu.memory_space<vmem>>, vector<64x4xf32>
    %cst_93 = arith.constant dense<0.000000e+00> : vector<1x4xf32>
    %134 = tpu.matmul %132, %133, %cst_93 {dimension_numbers = #tpu.dot_dimension_numbers<[1], [0], [0], [1], [0, 0, 1, 1], [], []>} : vector<1x64xf32>, vector<64x4xf32>, vector<1x4xf32> -> vector<1x4xf32>
    %cst_94 = arith.constant dense<0xFF800000> : vector<1xf32>
    %135 = vector.multi_reduction <maximumf>, %134, %cst_94 [1] : vector<1x4xf32> to vector<1xf32>
    %136 = vector.shape_cast %135 : vector<1xf32> to vector<1x1xf32>
    %137 = vector.broadcast %136 : vector<1x1xf32> to vector<1x4xf32>
    %138 = arith.subf %134, %137 : vector<1x4xf32>
    %139 = math.exp %138 : vector<1x4xf32>
    %cst_95 = arith.constant dense<0.000000e+00> : vector<1xf32>
    %140 = vector.multi_reduction <add>, %139, %cst_95 [1] : vector<1x4xf32> to vector<1xf32>
    %141 = vector.shape_cast %140 : vector<1xf32> to vector<1x1xf32>
    %142 = vector.broadcast %141 : vector<1x1xf32> to vector<1x4xf32>
    %143 = arith.divf %139, %142 : vector<1x4xf32>
    %c0_96 = arith.constant 0 : index
    %c0_97 = arith.constant 0 : index
    %144 = vector.load %arg18[%c0_96, %c0_97] : memref<1x4xf32, #tpu.memory_space<vmem>>, vector<1x4xf32>
    tpu.vector_store %arg18[%c0_96, %c0_97], %143 {strides = array<i32>} : memref<1x4xf32, #tpu.memory_space<vmem>>, vector<1x4xf32>,
    return
  }
}

</mosaic_0001>

<llo_original>
// kernel: fun_forward.3
$region0: #{fun_forward.3}
  #allocation0 [shape = 'u32[]', space=smem, size = 0x4, offset = 0x4, fixed_abs, tag = 'smem constant byte address 0x4 - core index']
  #allocation1 [shape = 'u32[144,128]{1,0:T(1,128)}', space=vmem, size = 0x12000, scoped, tag = 'internal scratch']
  %s0 = inlined_call_operand.vmem [shape: bf16[400,192], index: 0, kind: input, shape index: {}]
  %s1 = inlined_call_operand.vmem [shape: bf16[192,16], index: 1, kind: input, shape index: {}]
  %s2 = inlined_call_operand.vmem [shape: f32[1,16], index: 2, kind: input, shape index: {}]
  %s3 = inlined_call_operand.vmem [shape: bf16[16,81,400], index: 3, kind: input, shape index: {}]
  %s4 = inlined_call_operand.vmem [shape: bf16[16,16,32], index: 4, kind: input, shape index: {}]
  %s5 = inlined_call_operand.vmem [shape: f32[1,32], index: 5, kind: input, shape index: {}]
  %s6 = inlined_call_operand.vmem [shape: f32[81,32], index: 6, kind: output, shape index: {}]
  %s7 = sld [smem:[#allocation0]]
  $region34: #{fun_forward.3} parent=0
    _
  %s9 = ssub.s32 1, %s7
  %s10 = scalar_select 0, %s9, %s7
  // Predicated region
  $region2: #{fun_forward.3} parent=0 // pred_check
    _
  $region3: #{fun_forward.3} parent=0 // pred_check_branch
    %12 = sbr.rel (0) target = $region5
  $region4: #{fun_forward.3} parent=0 // pred_region
    _
  $region5: #{fun_forward.3} parent=0 // pred_fallthru
    _
  // Predicated region
  $region6: #{fun_forward.3} parent=0 // pred_check
    _
  $region7: #{fun_forward.3} parent=0 // pred_check_branch
    %14 = sbr.rel (0) target = $region9
  $region8: #{fun_forward.3} parent=0 // pred_region
    _
  $region9: #{fun_forward.3} parent=0 // pred_fallthru
    _
  // Predicated region
  $region10: #{fun_forward.3} parent=0 // pred_check
    _
  $region11: #{fun_forward.3} parent=0 // pred_check_branch
    %16 = sbr.rel (0) target = $region13
  $region12: #{fun_forward.3} parent=0 // pred_region
    _
  $region13: #{fun_forward.3} parent=0 // pred_fallthru
    _
  // Predicated region
  $region14: #{fun_forward.3} parent=0 // pred_check
    _
  $region15: #{fun_forward.3} parent=0 // pred_check_branch
    %18 = sbr.rel (0) target = $region17
  $region16: #{fun_forward.3} parent=0 // pred_region
    _
  $region17: #{fun_forward.3} parent=0 // pred_fallthru
    _
  // Predicated region
  $region18: #{fun_forward.3} parent=0 // pred_check
    _
  $region19: #{fun_forward.3} parent=0 // pred_check_branch
    %20 = sbr.rel (0) target = $region21
  $region20: #{fun_forward.3} parent=0 // pred_region
    _
  $region21: #{fun_forward.3} parent=0 // pred_fallthru
    _
  // Predicated region
  $region22: #{fun_forward.3} parent=0 // pred_check
    _
  $region23: #{fun_forward.3} parent=0 // pred_check_branch
    %22 = sbr.rel (0) target = $region25
  $region24: #{fun_forward.3} parent=0 // pred_region
    _
  $region25: #{fun_forward.3} parent=0 // pred_fallthru
    _
  %v24 = vld [vmem:[%s0] sm:$0xff]
  %v25 = vld [vmem:[%s0 + $0x8] sm:$0xff]
  %v26 = vld [vmem:[%s0 + $0x10] sm:$0xff]
  %v27 = vld [vmem:[%s0 + $0x18] sm:$0xff]
  %v28 = vld [vmem:[%s0 + $0x20] sm:$0xff]
  %v29 = vld [vmem:[%s0 + $0x28] sm:$0xff]
  %v30 = vld [vmem:[%s0 + $0x30] sm:$0xff]
  %v31 = vld [vmem:[%s0 + $0x38] sm:$0xff]
  %v32 = vld [vmem:[%s0 + $0x40] sm:$0xff]
  %v33 = vld [vmem:[%s0 + $0x48] sm:$0xff]
  %v34 = vld [vmem:[%s0 + $0x50] sm:$0xff]
  %v35 = vld [vmem:[%s0 + $0x58] sm:$0xff]
  %v36 = vld [vmem:[%s0 + $0x60] sm:$0xff]
  %v37 = vld [vmem:[%s0 + $0x68] sm:$0xff]
  %v38 = vld [vmem:[%s0 + $0x70] sm:$0xff]
  %v39 = vld [vmem:[%s0 + $0x78] sm:$0xff]
  %v40 = vld [vmem:[%s0 + $0x80] sm:$0xff]
  %v41 = vld [vmem:[%s0 + $0x88] sm:$0xff]
  %v42 = vld [vmem:[%s0 + $0x90] sm:$0xff]
  %v43 = vld [vmem:[%s0 + $0x98] sm:$0xff]
  %v44 = vld [vmem:[%s0 + $0xa0] sm:$0xff]
  %v45 = vld [vmem:[%s0 + $0xa8] sm:$0xff]
  %v46 = vld [vmem:[%s0 + $0xb0] sm:$0xff]
  %v47 = vld [vmem:[%s0 + $0xb8] sm:$0xff]
  %v48 = vld [vmem:[%s0 + $0xc0] sm:$0xff]
  %v49 = vld [vmem:[%s0 + $0xc8] sm:$0xff]
  %v50 = vld [vmem:[%s0 + $0xd0] sm:$0xff]
  %v51 = vld [vmem:[%s0 + $0xd8] sm:$0xff]
  %v52 = vld [vmem:[%s0 + $0xe0] sm:$0xff]
  %v53 = vld [vmem:[%s0 + $0xe8] sm:$0xff]
  %v54 = vld [vmem:[%s0 + $0xf0] sm:$0xff]
  %v55 = vld [vmem:[%s0 + $0xf8] sm:$0xff]
  %v56 = vld [vmem:[%s0 + $0x100] sm:$0xff]
  %v57 = vld [vmem:[%s0 + $0x108] sm:$0xff]
  %v58 = vld [vmem:[%s0 + $0x110] sm:$0xff]
  %v59 = vld [vmem:[%s0 + $0x118] sm:$0xff]
  %v60 = vld [vmem:[%s0 + $0x120] sm:$0xff]
  %v61 = vld [vmem:[%s0 + $0x128] sm:$0xff]
  %v62 = vld [vmem:[%s0 + $0x130] sm:$0xff]
  %v63 = vld [vmem:[%s0 + $0x138] sm:$0xff]
  %v64 = vld [vmem:[%s0 + $0x140] sm:$0xff]
  %v65 = vld [vmem:[%s0 + $0x148] sm:$0xff]
  %v66 = vld [vmem:[%s0 + $0x150] sm:$0xff]
  %v67 = vld [vmem:[%s0 + $0x158] sm:$0xff]
  %v68 = vld [vmem:[%s0 + $0x160] sm:$0xff]
  %v69 = vld [vmem:[%s0 + $0x168] sm:$0xff]
  %v70 = vld [vmem:[%s0 + $0x170] sm:$0xff]
  %v71 = vld [vmem:[%s0 + $0x178] sm:$0xff]
  %v72 = vld [vmem:[%s0 + $0x180] sm:$0xff]
  %v73 = vld [vmem:[%s0 + $0x188] sm:$0xff]
  %v74 = vld [vmem:[%s1] sm:$0xf]
  %v75 = vld [vmem:[%s1 + $0x4] sm:$0xf]
  %v76 = vld [vmem:[%s1 + $0x8] sm:$0xf]
  %v77 = vld [vmem:[%s1 + $0xc] sm:$0xf]
  %v78 = vld [vmem:[%s1 + $0x10] sm:$0xf]
  %v79 = vld [vmem:[%s1 + $0x14] sm:$0xf]
  %v80 = vld [vmem:[%s1 + $0x18] sm:$0xf]
  %v81 = vld [vmem:[%s1 + $0x1c] sm:$0xf]
  %v82 = vld [vmem:[%s1 + $0x20] sm:$0xf]
  %v83 = vld [vmem:[%s1 + $0x24] sm:$0xf]
  %v84 = vld [vmem:[%s1 + $0x28] sm:$0xf]
  %v85 = vld [vmem:[%s1 + $0x2c] sm:$0xf]
  %v86 = vld [vmem:[%s1 + $0x30] sm:$0xf]
  %v87 = vld [vmem:[%s1 + $0x34] sm:$0xf]
  %v88 = vld [vmem:[%s1 + $0x38] sm:$0xf]
  %v89 = vld [vmem:[%s1 + $0x3c] sm:$0xf]
  %v90 = vld [vmem:[%s1 + $0x40] sm:$0xf]
  %v91 = vld [vmem:[%s1 + $0x44] sm:$0xf]
  %v92 = vld [vmem:[%s1 + $0x48] sm:$0xf]
  %v93 = vld [vmem:[%s1 + $0x4c] sm:$0xf]
  %v94 = vld [vmem:[%s1 + $0x50] sm:$0xf]
  %v95 = vld [vmem:[%s1 + $0x54] sm:$0xf]
  %v96 = vld [vmem:[%s1 + $0x58] sm:$0xf]
  %v97 = vld [vmem:[%s1 + $0x5c] sm:$0xf]
  %v98 = vld [vmem:[%s2] sm:$0x1]
  %v100 = vlaneseq
  %v101 = vshrl.u32 %v100, 7
  %v102 = vsub.s32 0, %v101
  %v103 = vrot.slane %v98, %v102
  %v155 = vunpack.c.l.b16 %v24
  %v156 = vunpack.c.h.b16 %v24
  %v157 = vunpack.c.l.b16 %v25
  %v158 = vunpack.c.h.b16 %v25
  %v159 = vunpack.c.l.b16 %v26
  %v160 = vunpack.c.h.b16 %v26
  %v161 = vunpack.c.l.b16 %v27
  %v162 = vunpack.c.h.b16 %v27
  %v163 = vunpack.c.l.b16 %v28
  %v164 = vunpack.c.h.b16 %v28
  %v165 = vunpack.c.l.b16 %v29
  %v166 = vunpack.c.h.b16 %v29
  %v167 = vunpack.c.l.b16 %v30
  %v168 = vunpack.c.h.b16 %v30
  %v169 = vunpack.c.l.b16 %v31
  %v170 = vunpack.c.h.b16 %v31
  %v171 = vunpack.c.l.b16 %v32
  %v172 = vunpack.c.h.b16 %v32
  %v173 = vunpack.c.l.b16 %v33
  %v174 = vunpack.c.h.b16 %v33
  %v175 = vunpack.c.l.b16 %v34
  %v176 = vunpack.c.h.b16 %v34
  %v177 = vunpack.c.l.b16 %v35
  %v178 = vunpack.c.h.b16 %v35
  %v179 = vunpack.c.l.b16 %v36
  %v180 = vunpack.c.h.b16 %v36
  %v181 = vunpack.c.l.b16 %v37
  %v182 = vunpack.c.h.b16 %v37
  %v183 = vunpack.c.l.b16 %v38
  %v184 = vunpack.c.h.b16 %v38
  %v185 = vunpack.c.l.b16 %v39
  %v186 = vunpack.c.h.b16 %v39
  %v187 = vunpack.c.l.b16 %v40
  %v188 = vunpack.c.h.b16 %v40
  %v189 = vunpack.c.l.b16 %v41
  %v190 = vunpack.c.h.b16 %v41
  %v191 = vunpack.c.l.b16 %v42
  %v192 = vunpack.c.h.b16 %v42
  %v193 = vunpack.c.l.b16 %v43
  %v194 = vunpack.c.h.b16 %v43
  %v195 = vunpack.c.l.b16 %v44
  %v196 = vunpack.c.h.b16 %v44
  %v197 = vunpack.c.l.b16 %v45
  %v198 = vunpack.c.h.b16 %v45
  %v199 = vunpack.c.l.b16 %v46
  %v200 = vunpack.c.h.b16 %v46
  %v201 = vunpack.c.l.b16 %v47
  %v202 = vunpack.c.h.b16 %v47
  %v203 = vunpack.c.l.b16 %v48
  %v204 = vunpack.c.h.b16 %v48
  %v205 = vunpack.c.l.b16 %v49
  %v206 = vunpack.c.h.b16 %v49
  %v207 = vunpack.c.l.b16 %v50
  %v208 = vunpack.c.h.b16 %v50
  %v209 = vunpack.c.l.b16 %v51
  %v210 = vunpack.c.h.b16 %v51
  %v211 = vunpack.c.l.b16 %v52
  %v212 = vunpack.c.h.b16 %v52
  %v213 = vunpack.c.l.b16 %v53
  %v214 = vunpack.c.h.b16 %v53
  %v215 = vunpack.c.l.b16 %v54
  %v216 = vunpack.c.h.b16 %v54
  %v217 = vunpack.c.l.b16 %v55
  %v218 = vunpack.c.h.b16 %v55
  %v219 = vunpack.c.l.b16 %v56
  %v220 = vunpack.c.h.b16 %v56
  %v221 = vunpack.c.l.b16 %v57
  %v222 = vunpack.c.h.b16 %v57
  %v223 = vunpack.c.l.b16 %v58
  %v224 = vunpack.c.h.b16 %v58
  %v225 = vunpack.c.l.b16 %v59
  %v226 = vunpack.c.h.b16 %v59
  %v227 = vunpack.c.l.b16 %v60
  %v228 = vunpack.c.h.b16 %v60
  %v229 = vunpack.c.l.b16 %v61
  %v230 = vunpack.c.h.b16 %v61
  %v231 = vunpack.c.l.b16 %v62
  %v232 = vunpack.c.h.b16 %v62
  %v233 = vunpack.c.l.b16 %v63
  %v234 = vunpack.c.h.b16 %v63
  %v235 = vunpack.c.l.b16 %v64
  %v236 = vunpack.c.h.b16 %v64
  %v237 = vunpack.c.l.b16 %v65
  %v238 = vunpack.c.h.b16 %v65
  %v239 = vunpack.c.l.b16 %v66
  %v240 = vunpack.c.h.b16 %v66
  %v241 = vunpack.c.l.b16 %v67
  %v242 = vunpack.c.h.b16 %v67
  %v243 = vunpack.c.l.b16 %v68
  %v244 = vunpack.c.h.b16 %v68
  %v245 = vunpack.c.l.b16 %v69
  %v246 = vunpack.c.h.b16 %v69
  %v247 = vunpack.c.l.b16 %v70
  %v248 = vunpack.c.h.b16 %v70
  %v249 = vunpack.c.l.b16 %v71
  %v250 = vunpack.c.h.b16 %v71
  %v251 = vunpack.c.l.b16 %v72
  %v252 = vunpack.c.h.b16 %v72
  %v253 = vunpack.c.l.b16 %v73
  %v254 = vunpack.c.h.b16 %v73
  %v255 = vpack.c.b16 %v157, %v155
  %v256 = vpack.c.b16 %v158, %v156
  %v257 = vpack.c.b16 %v161, %v159
  %v258 = vpack.c.b16 %v162, %v160
  %v259 = vpack.c.b16 %v165, %v163
  %v260 = vpack.c.b16 %v166, %v164
  %v261 = vpack.c.b16 %v169, %v167
  %v262 = vpack.c.b16 %v170, %v168
  %v263 = vpack.c.b16 %v173, %v171
  %v264 = vpack.c.b16 %v174, %v172
  %v265 = vpack.c.b16 %v177, %v175
  %v266 = vpack.c.b16 %v178, %v176
  %v267 = vpack.c.b16 %v181, %v179
  %v268 = vpack.c.b16 %v182, %v180
  %v269 = vpack.c.b16 %v185, %v183
  %v270 = vpack.c.b16 %v186, %v184
  %v271 = vpack.c.b16 %v189, %v187
  %v272 = vpack.c.b16 %v190, %v188
  %v273 = vpack.c.b16 %v193, %v191
  %v274 = vpack.c.b16 %v194, %v192
  %v275 = vpack.c.b16 %v197, %v195
  %v276 = vpack.c.b16 %v198, %v196
  %v277 = vpack.c.b16 %v201, %v199
  %v278 = vpack.c.b16 %v202, %v200
  %v279 = vpack.c.b16 %v205, %v203
  %v280 = vpack.c.b16 %v206, %v204
  %v281 = vpack.c.b16 %v209, %v207
  %v282 = vpack.c.b16 %v210, %v208
  %v283 = vpack.c.b16 %v213, %v211
  %v284 = vpack.c.b16 %v214, %v212
  %v285 = vpack.c.b16 %v217, %v215
  %v286 = vpack.c.b16 %v218, %v216
  %v287 = vpack.c.b16 %v221, %v219
  %v288 = vpack.c.b16 %v222, %v220
  %v289 = vpack.c.b16 %v225, %v223
  %v290 = vpack.c.b16 %v226, %v224
  %v291 = vpack.c.b16 %v229, %v227
  %v292 = vpack.c.b16 %v230, %v228
  %v293 = vpack.c.b16 %v233, %v231
  %v294 = vpack.c.b16 %v234, %v232
  %v295 = vpack.c.b16 %v237, %v235
  %v296 = vpack.c.b16 %v238, %v236
  %v297 = vpack.c.b16 %v241, %v239
  %v298 = vpack.c.b16 %v242, %v240
  %v299 = vpack.c.b16 %v245, %v243
  %v300 = vpack.c.b16 %v246, %v244
  %v301 = vpack.c.b16 %v249, %v247
  %v302 = vpack.c.b16 %v250, %v248
  %v303 = vpack.c.b16 %v253, %v251
  %v304 = vpack.c.b16 %v254, %v252
  %v354 = vunpack.c.l.b16 %v74
  %v355 = vunpack.c.l.b16 %v75
  %v356 = vunpack.c.l.b16 %v76
  %v357 = vunpack.c.l.b16 %v77
  %v358 = vunpack.c.l.b16 %v78
  %v359 = vunpack.c.l.b16 %v79
  %v360 = vunpack.c.l.b16 %v80
  %v361 = vunpack.c.l.b16 %v81
  %v362 = vunpack.c.l.b16 %v82
  %v363 = vunpack.c.l.b16 %v83
  %v364 = vunpack.c.l.b16 %v84
  %v365 = vunpack.c.l.b16 %v85
  %v366 = vunpack.c.l.b16 %v86
  %v367 = vunpack.c.l.b16 %v87
  %v368 = vunpack.c.l.b16 %v88
  %v369 = vunpack.c.l.b16 %v89
  %v370 = vunpack.c.l.b16 %v90
  %v371 = vunpack.c.l.b16 %v91
  %v372 = vunpack.c.l.b16 %v92
  %v373 = vunpack.c.l.b16 %v93
  %v374 = vunpack.c.l.b16 %v94
  %v375 = vunpack.c.l.b16 %v95
  %v376 = vunpack.c.l.b16 %v96
  %v377 = vunpack.c.l.b16 %v97
  %v378 = vpack.c.b16 %v355, %v354
  %v379 = vpack.c.b16 %v357, %v356
  %v380 = vpack.c.b16 %v359, %v358
  %v381 = vpack.c.b16 %v361, %v360
  %v382 = vpack.c.b16 %v363, %v362
  %v383 = vpack.c.b16 %v365, %v364
  %v384 = vpack.c.b16 %v367, %v366
  %v385 = vpack.c.b16 %v369, %v368
  %v386 = vpack.c.b16 %v371, %v370
  %v387 = vpack.c.b16 %v373, %v372
  %v388 = vpack.c.b16 %v375, %v374
  %v389 = vpack.c.b16 %v377, %v376
  %vm402 = vcmask 523264
  %v404 = vsel %vm402, %v256, 0
  %v407 = vsel %vm402, %v258, 0
  %v410 = vsel %vm402, %v260, 0
  %v413 = vsel %vm402, %v262, 0
  %v416 = vsel %vm402, %v264, 0
  %v419 = vsel %vm402, %v266, 0
  %v422 = vsel %vm402, %v268, 0
  %v425 = vsel %vm402, %v270, 0
  %v428 = vsel %vm402, %v272, 0
  %v431 = vsel %vm402, %v274, 0
  %v434 = vsel %vm402, %v276, 0
  %v437 = vsel %vm402, %v278, 0
  %v440 = vsel %vm402, %v280, 0
  %v443 = vsel %vm402, %v282, 0
  %v446 = vsel %vm402, %v284, 0
  %v449 = vsel %vm402, %v286, 0
  %v452 = vsel %vm402, %v288, 0
  %v455 = vsel %vm402, %v290, 0
  %v458 = vsel %vm402, %v292, 0
  %v461 = vsel %vm402, %v294, 0
  %v464 = vsel %vm402, %v296, 0
  %v467 = vsel %vm402, %v298, 0
  %v470 = vsel %vm402, %v300, 0
  %v473 = vsel %vm402, %v302, 0
  %v476 = vsel %vm402, %v304, 0
  %478 = vmatprep.subr.bf16.mxu0 0
  %479 = vmatpush1.bf16.msra.mxu0 %v378
  %480 = vmatprep.subr.bf16.mxu0 0
  %481 = vmatpush1.bf16.msra.mxu0 %v379
  %482 = vmatprep.subr.bf16.mxu0 0
  %483 = vmatpush1.bf16.msra.mxu0 %v380
  %484 = vmatprep.subr.bf16.mxu0 0
  %485 = vmatpush1.bf16.msra.mxu0 %v381
  %486 = vmatprep.subr.bf16.mxu0 0
  %487 = vmatpush1.bf16.msra.mxu0 %v382
  %488 = vmatprep.subr.bf16.mxu0 0
  %489 = vmatpush1.bf16.msra.mxu0 %v383
  %490 = vmatprep.subr.bf16.mxu0 0
  %491 = vmatpush1.bf16.msra.mxu0 %v384
  %492 = vmatprep.subr.bf16.mxu0 0
  %493 = vmatpush1.bf16.msra.mxu0 %v385
  %494 = vmatprep.subr.bf16.mxu0 0
  %495 = vmatpush1.bf16.msra.mxu0 %v386
  %496 = vmatprep.subr.bf16.mxu0 0
  %497 = vmatpush1.bf16.msra.mxu0 %v387
  %498 = vmatprep.subr.bf16.mxu0 0
  %499 = vmatpush1.bf16.msra.mxu0 %v388
  %500 = vmatprep.subr.bf16.mxu0 0
  %501 = vmatpush1.bf16.msra.mxu0 %v389
  %502 = vmatprep.subr.bf16.mxu0 0
  %503 = vmatpush1.bf16.msra.mxu0 0
  %504 = vmatprep.subr.bf16.mxu0 0
  %505 = vmatpush1.bf16.msra.mxu0 0
  %506 = vmatprep.subr.bf16.mxu0 0
  %507 = vmatpush1.bf16.msra.mxu0 0
  %508 = vmatprep.subr.bf16.mxu0 0
  %509 = vmatpush1.bf16.msra.mxu0 0
  %510 = vmatprep.mubr.bf16.mxu0 %v404
  %511 = vmatmul.mubr.bf16.gmra.mrb[0].mxu0 %v255
  %v512 = vpop.f32.mrb[0].mxu0
  %v513 = vadd.f32 %v103, %v512
  %v514 = vpop.f32.mrb[0].mxu0
  %v515 = vpop.f32.mrb[0].mxu0
  %v516 = vadd.f32 %v103, %v515
  %v517 = vpop.f32.mrb[0].mxu0
  %518 = vmatprep.mubr.bf16.mxu0 %v407
  %519 = vmatmul.mubr.bf16.gmra.mrb[0].mxu0 %v257
  %v520 = vpop.f32.mrb[0].mxu0
  %v521 = vadd.f32 %v103, %v520
  %v522 = vpop.f32.mrb[0].mxu0
  %v523 = vpop.f32.mrb[0].mxu0
  %v524 = vadd.f32 %v103, %v523
  %v525 = vpop.f32.mrb[0].mxu0
  %526 = vmatprep.mubr.bf16.mxu0 %v410
  %527 = vmatmul.mubr.bf16.gmra.mrb[0].mxu0 %v259
  %v528 = vpop.f32.mrb[0].mxu0
  %v529 = vadd.f32 %v103, %v528
  %v530 = vpop.f32.mrb[0].mxu0
  %v531 = vpop.f32.mrb[0].mxu0
  %v532 = vadd.f32 %v103, %v531
  %v533 = vpop.f32.mrb[0].mxu0
  %534 = vmatprep.mubr.bf16.mxu0 %v413
  %535 = vmatmul.mubr.bf16.gmra.mrb[0].mxu0 %v261
  %v536 = vpop.f32.mrb[0].mxu0
  %v537 = vadd.f32 %v103, %v536
  %v538 = vpop.f32.mrb[0].mxu0
  %v539 = vpop.f32.mrb[0].mxu0
  %v540 = vadd.f32 %v103, %v539
  %v541 = vpop.f32.mrb[0].mxu0
  %542 = vmatprep.mubr.bf16.mxu0 %v416
  %543 = vmatmul.mubr.bf16.gmra.mrb[0].mxu0 %v263
  %v544 = vpop.f32.mrb[0].mxu0
  %v545 = vadd.f32 %v103, %v544
  %v546 = vpop.f32.mrb[0].mxu0
  %v547 = vpop.f32.mrb[0].mxu0
  %v548 = vadd.f32 %v103, %v547
  %v549 = vpop.f32.mrb[0].mxu0
  %550 = vmatprep.mubr.bf16.mxu0 %v419
  %551 = vmatmul.mubr.bf16.gmra.mrb[0].mxu0 %v265
  %v552 = vpop.f32.mrb[0].mxu0
  %v553 = vadd.f32 %v103, %v552
  %v554 = vpop.f32.mrb[0].mxu0
  %v555 = vpop.f32.mrb[0].mxu0
  %v556 = vadd.f32 %v103, %v555
  %v557 = vpop.f32.mrb[0].mxu0
  %558 = vmatprep.mubr.bf16.mxu0 %v422
  %559 = vmatmul.mubr.bf16.gmra.mrb[0].mxu0 %v267
  %v560 = vpop.f32.mrb[0].mxu0
  %v561 = vadd.f32 %v103, %v560
  %v562 = vpop.f32.mrb[0].mxu0
  %v563 = vpop.f32.mrb[0].mxu0
  %v564 = vadd.f32 %v103, %v563
  %v565 = vpop.f32.mrb[0].mxu0
  %566 = vmatprep.mubr.bf16.mxu0 %v425
  %567 = vmatmul.mubr.bf16.gmra.mrb[0].mxu0 %v269
  %v568 = vpop.f32.mrb[0].mxu0
  %v569 = vadd.f32 %v103, %v568
  %v570 = vpop.f32.mrb[0].mxu0
  %v571 = vpop.f32.mrb[0].mxu0
  %v572 = vadd.f32 %v103, %v571
  %v573 = vpop.f32.mrb[0].mxu0
  %574 = vmatprep.mubr.bf16.mxu0 %v428
  %575 = vmatmul.mubr.bf16.gmra.mrb[0].mxu0 %v271
  %v576 = vpop.f32.mrb[0].mxu0
  %v577 = vadd.f32 %v103, %v576
  %v578 = vpop.f32.mrb[0].mxu0
  %v579 = vpop.f32.mrb[0].mxu0
  %v580 = vadd.f32 %v103, %v579
  %v581 = vpop.f32.mrb[0].mxu0
  %582 = vmatprep.mubr.bf16.mxu0 %v431
  %583 = vmatmul.mubr.bf16.gmra.mrb[0].mxu0 %v273
  %v584 = vpop.f32.mrb[0].mxu0
  %v585 = vadd.f32 %v103, %v584
  %v586 = vpop.f32.mrb[0].mxu0
  %v587 = vpop.f32.mrb[0].mxu0
  %v588 = vadd.f32 %v103, %v587
  %v589 = vpop.f32.mrb[0].mxu0
  %590 = vmatprep.mubr.bf16.mxu0 %v434
  %591 = vmatmul.mubr.bf16.gmra.mrb[0].mxu0 %v275
  %v592 = vpop.f32.mrb[0].mxu0
  %v593 = vadd.f32 %v103, %v592
  %v594 = vpop.f32.mrb[0].mxu0
  %v595 = vpop.f32.mrb[0].mxu0
  %v596 = vadd.f32 %v103, %v595
  %v597 = vpop.f32.mrb[0].mxu0
  %598 = vmatprep.mubr.bf16.mxu0 %v437
  %599 = vmatmul.mubr.bf16.gmra.mrb[0].mxu0 %v277
  %v600 = vpop.f32.mrb[0].mxu0
  %v601 = vadd.f32 %v103, %v600
  %v602 = vpop.f32.mrb[0].mxu0
  %v603 = vpop.f32.mrb[0].mxu0
  %v604 = vadd.f32 %v103, %v603
  %v605 = vpop.f32.mrb[0].mxu0
  %606 = vmatprep.mubr.bf16.mxu0 %v440
  %607 = vmatmul.mubr.bf16.gmra.mrb[0].mxu0 %v279
  %v608 = vpop.f32.mrb[0].mxu0
  %v609 = vadd.f32 %v103, %v608
  %v610 = vpop.f32.mrb[0].mxu0
  %v611 = vpop.f32.mrb[0].mxu0
  %v612 = vadd.f32 %v103, %v611
  %v613 = vpop.f32.mrb[0].mxu0
  %614 = vmatprep.mubr.bf16.mxu0 %v443
  %615 = vmatmul.mubr.bf16.gmra.mrb[0].mxu0 %v281
  %v616 = vpop.f32.mrb[0].mxu0
  %v617 = vadd.f32 %v103, %v616
  %v618 = vpop.f32.mrb[0].mxu0
  %v619 = vpop.f32.mrb[0].mxu0
  %v620 = vadd.f32 %v103, %v619
  %v621 = vpop.f32.mrb[0].mxu0
  %622 = vmatprep.mubr.bf16.mxu0 %v446
  %623 = vmatmul.mubr.bf16.gmra.mrb[0].mxu0 %v283
  %v624 = vpop.f32.mrb[0].mxu0
  %v625 = vadd.f32 %v103, %v624
  %v626 = vpop.f32.mrb[0].mxu0
  %v627 = vpop.f32.mrb[0].mxu0
  %v628 = vadd.f32 %v103, %v627
  %v629 = vpop.f32.mrb[0].mxu0
  %630 = vmatprep.mubr.bf16.mxu0 %v449
  %631 = vmatmul.mubr.bf16.gmra.mrb[0].mxu0 %v285
  %v632 = vpop.f32.mrb[0].mxu0
  %v633 = vadd.f32 %v103, %v632
  %v634 = vpop.f32.mrb[0].mxu0
  %v635 = vpop.f32.mrb[0].mxu0
  %v636 = vadd.f32 %v103, %v635
  %v637 = vpop.f32.mrb[0].mxu0
  %638 = vmatprep.mubr.bf16.mxu0 %v452
  %639 = vmatmul.mubr.bf16.gmra.mrb[0].mxu0 %v287
  %v640 = vpop.f32.mrb[0].mxu0
  %v641 = vadd.f32 %v103, %v640
  %v642 = vpop.f32.mrb[0].mxu0
  %v643 = vpop.f32.mrb[0].mxu0
  %v644 = vadd.f32 %v103, %v643
  %v645 = vpop.f32.mrb[0].mxu0
  %646 = vmatprep.mubr.bf16.mxu0 %v455
  %647 = vmatmul.mubr.bf16.gmra.mrb[0].mxu0 %v289
  %v648 = vpop.f32.mrb[0].mxu0
  %v649 = vadd.f32 %v103, %v648
  %v650 = vpop.f32.mrb[0].mxu0
  %v651 = vpop.f32.mrb[0].mxu0
  %v652 = vadd.f32 %v103, %v651
  %v653 = vpop.f32.mrb[0].mxu0
  %654 = vmatprep.mubr.bf16.mxu0 %v458
  %655 = vmatmul.mubr.bf16.gmra.mrb[0].mxu0 %v291
  %v656 = vpop.f32.mrb[0].mxu0
  %v657 = vadd.f32 %v103, %v656
  %v658 = vpop.f32.mrb[0].mxu0
  %v659 = vpop.f32.mrb[0].mxu0
  %v660 = vadd.f32 %v103, %v659
  %v661 = vpop.f32.mrb[0].mxu0
  %662 = vmatprep.mubr.bf16.mxu0 %v461
  %663 = vmatmul.mubr.bf16.gmra.mrb[0].mxu0 %v293
  %v664 = vpop.f32.mrb[0].mxu0
  %v665 = vadd.f32 %v103, %v664
  %v666 = vpop.f32.mrb[0].mxu0
  %v667 = vpop.f32.mrb[0].mxu0
  %v668 = vadd.f32 %v103, %v667
  %v669 = vpop.f32.mrb[0].mxu0
  %670 = vmatprep.mubr.bf16.mxu0 %v464
  %671 = vmatmul.mubr.bf16.gmra.mrb[0].mxu0 %v295
  %v672 = vpop.f32.mrb[0].mxu0
  %v673 = vadd.f32 %v103, %v672
  %v674 = vpop.f32.mrb[0].mxu0
  %v675 = vpop.f32.mrb[0].mxu0
  %v676 = vadd.f32 %v103, %v675
  %v677 = vpop.f32.mrb[0].mxu0
  %678 = vmatprep.mubr.bf16.mxu0 %v467
  %679 = vmatmul.mubr.bf16.gmra.mrb[0].mxu0 %v297
  %v680 = vpop.f32.mrb[0].mxu0
  %v681 = vadd.f32 %v103, %v680
  %v682 = vpop.f32.mrb[0].mxu0
  %v683 = vpop.f32.mrb[0].mxu0
  %v684 = vadd.f32 %v103, %v683
  %v685 = vpop.f32.mrb[0].mxu0
  %686 = vmatprep.mubr.bf16.mxu0 %v470
  %687 = vmatmul.mubr.bf16.gmra.mrb[0].mxu0 %v299
  %v688 = vpop.f32.mrb[0].mxu0
  %v689 = vadd.f32 %v103, %v688
  %v690 = vpop.f32.mrb[0].mxu0
  %v691 = vpop.f32.mrb[0].mxu0
  %v692 = vadd.f32 %v103, %v691
  %v693 = vpop.f32.mrb[0].mxu0
  %694 = vmatprep.mubr.bf16.mxu0 %v473
  %695 = vmatmul.mubr.bf16.gmra.mrb[0].mxu0 %v301
  %v696 = vpop.f32.mrb[0].mxu0
  %v697 = vadd.f32 %v103, %v696
  %v698 = vpop.f32.mrb[0].mxu0
  %v699 = vpop.f32.mrb[0].mxu0
  %v700 = vadd.f32 %v103, %v699
  %v701 = vpop.f32.mrb[0].mxu0
  %702 = vmatprep.mubr.bf16.mxu0 %v476
  %703 = vmatmul.mubr.bf16.gmra.mrb[0].mxu0 %v303
  %v704 = vpop.f32.mrb[0].mxu0
  %v705 = vadd.f32 %v103, %v704
  %v706 = vpop.f32.mrb[0].mxu0
  %v707 = vpop.f32.mrb[0].mxu0
  %v708 = vadd.f32 %v103, %v707
  %v709 = vpop.f32.mrb[0].mxu0
  %710 = vdwg.mxu0
  %v711 = vmax.f32 %v513, 0.0
  %v712 = vmax.f32 %v516, 0.0
  %v713 = vmax.f32 %v521, 0.0
  %v714 = vmax.f32 %v524, 0.0
  %v715 = vmax.f32 %v529, 0.0
  %v716 = vmax.f32 %v532, 0.0
  %v717 = vmax.f32 %v537, 0.0
  %v718 = vmax.f32 %v540, 0.0
  %v719 = vmax.f32 %v545, 0.0
  %v720 = vmax.f32 %v548, 0.0
  %v721 = vmax.f32 %v553, 0.0
  %v722 = vmax.f32 %v556, 0.0
  %v723 = vmax.f32 %v561, 0.0
  %v724 = vmax.f32 %v564, 0.0
  %v725 = vmax.f32 %v569, 0.0
  %v726 = vmax.f32 %v572, 0.0
  %v727 = vmax.f32 %v577, 0.0
  %v728 = vmax.f32 %v580, 0.0
  %v729 = vmax.f32 %v585, 0.0
  %v730 = vmax.f32 %v588, 0.0
  %v731 = vmax.f32 %v593, 0.0
  %v732 = vmax.f32 %v596, 0.0
  %v733 = vmax.f32 %v601, 0.0
  %v734 = vmax.f32 %v604, 0.0
  %v735 = vmax.f32 %v609, 0.0
  %v736 = vmax.f32 %v612, 0.0
  %v737 = vmax.f32 %v617, 0.0
  %v738 = vmax.f32 %v620, 0.0
  %v739 = vmax.f32 %v625, 0.0
  %v740 = vmax.f32 %v628, 0.0
  %v741 = vmax.f32 %v633, 0.0
  %v742 = vmax.f32 %v636, 0.0
  %v743 = vmax.f32 %v641, 0.0
  %v744 = vmax.f32 %v644, 0.0
  %v745 = vmax.f32 %v649, 0.0
  %v746 = vmax.f32 %v652, 0.0
  %v747 = vmax.f32 %v657, 0.0
  %v748 = vmax.f32 %v660, 0.0
  %v749 = vmax.f32 %v665, 0.0
  %v750 = vmax.f32 %v668, 0.0
  %v751 = vmax.f32 %v673, 0.0
  %v752 = vmax.f32 %v676, 0.0
  %v753 = vmax.f32 %v681, 0.0
  %v754 = vmax.f32 %v684, 0.0
  %v755 = vmax.f32 %v689, 0.0
  %v756 = vmax.f32 %v692, 0.0
  %v757 = vmax.f32 %v697, 0.0
  %v758 = vmax.f32 %v700, 0.0
  %v759 = vmax.f32 %v705, 0.0
  %v760 = vmax.f32 %v708, 0.0
  %v761 = vpack.c.bf16 %v712, %v711
  %v762 = vpack.c.bf16 %v714, %v713
  %v763 = vpack.c.bf16 %v716, %v715
  %v764 = vpack.c.bf16 %v718, %v717
  %v765 = vpack.c.bf16 %v720, %v719
  %v766 = vpack.c.bf16 %v722, %v721
  %v767 = vpack.c.bf16 %v724, %v723
  %v768 = vpack.c.bf16 %v726, %v725
  %v769 = vpack.c.bf16 %v728, %v727
  %v770 = vpack.c.bf16 %v730, %v729
  %v771 = vpack.c.bf16 %v732, %v731
  %v772 = vpack.c.bf16 %v734, %v733
  %v773 = vpack.c.bf16 %v736, %v735
  %v774 = vpack.c.bf16 %v738, %v737
  %v775 = vpack.c.bf16 %v740, %v739
  %v776 = vpack.c.bf16 %v742, %v741
  %v777 = vpack.c.bf16 %v744, %v743
  %v778 = vpack.c.bf16 %v746, %v745
  %v779 = vpack.c.bf16 %v748, %v747
  %v780 = vpack.c.bf16 %v750, %v749
  %v781 = vpack.c.bf16 %v752, %v751
  %v782 = vpack.c.bf16 %v754, %v753
  %v783 = vpack.c.bf16 %v756, %v755
  %v784 = vpack.c.bf16 %v758, %v757
  %v785 = vpack.c.bf16 %v760, %v759
  %v786 = vld [vmem:[%s3] sm:$0xff]
  %v787 = vld [vmem:[%s3 + $0x8] sm:$0xff]
  %v788 = vld [vmem:[%s3 + $0x10] sm:$0xff]
  %v789 = vld [vmem:[%s3 + $0x18] sm:$0xff]
  %v790 = vld [vmem:[%s3 + $0x20] sm:$0xff]
  %v791 = vld [vmem:[%s3 + $0x28] sm:$0xff]
  %v792 = vld [vmem:[%s3 + $0x30] sm:$0xff]
  %v793 = vld [vmem:[%s3 + $0x38] sm:$0xff]
  %v794 = vld [vmem:[%s3 + $0x40] sm:$0xff]
  %v795 = vld [vmem:[%s3 + $0x48] sm:$0xff]
  %v796 = vld [vmem:[%s3 + $0x50] sm:$0xff]
  %v797 = vld [vmem:[%s3 + $0x58] sm:$0xff]
  %v798 = vld [vmem:[%s3 + $0x60] sm:$0xff]
  %v799 = vld [vmem:[%s3 + $0x68] sm:$0xff]
  %v800 = vld [vmem:[%s3 + $0x70] sm:$0xff]
  %v801 = vld [vmem:[%s3 + $0x78] sm:$0xff]
  %v802 = vld [vmem:[%s3 + $0x80] sm:$0xff]
  %v803 = vld [vmem:[%s3 + $0x88] sm:$0xff]
  %v804 = vld [vmem:[%s3 + $0x90] sm:$0xff]
  %v805 = vld [vmem:[%s3 + $0x98] sm:$0xff]
  %v806 = vld [vmem:[%s3 + $0xa0] sm:$0x11]
  %v807 = vld [vmem:[%s3 + $0xa8] sm:$0x11]
  %v830 = vunpack.c.l.b16 %v786
  %v831 = vunpack.c.h.b16 %v786
  %v832 = vunpack.c.l.b16 %v787
  %v833 = vunpack.c.h.b16 %v787
  %v834 = vunpack.c.l.b16 %v788
  %v835 = vunpack.c.h.b16 %v788
  %v836 = vunpack.c.l.b16 %v789
  %v837 = vunpack.c.h.b16 %v789
  %v838 = vunpack.c.l.b16 %v790
  %v839 = vunpack.c.h.b16 %v790
  %v840 = vunpack.c.l.b16 %v791
  %v841 = vunpack.c.h.b16 %v791
  %v842 = vunpack.c.l.b16 %v792
  %v843 = vunpack.c.h.b16 %v792
  %v844 = vunpack.c.l.b16 %v793
  %v845 = vunpack.c.h.b16 %v793
  %v846 = vunpack.c.l.b16 %v794
  %v847 = vunpack.c.h.b16 %v794
  %v848 = vunpack.c.l.b16 %v795
  %v849 = vunpack.c.h.b16 %v795
  %v850 = vunpack.c.l.b16 %v796
  %v851 = vunpack.c.h.b16 %v796
  %v852 = vunpack.c.l.b16 %v797
  %v853 = vunpack.c.h.b16 %v797
  %v854 = vunpack.c.l.b16 %v798
  %v855 = vunpack.c.h.b16 %v798
  %v856 = vunpack.c.l.b16 %v799
  %v857 = vunpack.c.h.b16 %v799
  %v858 = vunpack.c.l.b16 %v800
  %v859 = vunpack.c.h.b16 %v800
  %v860 = vunpack.c.l.b16 %v801
  %v861 = vunpack.c.h.b16 %v801
  %v862 = vunpack.c.l.b16 %v802
  %v863 = vunpack.c.h.b16 %v802
  %v864 = vunpack.c.l.b16 %v803
  %v865 = vunpack.c.h.b16 %v803
  %v866 = vunpack.c.l.b16 %v804
  %v867 = vunpack.c.h.b16 %v804
  %v868 = vunpack.c.l.b16 %v805
  %v869 = vunpack.c.h.b16 %v805
  %v870 = vunpack.c.l.b16 %v806
  %v871 = vunpack.c.h.b16 %v806
  %v872 = vunpack.c.l.b16 %v807
  %v873 = vunpack.c.h.b16 %v807
  %v874 = vpack.c.b16 %v834, %v830
  %v875 = vpack.c.b16 %v835, %v831
  %v876 = vpack.c.b16 %v836, %v832
  %v877 = vpack.c.b16 %v837, %v833
  %v878 = vpack.c.b16 %v842, %v838
  %v879 = vpack.c.b16 %v843, %v839
  %v880 = vpack.c.b16 %v844, %v840
  %v881 = vpack.c.b16 %v845, %v841
  %v882 = vpack.c.b16 %v850, %v846
  %v883 = vpack.c.b16 %v851, %v847
  %v884 = vpack.c.b16 %v852, %v848
  %v885 = vpack.c.b16 %v853, %v849
  %v886 = vpack.c.b16 %v858, %v854
  %v887 = vpack.c.b16 %v859, %v855
  %v888 = vpack.c.b16 %v860, %v856
  %v889 = vpack.c.b16 %v861, %v857
  %v890 = vpack.c.b16 %v866, %v862
  %v891 = vpack.c.b16 %v867, %v863
  %v892 = vpack.c.b16 %v868, %v864
  %v893 = vpack.c.b16 %v869, %v865
  %v894 = vpack.c.b16 %v870, %v870
  %v895 = vpack.c.b16 %v871, %v871
  %v896 = vpack.c.b16 %v872, %v872
  %v897 = vpack.c.b16 %v873, %v873
  %vm916 = vcmask 130048
  %v918 = vsel %vm916, %v877, 0
  %v921 = vsel %vm916, %v881, 0
  %v924 = vsel %vm916, %v885, 0
  %v927 = vsel %vm916, %v889, 0
  %v930 = vsel %vm916, %v893, 0
  %v933 = vsel %vm916, %v897, 0
  %935 = vmatprep.subr.bf16.mxu0 0
  %936 = vmatpush1.bf16.msra.mxu0 %v761
  %937 = vmatprep.subr.bf16.mxu0 0
  %938 = vmatpush1.bf16.msra.mxu0 %v762
  %939 = vmatprep.subr.bf16.mxu0 0
  %940 = vmatpush1.bf16.msra.mxu0 %v763
  %941 = vmatprep.subr.bf16.mxu0 0
  %942 = vmatpush1.bf16.msra.mxu0 %v764
  %943 = vmatprep.subr.bf16.mxu0 0
  %944 = vmatpush1.bf16.msra.mxu0 %v765
  %945 = vmatprep.subr.bf16.mxu0 0
  %946 = vmatpush1.bf16.msra.mxu0 %v766
  %947 = vmatprep.subr.bf16.mxu0 0
  %948 = vmatpush1.bf16.msra.mxu0 %v767
  %949 = vmatprep.subr.bf16.mxu0 0
  %950 = vmatpush1.bf16.msra.mxu0 %v768
  %951 = vmatprep.subr.bf16.mxu0 0
  %952 = vmatpush1.bf16.msra.mxu0 %v769
  %953 = vmatprep.subr.bf16.mxu0 0
  %954 = vmatpush1.bf16.msra.mxu0 %v770
  %955 = vmatprep.subr.bf16.mxu0 0
  %956 = vmatpush1.bf16.msra.mxu0 %v771
  %957 = vmatprep.subr.bf16.mxu0 0
  %958 = vmatpush1.bf16.msra.mxu0 %v772
  %959 = vmatprep.subr.bf16.mxu0 0
  %960 = vmatpush1.bf16.msra.mxu0 %v773
  %961 = vmatprep.subr.bf16.mxu0 0
  %962 = vmatpush1.bf16.msra.mxu0 %v774
  %963 = vmatprep.subr.bf16.mxu0 0
  %964 = vmatpush1.bf16.msra.mxu0 %v775
  %965 = vmatprep.subr.bf16.mxu0 0
  %966 = vmatpush1.bf16.msra.mxu0 %v776
  %967 = vmatprep.mubr.bf16.mxu0 %v875
  %968 = vmatmul.mubr.bf16.gmra.mrb[0].mxu0 %v874
  %v969 = vpop.f32.mrb[0].mxu0
  %v970 = vadd.f32 0.0, %v969
  %v971 = vpop.f32.mrb[0].mxu0
  %v972 = vpop.f32.mrb[0].mxu0
  %v973 = vadd.f32 0.0, %v972
  %v974 = vpop.f32.mrb[0].mxu0
  %975 = vmatprep.mubr.bf16.mxu0 %v879
  %976 = vmatmul.mubr.bf16.gmra.mrb[0].mxu0 %v878
  %v977 = vpop.f32.mrb[0].mxu0
  %v978 = vadd.f32 0.0, %v977
  %v979 = vpop.f32.mrb[0].mxu0
  %v980 = vpop.f32.mrb[0].mxu0
  %v981 = vadd.f32 0.0, %v980
  %v982 = vpop.f32.mrb[0].mxu0
  %983 = vmatprep.mubr.bf16.mxu0 %v883
  %984 = vmatmul.mubr.bf16.gmra.mrb[0].mxu0 %v882
  %v985 = vpop.f32.mrb[0].mxu0
  %v986 = vadd.f32 0.0, %v985
  %v987 = vpop.f32.mrb[0].mxu0
  %v988 = vpop.f32.mrb[0].mxu0
  %v989 = vadd.f32 0.0, %v988
  %v990 = vpop.f32.mrb[0].mxu0
  %991 = vmatprep.mubr.bf16.mxu0 %v887
  %992 = vmatmul.mubr.bf16.gmra.mrb[0].mxu0 %v886
  %v993 = vpop.f32.mrb[0].mxu0
  %v994 = vadd.f32 0.0, %v993
  %v995 = vpop.f32.mrb[0].mxu0
  %v996 = vpop.f32.mrb[0].mxu0
  %v997 = vadd.f32 0.0, %v996
  %v998 = vpop.f32.mrb[0].mxu0
  %999 = vmatprep.mubr.bf16.mxu0 %v891
  %1000 = vmatmul.mubr.bf16.gmra.mrb[0].mxu0 %v890
  %v1001 = vpop.f32.mrb[0].mxu0
  %v1002 = vadd.f32 0.0, %v1001
  %v1003 = vpop.f32.mrb[0].mxu0
  %v1004 = vpop.f32.mrb[0].mxu0
  %v1005 = vadd.f32 0.0, %v1004
  %v1006 = vpop.f32.mrb[0].mxu0
  %1007 = vmatprep.mubr.bf16.mxu0 %v895
  %1008 = vmatmul.mubr.bf16.gmra.mrb[0].mxu0 %v894
  %v1009 = vpop.f32.mrb[0].mxu0
  %v1010 = vadd.f32 0.0, %v1009
  %v1011 = vpop.f32.mrb[0].mxu0
  %v1012 = vpop.f32.mrb[0].mxu0
  %v1013 = vpop.f32.mrb[0].mxu0
  %1014 = vdwg.mxu0
  %1015 = vmatprep.subr.bf16.mxu0 0
  %1016 = vmatpush1.bf16.msra.mxu0 %v777
  %1017 = vmatprep.subr.bf16.mxu0 0
  %1018 = vmatpush1.bf16.msra.mxu0 %v778
  %1019 = vmatprep.subr.bf16.mxu0 0
  %1020 = vmatpush1.bf16.msra.mxu0 %v779
  %1021 = vmatprep.subr.bf16.mxu0 0
  %1022 = vmatpush1.bf16.msra.mxu0 %v780
  %1023 = vmatprep.subr.bf16.mxu0 0
  %1024 = vmatpush1.bf16.msra.mxu0 %v781
  %1025 = vmatprep.subr.bf16.mxu0 0
  %1026 = vmatpush1.bf16.msra.mxu0 %v782
  %1027 = vmatprep.subr.bf16.mxu0 0
  %1028 = vmatpush1.bf16.msra.mxu0 %v783
  %1029 = vmatprep.subr.bf16.mxu0 0
  %1030 = vmatpush1.bf16.msra.mxu0 %v784
  %1031 = vmatprep.subr.bf16.mxu0 0
  %1032 = vmatpush1.bf16.msra.mxu0 %v785
  %1033 = vmatprep.subr.bf16.mxu0 0
  %1034 = vmatpush1.bf16.msra.mxu0 0
  %1035 = vmatprep.subr.bf16.mxu0 0
  %1036 = vmatpush1.bf16.msra.mxu0 0
  %1037 = vmatprep.subr.bf16.mxu0 0
  %1038 = vmatpush1.bf16.msra.mxu0 0
  %1039 = vmatprep.subr.bf16.mxu0 0
  %1040 = vmatpush1.bf16.msra.mxu0 0
  %1041 = vmatprep.subr.bf16.mxu0 0
  %1042 = vmatpush1.bf16.msra.mxu0 0
  %1043 = vmatprep.subr.bf16.mxu0 0
  %1044 = vmatpush1.bf16.msra.mxu0 0
  %1045 = vmatprep.subr.bf16.mxu0 0
  %1046 = vmatpush1.bf16.msra.mxu0 0
  %1047 = vmatprep.mubr.bf16.mxu0 %v918
  %1048 = vmatmul.mubr.bf16.gmra.mrb[0].mxu0 %v876
  %v1049 = vpop.f32.mrb[0].mxu0
  %v1050 = vadd.f32 %v970, %v1049
  %v1051 = vpop.f32.mrb[0].mxu0
  %v1052 = vpop.f32.mrb[0].mxu0
  %v1053 = vadd.f32 %v973, %v1052
  %v1054 = vpop.f32.mrb[0].mxu0
  %1055 = vmatprep.mubr.bf16.mxu0 %v921
  %1056 = vmatmul.mubr.bf16.gmra.mrb[0].mxu0 %v880
  %v1057 = vpop.f32.mrb[0].mxu0
  %v1058 = vadd.f32 %v978, %v1057
  %v1059 = vpop.f32.mrb[0].mxu0
  %v1060 = vpop.f32.mrb[0].mxu0
  %v1061 = vadd.f32 %v981, %v1060
  %v1062 = vpop.f32.mrb[0].mxu0
  %1063 = vmatprep.mubr.bf16.mxu0 %v924
  %1064 = vmatmul.mubr.bf16.gmra.mrb[0].mxu0 %v884
  %v1065 = vpop.f32.mrb[0].mxu0
  %v1066 = vadd.f32 %v986, %v1065
  %v1067 = vpop.f32.mrb[0].mxu0
  %v1068 = vpop.f32.mrb[0].mxu0
  %v1069 = vadd.f32 %v989, %v1068
  %v1070 = vpop.f32.mrb[0].mxu0
  %1071 = vmatprep.mubr.bf16.mxu0 %v927
  %1072 = vmatmul.mubr.bf16.gmra.mrb[0].mxu0 %v888
  %v1073 = vpop.f32.mrb[0].mxu0
  %v1074 = vadd.f32 %v994, %v1073
  %v1075 = vpop.f32.mrb[0].mxu0
  %v1076 = vpop.f32.mrb[0].mxu0
  %v1077 = vadd.f32 %v997, %v1076
  %v1078 = vpop.f32.mrb[0].mxu0
  %1079 = vmatprep.mubr.bf16.mxu0 %v930
  %1080 = vmatmul.mubr.bf16.gmra.mrb[0].mxu0 %v892
  %v1081 = vpop.f32.mrb[0].mxu0
  %v1082 = vadd.f32 %v1002, %v1081
  %v1083 = vpop.f32.mrb[0].mxu0
  %v1084 = vpop.f32.mrb[0].mxu0
  %v1085 = vadd.f32 %v1005, %v1084
  %v1086 = vpop.f32.mrb[0].mxu0
  %1087 = vmatprep.mubr.bf16.mxu0 %v933
  %1088 = vmatmul.mubr.bf16.gmra.mrb[0].mxu0 %v896
  %v1089 = vpop.f32.mrb[0].mxu0
  %v1090 = vadd.f32 %v1010, %v1089
  %v1091 = vpop.f32.mrb[0].mxu0
  %v1092 = vpop.f32.mrb[0].mxu0
  %v1093 = vpop.f32.mrb[0].mxu0
  %1094 = vdwg.mxu0
  %v1095 = vpack.c.bf16 %v1053, %v1050
  %v1096 = vpack.c.bf16 %v1061, %v1058
  %v1097 = vpack.c.bf16 %v1069, %v1066
  %v1098 = vpack.c.bf16 %v1077, %v1074
  %v1099 = vpack.c.bf16 %v1085, %v1082
  %v1100 = vpack.c.bf16 %v1090, %v1090
  %v1101 = vld [vmem:[%s4] sm:$0xf]
  %v1102 = vld [vmem:[%s4 + $0x4] sm:$0xf]
  %s1103 = scalar_lea.vmem %s3, 176
  %v1104 = vld [vmem:[%s1103] sm:$0xff]
  %v1105 = vld [vmem:[%s1103 + $0x8] sm:$0xff]
  %v1106 = vld [vmem:[%s1103 + $0x10] sm:$0xff]
  %v1107 = vld [vmem:[%s1103 + $0x18] sm:$0xff]
  %v1108 = vld [vmem:[%s1103 + $0x20] sm:$0xff]
  %v1109 = vld [vmem:[%s1103 + $0x28] sm:$0xff]
  %v1110 = vld [vmem:[%s1103 + $0x30] sm:$0xff]
  %v1111 = vld [vmem:[%s1103 + $0x38] sm:$0xff]
  %v1112 = vld [vmem:[%s1103 + $0x40] sm:$0xff]
  %v1113 = vld [vmem:[%s1103 + $0x48] sm:$0xff]
  %v1114 = vld [vmem:[%s1103 + $0x50] sm:$0xff]
  %v1115 = vld [vmem:[%s1103 + $0x58] sm:$0xff]
  %v1116 = vld [vmem:[%s1103 + $0x60] sm:$0xff]
  %v1117 = vld [vmem:[%s1103 + $0x68] sm:$0xff]
  %v1118 = vld [vmem:[%s1103 + $0x70] sm:$0xff]
  %v1119 = vld [vmem:[%s1103 + $0x78] sm:$0xff]
  %v1120 = vld [vmem:[%s1103 + $0x80] sm:$0xff]
  %v1121 = vld [vmem:[%s1103 + $0x88] sm:$0xff]
  %v1122 = vld [vmem:[%s1103 + $0x90] sm:$0xff]
  %v1123 = vld [vmem:[%s1103 + $0x98] sm:$0xff]
  %v1124 = vld [vmem:[%s1103 + $0xa0] sm:$0x11]
  %v1125 = vld [vmem:[%s1103 + $0xa8] sm:$0x11]
  %v1148 = vunpack.c.l.b16 %v1104
  %v1149 = vunpack.c.h.b16 %v1104
  %v1150 = vunpack.c.l.b16 %v1105
  %v1151 = vunpack.c.h.b16 %v1105
  %v1152 = vunpack.c.l.b16 %v1106
  %v1153 = vunpack.c.h.b16 %v1106
  %v1154 = vunpack.c.l.b16 %v1107
  %v1155 = vunpack.c.h.b16 %v1107
  %v1156 = vunpack.c.l.b16 %v1108
  %v1157 = vunpack.c.h.b16 %v1108
  %v1158 = vunpack.c.l.b16 %v1109
  %v1159 = vunpack.c.h.b16 %v1109
  %v1160 = vunpack.c.l.b16 %v1110
  %v1161 = vunpack.c.h.b16 %v1110
  %v1162 = vunpack.c.l.b16 %v1111
  %v1163 = vunpack.c.h.b16 %v1111
  %v1164 = vunpack.c.l.b16 %v1112
  %v1165 = vunpack.c.h.b16 %v1112
  %v1166 = vunpack.c.l.b16 %v1113
  %v1167 = vunpack.c.h.b16 %v1113
  %v1168 = vunpack.c.l.b16 %v1114
  %v1169 = vunpack.c.h.b16 %v1114
  %v1170 = vunpack.c.l.b16 %v1115
  %v1171 = vunpack.c.h.b16 %v1115
  %v1172 = vunpack.c.l.b16 %v1116
  %v1173 = vunpack.c.h.b16 %v1116
  %v1174 = vunpack.c.l.b16 %v1117
  %v1175 = vunpack.c.h.b16 %v1117
  %v1176 = vunpack.c.l.b16 %v1118
  %v1177 = vunpack.c.h.b16 %v1118
  %v1178 = vunpack.c.l.b16 %v1119
  %v1179 = vunpack.c.h.b16 %v1119
  %v1180 = vunpack.c.l.b16 %v1120
  %v1181 = vunpack.c.h.b16 %v1120
  %v1182 = vunpack.c.l.b16 %v1121
  %v1183 = vunpack.c.h.b16 %v1121
  %v1184 = vunpack.c.l.b16 %v1122
  %v1185 = vunpack.c.h.b16 %v1122
  %v1186 = vunpack.c.l.b16 %v1123
  %v1187 = vunpack.c.h.b16 %v1123
  %v1188 = vunpack.c.l.b16 %v1124
  %v1189 = vunpack.c.h.b16 %v1124
  %v1190 = vunpack.c.l.b16 %v1125
  %v1191 = vunpack.c.h.b16 %v1125
  %v1192 = vpack.c.b16 %v1152, %v1148
  %v1193 = vpack.c.b16 %v1153, %v1149
  %v1194 = vpack.c.b16 %v1154, %v1150
  %v1195 = vpack.c.b16 %v1155, %v1151
  %v1196 = vpack.c.b16 %v1160, %v1156
  %v1197 = vpack.c.b16 %v1161, %v1157
  %v1198 = vpack.c.b16 %v1162, %v1158
  %v1199 = vpack.c.b16 %v1163, %v1159
  %v1200 = vpack.c.b16 %v1168, %v1164
  %v1201 = vpack.c.b16 %v1169, %v1165
  %v1202 = vpack.c.b16 %v1170, %v1166
  %v1203 = vpack.c.b16 %v1171, %v1167
  %v1204 = vpack.c.b16 %v1176, %v1172
  %v1205 = vpack.c.b16 %v1177, %v1173
  %v1206 = vpack.c.b16 %v1178, %v1174
  %v1207 = vpack.c.b16 %v1179, %v1175
  %v1208 = vpack.c.b16 %v1184, %v1180
  %v1209 = vpack.c.b16 %v1185, %v1181
  %v1210 = vpack.c.b16 %v1186, %v1182
  %v1211 = vpack.c.b16 %v1187, %v1183
  %v1212 = vpack.c.b16 %v1188, %v1188
  %v1213 = vpack.c.b16 %v1189, %v1189
  %v1214 = vpack.c.b16 %v1190, %v1190
  %v1215 = vpack.c.b16 %v1191, %v1191
  %v1235 = vsel %vm916, %v1195, 0
  %v1238 = vsel %vm916, %v1199, 0
  %v1241 = vsel %vm916, %v1203, 0
  %v1244 = vsel %vm916, %v1207, 0
  %v1247 = vsel %vm916, %v1211, 0
  %v1250 = vsel %vm916, %v1215, 0
  %1252 = vmatprep.subr.bf16.mxu0 0
  %1253 = vmatpush1.bf16.msra.mxu0 %v761
  %1254 = vmatprep.subr.bf16.mxu0 0
  %1255 = vmatpush1.bf16.msra.mxu0 %v762
  %1256 = vmatprep.subr.bf16.mxu0 0
  %1257 = vmatpush1.bf16.msra.mxu0 %v763
  %1258 = vmatprep.subr.bf16.mxu0 0
  %1259 = vmatpush1.bf16.msra.mxu0 %v764
  %1260 = vmatprep.subr.bf16.mxu0 0
  %1261 = vmatpush1.bf16.msra.mxu0 %v765
  %1262 = vmatprep.subr.bf16.mxu0 0
  %1263 = vmatpush1.bf16.msra.mxu0 %v766
  %1264 = vmatprep.subr.bf16.mxu0 0
  %1265 = vmatpush1.bf16.msra.mxu0 %v767
  %1266 = vmatprep.subr.bf16.mxu0 0
  %1267 = vmatpush1.bf16.msra.mxu0 %v768
  %1268 = vmatprep.subr.bf16.mxu0 0
  %1269 = vmatpush1.bf16.msra.mxu0 %v769
  %1270 = vmatprep.subr.bf16.mxu0 0
  %1271 = vmatpush1.bf16.msra.mxu0 %v770
  %1272 = vmatprep.subr.bf16.mxu0 0
  %1273 = vmatpush1.bf16.msra.mxu0 %v771
  %1274 = vmatprep.subr.bf16.mxu0 0
  %1275 = vmatpush1.bf16.msra.mxu0 %v772
  %1276 = vmatprep.subr.bf16.mxu0 0
  %1277 = vmatpush1.bf16.msra.mxu0 %v773
  %1278 = vmatprep.subr.bf16.mxu0 0
  %1279 = vmatpush1.bf16.msra.mxu0 %v774
  %1280 = vmatprep.subr.bf16.mxu0 0
  %1281 = vmatpush1.bf16.msra.mxu0 %v775
  %1282 = vmatprep.subr.bf16.mxu0 0
  %1283 = vmatpush1.bf16.msra.mxu0 %v776
  %1284 = vmatprep.mubr.bf16.mxu0 %v1193
  %1285 = vmatmul.mubr.bf16.gmra.mrb[0].mxu0 %v1192
  %v1286 = vpop.f32.mrb[0].mxu0
  %v1287 = vadd.f32 0.0, %v1286
  %v1288 = vpop.f32.mrb[0].mxu0
  %v1289 = vpop.f32.mrb[0].mxu0
  %v1290 = vadd.f32 0.0, %v1289
  %v1291 = vpop.f32.mrb[0].mxu0
  %1292 = vmatprep.mubr.bf16.mxu0 %v1197
  %1293 = vmatmul.mubr.bf16.gmra.mrb[0].mxu0 %v1196
  %v1294 = vpop.f32.mrb[0].mxu0
  %v1295 = vadd.f32 0.0, %v1294
  %v1296 = vpop.f32.mrb[0].mxu0
  %v1297 = vpop.f32.mrb[0].mxu0
  %v1298 = vadd.f32 0.0, %v1297
  %v1299 = vpop.f32.mrb[0].mxu0
  %1300 = vmatprep.mubr.bf16.mxu0 %v1201
  %1301 = vmatmul.mubr.bf16.gmra.mrb[0].mxu0 %v1200
  %v1302 = vpop.f32.mrb[0].mxu0
  %v1303 = vadd.f32 0.0, %v1302
  %v1304 = vpop.f32.mrb[0].mxu0
  %v1305 = vpop.f32.mrb[0].mxu0
  %v1306 = vadd.f32 0.0, %v1305
  %v1307 = vpop.f32.mrb[0].mxu0
  %1308 = vmatprep.mubr.bf16.mxu0 %v1205
  %1309 = vmatmul.mubr.bf16.gmra.mrb[0].mxu0 %v1204
  %v1310 = vpop.f32.mrb[0].mxu0
  %v1311 = vadd.f32 0.0, %v1310
  %v1312 = vpop.f32.mrb[0].mxu0
  %v1313 = vpop.f32.mrb[0].mxu0
  %v1314 = vadd.f32 0.0, %v1313
  %v1315 = vpop.f32.mrb[0].mxu0
  %1316 = vmatprep.mubr.bf16.mxu0 %v1209
  %1317 = vmatmul.mubr.bf16.gmra.mrb[0].mxu0 %v1208
  %v1318 = vpop.f32.mrb[0].mxu0
  %v1319 = vadd.f32 0.0, %v1318
  %v1320 = vpop.f32.mrb[0].mxu0
  %v1321 = vpop.f32.mrb[0].mxu0
  %v1322 = vadd.f32 0.0, %v1321
  %v1323 = vpop.f32.mrb[0].mxu0
  %1324 = vmatprep.mubr.bf16.mxu0 %v1213
  %1325 = vmatmul.mubr.bf16.gmra.mrb[0].mxu0 %v1212
  %v1326 = vpop.f32.mrb[0].mxu0
  %v1327 = vadd.f32 0.0, %v1326
  %v1328 = vpop.f32.mrb[0].mxu0
  %v1329 = vpop.f32.mrb[0].mxu0
  %v1330 = vpop.f32.mrb[0].mxu0
  %1331 = vdwg.mxu0
  %1332 = vmatprep.subr.bf16.mxu0 0
  %1333 = vmatpush1.bf16.msra.mxu0 %v777
  %1334 = vmatprep.subr.bf16.mxu0 0
  %1335 = vmatpush1.bf16.msra.mxu0 %v778
  %1336 = vmatprep.subr.bf16.mxu0 0
  %1337 = vmatpush1.bf16.msra.mxu0 %v779
  %1338 = vmatprep.subr.bf16.mxu0 0
  %1339 = vmatpush1.bf16.msra.mxu0 %v780
  %1340 = vmatprep.subr.bf16.mxu0 0
  %1341 = vmatpush1.bf16.msra.mxu0 %v781
  %1342 = vmatprep.subr.bf16.mxu0 0
  %1343 = vmatpush1.bf16.msra.mxu0 %v782
  %1344 = vmatprep.subr.bf16.mxu0 0
  %1345 = vmatpush1.bf16.msra.mxu0 %v783
  %1346 = vmatprep.subr.bf16.mxu0 0
  %1347 = vmatpush1.bf16.msra.mxu0 %v784
  %1348 = vmatprep.subr.bf16.mxu0 0
  %1349 = vmatpush1.bf16.msra.mxu0 %v785
  %1350 = vmatprep.subr.bf16.mxu0 0
  %1351 = vmatpush1.bf16.msra.mxu0 0
  %1352 = vmatprep.subr.bf16.mxu0 0
  %1353 = vmatpush1.bf16.msra.mxu0 0
  %1354 = vmatprep.subr.bf16.mxu0 0
  %1355 = vmatpush1.bf16.msra.mxu0 0
  %1356 = vmatprep.subr.bf16.mxu0 0
  %1357 = vmatpush1.bf16.msra.mxu0 0
  %1358 = vmatprep.subr.bf16.mxu0 0
  %1359 = vmatpush1.bf16.msra.mxu0 0
  %1360 = vmatprep.subr.bf16.mxu0 0
  %1361 = vmatpush1.bf16.msra.mxu0 0
  %1362 = vmatprep.subr.bf16.mxu0 0
  %1363 = vmatpush1.bf16.msra.mxu0 0
  %1364 = vmatprep.mubr.bf16.mxu0 %v1235
  %1365 = vmatmul.mubr.bf16.gmra.mrb[0].mxu0 %v1194
  %v1366 = vpop.f32.mrb[0].mxu0
  %v1367 = vadd.f32 %v1287, %v1366
  %v1368 = vpop.f32.mrb[0].mxu0
  %v1369 = vpop.f32.mrb[0].mxu0
  %v1370 = vadd.f32 %v1290, %v1369
  %v1371 = vpop.f32.mrb[0].mxu0
  %1372 = vmatprep.mubr.bf16.mxu0 %v1238
  %1373 = vmatmul.mubr.bf16.gmra.mrb[0].mxu0 %v1198
  %v1374 = vpop.f32.mrb[0].mxu0
  %v1375 = vadd.f32 %v1295, %v1374
  %v1376 = vpop.f32.mrb[0].mxu0
  %v1377 = vpop.f32.mrb[0].mxu0
  %v1378 = vadd.f32 %v1298, %v1377
  %v1379 = vpop.f32.mrb[0].mxu0
  %1380 = vmatprep.mubr.bf16.mxu0 %v1241
  %1381 = vmatmul.mubr.bf16.gmra.mrb[0].mxu0 %v1202
  %v1382 = vpop.f32.mrb[0].mxu0
  %v1383 = vadd.f32 %v1303, %v1382
  %v1384 = vpop.f32.mrb[0].mxu0
  %v1385 = vpop.f32.mrb[0].mxu0
  %v1386 = vadd.f32 %v1306, %v1385
  %v1387 = vpop.f32.mrb[0].mxu0
  %1388 = vmatprep.mubr.bf16.mxu0 %v1244
  %1389 = vmatmul.mubr.bf16.gmra.mrb[0].mxu0 %v1206
  %v1390 = vpop.f32.mrb[0].mxu0
  %v1391 = vadd.f32 %v1311, %v1390
  %v1392 = vpop.f32.mrb[0].mxu0
  %v1393 = vpop.f32.mrb[0].mxu0
  %v1394 = vadd.f32 %v1314, %v1393
  %v1395 = vpop.f32.mrb[0].mxu0
  %1396 = vmatprep.mubr.bf16.mxu0 %v1247
  %1397 = vmatmul.mubr.bf16.gmra.mrb[0].mxu0 %v1210
  %v1398 = vpop.f32.mrb[0].mxu0
  %v1399 = vadd.f32 %v1319, %v1398
  %v1400 = vpop.f32.mrb[0].mxu0
  %v1401 = vpop.f32.mrb[0].mxu0
  %v1402 = vadd.f32 %v1322, %v1401
  %v1403 = vpop.f32.mrb[0].mxu0
  %1404 = vmatprep.mubr.bf16.mxu0 %v1250
  %1405 = vmatmul.mubr.bf16.gmra.mrb[0].mxu0 %v1214
  %v1406 = vpop.f32.mrb[0].mxu0
  %v1407 = vadd.f32 %v1327, %v1406
  %v1408 = vpop.f32.mrb[0].mxu0
  %v1409 = vpop.f32.mrb[0].mxu0
  %v1410 = vpop.f32.mrb[0].mxu0
  %1411 = vdwg.mxu0
  %v1412 = vpack.c.bf16 %v1370, %v1367
  %v1413 = vpack.c.bf16 %v1378, %v1375
  %v1414 = vpack.c.bf16 %v1386, %v1383
  %v1415 = vpack.c.bf16 %v1394, %v1391
  %v1416 = vpack.c.bf16 %v1402, %v1399
  %v1417 = vpack.c.bf16 %v1407, %v1407
  %s1418 = scalar_lea.vmem %s4, 8
  %v1419 = vld [vmem:[%s1418] sm:$0xf]
  %v1420 = vld [vmem:[%s1418 + $0x4] sm:$0xf]
  %v1423 = vunpack.c.l.b16 %v1419
  %v1424 = vunpack.c.l.b16 %v1420
  %v1425 = vpack.c.b16 %v1424, %v1423
  %v1428 = vsel %vm916, %v1412, 0
  %v1431 = vsel %vm916, %v1413, 0
  %v1434 = vsel %vm916, %v1414, 0
  %v1437 = vsel %vm916, %v1415, 0
  %v1440 = vsel %vm916, %v1416, 0
  %v1443 = vsel %vm916, %v1417, 0
  %1445 = vmatprep.subr.bf16.mxu0 0
  %1446 = vmatpush1.bf16.msra.mxu0 %v1425
  %1447 = vmatprep.subr.bf16.mxu0 0
  %1448 = vmatpush1.bf16.msra.mxu0 0
  %1449 = vmatprep.subr.bf16.mxu0 0
  %1450 = vmatpush1.bf16.msra.mxu0 0
  %1451 = vmatprep.subr.bf16.mxu0 0
  %1452 = vmatpush1.bf16.msra.mxu0 0
  %1453 = vmatprep.subr.bf16.mxu0 0
  %1454 = vmatpush1.bf16.msra.mxu0 0
  %1455 = vmatprep.subr.bf16.mxu0 0
  %1456 = vmatpush1.bf16.msra.mxu0 0
  %1457 = vmatprep.subr.bf16.mxu0 0
  %1458 = vmatpush1.bf16.msra.mxu0 0
  %1459 = vmatprep.subr.bf16.mxu0 0
  %1460 = vmatpush1.bf16.msra.mxu0 0
  %1461 = vmatprep.subr.bf16.mxu0 0
  %1462 = vmatpush1.bf16.msra.mxu0 0
  %1463 = vmatprep.subr.bf16.mxu0 0
  %1464 = vmatpush1.bf16.msra.mxu0 0
  %1465 = vmatprep.subr.bf16.mxu0 0
  %1466 = vmatpush1.bf16.msra.mxu0 0
  %1467 = vmatprep.subr.bf16.mxu0 0
  %1468 = vmatpush1.bf16.msra.mxu0 0
  %1469 = vmatprep.subr.bf16.mxu0 0
  %1470 = vmatpush1.bf16.msra.mxu0 0
  %1471 = vmatprep.subr.bf16.mxu0 0
  %1472 = vmatpush1.bf16.msra.mxu0 0
  %1473 = vmatprep.subr.bf16.mxu0 0
  %1474 = vmatpush1.bf16.msra.mxu0 0
  %1475 = vmatprep.subr.bf16.mxu0 0
  %1476 = vmatpush1.bf16.msra.mxu0 0
  %1477 = vmatprep.mubr.bf16.mxu0 0
  %1478 = vmatmul.mubr.bf16.gmra.mrb[0].mxu0 %v1428
  %v1479 = vpop.f32.mrb[0].mxu0
  %v1480 = vadd.f32 0.0, %v1479
  %v1481 = vpop.f32.mrb[0].mxu0
  %v1482 = vpop.f32.mrb[0].mxu0
  %v1483 = vadd.f32 0.0, %v1482
  %v1484 = vpop.f32.mrb[0].mxu0
  %1485 = vmatprep.mubr.bf16.mxu0 0
  %1486 = vmatmul.mubr.bf16.gmra.mrb[0].mxu0 %v1431
  %v1487 = vpop.f32.mrb[0].mxu0
  %v1488 = vadd.f32 0.0, %v1487
  %v1489 = vpop.f32.mrb[0].mxu0
  %v1490 = vpop.f32.mrb[0].mxu0
  %v1491 = vadd.f32 0.0, %v1490
  %v1492 = vpop.f32.mrb[0].mxu0
  %1493 = vmatprep.mubr.bf16.mxu0 0
  %1494 = vmatmul.mubr.bf16.gmra.mrb[0].mxu0 %v1434
  %v1495 = vpop.f32.mrb[0].mxu0
  %v1496 = vadd.f32 0.0, %v1495
  %v1497 = vpop.f32.mrb[0].mxu0
  %v1498 = vpop.f32.mrb[0].mxu0
  %v1499 = vadd.f32 0.0, %v1498
  %v1500 = vpop.f32.mrb[0].mxu0
  %1501 = vmatprep.mubr.bf16.mxu0 0
  %1502 = vmatmul.mubr.bf16.gmra.mrb[0].mxu0 %v1437
  %v1503 = vpop.f32.mrb[0].mxu0
  %v1504 = vadd.f32 0.0, %v1503
  %v1505 = vpop.f32.mrb[0].mxu0
  %v1506 = vpop.f32.mrb[0].mxu0
  %v1507 = vadd.f32 0.0, %v1506
  %v1508 = vpop.f32.mrb[0].mxu0
  %1509 = vmatprep.mubr.bf16.mxu0 0
  %1510 = vmatmul.mubr.bf16.gmra.mrb[0].mxu0 %v1440
  %v1511 = vpop.f32.mrb[0].mxu0
  %v1512 = vadd.f32 0.0, %v1511
  %v1513 = vpop.f32.mrb[0].mxu0
  %v1514 = vpop.f32.mrb[0].mxu0
  %v1515 = vadd.f32 0.0, %v1514
  %v1516 = vpop.f32.mrb[0].mxu0
  %1517 = vmatprep.mubr.bf16.mxu0 0
  %1518 = vmatmul.mubr.bf16.gmra.mrb[0].mxu0 %v1443
  %v1519 = vpop.f32.mrb[0].mxu0
  %v1520 = vadd.f32 0.0, %v1519
  %v1521 = vpop.f32.mrb[0].mxu0
  %v1522 = vpop.f32.mrb[0].mxu0
  %v1523 = vpop.f32.mrb[0].mxu0
  %1524 = vdwg.mxu0
  %v1527 = vunpack.c.l.b16 %v1101
  %v1528 = vunpack.c.l.b16 %v1102
  %v1529 = vpack.c.b16 %v1528, %v1527
  %v1532 = vsel %vm916, %v1095, 0
  %v1535 = vsel %vm916, %v1096, 0
  %v1538 = vsel %vm916, %v1097, 0
  %v1541 = vsel %vm916, %v1098, 0
  %v1544 = vsel %vm916, %v1099, 0
  %v1547 = vsel %vm916, %v1100, 0
  %1549 = vmatprep.subr.bf16.mxu0 0
  %1550 = vmatpush1.bf16.msra.mxu0 %v1529
  %1551 = vmatprep.subr.bf16.mxu0 0
  %1552 = vmatpush1.bf16.msra.mxu0 0
  %1553 = vmatprep.subr.bf16.mxu0 0
  %1554 = vmatpush1.bf16.msra.mxu0 0
  %1555 = vmatprep.subr.bf16.mxu0 0
  %1556 = vmatpush1.bf16.msra.mxu0 0
  %1557 = vmatprep.subr.bf16.mxu0 0
  %1558 = vmatpush1.bf16.msra.mxu0 0
  %1559 = vmatprep.subr.bf16.mxu0 0
  %1560 = vmatpush1.bf16.msra.mxu0 0
  %1561 = vmatprep.subr.bf16.mxu0 0
  %1562 = vmatpush1.bf16.msra.mxu0 0
  %1563 = vmatprep.subr.bf16.mxu0 0
  %1564 = vmatpush1.bf16.msra.mxu0 0
  %1565 = vmatprep.subr.bf16.mxu0 0
  %1566 = vmatpush1.bf16.msra.mxu0 0
  %1567 = vmatprep.subr.bf16.mxu0 0
  %1568 = vmatpush1.bf16.msra.mxu0 0
  %1569 = vmatprep.subr.bf16.mxu0 0
  %1570 = vmatpush1.bf16.msra.mxu0 0
  %1571 = vmatprep.subr.bf16.mxu0 0
  %1572 = vmatpush1.bf16.msra.mxu0 0
  %1573 = vmatprep.subr.bf16.mxu0 0
  %1574 = vmatpush1.bf16.msra.mxu0 0
  %1575 = vmatprep.subr.bf16.mxu0 0
  %1576 = vmatpush1.bf16.msra.mxu0 0
  %1577 = vmatprep.subr.bf16.mxu0 0
  %1578 = vmatpush1.bf16.msra.mxu0 0
  %1579 = vmatprep.subr.bf16.mxu0 0
  %1580 = vmatpush1.bf16.msra.mxu0 0
  %1581 = vmatprep.mubr.bf16.mxu0 0
  %1582 = vmatmul.mubr.bf16.gmra.mrb[0].mxu0 %v1532
  %v1583 = vpop.f32.mrb[0].mxu0
  %v1584 = vadd.f32 %v1480, %v1583
  %v1585 = vpop.f32.mrb[0].mxu0
  %v1586 = vpop.f32.mrb[0].mxu0
  %v1587 = vadd.f32 %v1483, %v1586
  %v1588 = vpop.f32.mrb[0].mxu0
  %1589 = vmatprep.mubr.bf16.mxu0 0
  %1590 = vmatmul.mubr.bf16.gmra.mrb[0].mxu0 %v1535
  %v1591 = vpop.f32.mrb[0].mxu0
  %v1592 = vadd.f32 %v1488, %v1591
  %v1593 = vpop.f32.mrb[0].mxu0
  %v1594 = vpop.f32.mrb[0].mxu0
  %v1595 = vadd.f32 %v1491, %v1594
  %v1596 = vpop.f32.mrb[0].mxu0
  %1597 = vmatprep.mubr.bf16.mxu0 0
  %1598 = vmatmul.mubr.bf16.gmra.mrb[0].mxu0 %v1538
  %v1599 = vpop.f32.mrb[0].mxu0
  %v1600 = vadd.f32 %v1496, %v1599
  %v1601 = vpop.f32.mrb[0].mxu0
  %v1602 = vpop.f32.mrb[0].mxu0
  %v1603 = vadd.f32 %v1499, %v1602
  %v1604 = vpop.f32.mrb[0].mxu0
  %1605 = vmatprep.mubr.bf16.mxu0 0
  %1606 = vmatmul.mubr.bf16.gmra.mrb[0].mxu0 %v1541
  %v1607 = vpop.f32.mrb[0].mxu0
  %v1608 = vadd.f32 %v1504, %v1607
  %v1609 = vpop.f32.mrb[0].mxu0
  %v1610 = vpop.f32.mrb[0].mxu0
  %v1611 = vadd.f32 %v1507, %v1610
  %v1612 = vpop.f32.mrb[0].mxu0
  %1613 = vmatprep.mubr.bf16.mxu0 0
  %1614 = vmatmul.mubr.bf16.gmra.mrb[0].mxu0 %v1544
  %v1615 = vpop.f32.mrb[0].mxu0
  %v1616 = vadd.f32 %v1512, %v1615
  %v1617 = vpop.f32.mrb[0].mxu0
  %v1618 = vpop.f32.mrb[0].mxu0
  %v1619 = vadd.f32 %v1515, %v1618
  %v1620 = vpop.f32.mrb[0].mxu0
  %1621 = vmatprep.mubr.bf16.mxu0 0
  %1622 = vmatmul.mubr.bf16.gmra.mrb[0].mxu0 %v1547
  %v1623 = vpop.f32.mrb[0].mxu0
  %v1624 = vadd.f32 %v1520, %v1623
  %v1625 = vpop.f32.mrb[0].mxu0
  %v1626 = vpop.f32.mrb[0].mxu0
  %v1627 = vpop.f32.mrb[0].mxu0
  %1628 = vdwg.mxu0
  %s1629 = scalar_lea.vmem %s3, 352
  %v1630 = vld [vmem:[%s1629] sm:$0xff]
  %v1631 = vld [vmem:[%s1629 + $0x8] sm:$0xff]
  %v1632 = vld [vmem:[%s1629 + $0x10] sm:$0xff]
  %v1633 = vld [vmem:[%s1629 + $0x18] sm:$0xff]
  %v1634 = vld [vmem:[%s1629 + $0x20] sm:$0xff]
  %v1635 = vld [vmem:[%s1629 + $0x28] sm:$0xff]
  %v1636 = vld [vmem:[%s1629 + $0x30] sm:$0xff]
  %v1637 = vld [vmem:[%s1629 + $0x38] sm:$0xff]
  %v1638 = vld [vmem:[%s1629 + $0x40] sm:$0xff]
  %v1639 = vld [vmem:[%s1629 + $0x48] sm:$0xff]
  %v1640 = vld [vmem:[%s1629 + $0x50] sm:$0xff]
  %v1641 = vld [vmem:[%s1629 + $0x58] sm:$0xff]
  %v1642 = vld [vmem:[%s1629 + $0x60] sm:$0xff]
  %v1643 = vld [vmem:[%s1629 + $0x68] sm:$0xff]
  %v1644 = vld [vmem:[%s1629 + $0x70] sm:$0xff]
  %v1645 = vld [vmem:[%s1629 + $0x78] sm:$0xff]
  %v1646 = vld [vmem:[%s1629 + $0x80] sm:$0xff]
  %v1647 = vld [vmem:[%s1629 + $0x88] sm:$0xff]
  %v1648 = vld [vmem:[%s1629 + $0x90] sm:$0xff]
  %v1649 = vld [vmem:[%s1629 + $0x98] sm:$0xff]
  %v1650 = vld [vmem:[%s1629 + $0xa0] sm:$0x11]
  %v1651 = vld [vmem:[%s1629 + $0xa8] sm:$0x11]
  %v1674 = vunpack.c.l.b16 %v1630
  %v1675 = vunpack.c.h.b16 %v1630
  %v1676 = vunpack.c.l.b16 %v1631
  %v1677 = vunpack.c.h.b16 %v1631
  %v1678 = vunpack.c.l.b16 %v1632
  %v1679 = vunpack.c.h.b16 %v1632
  %v1680 = vunpack.c.l.b16 %v1633
  %v1681 = vunpack.c.h.b16 %v1633
  %v1682 = vunpack.c.l.b16 %v1634
  %v1683 = vunpack.c.h.b16 %v1634
  %v1684 = vunpack.c.l.b16 %v1635
  %v1685 = vunpack.c.h.b16 %v1635
  %v1686 = vunpack.c.l.b16 %v1636
  %v1687 = vunpack.c.h.b16 %v1636
  %v1688 = vunpack.c.l.b16 %v1637
  %v1689 = vunpack.c.h.b16 %v1637
  %v1690 = vunpack.c.l.b16 %v1638
  %v1691 = vunpack.c.h.b16 %v1638
  %v1692 = vunpack.c.l.b16 %v1639
  %v1693 = vunpack.c.h.b16 %v1639
  %v1694 = vunpack.c.l.b16 %v1640
  %v1695 = vunpack.c.h.b16 %v1640
  %v1696 = vunpack.c.l.b16 %v1641
  %v1697 = vunpack.c.h.b16 %v1641
  %v1698 = vunpack.c.l.b16 %v1642
  %v1699 = vunpack.c.h.b16 %v1642
  %v1700 = vunpack.c.l.b16 %v1643
  %v1701 = vunpack.c.h.b16 %v1643
  %v1702 = vunpack.c.l.b16 %v1644
  %v1703 = vunpack.c.h.b16 %v1644
  %v1704 = vunpack.c.l.b16 %v1645
  %v1705 = vunpack.c.h.b16 %v1645
  %v1706 = vunpack.c.l.b16 %v1646
  %v1707 = vunpack.c.h.b16 %v1646
  %v1708 = vunpack.c.l.b16 %v1647
  %v1709 = vunpack.c.h.b16 %v1647
  %v1710 = vunpack.c.l.b16 %v1648
  %v1711 = vunpack.c.h.b16 %v1648
  %v1712 = vunpack.c.l.b16 %v1649
  %v1713 = vunpack.c.h.b16 %v1649
  %v1714 = vunpack.c.l.b16 %v1650
  %v1715 = vunpack.c.h.b16 %v1650
  %v1716 = vunpack.c.l.b16 %v1651
  %v1717 = vunpack.c.h.b16 %v1651
  %v1718 = vpack.c.b16 %v1678, %v1674
  %v1719 = vpack.c.b16 %v1679, %v1675
  %v1720 = vpack.c.b16 %v1680, %v1676
  %v1721 = vpack.c.b16 %v1681, %v1677
  %v1722 = vpack.c.b16 %v1686, %v1682
  %v1723 = vpack.c.b16 %v1687, %v1683
  %v1724 = vpack.c.b16 %v1688, %v1684
  %v1725 = vpack.c.b16 %v1689, %v1685
  %v1726 = vpack.c.b16 %v1694, %v1690
  %v1727 = vpack.c.b16 %v1695, %v1691
  %v1728 = vpack.c.b16 %v1696, %v1692
  %v1729 = vpack.c.b16 %v1697, %v1693
  %v1730 = vpack.c.b16 %v1702, %v1698
  %v1731 = vpack.c.b16 %v1703, %v1699
  %v1732 = vpack.c.b16 %v1704, %v1700
  %v1733 = vpack.c.b16 %v1705, %v1701
  %v1734 = vpack.c.b16 %v1710, %v1706
  %v1735 = vpack.c.b16 %v1711, %v1707
  %v1736 = vpack.c.b16 %v1712, %v1708
  %v1737 = vpack.c.b16 %v1713, %v1709
  %v1738 = vpack.c.b16 %v1714, %v1714
  %v1739 = vpack.c.b16 %v1715, %v1715
  %v1740 = vpack.c.b16 %v1716, %v1716
  %v1741 = vpack.c.b16 %v1717, %v1717
  %v1761 = vsel %vm916, %v1721, 0
  %v1764 = vsel %vm916, %v1725, 0
  %v1767 = vsel %vm916, %v1729, 0
  %v1770 = vsel %vm916, %v1733, 0
  %v1773 = vsel %vm916, %v1737, 0
  %v1776 = vsel %vm916, %v1741, 0
  %1778 = vmatprep.subr.bf16.mxu0 0
  %1779 = vmatpush1.bf16.msra.mxu0 %v761
  %1780 = vmatprep.subr.bf16.mxu0 0
  %1781 = vmatpush1.bf16.msra.mxu0 %v762
  %1782 = vmatprep.subr.bf16.mxu0 0
  %1783 = vmatpush1.bf16.msra.mxu0 %v763
  %1784 = vmatprep.subr.bf16.mxu0 0
  %1785 = vmatpush1.bf16.msra.mxu0 %v764
  %1786 = vmatprep.subr.bf16.mxu0 0
  %1787 = vmatpush1.bf16.msra.mxu0 %v765
  %1788 = vmatprep.subr.bf16.mxu0 0
  %1789 = vmatpush1.bf16.msra.mxu0 %v766
  %1790 = vmatprep.subr.bf16.mxu0 0
  %1791 = vmatpush1.bf16.msra.mxu0 %v767
  %1792 = vmatprep.subr.bf16.mxu0 0
  %1793 = vmatpush1.bf16.msra.mxu0 %v768
  %1794 = vmatprep.subr.bf16.mxu0 0
  %1795 = vmatpush1.bf16.msra.mxu0 %v769
  %1796 = vmatprep.subr.bf16.mxu0 0
  %1797 = vmatpush1.bf16.msra.mxu0 %v770
  %1798 = vmatprep.subr.bf16.mxu0 0
  %1799 = vmatpush1.bf16.msra.mxu0 %v771
  %1800 = vmatprep.subr.bf16.mxu0 0
  %1801 = vmatpush1.bf16.msra.mxu0 %v772
  %1802 = vmatprep.subr.bf16.mxu0 0
  %1803 = vmatpush1.bf16.msra.mxu0 %v773
  %1804 = vmatprep.subr.bf16.mxu0 0
  %1805 = vmatpush1.bf16.msra.mxu0 %v774
  %1806 = vmatprep.subr.bf16.mxu0 0
  %1807 = vmatpush1.bf16.msra.mxu0 %v775
  %1808 = vmatprep.subr.bf16.mxu0 0
  %1809 = vmatpush1.bf16.msra.mxu0 %v776
  %1810 = vmatprep.mubr.bf16.mxu0 %v1719
  %1811 = vmatmul.mubr.bf16.gmra.mrb[0].mxu0 %v1718
  %v1812 = vpop.f32.mrb[0].mxu0
  %v1813 = vadd.f32 0.0, %v1812
  %v1814 = vpop.f32.mrb[0].mxu0
  %v1815 = vpop.f32.mrb[0].mxu0
  %v1816 = vadd.f32 0.0, %v1815
  %v1817 = vpop.f32.mrb[0].mxu0
  %1818 = vmatprep.mubr.bf16.mxu0 %v1723
  %1819 = vmatmul.mubr.bf16.gmra.mrb[0].mxu0 %v1722
  %v1820 = vpop.f32.mrb[0].mxu0
  %v1821 = vadd.f32 0.0, %v1820
  %v1822 = vpop.f32.mrb[0].mxu0
  %v1823 = vpop.f32.mrb[0].mxu0
  %v1824 = vadd.f32 0.0, %v1823
  %v1825 = vpop.f32.mrb[0].mxu0
  %1826 = vmatprep.mubr.bf16.mxu0 %v1727
  %1827 = vmatmul.mubr.bf16.gmra.mrb[0].mxu0 %v1726
  %v1828 = vpop.f32.mrb[0].mxu0
  %v1829 = vadd.f32 0.0, %v1828
  %v1830 = vpop.f32.mrb[0].mxu0
  %v1831 = vpop.f32.mrb[0].mxu0
  %v1832 = vadd.f32 0.0, %v1831
  %v1833 = vpop.f32.mrb[0].mxu0
  %1834 = vmatprep.mubr.bf16.mxu0 %v1731
  %1835 = vmatmul.mubr.bf16.gmra.mrb[0].mxu0 %v1730
  %v1836 = vpop.f32.mrb[0].mxu0
  %v1837 = vadd.f32 0.0, %v1836
  %v1838 = vpop.f32.mrb[0].mxu0
  %v1839 = vpop.f32.mrb[0].mxu0
  %v1840 = vadd.f32 0.0, %v1839
  %v1841 = vpop.f32.mrb[0].mxu0
  %1842 = vmatprep.mubr.bf16.mxu0 %v1735
  %1843 = vmatmul.mubr.bf16.gmra.mrb[0].mxu0 %v1734
  %v1844 = vpop.f32.mrb[0].mxu0
  %v1845 = vadd.f32 0.0, %v1844
  %v1846 = vpop.f32.mrb[0].mxu0
  %v1847 = vpop.f32.mrb[0].mxu0
  %v1848 = vadd.f32 0.0, %v1847
  %v1849 = vpop.f32.mrb[0].mxu0
  %1850 = vmatprep.mubr.bf16.mxu0 %v1739
  %1851 = vmatmul.mubr.bf16.gmra.mrb[0].mxu0 %v1738
  %v1852 = vpop.f32.mrb[0].mxu0
  %v1853 = vadd.f32 0.0, %v1852
  %v1854 = vpop.f32.mrb[0].mxu0
  %v1855 = vpop.f32.mrb[0].mxu0
  %v1856 = vpop.f32.mrb[0].mxu0
  %1857 = vdwg.mxu0
  %1858 = vmatprep.subr.bf16.mxu0 0
  %1859 = vmatpush1.bf16.msra.mxu0 %v777
  %1860 = vmatprep.subr.bf16.mxu0 0
  %1861 = vmatpush1.bf16.msra.mxu0 %v778
  %1862 = vmatprep.subr.bf16.mxu0 0
  %1863 = vmatpush1.bf16.msra.mxu0 %v779
  %1864 = vmatprep.subr.bf16.mxu0 0
  %1865 = vmatpush1.bf16.msra.mxu0 %v780
  %1866 = vmatprep.subr.bf16.mxu0 0
  %1867 = vmatpush1.bf16.msra.mxu0 %v781
  %1868 = vmatprep.subr.bf16.mxu0 0
  %1869 = vmatpush1.bf16.msra.mxu0 %v782
  %1870 = vmatprep.subr.bf16.mxu0 0
  %1871 = vmatpush1.bf16.msra.mxu0 %v783
  %1872 = vmatprep.subr.bf16.mxu0 0
  %1873 = vmatpush1.bf16.msra.mxu0 %v784
  %1874 = vmatprep.subr.bf16.mxu0 0
  %1875 = vmatpush1.bf16.msra.mxu0 %v785
  %1876 = vmatprep.subr.bf16.mxu0 0
  %1877 = vmatpush1.bf16.msra.mxu0 0
  %1878 = vmatprep.subr.bf16.mxu0 0
  %1879 = vmatpush1.bf16.msra.mxu0 0
  %1880 = vmatprep.subr.bf16.mxu0 0
  %1881 = vmatpush1.bf16.msra.mxu0 0
  %1882 = vmatprep.subr.bf16.mxu0 0
  %1883 = vmatpush1.bf16.msra.mxu0 0
  %1884 = vmatprep.subr.bf16.mxu0 0
  %1885 = vmatpush1.bf16.msra.mxu0 0
  %1886 = vmatprep.subr.bf16.mxu0 0
  %1887 = vmatpush1.bf16.msra.mxu0 0
  %1888 = vmatprep.subr.bf16.mxu0 0
  %1889 = vmatpush1.bf16.msra.mxu0 0
  %1890 = vmatprep.mubr.bf16.mxu0 %v1761
  %1891 = vmatmul.mubr.bf16.gmra.mrb[0].mxu0 %v1720
  %v1892 = vpop.f32.mrb[0].mxu0
  %v1893 = vadd.f32 %v1813, %v1892
  %v1894 = vpop.f32.mrb[0].mxu0
  %v1895 = vpop.f32.mrb[0].mxu0
  %v1896 = vadd.f32 %v1816, %v1895
  %v1897 = vpop.f32.mrb[0].mxu0
  %1898 = vmatprep.mubr.bf16.mxu0 %v1764
  %1899 = vmatmul.mubr.bf16.gmra.mrb[0].mxu0 %v1724
  %v1900 = vpop.f32.mrb[0].mxu0
  %v1901 = vadd.f32 %v1821, %v1900
  %v1902 = vpop.f32.mrb[0].mxu0
  %v1903 = vpop.f32.mrb[0].mxu0
  %v1904 = vadd.f32 %v1824, %v1903
  %v1905 = vpop.f32.mrb[0].mxu0
  %1906 = vmatprep.mubr.bf16.mxu0 %v1767
  %1907 = vmatmul.mubr.bf16.gmra.mrb[0].mxu0 %v1728
  %v1908 = vpop.f32.mrb[0].mxu0
  %v1909 = vadd.f32 %v1829, %v1908
  %v1910 = vpop.f32.mrb[0].mxu0
  %v1911 = vpop.f32.mrb[0].mxu0
  %v1912 = vadd.f32 %v1832, %v1911
  %v1913 = vpop.f32.mrb[0].mxu0
  %1914 = vmatprep.mubr.bf16.mxu0 %v1770
  %1915 = vmatmul.mubr.bf16.gmra.mrb[0].mxu0 %v1732
  %v1916 = vpop.f32.mrb[0].mxu0
  %v1917 = vadd.f32 %v1837, %v1916
  %v1918 = vpop.f32.mrb[0].mxu0
  %v1919 = vpop.f32.mrb[0].mxu0
  %v1920 = vadd.f32 %v1840, %v1919
  %v1921 = vpop.f32.mrb[0].mxu0
  %1922 = vmatprep.mubr.bf16.mxu0 %v1773
  %1923 = vmatmul.mubr.bf16.gmra.mrb[0].mxu0 %v1736
  %v1924 = vpop.f32.mrb[0].mxu0
  %v1925 = vadd.f32 %v1845, %v1924
  %v1926 = vpop.f32.mrb[0].mxu0
  %v1927 = vpop.f32.mrb[0].mxu0
  %v1928 = vadd.f32 %v1848, %v1927
  %v1929 = vpop.f32.mrb[0].mxu0
  %1930 = vmatprep.mubr.bf16.mxu0 %v1776
  %1931 = vmatmul.mubr.bf16.gmra.mrb[0].mxu0 %v1740
  %v1932 = vpop.f32.mrb[0].mxu0
  %v1933 = vadd.f32 %v1853, %v1932
  %v1934 = vpop.f32.mrb[0].mxu0
  %v1935 = vpop.f32.mrb[0].mxu0
  %v1936 = vpop.f32.mrb[0].mxu0
  %1937 = vdwg.mxu0
  %v1938 = vpack.c.bf16 %v1896, %v1893
  %v1939 = vpack.c.bf16 %v1904, %v1901
  %v1940 = vpack.c.bf16 %v1912, %v1909
  %v1941 = vpack.c.bf16 %v1920, %v1917
  %v1942 = vpack.c.bf16 %v1928, %v1925
  %v1943 = vpack.c.bf16 %v1933, %v1933
  %s1944 = scalar_lea.vmem %s4, 16
  %v1945 = vld [vmem:[%s1944] sm:$0xf]
  %v1946 = vld [vmem:[%s1944 + $0x4] sm:$0xf]
  %v1949 = vunpack.c.l.b16 %v1945
  %v1950 = vunpack.c.l.b16 %v1946
  %v1951 = vpack.c.b16 %v1950, %v1949
  %v1954 = vsel %vm916, %v1938, 0
  %v1957 = vsel %vm916, %v1939, 0
  %v1960 = vsel %vm916, %v1940, 0
  %v1963 = vsel %vm916, %v1941, 0
  %v1966 = vsel %vm916, %v1942, 0
  %v1969 = vsel %vm916, %v1943, 0
  %1971 = vmatprep.subr.bf16.mxu0 0
  %1972 = vmatpush1.bf16.msra.mxu0 %v1951
  %1973 = vmatprep.subr.bf16.mxu0 0
  %1974 = vmatpush1.bf16.msra.mxu0 0
  %1975 = vmatprep.subr.bf16.mxu0 0
  %1976 = vmatpush1.bf16.msra.mxu0 0
  %1977 = vmatprep.subr.bf16.mxu0 0
  %1978 = vmatpush1.bf16.msra.mxu0 0
  %1979 = vmatprep.subr.bf16.mxu0 0
  %1980 = vmatpush1.bf16.msra.mxu0 0
  %1981 = vmatprep.subr.bf16.mxu0 0
  %1982 = vmatpush1.bf16.msra.mxu0 0
  %1983 = vmatprep.subr.bf16.mxu0 0
  %1984 = vmatpush1.bf16.msra.mxu0 0
  %1985 = vmatprep.subr.bf16.mxu0 0
  %1986 = vmatpush1.bf16.msra.mxu0 0
  %1987 = vmatprep.subr.bf16.mxu0 0
  %1988 = vmatpush1.bf16.msra.mxu0 0
  %1989 = vmatprep.subr.bf16.mxu0 0
  %1990 = vmatpush1.bf16.msra.mxu0 0
  %1991 = vmatprep.subr.bf16.mxu0 0
  %1992 = vmatpush1.bf16.msra.mxu0 0
  %1993 = vmatprep.subr.bf16.mxu0 0
  %1994 = vmatpush1.bf16.msra.mxu0 0
  %1995 = vmatprep.subr.bf16.mxu0 0
  %1996 = vmatpush1.bf16.msra.mxu0 0
  %1997 = vmatprep.subr.bf16.mxu0 0
  %1998 = vmatpush1.bf16.msra.mxu0 0
  %1999 = vmatprep.subr.bf16.mxu0 0
  %2000 = vmatpush1.bf16.msra.mxu0 0
  %2001 = vmatprep.subr.bf16.mxu0 0
  %2002 = vmatpush1.bf16.msra.mxu0 0
  %2003 = vmatprep.mubr.bf16.mxu0 0
  %2004 = vmatmul.mubr.bf16.gmra.mrb[0].mxu0 %v1954
  %v2005 = vpop.f32.mrb[0].mxu0
  %v2006 = vadd.f32 0.0, %v2005
  %v2007 = vpop.f32.mrb[0].mxu0
  %v2008 = vpop.f32.mrb[0].mxu0
  %v2009 = vadd.f32 0.0, %v2008
  %v2010 = vpop.f32.mrb[0].mxu0
  %2011 = vmatprep.mubr.bf16.mxu0 0
  %2012 = vmatmul.mubr.bf16.gmra.mrb[0].mxu0 %v1957
  %v2013 = vpop.f32.mrb[0].mxu0
  %v2014 = vadd.f32 0.0, %v2013
  %v2015 = vpop.f32.mrb[0].mxu0
  %v2016 = vpop.f32.mrb[0].mxu0
  %v2017 = vadd.f32 0.0, %v2016
  %v2018 = vpop.f32.mrb[0].mxu0
  %2019 = vmatprep.mubr.bf16.mxu0 0
  %2020 = vmatmul.mubr.bf16.gmra.mrb[0].mxu0 %v1960
  %v2021 = vpop.f32.mrb[0].mxu0
  %v2022 = vadd.f32 0.0, %v2021
  %v2023 = vpop.f32.mrb[0].mxu0
  %v2024 = vpop.f32.mrb[0].mxu0
  %v2025 = vadd.f32 0.0, %v2024
  %v2026 = vpop.f32.mrb[0].mxu0
  %2027 = vmatprep.mubr.bf16.mxu0 0
  %2028 = vmatmul.mubr.bf16.gmra.mrb[0].mxu0 %v1963
  %v2029 = vpop.f32.mrb[0].mxu0
  %v2030 = vadd.f32 0.0, %v2029
  %v2031 = vpop.f32.mrb[0].mxu0
  %v2032 = vpop.f32.mrb[0].mxu0
  %v2033 = vadd.f32 0.0, %v2032
  %v2034 = vpop.f32.mrb[0].mxu0
  %2035 = vmatprep.mubr.bf16.mxu0 0
  %2036 = vmatmul.mubr.bf16.gmra.mrb[0].mxu0 %v1966
  %v2037 = vpop.f32.mrb[0].mxu0
  %v2038 = vadd.f32 0.0, %v2037
  %v2039 = vpop.f32.mrb[0].mxu0
  %v2040 = vpop.f32.mrb[0].mxu0
  %v2041 = vadd.f32 0.0, %v2040
  %v2042 = vpop.f32.mrb[0].mxu0
  %2043 = vmatprep.mubr.bf16.mxu0 0
  %2044 = vmatmul.mubr.bf16.gmra.mrb[0].mxu0 %v1969
  %v2045 = vpop.f32.mrb[0].mxu0
  %v2046 = vadd.f32 0.0, %v2045
  %v2047 = vpop.f32.mrb[0].mxu0
  %v2048 = vpop.f32.mrb[0].mxu0
  %v2049 = vpop.f32.mrb[0].mxu0
  %2050 = vdwg.mxu0
  %v2051 = vadd.f32 %v1584, %v2006
  %v2052 = vadd.f32 %v1587, %v2009
  %v2053 = vadd.f32 %v1592, %v2014
  %v2054 = vadd.f32 %v1595, %v2017
  %v2055 = vadd.f32 %v1600, %v2022
  %v2056 = vadd.f32 %v1603, %v2025
  %v2057 = vadd.f32 %v1608, %v2030
  %v2058 = vadd.f32 %v1611, %v2033
  %v2059 = vadd.f32 %v1616, %v2038
  %v2060 = vadd.f32 %v1619, %v2041
  %v2061 = vadd.f32 %v1624, %v2046
  %s2062 = scalar_lea.vmem %s3, 528
  %v2063 = vld [vmem:[%s2062] sm:$0xff]
  %v2064 = vld [vmem:[%s2062 + $0x8] sm:$0xff]
  %v2065 = vld [vmem:[%s2062 + $0x10] sm:$0xff]
  %v2066 = vld [vmem:[%s2062 + $0x18] sm:$0xff]
  %v2067 = vld [vmem:[%s2062 + $0x20] sm:$0xff]
  %v2068 = vld [vmem:[%s2062 + $0x28] sm:$0xff]
  %v2069 = vld [vmem:[%s2062 + $0x30] sm:$0xff]
  %v2070 = vld [vmem:[%s2062 + $0x38] sm:$0xff]
  %v2071 = vld [vmem:[%s2062 + $0x40] sm:$0xff]
  %v2072 = vld [vmem:[%s2062 + $0x48] sm:$0xff]
  %v2073 = vld [vmem:[%s2062 + $0x50] sm:$0xff]
  %v2074 = vld [vmem:[%s2062 + $0x58] sm:$0xff]
  %v2075 = vld [vmem:[%s2062 + $0x60] sm:$0xff]
  %v2076 = vld [vmem:[%s2062 + $0x68] sm:$0xff]
  %v2077 = vld [vmem:[%s2062 + $0x70] sm:$0xff]
  %v2078 = vld [vmem:[%s2062 + $0x78] sm:$0xff]
  %v2079 = vld [vmem:[%s2062 + $0x80] sm:$0xff]
  %v2080 = vld [vmem:[%s2062 + $0x88] sm:$0xff]
  %v2081 = vld [vmem:[%s2062 + $0x90] sm:$0xff]
  %v2082 = vld [vmem:[%s2062 + $0x98] sm:$0xff]
  %v2083 = vld [vmem:[%s2062 + $0xa0] sm:$0x11]
  %v2084 = vld [vmem:[%s2062 + $0xa8] sm:$0x11]
  %v2107 = vunpack.c.l.b16 %v2063
  %v2108 = vunpack.c.h.b16 %v2063
  %v2109 = vunpack.c.l.b16 %v2064
  %v2110 = vunpack.c.h.b16 %v2064
  %v2111 = vunpack.c.l.b16 %v2065
  %v2112 = vunpack.c.h.b16 %v2065
  %v2113 = vunpack.c.l.b16 %v2066
  %v2114 = vunpack.c.h.b16 %v2066
  %v2115 = vunpack.c.l.b16 %v2067
  %v2116 = vunpack.c.h.b16 %v2067
  %v2117 = vunpack.c.l.b16 %v2068
  %v2118 = vunpack.c.h.b16 %v2068
  %v2119 = vunpack.c.l.b16 %v2069
  %v2120 = vunpack.c.h.b16 %v2069
  %v2121 = vunpack.c.l.b16 %v2070
  %v2122 = vunpack.c.h.b16 %v2070
  %v2123 = vunpack.c.l.b16 %v2071
  %v2124 = vunpack.c.h.b16 %v2071
  %v2125 = vunpack.c.l.b16 %v2072
  %v2126 = vunpack.c.h.b16 %v2072
  %v2127 = vunpack.c.l.b16 %v2073
  %v2128 = vunpack.c.h.b16 %v2073
  %v2129 = vunpack.c.l.b16 %v2074
  %v2130 = vunpack.c.h.b16 %v2074
  %v2131 = vunpack.c.l.b16 %v2075
  %v2132 = vunpack.c.h.b16 %v2075
  %v2133 = vunpack.c.l.b16 %v2076
  %v2134 = vunpack.c.h.b16 %v2076
  %v2135 = vunpack.c.l.b16 %v2077
  %v2136 = vunpack.c.h.b16 %v2077
  %v2137 = vunpack.c.l.b16 %v2078
  %v2138 = vunpack.c.h.b16 %v2078
  %v2139 = vunpack.c.l.b16 %v2079
  %v2140 = vunpack.c.h.b16 %v2079
  %v2141 = vunpack.c.l.b16 %v2080
  %v2142 = vunpack.c.h.b16 %v2080
  %v2143 = vunpack.c.l.b16 %v2081
  %v2144 = vunpack.c.h.b16 %v2081
  %v2145 = vunpack.c.l.b16 %v2082
  %v2146 = vunpack.c.h.b16 %v2082
  %v2147 = vunpack.c.l.b16 %v2083
  %v2148 = vunpack.c.h.b16 %v2083
  %v2149 = vunpack.c.l.b16 %v2084
  %v2150 = vunpack.c.h.b16 %v2084
  %v2151 = vpack.c.b16 %v2111, %v2107
  %v2152 = vpack.c.b16 %v2112, %v2108
  %v2153 = vpack.c.b16 %v2113, %v2109
  %v2154 = vpack.c.b16 %v2114, %v2110
  %v2155 = vpack.c.b16 %v2119, %v2115
  %v2156 = vpack.c.b16 %v2120, %v2116
  %v2157 = vpack.c.b16 %v2121, %v2117
  %v2158 = vpack.c.b16 %v2122, %v2118
  %v2159 = vpack.c.b16 %v2127, %v2123
  %v2160 = vpack.c.b16 %v2128, %v2124
  %v2161 = vpack.c.b16 %v2129, %v2125
  %v2162 = vpack.c.b16 %v2130, %v2126
  %v2163 = vpack.c.b16 %v2135, %v2131
  %v2164 = vpack.c.b16 %v2136, %v2132
  %v2165 = vpack.c.b16 %v2137, %v2133
  %v2166 = vpack.c.b16 %v2138, %v2134
  %v2167 = vpack.c.b16 %v2143, %v2139
  %v2168 = vpack.c.b16 %v2144, %v2140
  %v2169 = vpack.c.b16 %v2145, %v2141
  %v2170 = vpack.c.b16 %v2146, %v2142
  %v2171 = vpack.c.b16 %v2147, %v2147
  %v2172 = vpack.c.b16 %v2148, %v2148
  %v2173 = vpack.c.b16 %v2149, %v2149
  %v2174 = vpack.c.b16 %v2150, %v2150
  %v2194 = vsel %vm916, %v2154, 0
  %v2197 = vsel %vm916, %v2158, 0
  %v2200 = vsel %vm916, %v2162, 0
  %v2203 = vsel %vm916, %v2166, 0
  %v2206 = vsel %vm916, %v2170, 0
  %v2209 = vsel %vm916, %v2174, 0
  %2211 = vmatprep.subr.bf16.mxu0 0
  %2212 = vmatpush1.bf16.msra.mxu0 %v761
  %2213 = vmatprep.subr.bf16.mxu0 0
  %2214 = vmatpush1.bf16.msra.mxu0 %v762
  %2215 = vmatprep.subr.bf16.mxu0 0
  %2216 = vmatpush1.bf16.msra.mxu0 %v763
  %2217 = vmatprep.subr.bf16.mxu0 0
  %2218 = vmatpush1.bf16.msra.mxu0 %v764
  %2219 = vmatprep.subr.bf16.mxu0 0
  %2220 = vmatpush1.bf16.msra.mxu0 %v765
  %2221 = vmatprep.subr.bf16.mxu0 0
  %2222 = vmatpush1.bf16.msra.mxu0 %v766
  %2223 = vmatprep.subr.bf16.mxu0 0
  %2224 = vmatpush1.bf16.msra.mxu0 %v767
  %2225 = vmatprep.subr.bf16.mxu0 0
  %2226 = vmatpush1.bf16.msra.mxu0 %v768
  %2227 = vmatprep.subr.bf16.mxu0 0
  %2228 = vmatpush1.bf16.msra.mxu0 %v769
  %2229 = vmatprep.subr.bf16.mxu0 0
  %2230 = vmatpush1.bf16.msra.mxu0 %v770
  %2231 = vmatprep.subr.bf16.mxu0 0
  %2232 = vmatpush1.bf16.msra.mxu0 %v771
  %2233 = vmatprep.subr.bf16.mxu0 0
  %2234 = vmatpush1.bf16.msra.mxu0 %v772
  %2235 = vmatprep.subr.bf16.mxu0 0
  %2236 = vmatpush1.bf16.msra.mxu0 %v773
  %2237 = vmatprep.subr.bf16.mxu0 0
  %2238 = vmatpush1.bf16.msra.mxu0 %v774
  %2239 = vmatprep.subr.bf16.mxu0 0
  %2240 = vmatpush1.bf16.msra.mxu0 %v775
  %2241 = vmatprep.subr.bf16.mxu0 0
  %2242 = vmatpush1.bf16.msra.mxu0 %v776
  %2243 = vmatprep.mubr.bf16.mxu0 %v2152
  %2244 = vmatmul.mubr.bf16.gmra.mrb[0].mxu0 %v2151
  %v2245 = vpop.f32.mrb[0].mxu0
  %v2246 = vadd.f32 0.0, %v2245
  %v2247 = vpop.f32.mrb[0].mxu0
  %v2248 = vpop.f32.mrb[0].mxu0
  %v2249 = vadd.f32 0.0, %v2248
  %v2250 = vpop.f32.mrb[0].mxu0
  %2251 = vmatprep.mubr.bf16.mxu0 %v2156
  %2252 = vmatmul.mubr.bf16.gmra.mrb[0].mxu0 %v2155
  %v2253 = vpop.f32.mrb[0].mxu0
  %v2254 = vadd.f32 0.0, %v2253
  %v2255 = vpop.f32.mrb[0].mxu0
  %v2256 = vpop.f32.mrb[0].mxu0
  %v2257 = vadd.f32 0.0, %v2256
  %v2258 = vpop.f32.mrb[0].mxu0
  %2259 = vmatprep.mubr.bf16.mxu0 %v2160
  %2260 = vmatmul.mubr.bf16.gmra.mrb[0].mxu0 %v2159
  %v2261 = vpop.f32.mrb[0].mxu0
  %v2262 = vadd.f32 0.0, %v2261
  %v2263 = vpop.f32.mrb[0].mxu0
  %v2264 = vpop.f32.mrb[0].mxu0
  %v2265 = vadd.f32 0.0, %v2264
  %v2266 = vpop.f32.mrb[0].mxu0
  %2267 = vmatprep.mubr.bf16.mxu0 %v2164
  %2268 = vmatmul.mubr.bf16.gmra.mrb[0].mxu0 %v2163
  %v2269 = vpop.f32.mrb[0].mxu0
  %v2270 = vadd.f32 0.0, %v2269
  %v2271 = vpop.f32.mrb[0].mxu0
  %v2272 = vpop.f32.mrb[0].mxu0
  %v2273 = vadd.f32 0.0, %v2272
  %v2274 = vpop.f32.mrb[0].mxu0
  %2275 = vmatprep.mubr.bf16.mxu0 %v2168
  %2276 = vmatmul.mubr.bf16.gmra.mrb[0].mxu0 %v2167
  %v2277 = vpop.f32.mrb[0].mxu0
  %v2278 = vadd.f32 0.0, %v2277
  %v2279 = vpop.f32.mrb[0].mxu0
  %v2280 = vpop.f32.mrb[0].mxu0
  %v2281 = vadd.f32 0.0, %v2280
  %v2282 = vpop.f32.mrb[0].mxu0
  %2283 = vmatprep.mubr.bf16.mxu0 %v2172
  %2284 = vmatmul.mubr.bf16.gmra.mrb[0].mxu0 %v2171
  %v2285 = vpop.f32.mrb[0].mxu0
  %v2286 = vadd.f32 0.0, %v2285
  %v2287 = vpop.f32.mrb[0].mxu0
  %v2288 = vpop.f32.mrb[0].mxu0
  %v2289 = vpop.f32.mrb[0].mxu0
  %2290 = vdwg.mxu0
  %2291 = vmatprep.subr.bf16.mxu0 0
  %2292 = vmatpush1.bf16.msra.mxu0 %v777
  %2293 = vmatprep.subr.bf16.mxu0 0
  %2294 = vmatpush1.bf16.msra.mxu0 %v778
  %2295 = vmatprep.subr.bf16.mxu0 0
  %2296 = vmatpush1.bf16.msra.mxu0 %v779
  %2297 = vmatprep.subr.bf16.mxu0 0
  %2298 = vmatpush1.bf16.msra.mxu0 %v780
  %2299 = vmatprep.subr.bf16.mxu0 0
  %2300 = vmatpush1.bf16.msra.mxu0 %v781
  %2301 = vmatprep.subr.bf16.mxu0 0
  %2302 = vmatpush1.bf16.msra.mxu0 %v782
  %2303 = vmatprep.subr.bf16.mxu0 0
  %2304 = vmatpush1.bf16.msra.mxu0 %v783
  %2305 = vmatprep.subr.bf16.mxu0 0
  %2306 = vmatpush1.bf16.msra.mxu0 %v784
  %2307 = vmatprep.subr.bf16.mxu0 0
  %2308 = vmatpush1.bf16.msra.mxu0 %v785
  %2309 = vmatprep.subr.bf16.mxu0 0
  %2310 = vmatpush1.bf16.msra.mxu0 0
  %2311 = vmatprep.subr.bf16.mxu0 0
  %2312 = vmatpush1.bf16.msra.mxu0 0
  %2313 = vmatprep.subr.bf16.mxu0 0
  %2314 = vmatpush1.bf16.msra.mxu0 0
  %2315 = vmatprep.subr.bf16.mxu0 0
  %2316 = vmatpush1.bf16.msra.mxu0 0
  %2317 = vmatprep.subr.bf16.mxu0 0
  %2318 = vmatpush1.bf16.msra.mxu0 0
  %2319 = vmatprep.subr.bf16.mxu0 0
  %2320 = vmatpush1.bf16.msra.mxu0 0
  %2321 = vmatprep.subr.bf16.mxu0 0
  %2322 = vmatpush1.bf16.msra.mxu0 0
  %2323 = vmatprep.mubr.bf16.mxu0 %v2194
  %2324 = vmatmul.mubr.bf16.gmra.mrb[0].mxu0 %v2153
  %v2325 = vpop.f32.mrb[0].mxu0
  %v2326 = vadd.f32 %v2246, %v2325
  %v2327 = vpop.f32.mrb[0].mxu0
  %v2328 = vpop.f32.mrb[0].mxu0
  %v2329 = vadd.f32 %v2249, %v2328
  %v2330 = vpop.f32.mrb[0].mxu0
  %2331 = vmatprep.mubr.bf16.mxu0 %v2197
  %2332 = vmatmul.mubr.bf16.gmra.mrb[0].mxu0 %v2157
  %v2333 = vpop.f32.mrb[0].mxu0
  %v2334 = vadd.f32 %v2254, %v2333
  %v2335 = vpop.f32.mrb[0].mxu0
  %v2336 = vpop.f32.mrb[0].mxu0
  %v2337 = vadd.f32 %v2257, %v2336
  %v2338 = vpop.f32.mrb[0].mxu0
  %2339 = vmatprep.mubr.bf16.mxu0 %v2200
  %2340 = vmatmul.mubr.bf16.gmra.mrb[0].mxu0 %v2161
  %v2341 = vpop.f32.mrb[0].mxu0
  %v2342 = vadd.f32 %v2262, %v2341
  %v2343 = vpop.f32.mrb[0].mxu0
  %v2344 = vpop.f32.mrb[0].mxu0
  %v2345 = vadd.f32 %v2265, %v2344
  %v2346 = vpop.f32.mrb[0].mxu0
  %2347 = vmatprep.mubr.bf16.mxu0 %v2203
  %2348 = vmatmul.mubr.bf16.gmra.mrb[0].mxu0 %v2165
  %v2349 = vpop.f32.mrb[0].mxu0
  %v2350 = vadd.f32 %v2270, %v2349
  %v2351 = vpop.f32.mrb[0].mxu0
  %v2352 = vpop.f32.mrb[0].mxu0
  %v2353 = vadd.f32 %v2273, %v2352
  %v2354 = vpop.f32.mrb[0].mxu0
  %2355 = vmatprep.mubr.bf16.mxu0 %v2206
  %2356 = vmatmul.mubr.bf16.gmra.mrb[0].mxu0 %v2169
  %v2357 = vpop.f32.mrb[0].mxu0
  %v2358 = vadd.f32 %v2278, %v2357
  %v2359 = vpop.f32.mrb[0].mxu0
  %v2360 = vpop.f32.mrb[0].mxu0
  %v2361 = vadd.f32 %v2281, %v2360
  %v2362 = vpop.f32.mrb[0].mxu0
  %2363 = vmatprep.mubr.bf16.mxu0 %v2209
  %2364 = vmatmul.mubr.bf16.gmra.mrb[0].mxu0 %v2173
  %v2365 = vpop.f32.mrb[0].mxu0
  %v2366 = vadd.f32 %v2286, %v2365
  %v2367 = vpop.f32.mrb[0].mxu0
  %v2368 = vpop.f32.mrb[0].mxu0
  %v2369 = vpop.f32.mrb[0].mxu0
  %2370 = vdwg.mxu0
  %v2371 = vpack.c.bf16 %v2329, %v2326
  %v2372 = vpack.c.bf16 %v2337, %v2334
  %v2373 = vpack.c.bf16 %v2345, %v2342
  %v2374 = vpack.c.bf16 %v2353, %v2350
  %v2375 = vpack.c.bf16 %v2361, %v2358
  %v2376 = vpack.c.bf16 %v2366, %v2366
  %s2377 = scalar_lea.vmem %s4, 24
  %v2378 = vld [vmem:[%s2377] sm:$0xf]
  %v2379 = vld [vmem:[%s2377 + $0x4] sm:$0xf]
  %v2382 = vunpack.c.l.b16 %v2378
  %v2383 = vunpack.c.l.b16 %v2379
  %v2384 = vpack.c.b16 %v2383, %v2382
  %v2387 = vsel %vm916, %v2371, 0
  %v2390 = vsel %vm916, %v2372, 0
  %v2393 = vsel %vm916, %v2373, 0
  %v2396 = vsel %vm916, %v2374, 0
  %v2399 = vsel %vm916, %v2375, 0
  %v2402 = vsel %vm916, %v2376, 0
  %2404 = vmatprep.subr.bf16.mxu0 0
  %2405 = vmatpush1.bf16.msra.mxu0 %v2384
  %2406 = vmatprep.subr.bf16.mxu0 0
  %2407 = vmatpush1.bf16.msra.mxu0 0
  %2408 = vmatprep.subr.bf16.mxu0 0
  %2409 = vmatpush1.bf16.msra.mxu0 0
  %2410 = vmatprep.subr.bf16.mxu0 0
  %2411 = vmatpush1.bf16.msra.mxu0 0
  %2412 = vmatprep.subr.bf16.mxu0 0
  %2413 = vmatpush1.bf16.msra.mxu0 0
  %2414 = vmatprep.subr.bf16.mxu0 0
  %2415 = vmatpush1.bf16.msra.mxu0 0
  %2416 = vmatprep.subr.bf16.mxu0 0
  %2417 = vmatpush1.bf16.msra.mxu0 0
  %2418 = vmatprep.subr.bf16.mxu0 0
  %2419 = vmatpush1.bf16.msra.mxu0 0
  %2420 = vmatprep.subr.bf16.mxu0 0
  %2421 = vmatpush1.bf16.msra.mxu0 0
  %2422 = vmatprep.subr.bf16.mxu0 0
  %2423 = vmatpush1.bf16.msra.mxu0 0
  %2424 = vmatprep.subr.bf16.mxu0 0
  %2425 = vmatpush1.bf16.msra.mxu0 0
  %2426 = vmatprep.subr.bf16.mxu0 0
  %2427 = vmatpush1.bf16.msra.mxu0 0
  %2428 = vmatprep.subr.bf16.mxu0 0
  %2429 = vmatpush1.bf16.msra.mxu0 0
  %2430 = vmatprep.subr.bf16.mxu0 0
  %2431 = vmatpush1.bf16.msra.mxu0 0
  %2432 = vmatprep.subr.bf16.mxu0 0
  %2433 = vmatpush1.bf16.msra.mxu0 0
  %2434 = vmatprep.subr.bf16.mxu0 0
  %2435 = vmatpush1.bf16.msra.mxu0 0
  %2436 = vmatprep.mubr.bf16.mxu0 0
  %2437 = vmatmul.mubr.bf16.gmra.mrb[0].mxu0 %v2387
  %v2438 = vpop.f32.mrb[0].mxu0
  %v2439 = vadd.f32 0.0, %v2438
  %v2440 = vpop.f32.mrb[0].mxu0
  %v2441 = vpop.f32.mrb[0].mxu0
  %v2442 = vadd.f32 0.0, %v2441
  %v2443 = vpop.f32.mrb[0].mxu0
  %2444 = vmatprep.mubr.bf16.mxu0 0
  %2445 = vmatmul.mubr.bf16.gmra.mrb[0].mxu0 %v2390
  %v2446 = vpop.f32.mrb[0].mxu0
  %v2447 = vadd.f32 0.0, %v2446
  %v2448 = vpop.f32.mrb[0].mxu0
  %v2449 = vpop.f32.mrb[0].mxu0
  %v2450 = vadd.f32 0.0, %v2449
  %v2451 = vpop.f32.mrb[0].mxu0
  %2452 = vmatprep.mubr.bf16.mxu0 0
  %2453 = vmatmul.mubr.bf16.gmra.mrb[0].mxu0 %v2393
  %v2454 = vpop.f32.mrb[0].mxu0
  %v2455 = vadd.f32 0.0, %v2454
  %v2456 = vpop.f32.mrb[0].mxu0
  %v2457 = vpop.f32.mrb[0].mxu0
  %v2458 = vadd.f32 0.0, %v2457
  %v2459 = vpop.f32.mrb[0].mxu0
  %2460 = vmatprep.mubr.bf16.mxu0 0
  %2461 = vmatmul.mubr.bf16.gmra.mrb[0].mxu0 %v2396
  %v2462 = vpop.f32.mrb[0].mxu0
  %v2463 = vadd.f32 0.0, %v2462
  %v2464 = vpop.f32.mrb[0].mxu0
  %v2465 = vpop.f32.mrb[0].mxu0
  %v2466 = vadd.f32 0.0, %v2465
  %v2467 = vpop.f32.mrb[0].mxu0
  %2468 = vmatprep.mubr.bf16.mxu0 0
  %2469 = vmatmul.mubr.bf16.gmra.mrb[0].mxu0 %v2399
  %v2470 = vpop.f32.mrb[0].mxu0
  %v2471 = vadd.f32 0.0, %v2470
  %v2472 = vpop.f32.mrb[0].mxu0
  %v2473 = vpop.f32.mrb[0].mxu0
  %v2474 = vadd.f32 0.0, %v2473
  %v2475 = vpop.f32.mrb[0].mxu0
  %2476 = vmatprep.mubr.bf16.mxu0 0
  %2477 = vmatmul.mubr.bf16.gmra.mrb[0].mxu0 %v2402
  %v2478 = vpop.f32.mrb[0].mxu0
  %v2479 = vadd.f32 0.0, %v2478
  %v2480 = vpop.f32.mrb[0].mxu0
  %v2481 = vpop.f32.mrb[0].mxu0
  %v2482 = vpop.f32.mrb[0].mxu0
  %2483 = vdwg.mxu0
  %v2484 = vadd.f32 %v2051, %v2439
  %v2485 = vadd.f32 %v2052, %v2442
  %v2486 = vadd.f32 %v2053, %v2447
  %v2487 = vadd.f32 %v2054, %v2450
  %v2488 = vadd.f32 %v2055, %v2455
  %v2489 = vadd.f32 %v2056, %v2458
  %v2490 = vadd.f32 %v2057, %v2463
  %v2491 = vadd.f32 %v2058, %v2466
  %v2492 = vadd.f32 %v2059, %v2471
  %v2493 = vadd.f32 %v2060, %v2474
  %v2494 = vadd.f32 %v2061, %v2479
  %s2495 = scalar_lea.vmem %s3, 704
  %v2496 = vld [vmem:[%s2495] sm:$0xff]
  %v2497 = vld [vmem:[%s2495 + $0x8] sm:$0xff]
  %v2498 = vld [vmem:[%s2495 + $0x10] sm:$0xff]
  %v2499 = vld [vmem:[%s2495 + $0x18] sm:$0xff]
  %v2500 = vld [vmem:[%s2495 + $0x20] sm:$0xff]
  %v2501 = vld [vmem:[%s2495 + $0x28] sm:$0xff]
  %v2502 = vld [vmem:[%s2495 + $0x30] sm:$0xff]
  %v2503 = vld [vmem:[%s2495 + $0x38] sm:$0xff]
  %v2504 = vld [vmem:[%s2495 + $0x40] sm:$0xff]
  %v2505 = vld [vmem:[%s2495 + $0x48] sm:$0xff]
  %v2506 = vld [vmem:[%s2495 + $0x50] sm:$0xff]
  %v2507 = vld [vmem:[%s2495 + $0x58] sm:$0xff]
  %v2508 = vld [vmem:[%s2495 + $0x60] sm:$0xff]
  %v2509 = vld [vmem:[%s2495 + $0x68] sm:$0xff]
  %v2510 = vld [vmem:[%s2495 + $0x70] sm:$0xff]
  %v2511 = vld [vmem:[%s2495 + $0x78] sm:$0xff]
  %v2512 = vld [vmem:[%s2495 + $0x80] sm:$0xff]
  %v2513 = vld [vmem:[%s2495 + $0x88] sm:$0xff]
  %v2514 = vld [vmem:[%s2495 + $0x90] sm:$0xff]
  %v2515 = vld [vmem:[%s2495 + $0x98] sm:$0xff]
  %v2516 = vld [vmem:[%s2495 + $0xa0] sm:$0x11]
  %v2517 = vld [vmem:[%s2495 + $0xa8] sm:$0x11]
  %v2540 = vunpack.c.l.b16 %v2496
  %v2541 = vunpack.c.h.b16 %v2496
  %v2542 = vunpack.c.l.b16 %v2497
  %v2543 = vunpack.c.h.b16 %v2497
  %v2544 = vunpack.c.l.b16 %v2498
  %v2545 = vunpack.c.h.b16 %v2498
  %v2546 = vunpack.c.l.b16 %v2499
  %v2547 = vunpack.c.h.b16 %v2499
  %v2548 = vunpack.c.l.b16 %v2500
  %v2549 = vunpack.c.h.b16 %v2500
  %v2550 = vunpack.c.l.b16 %v2501
  %v2551 = vunpack.c.h.b16 %v2501
  %v2552 = vunpack.c.l.b16 %v2502
  %v2553 = vunpack.c.h.b16 %v2502
  %v2554 = vunpack.c.l.b16 %v2503
  %v2555 = vunpack.c.h.b16 %v2503
  %v2556 = vunpack.c.l.b16 %v2504
  %v2557 = vunpack.c.h.b16 %v2504
  %v2558 = vunpack.c.l.b16 %v2505
  %v2559 = vunpack.c.h.b16 %v2505
  %v2560 = vunpack.c.l.b16 %v2506
  %v2561 = vunpack.c.h.b16 %v2506
  %v2562 = vunpack.c.l.b16 %v2507
  %v2563 = vunpack.c.h.b16 %v2507
  %v2564 = vunpack.c.l.b16 %v2508
  %v2565 = vunpack.c.h.b16 %v2508
  %v2566 = vunpack.c.l.b16 %v2509
  %v2567 = vunpack.c.h.b16 %v2509
  %v2568 = vunpack.c.l.b16 %v2510
  %v2569 = vunpack.c.h.b16 %v2510
  %v2570 = vunpack.c.l.b16 %v2511
  %v2571 = vunpack.c.h.b16 %v2511
  %v2572 = vunpack.c.l.b16 %v2512
  %v2573 = vunpack.c.h.b16 %v2512
  %v2574 = vunpack.c.l.b16 %v2513
  %v2575 = vunpack.c.h.b16 %v2513
  %v2576 = vunpack.c.l.b16 %v2514
  %v2577 = vunpack.c.h.b16 %v2514
  %v2578 = vunpack.c.l.b16 %v2515
  %v2579 = vunpack.c.h.b16 %v2515
  %v2580 = vunpack.c.l.b16 %v2516
  %v2581 = vunpack.c.h.b16 %v2516
  %v2582 = vunpack.c.l.b16 %v2517
  %v2583 = vunpack.c.h.b16 %v2517
  %v2584 = vpack.c.b16 %v2544, %v2540
  %v2585 = vpack.c.b16 %v2545, %v2541
  %v2586 = vpack.c.b16 %v2546, %v2542
  %v2587 = vpack.c.b16 %v2547, %v2543
  %v2588 = vpack.c.b16 %v2552, %v2548
  %v2589 = vpack.c.b16 %v2553, %v2549
  %v2590 = vpack.c.b16 %v2554, %v2550
  %v2591 = vpack.c.b16 %v2555, %v2551
  %v2592 = vpack.c.b16 %v2560, %v2556
  %v2593 = vpack.c.b16 %v2561, %v2557
  %v2594 = vpack.c.b16 %v2562, %v2558
  %v2595 = vpack.c.b16 %v2563, %v2559
  %v2596 = vpack.c.b16 %v2568, %v2564
  %v2597 = vpack.c.b16 %v2569, %v2565
  %v2598 = vpack.c.b16 %v2570, %v2566
  %v2599 = vpack.c.b16 %v2571, %v2567
  %v2600 = vpack.c.b16 %v2576, %v2572
  %v2601 = vpack.c.b16 %v2577, %v2573
  %v2602 = vpack.c.b16 %v2578, %v2574
  %v2603 = vpack.c.b16 %v2579, %v2575
  %v2604 = vpack.c.b16 %v2580, %v2580
  %v2605 = vpack.c.b16 %v2581, %v2581
  %v2606 = vpack.c.b16 %v2582, %v2582
  %v2607 = vpack.c.b16 %v2583, %v2583
  %v2627 = vsel %vm916, %v2587, 0
  %v2630 = vsel %vm916, %v2591, 0
  %v2633 = vsel %vm916, %v2595, 0
  %v2636 = vsel %vm916, %v2599, 0
  %v2639 = vsel %vm916, %v2603, 0
  %v2642 = vsel %vm916, %v2607, 0
  %2644 = vmatprep.subr.bf16.mxu0 0
  %2645 = vmatpush1.bf16.msra.mxu0 %v761
  %2646 = vmatprep.subr.bf16.mxu0 0
  %2647 = vmatpush1.bf16.msra.mxu0 %v762
  %2648 = vmatprep.subr.bf16.mxu0 0
  %2649 = vmatpush1.bf16.msra.mxu0 %v763
  %2650 = vmatprep.subr.bf16.mxu0 0
  %2651 = vmatpush1.bf16.msra.mxu0 %v764
  %2652 = vmatprep.subr.bf16.mxu0 0
  %2653 = vmatpush1.bf16.msra.mxu0 %v765
  %2654 = vmatprep.subr.bf16.mxu0 0
  %2655 = vmatpush1.bf16.msra.mxu0 %v766
  %2656 = vmatprep.subr.bf16.mxu0 0
  %2657 = vmatpush1.bf16.msra.mxu0 %v767
  %2658 = vmatprep.subr.bf16.mxu0 0
  %2659 = vmatpush1.bf16.msra.mxu0 %v768
  %2660 = vmatprep.subr.bf16.mxu0 0
  %2661 = vmatpush1.bf16.msra.mxu0 %v769
  %2662 = vmatprep.subr.bf16.mxu0 0
  %2663 = vmatpush1.bf16.msra.mxu0 %v770
  %2664 = vmatprep.subr.bf16.mxu0 0
  %2665 = vmatpush1.bf16.msra.mxu0 %v771
  %2666 = vmatprep.subr.bf16.mxu0 0
  %2667 = vmatpush1.bf16.msra.mxu0 %v772
  %2668 = vmatprep.subr.bf16.mxu0 0
  %2669 = vmatpush1.bf16.msra.mxu0 %v773
  %2670 = vmatprep.subr.bf16.mxu0 0
  %2671 = vmatpush1.bf16.msra.mxu0 %v774
  %2672 = vmatprep.subr.bf16.mxu0 0
  %2673 = vmatpush1.bf16.msra.mxu0 %v775
  %2674 = vmatprep.subr.bf16.mxu0 0
  %2675 = vmatpush1.bf16.msra.mxu0 %v776
  %2676 = vmatprep.mubr.bf16.mxu0 %v2585
  %2677 = vmatmul.mubr.bf16.gmra.mrb[0].mxu0 %v2584
  %v2678 = vpop.f32.mrb[0].mxu0
  %v2679 = vadd.f32 0.0, %v2678
  %v2680 = vpop.f32.mrb[0].mxu0
  %v2681 = vpop.f32.mrb[0].mxu0
  %v2682 = vadd.f32 0.0, %v2681
  %v2683 = vpop.f32.mrb[0].mxu0
  %2684 = vmatprep.mubr.bf16.mxu0 %v2589
  %2685 = vmatmul.mubr.bf16.gmra.mrb[0].mxu0 %v2588
  %v2686 = vpop.f32.mrb[0].mxu0
  %v2687 = vadd.f32 0.0, %v2686
  %v2688 = vpop.f32.mrb[0].mxu0
  %v2689 = vpop.f32.mrb[0].mxu0
  %v2690 = vadd.f32 0.0, %v2689
  %v2691 = vpop.f32.mrb[0].mxu0
  %2692 = vmatprep.mubr.bf16.mxu0 %v2593
  %2693 = vmatmul.mubr.bf16.gmra.mrb[0].mxu0 %v2592
  %v2694 = vpop.f32.mrb[0].mxu0
  %v2695 = vadd.f32 0.0, %v2694
  %v2696 = vpop.f32.mrb[0].mxu0
  %v2697 = vpop.f32.mrb[0].mxu0
  %v2698 = vadd.f32 0.0, %v2697
  %v2699 = vpop.f32.mrb[0].mxu0
  %2700 = vmatprep.mubr.bf16.mxu0 %v2597
  %2701 = vmatmul.mubr.bf16.gmra.mrb[0].mxu0 %v2596
  %v2702 = vpop.f32.mrb[0].mxu0
  %v2703 = vadd.f32 0.0, %v2702
  %v2704 = vpop.f32.mrb[0].mxu0
  %v2705 = vpop.f32.mrb[0].mxu0
  %v2706 = vadd.f32 0.0, %v2705
  %v2707 = vpop.f32.mrb[0].mxu0
  %2708 = vmatprep.mubr.bf16.mxu0 %v2601
  %2709 = vmatmul.mubr.bf16.gmra.mrb[0].mxu0 %v2600
  %v2710 = vpop.f32.mrb[0].mxu0
  %v2711 = vadd.f32 0.0, %v2710
  %v2712 = vpop.f32.mrb[0].mxu0
  %v2713 = vpop.f32.mrb[0].mxu0
  %v2714 = vadd.f32 0.0, %v2713
  %v2715 = vpop.f32.mrb[0].mxu0
  %2716 = vmatprep.mubr.bf16.mxu0 %v2605
  %2717 = vmatmul.mubr.bf16.gmra.mrb[0].mxu0 %v2604
  %v2718 = vpop.f32.mrb[0].mxu0
  %v2719 = vadd.f32 0.0, %v2718
  %v2720 = vpop.f32.mrb[0].mxu0
  %v2721 = vpop.f32.mrb[0].mxu0
  %v2722 = vpop.f32.mrb[0].mxu0
  %2723 = vdwg.mxu0
  %2724 = vmatprep.subr.bf16.mxu0 0
  %2725 = vmatpush1.bf16.msra.mxu0 %v777
  %2726 = vmatprep.subr.bf16.mxu0 0
  %2727 = vmatpush1.bf16.msra.mxu0 %v778
  %2728 = vmatprep.subr.bf16.mxu0 0
  %2729 = vmatpush1.bf16.msra.mxu0 %v779
  %2730 = vmatprep.subr.bf16.mxu0 0
  %2731 = vmatpush1.bf16.msra.mxu0 %v780
  %2732 = vmatprep.subr.bf16.mxu0 0
  %2733 = vmatpush1.bf16.msra.mxu0 %v781
  %2734 = vmatprep.subr.bf16.mxu0 0
  %2735 = vmatpush1.bf16.msra.mxu0 %v782
  %2736 = vmatprep.subr.bf16.mxu0 0
  %2737 = vmatpush1.bf16.msra.mxu0 %v783
  %2738 = vmatprep.subr.bf16.mxu0 0
  %2739 = vmatpush1.bf16.msra.mxu0 %v784
  %2740 = vmatprep.subr.bf16.mxu0 0
  %2741 = vmatpush1.bf16.msra.mxu0 %v785
  %2742 = vmatprep.subr.bf16.mxu0 0
  %2743 = vmatpush1.bf16.msra.mxu0 0
  %2744 = vmatprep.subr.bf16.mxu0 0
  %2745 = vmatpush1.bf16.msra.mxu0 0
  %2746 = vmatprep.subr.bf16.mxu0 0
  %2747 = vmatpush1.bf16.msra.mxu0 0
  %2748 = vmatprep.subr.bf16.mxu0 0
  %2749 = vmatpush1.bf16.msra.mxu0 0
  %2750 = vmatprep.subr.bf16.mxu0 0
  %2751 = vmatpush1.bf16.msra.mxu0 0
  %2752 = vmatprep.subr.bf16.mxu0 0
  %2753 = vmatpush1.bf16.msra.mxu0 0
  %2754 = vmatprep.subr.bf16.mxu0 0
  %2755 = vmatpush1.bf16.msra.mxu0 0
  %2756 = vmatprep.mubr.bf16.mxu0 %v2627
  %2757 = vmatmul.mubr.bf16.gmra.mrb[0].mxu0 %v2586
  %v2758 = vpop.f32.mrb[0].mxu0
  %v2759 = vadd.f32 %v2679, %v2758
  %v2760 = vpop.f32.mrb[0].mxu0
  %v2761 = vpop.f32.mrb[0].mxu0
  %v2762 = vadd.f32 %v2682, %v2761
  %v2763 = vpop.f32.mrb[0].mxu0
  %2764 = vmatprep.mubr.bf16.mxu0 %v2630
  %2765 = vmatmul.mubr.bf16.gmra.mrb[0].mxu0 %v2590
  %v2766 = vpop.f32.mrb[0].mxu0
  %v2767 = vadd.f32 %v2687, %v2766
  %v2768 = vpop.f32.mrb[0].mxu0
  %v2769 = vpop.f32.mrb[0].mxu0
  %v2770 = vadd.f32 %v2690, %v2769
  %v2771 = vpop.f32.mrb[0].mxu0
  %2772 = vmatprep.mubr.bf16.mxu0 %v2633
  %2773 = vmatmul.mubr.bf16.gmra.mrb[0].mxu0 %v2594
  %v2774 = vpop.f32.mrb[0].mxu0
  %v2775 = vadd.f32 %v2695, %v2774
  %v2776 = vpop.f32.mrb[0].mxu0
  %v2777 = vpop.f32.mrb[0].mxu0
  %v2778 = vadd.f32 %v2698, %v2777
  %v2779 = vpop.f32.mrb[0].mxu0
  %2780 = vmatprep.mubr.bf16.mxu0 %v2636
  %2781 = vmatmul.mubr.bf16.gmra.mrb[0].mxu0 %v2598
  %v2782 = vpop.f32.mrb[0].mxu0
  %v2783 = vadd.f32 %v2703, %v2782
  %v2784 = vpop.f32.mrb[0].mxu0
  %v2785 = vpop.f32.mrb[0].mxu0
  %v2786 = vadd.f32 %v2706, %v2785
  %v2787 = vpop.f32.mrb[0].mxu0
  %2788 = vmatprep.mubr.bf16.mxu0 %v2639
  %2789 = vmatmul.mubr.bf16.gmra.mrb[0].mxu0 %v2602
  %v2790 = vpop.f32.mrb[0].mxu0
  %v2791 = vadd.f32 %v2711, %v2790
  %v2792 = vpop.f32.mrb[0].mxu0
  %v2793 = vpop.f32.mrb[0].mxu0
  %v2794 = vadd.f32 %v2714, %v2793
  %v2795 = vpop.f32.mrb[0].mxu0
  %2796 = vmatprep.mubr.bf16.mxu0 %v2642
  %2797 = vmatmul.mubr.bf16.gmra.mrb[0].mxu0 %v2606
  %v2798 = vpop.f32.mrb[0].mxu0
  %v2799 = vadd.f32 %v2719, %v2798
  %v2800 = vpop.f32.mrb[0].mxu0
  %v2801 = vpop.f32.mrb[0].mxu0
  %v2802 = vpop.f32.mrb[0].mxu0
  %2803 = vdwg.mxu0
  %v2804 = vpack.c.bf16 %v2762, %v2759
  %v2805 = vpack.c.bf16 %v2770, %v2767
  %v2806 = vpack.c.bf16 %v2778, %v2775
  %v2807 = vpack.c.bf16 %v2786, %v2783
  %v2808 = vpack.c.bf16 %v2794, %v2791
  %v2809 = vpack.c.bf16 %v2799, %v2799
  %s2810 = scalar_lea.vmem %s4, 32
  %v2811 = vld [vmem:[%s2810] sm:$0xf]
  %v2812 = vld [vmem:[%s2810 + $0x4] sm:$0xf]
  %v2815 = vunpack.c.l.b16 %v2811
  %v2816 = vunpack.c.l.b16 %v2812
  %v2817 = vpack.c.b16 %v2816, %v2815
  %v2820 = vsel %vm916, %v2804, 0
  %v2823 = vsel %vm916, %v2805, 0
  %v2826 = vsel %vm916, %v2806, 0
  %v2829 = vsel %vm916, %v2807, 0
  %v2832 = vsel %vm916, %v2808, 0
  %v2835 = vsel %vm916, %v2809, 0
  %2837 = vmatprep.subr.bf16.mxu0 0
  %2838 = vmatpush1.bf16.msra.mxu0 %v2817
  %2839 = vmatprep.subr.bf16.mxu0 0
  %2840 = vmatpush1.bf16.msra.mxu0 0
  %2841 = vmatprep.subr.bf16.mxu0 0
  %2842 = vmatpush1.bf16.msra.mxu0 0
  %2843 = vmatprep.subr.bf16.mxu0 0
  %2844 = vmatpush1.bf16.msra.mxu0 0
  %2845 = vmatprep.subr.bf16.mxu0 0
  %2846 = vmatpush1.bf16.msra.mxu0 0
  %2847 = vmatprep.subr.bf16.mxu0 0
  %2848 = vmatpush1.bf16.msra.mxu0 0
  %2849 = vmatprep.subr.bf16.mxu0 0
  %2850 = vmatpush1.bf16.msra.mxu0 0
  %2851 = vmatprep.subr.bf16.mxu0 0
  %2852 = vmatpush1.bf16.msra.mxu0 0
  %2853 = vmatprep.subr.bf16.mxu0 0
  %2854 = vmatpush1.bf16.msra.mxu0 0
  %2855 = vmatprep.subr.bf16.mxu0 0
  %2856 = vmatpush1.bf16.msra.mxu0 0
  %2857 = vmatprep.subr.bf16.mxu0 0
  %2858 = vmatpush1.bf16.msra.mxu0 0
  %2859 = vmatprep.subr.bf16.mxu0 0
  %2860 = vmatpush1.bf16.msra.mxu0 0
  %2861 = vmatprep.subr.bf16.mxu0 0
  %2862 = vmatpush1.bf16.msra.mxu0 0
  %2863 = vmatprep.subr.bf16.mxu0 0
  %2864 = vmatpush1.bf16.msra.mxu0 0
  %2865 = vmatprep.subr.bf16.mxu0 0
  %2866 = vmatpush1.bf16.msra.mxu0 0
  %2867 = vmatprep.subr.bf16.mxu0 0
  %2868 = vmatpush1.bf16.msra.mxu0 0
  %2869 = vmatprep.mubr.bf16.mxu0 0
  %2870 = vmatmul.mubr.bf16.gmra.mrb[0].mxu0 %v2820
  %v2871 = vpop.f32.mrb[0].mxu0
  %v2872 = vadd.f32 0.0, %v2871
  %v2873 = vpop.f32.mrb[0].mxu0
  %v2874 = vpop.f32.mrb[0].mxu0
  %v2875 = vadd.f32 0.0, %v2874
  %v2876 = vpop.f32.mrb[0].mxu0
  %2877 = vmatprep.mubr.bf16.mxu0 0
  %2878 = vmatmul.mubr.bf16.gmra.mrb[0].mxu0 %v2823
  %v2879 = vpop.f32.mrb[0].mxu0
  %v2880 = vadd.f32 0.0, %v2879
  %v2881 = vpop.f32.mrb[0].mxu0
  %v2882 = vpop.f32.mrb[0].mxu0
  %v2883 = vadd.f32 0.0, %v2882
  %v2884 = vpop.f32.mrb[0].mxu0
  %2885 = vmatprep.mubr.bf16.mxu0 0
  %2886 = vmatmul.mubr.bf16.gmra.mrb[0].mxu0 %v2826
  %v2887 = vpop.f32.mrb[0].mxu0
  %v2888 = vadd.f32 0.0, %v2887
  %v2889 = vpop.f32.mrb[0].mxu0
  %v2890 = vpop.f32.mrb[0].mxu0
  %v2891 = vadd.f32 0.0, %v2890
  %v2892 = vpop.f32.mrb[0].mxu0
  %2893 = vmatprep.mubr.bf16.mxu0 0
  %2894 = vmatmul.mubr.bf16.gmra.mrb[0].mxu0 %v2829
  %v2895 = vpop.f32.mrb[0].mxu0
  %v2896 = vadd.f32 0.0, %v2895
  %v2897 = vpop.f32.mrb[0].mxu0
  %v2898 = vpop.f32.mrb[0].mxu0
  %v2899 = vadd.f32 0.0, %v2898
  %v2900 = vpop.f32.mrb[0].mxu0
  %2901 = vmatprep.mubr.bf16.mxu0 0
  %2902 = vmatmul.mubr.bf16.gmra.mrb[0].mxu0 %v2832
  %v2903 = vpop.f32.mrb[0].mxu0
  %v2904 = vadd.f32 0.0, %v2903
  %v2905 = vpop.f32.mrb[0].mxu0
  %v2906 = vpop.f32.mrb[0].mxu0
  %v2907 = vadd.f32 0.0, %v2906
  %v2908 = vpop.f32.mrb[0].mxu0
  %2909 = vmatprep.mubr.bf16.mxu0 0
  %2910 = vmatmul.mubr.bf16.gmra.mrb[0].mxu0 %v2835
  %v2911 = vpop.f32.mrb[0].mxu0
  %v2912 = vadd.f32 0.0, %v2911
  %v2913 = vpop.f32.mrb[0].mxu0
  %v2914 = vpop.f32.mrb[0].mxu0
  %v2915 = vpop.f32.mrb[0].mxu0
  %2916 = vdwg.mxu0
  %v2917 = vadd.f32 %v2484, %v2872
  %v2918 = vadd.f32 %v2485, %v2875
  %v2919 = vadd.f32 %v2486, %v2880
  %v2920 = vadd.f32 %v2487, %v2883
  %v2921 = vadd.f32 %v2488, %v2888
  %v2922 = vadd.f32 %v2489, %v2891
  %v2923 = vadd.f32 %v2490, %v2896
  %v2924 = vadd.f32 %v2491, %v2899
  %v2925 = vadd.f32 %v2492, %v2904
  %v2926 = vadd.f32 %v2493, %v2907
  %v2927 = vadd.f32 %v2494, %v2912
  %s2928 = scalar_lea.vmem %s3, 880
  %v2929 = vld [vmem:[%s2928] sm:$0xff]
  %v2930 = vld [vmem:[%s2928 + $0x8] sm:$0xff]
  %v2931 = vld [vmem:[%s2928 + $0x10] sm:$0xff]
  %v2932 = vld [vmem:[%s2928 + $0x18] sm:$0xff]
  %v2933 = vld [vmem:[%s2928 + $0x20] sm:$0xff]
  %v2934 = vld [vmem:[%s2928 + $0x28] sm:$0xff]
  %v2935 = vld [vmem:[%s2928 + $0x30] sm:$0xff]
  %v2936 = vld [vmem:[%s2928 + $0x38] sm:$0xff]
  %v2937 = vld [vmem:[%s2928 + $0x40] sm:$0xff]
  %v2938 = vld [vmem:[%s2928 + $0x48] sm:$0xff]
  %v2939 = vld [vmem:[%s2928 + $0x50] sm:$0xff]
  %v2940 = vld [vmem:[%s2928 + $0x58] sm:$0xff]
  %v2941 = vld [vmem:[%s2928 + $0x60] sm:$0xff]
  %v2942 = vld [vmem:[%s2928 + $0x68] sm:$0xff]
  %v2943 = vld [vmem:[%s2928 + $0x70] sm:$0xff]
  %v2944 = vld [vmem:[%s2928 + $0x78] sm:$0xff]
  %v2945 = vld [vmem:[%s2928 + $0x80] sm:$0xff]
  %v2946 = vld [vmem:[%s2928 + $0x88] sm:$0xff]
  %v2947 = vld [vmem:[%s2928 + $0x90] sm:$0xff]
  %v2948 = vld [vmem:[%s2928 + $0x98] sm:$0xff]
  %v2949 = vld [vmem:[%s2928 + $0xa0] sm:$0x11]
  %v2950 = vld [vmem:[%s2928 + $0xa8] sm:$0x11]
  %v2973 = vunpack.c.l.b16 %v2929
  %v2974 = vunpack.c.h.b16 %v2929
  %v2975 = vunpack.c.l.b16 %v2930
  %v2976 = vunpack.c.h.b16 %v2930
  %v2977 = vunpack.c.l.b16 %v2931
  %v2978 = vunpack.c.h.b16 %v2931
  %v2979 = vunpack.c.l.b16 %v2932
  %v2980 = vunpack.c.h.b16 %v2932
  %v2981 = vunpack.c.l.b16 %v2933
  %v2982 = vunpack.c.h.b16 %v2933
  %v2983 = vunpack.c.l.b16 %v2934
  %v2984 = vunpack.c.h.b16 %v2934
  %v2985 = vunpack.c.l.b16 %v2935
  %v2986 = vunpack.c.h.b16 %v2935
  %v2987 = vunpack.c.l.b16 %v2936
  %v2988 = vunpack.c.h.b16 %v2936
  %v2989 = vunpack.c.l.b16 %v2937
  %v2990 = vunpack.c.h.b16 %v2937
  %v2991 = vunpack.c.l.b16 %v2938
  %v2992 = vunpack.c.h.b16 %v2938
  %v2993 = vunpack.c.l.b16 %v2939
  %v2994 = vunpack.c.h.b16 %v2939
  %v2995 = vunpack.c.l.b16 %v2940
  %v2996 = vunpack.c.h.b16 %v2940
  %v2997 = vunpack.c.l.b16 %v2941
  %v2998 = vunpack.c.h.b16 %v2941
  %v2999 = vunpack.c.l.b16 %v2942
  %v3000 = vunpack.c.h.b16 %v2942
  %v3001 = vunpack.c.l.b16 %v2943
  %v3002 = vunpack.c.h.b16 %v2943
  %v3003 = vunpack.c.l.b16 %v2944
  %v3004 = vunpack.c.h.b16 %v2944
  %v3005 = vunpack.c.l.b16 %v2945
  %v3006 = vunpack.c.h.b16 %v2945
  %v3007 = vunpack.c.l.b16 %v2946
  %v3008 = vunpack.c.h.b16 %v2946
  %v3009 = vunpack.c.l.b16 %v2947
  %v3010 = vunpack.c.h.b16 %v2947
  %v3011 = vunpack.c.l.b16 %v2948
  %v3012 = vunpack.c.h.b16 %v2948
  %v3013 = vunpack.c.l.b16 %v2949
  %v3014 = vunpack.c.h.b16 %v2949
  %v3015 = vunpack.c.l.b16 %v2950
  %v3016 = vunpack.c.h.b16 %v2950
  %v3017 = vpack.c.b16 %v2977, %v2973
  %v3018 = vpack.c.b16 %v2978, %v2974
  %v3019 = vpack.c.b16 %v2979, %v2975
  %v3020 = vpack.c.b16 %v2980, %v2976
  %v3021 = vpack.c.b16 %v2985, %v2981
  %v3022 = vpack.c.b16 %v2986, %v2982
  %v3023 = vpack.c.b16 %v2987, %v2983
  %v3024 = vpack.c.b16 %v2988, %v2984
  %v3025 = vpack.c.b16 %v2993, %v2989
  %v3026 = vpack.c.b16 %v2994, %v2990
  %v3027 = vpack.c.b16 %v2995, %v2991
  %v3028 = vpack.c.b16 %v2996, %v2992
  %v3029 = vpack.c.b16 %v3001, %v2997
  %v3030 = vpack.c.b16 %v3002, %v2998
  %v3031 = vpack.c.b16 %v3003, %v2999
  %v3032 = vpack.c.b16 %v3004, %v3000
  %v3033 = vpack.c.b16 %v3009, %v3005
  %v3034 = vpack.c.b16 %v3010, %v3006
  %v3035 = vpack.c.b16 %v3011, %v3007
  %v3036 = vpack.c.b16 %v3012, %v3008
  %v3037 = vpack.c.b16 %v3013, %v3013
  %v3038 = vpack.c.b16 %v3014, %v3014
  %v3039 = vpack.c.b16 %v3015, %v3015
  %v3040 = vpack.c.b16 %v3016, %v3016
  %v3060 = vsel %vm916, %v3020, 0
  %v3063 = vsel %vm916, %v3024, 0
  %v3066 = vsel %vm916, %v3028, 0
  %v3069 = vsel %vm916, %v3032, 0
  %v3072 = vsel %vm916, %v3036, 0
  %v3075 = vsel %vm916, %v3040, 0
  %3077 = vmatprep.subr.bf16.mxu0 0
  %3078 = vmatpush1.bf16.msra.mxu0 %v761
  %3079 = vmatprep.subr.bf16.mxu0 0
  %3080 = vmatpush1.bf16.msra.mxu0 %v762
  %3081 = vmatprep.subr.bf16.mxu0 0
  %3082 = vmatpush1.bf16.msra.mxu0 %v763
  %3083 = vmatprep.subr.bf16.mxu0 0
  %3084 = vmatpush1.bf16.msra.mxu0 %v764
  %3085 = vmatprep.subr.bf16.mxu0 0
  %3086 = vmatpush1.bf16.msra.mxu0 %v765
  %3087 = vmatprep.subr.bf16.mxu0 0
  %3088 = vmatpush1.bf16.msra.mxu0 %v766
  %3089 = vmatprep.subr.bf16.mxu0 0
  %3090 = vmatpush1.bf16.msra.mxu0 %v767
  %3091 = vmatprep.subr.bf16.mxu0 0
  %3092 = vmatpush1.bf16.msra.mxu0 %v768
  %3093 = vmatprep.subr.bf16.mxu0 0
  %3094 = vmatpush1.bf16.msra.mxu0 %v769
  %3095 = vmatprep.subr.bf16.mxu0 0
  %3096 = vmatpush1.bf16.msra.mxu0 %v770
  %3097 = vmatprep.subr.bf16.mxu0 0
  %3098 = vmatpush1.bf16.msra.mxu0 %v771
  %3099 = vmatprep.subr.bf16.mxu0 0
  %3100 = vmatpush1.bf16.msra.mxu0 %v772
  %3101 = vmatprep.subr.bf16.mxu0 0
  %3102 = vmatpush1.bf16.msra.mxu0 %v773
  %3103 = vmatprep.subr.bf16.mxu0 0
  %3104 = vmatpush1.bf16.msra.mxu0 %v774
  %3105 = vmatprep.subr.bf16.mxu0 0
  %3106 = vmatpush1.bf16.msra.mxu0 %v775
  %3107 = vmatprep.subr.bf16.mxu0 0
  %3108 = vmatpush1.bf16.msra.mxu0 %v776
  %3109 = vmatprep.mubr.bf16.mxu0 %v3018
  %3110 = vmatmul.mubr.bf16.gmra.mrb[0].mxu0 %v3017
  %v3111 = vpop.f32.mrb[0].mxu0
  %v3112 = vadd.f32 0.0, %v3111
  %v3113 = vpop.f32.mrb[0].mxu0
  %v3114 = vpop.f32.mrb[0].mxu0
  %v3115 = vadd.f32 0.0, %v3114
  %v3116 = vpop.f32.mrb[0].mxu0
  %3117 = vmatprep.mubr.bf16.mxu0 %v3022
  %3118 = vmatmul.mubr.bf16.gmra.mrb[0].mxu0 %v3021
  %v3119 = vpop.f32.mrb[0].mxu0
  %v3120 = vadd.f32 0.0, %v3119
  %v3121 = vpop.f32.mrb[0].mxu0
  %v3122 = vpop.f32.mrb[0].mxu0
  %v3123 = vadd.f32 0.0, %v3122
  %v3124 = vpop.f32.mrb[0].mxu0
  %3125 = vmatprep.mubr.bf16.mxu0 %v3026
  %3126 = vmatmul.mubr.bf16.gmra.mrb[0].mxu0 %v3025
  %v3127 = vpop.f32.mrb[0].mxu0
  %v3128 = vadd.f32 0.0, %v3127
  %v3129 = vpop.f32.mrb[0].mxu0
  %v3130 = vpop.f32.mrb[0].mxu0
  %v3131 = vadd.f32 0.0, %v3130
  %v3132 = vpop.f32.mrb[0].mxu0
  %3133 = vmatprep.mubr.bf16.mxu0 %v3030
  %3134 = vmatmul.mubr.bf16.gmra.mrb[0].mxu0 %v3029
  %v3135 = vpop.f32.mrb[0].mxu0
  %v3136 = vadd.f32 0.0, %v3135
  %v3137 = vpop.f32.mrb[0].mxu0
  %v3138 = vpop.f32.mrb[0].mxu0
  %v3139 = vadd.f32 0.0, %v3138
  %v3140 = vpop.f32.mrb[0].mxu0
  %3141 = vmatprep.mubr.bf16.mxu0 %v3034
  %3142 = vmatmul.mubr.bf16.gmra.mrb[0].mxu0 %v3033
  %v3143 = vpop.f32.mrb[0].mxu0
  %v3144 = vadd.f32 0.0, %v3143
  %v3145 = vpop.f32.mrb[0].mxu0
  %v3146 = vpop.f32.mrb[0].mxu0
  %v3147 = vadd.f32 0.0, %v3146
  %v3148 = vpop.f32.mrb[0].mxu0
  %3149 = vmatprep.mubr.bf16.mxu0 %v3038
  %3150 = vmatmul.mubr.bf16.gmra.mrb[0].mxu0 %v3037
  %v3151 = vpop.f32.mrb[0].mxu0
  %v3152 = vadd.f32 0.0, %v3151
  %v3153 = vpop.f32.mrb[0].mxu0
  %v3154 = vpop.f32.mrb[0].mxu0
  %v3155 = vpop.f32.mrb[0].mxu0
  %3156 = vdwg.mxu0
  %3157 = vmatprep.subr.bf16.mxu0 0
  %3158 = vmatpush1.bf16.msra.mxu0 %v777
  %3159 = vmatprep.subr.bf16.mxu0 0
  %3160 = vmatpush1.bf16.msra.mxu0 %v778
  %3161 = vmatprep.subr.bf16.mxu0 0
  %3162 = vmatpush1.bf16.msra.mxu0 %v779
  %3163 = vmatprep.subr.bf16.mxu0 0
  %3164 = vmatpush1.bf16.msra.mxu0 %v780
  %3165 = vmatprep.subr.bf16.mxu0 0
  %3166 = vmatpush1.bf16.msra.mxu0 %v781
  %3167 = vmatprep.subr.bf16.mxu0 0
  %3168 = vmatpush1.bf16.msra.mxu0 %v782
  %3169 = vmatprep.subr.bf16.mxu0 0
  %3170 = vmatpush1.bf16.msra.mxu0 %v783
  %3171 = vmatprep.subr.bf16.mxu0 0
  %3172 = vmatpush1.bf16.msra.mxu0 %v784
  %3173 = vmatprep.subr.bf16.mxu0 0
  %3174 = vmatpush1.bf16.msra.mxu0 %v785
  %3175 = vmatprep.subr.bf16.mxu0 0
  %3176 = vmatpush1.bf16.msra.mxu0 0
  %3177 = vmatprep.subr.bf16.mxu0 0
  %3178 = vmatpush1.bf16.msra.mxu0 0
  %3179 = vmatprep.subr.bf16.mxu0 0
  %3180 = vmatpush1.bf16.msra.mxu0 0
  %3181 = vmatprep.subr.bf16.mxu0 0
  %3182 = vmatpush1.bf16.msra.mxu0 0
  %3183 = vmatprep.subr.bf16.mxu0 0
  %3184 = vmatpush1.bf16.msra.mxu0 0
  %3185 = vmatprep.subr.bf16.mxu0 0
  %3186 = vmatpush1.bf16.msra.mxu0 0
  %3187 = vmatprep.subr.bf16.mxu0 0
  %3188 = vmatpush1.bf16.msra.mxu0 0
  %3189 = vmatprep.mubr.bf16.mxu0 %v3060
  %3190 = vmatmul.mubr.bf16.gmra.mrb[0].mxu0 %v3019
  %v3191 = vpop.f32.mrb[0].mxu0
  %v3192 = vadd.f32 %v3112, %v3191
  %v3193 = vpop.f32.mrb[0].mxu0
  %v3194 = vpop.f32.mrb[0].mxu0
  %v3195 = vadd.f32 %v3115, %v3194
  %v3196 = vpop.f32.mrb[0].mxu0
  %3197 = vmatprep.mubr.bf16.mxu0 %v3063
  %3198 = vmatmul.mubr.bf16.gmra.mrb[0].mxu0 %v3023
  %v3199 = vpop.f32.mrb[0].mxu0
  %v3200 = vadd.f32 %v3120, %v3199
  %v3201 = vpop.f32.mrb[0].mxu0
  %v3202 = vpop.f32.mrb[0].mxu0
  %v3203 = vadd.f32 %v3123, %v3202
  %v3204 = vpop.f32.mrb[0].mxu0
  %3205 = vmatprep.mubr.bf16.mxu0 %v3066
  %3206 = vmatmul.mubr.bf16.gmra.mrb[0].mxu0 %v3027
  %v3207 = vpop.f32.mrb[0].mxu0
  %v3208 = vadd.f32 %v3128, %v3207
  %v3209 = vpop.f32.mrb[0].mxu0
  %v3210 = vpop.f32.mrb[0].mxu0
  %v3211 = vadd.f32 %v3131, %v3210
  %v3212 = vpop.f32.mrb[0].mxu0
  %3213 = vmatprep.mubr.bf16.mxu0 %v3069
  %3214 = vmatmul.mubr.bf16.gmra.mrb[0].mxu0 %v3031
  %v3215 = vpop.f32.mrb[0].mxu0
  %v3216 = vadd.f32 %v3136, %v3215
  %v3217 = vpop.f32.mrb[0].mxu0
  %v3218 = vpop.f32.mrb[0].mxu0
  %v3219 = vadd.f32 %v3139, %v3218
  %v3220 = vpop.f32.mrb[0].mxu0
  %3221 = vmatprep.mubr.bf16.mxu0 %v3072
  %3222 = vmatmul.mubr.bf16.gmra.mrb[0].mxu0 %v3035
  %v3223 = vpop.f32.mrb[0].mxu0
  %v3224 = vadd.f32 %v3144, %v3223
  %v3225 = vpop.f32.mrb[0].mxu0
  %v3226 = vpop.f32.mrb[0].mxu0
  %v3227 = vadd.f32 %v3147, %v3226
  %v3228 = vpop.f32.mrb[0].mxu0
  %3229 = vmatprep.mubr.bf16.mxu0 %v3075
  %3230 = vmatmul.mubr.bf16.gmra.mrb[0].mxu0 %v3039
  %v3231 = vpop.f32.mrb[0].mxu0
  %v3232 = vadd.f32 %v3152, %v3231
  %v3233 = vpop.f32.mrb[0].mxu0
  %v3234 = vpop.f32.mrb[0].mxu0
  %v3235 = vpop.f32.mrb[0].mxu0
  %3236 = vdwg.mxu0
  %v3237 = vpack.c.bf16 %v3195, %v3192
  %v3238 = vpack.c.bf16 %v3203, %v3200
  %v3239 = vpack.c.bf16 %v3211, %v3208
  %v3240 = vpack.c.bf16 %v3219, %v3216
  %v3241 = vpack.c.bf16 %v3227, %v3224
  %v3242 = vpack.c.bf16 %v3232, %v3232
  %s3243 = scalar_lea.vmem %s4, 40
  %v3244 = vld [vmem:[%s3243] sm:$0xf]
  %v3245 = vld [vmem:[%s3243 + $0x4] sm:$0xf]
  %v3248 = vunpack.c.l.b16 %v3244
  %v3249 = vunpack.c.l.b16 %v3245
  %v3250 = vpack.c.b16 %v3249, %v3248
  %v3253 = vsel %vm916, %v3237, 0
  %v3256 = vsel %vm916, %v3238, 0
  %v3259 = vsel %vm916, %v3239, 0
  %v3262 = vsel %vm916, %v3240, 0
  %v3265 = vsel %vm916, %v3241, 0
  %v3268 = vsel %vm916, %v3242, 0
  %3270 = vmatprep.subr.bf16.mxu0 0
  %3271 = vmatpush1.bf16.msra.mxu0 %v3250
  %3272 = vmatprep.subr.bf16.mxu0 0
  %3273 = vmatpush1.bf16.msra.mxu0 0
  %3274 = vmatprep.subr.bf16.mxu0 0
  %3275 = vmatpush1.bf16.msra.mxu0 0
  %3276 = vmatprep.subr.bf16.mxu0 0
  %3277 = vmatpush1.bf16.msra.mxu0 0
  %3278 = vmatprep.subr.bf16.mxu0 0
  %3279 = vmatpush1.bf16.msra.mxu0 0
  %3280 = vmatprep.subr.bf16.mxu0 0
  %3281 = vmatpush1.bf16.msra.mxu0 0
  %3282 = vmatprep.subr.bf16.mxu0 0
  %3283 = vmatpush1.bf16.msra.mxu0 0
  %3284 = vmatprep.subr.bf16.mxu0 0
  %3285 = vmatpush1.bf16.msra.mxu0 0
  %3286 = vmatprep.subr.bf16.mxu0 0
  %3287 = vmatpush1.bf16.msra.mxu0 0
  %3288 = vmatprep.subr.bf16.mxu0 0
  %3289 = vmatpush1.bf16.msra.mxu0 0
  %3290 = vmatprep.subr.bf16.mxu0 0
  %3291 = vmatpush1.bf16.msra.mxu0 0
  %3292 = vmatprep.subr.bf16.mxu0 0
  %3293 = vmatpush1.bf16.msra.mxu0 0
  %3294 = vmatprep.subr.bf16.mxu0 0
  %3295 = vmatpush1.bf16.msra.mxu0 0
  %3296 = vmatprep.subr.bf16.mxu0 0
  %3297 = vmatpush1.bf16.msra.mxu0 0
  %3298 = vmatprep.subr.bf16.mxu0 0
  %3299 = vmatpush1.bf16.msra.mxu0 0
  %3300 = vmatprep.subr.bf16.mxu0 0
  %3301 = vmatpush1.bf16.msra.mxu0 0
  %3302 = vmatprep.mubr.bf16.mxu0 0
  %3303 = vmatmul.mubr.bf16.gmra.mrb[0].mxu0 %v3253
  %v3304 = vpop.f32.mrb[0].mxu0
  %v3305 = vadd.f32 0.0, %v3304
  %v3306 = vpop.f32.mrb[0].mxu0
  %v3307 = vpop.f32.mrb[0].mxu0
  %v3308 = vadd.f32 0.0, %v3307
  %v3309 = vpop.f32.mrb[0].mxu0
  %3310 = vmatprep.mubr.bf16.mxu0 0
  %3311 = vmatmul.mubr.bf16.gmra.mrb[0].mxu0 %v3256
  %v3312 = vpop.f32.mrb[0].mxu0
  %v3313 = vadd.f32 0.0, %v3312
  %v3314 = vpop.f32.mrb[0].mxu0
  %v3315 = vpop.f32.mrb[0].mxu0
  %v3316 = vadd.f32 0.0, %v3315
  %v3317 = vpop.f32.mrb[0].mxu0
  %3318 = vmatprep.mubr.bf16.mxu0 0
  %3319 = vmatmul.mubr.bf16.gmra.mrb[0].mxu0 %v3259
  %v3320 = vpop.f32.mrb[0].mxu0
  %v3321 = vadd.f32 0.0, %v3320
  %v3322 = vpop.f32.mrb[0].mxu0
  %v3323 = vpop.f32.mrb[0].mxu0
  %v3324 = vadd.f32 0.0, %v3323
  %v3325 = vpop.f32.mrb[0].mxu0
  %3326 = vmatprep.mubr.bf16.mxu0 0
  %3327 = vmatmul.mubr.bf16.gmra.mrb[0].mxu0 %v3262
  %v3328 = vpop.f32.mrb[0].mxu0
  %v3329 = vadd.f32 0.0, %v3328
  %v3330 = vpop.f32.mrb[0].mxu0
  %v3331 = vpop.f32.mrb[0].mxu0
  %v3332 = vadd.f32 0.0, %v3331
  %v3333 = vpop.f32.mrb[0].mxu0
  %3334 = vmatprep.mubr.bf16.mxu0 0
  %3335 = vmatmul.mubr.bf16.gmra.mrb[0].mxu0 %v3265
  %v3336 = vpop.f32.mrb[0].mxu0
  %v3337 = vadd.f32 0.0, %v3336
  %v3338 = vpop.f32.mrb[0].mxu0
  %v3339 = vpop.f32.mrb[0].mxu0
  %v3340 = vadd.f32 0.0, %v3339
  %v3341 = vpop.f32.mrb[0].mxu0
  %3342 = vmatprep.mubr.bf16.mxu0 0
  %3343 = vmatmul.mubr.bf16.gmra.mrb[0].mxu0 %v3268
  %v3344 = vpop.f32.mrb[0].mxu0
  %v3345 = vadd.f32 0.0, %v3344
  %v3346 = vpop.f32.mrb[0].mxu0
  %v3347 = vpop.f32.mrb[0].mxu0
  %v3348 = vpop.f32.mrb[0].mxu0
  %3349 = vdwg.mxu0
  %v3350 = vadd.f32 %v2917, %v3305
  %v3351 = vadd.f32 %v2918, %v3308
  %v3352 = vadd.f32 %v2919, %v3313
  %v3353 = vadd.f32 %v2920, %v3316
  %v3354 = vadd.f32 %v2921, %v3321
  %v3355 = vadd.f32 %v2922, %v3324
  %v3356 = vadd.f32 %v2923, %v3329
  %v3357 = vadd.f32 %v2924, %v3332
  %v3358 = vadd.f32 %v2925, %v3337
  %v3359 = vadd.f32 %v2926, %v3340
  %v3360 = vadd.f32 %v2927, %v3345
  %s3361 = scalar_lea.vmem %s3, 1056
  %v3362 = vld [vmem:[%s3361] sm:$0xff]
  %v3363 = vld [vmem:[%s3361 + $0x8] sm:$0xff]
  %v3364 = vld [vmem:[%s3361 + $0x10] sm:$0xff]
  %v3365 = vld [vmem:[%s3361 + $0x18] sm:$0xff]
  %v3366 = vld [vmem:[%s3361 + $0x20] sm:$0xff]
  %v3367 = vld [vmem:[%s3361 + $0x28] sm:$0xff]
  %v3368 = vld [vmem:[%s3361 + $0x30] sm:$0xff]
  %v3369 = vld [vmem:[%s3361 + $0x38] sm:$0xff]
  %v3370 = vld [vmem:[%s3361 + $0x40] sm:$0xff]
  %v3371 = vld [vmem:[%s3361 + $0x48] sm:$0xff]
  %v3372 = vld [vmem:[%s3361 + $0x50] sm:$0xff]
  %v3373 = vld [vmem:[%s3361 + $0x58] sm:$0xff]
  %v3374 = vld [vmem:[%s3361 + $0x60] sm:$0xff]
  %v3375 = vld [vmem:[%s3361 + $0x68] sm:$0xff]
  %v3376 = vld [vmem:[%s3361 + $0x70] sm:$0xff]
  %v3377 = vld [vmem:[%s3361 + $0x78] sm:$0xff]
  %v3378 = vld [vmem:[%s3361 + $0x80] sm:$0xff]
  %v3379 = vld [vmem:[%s3361 + $0x88] sm:$0xff]
  %v3380 = vld [vmem:[%s3361 + $0x90] sm:$0xff]
  %v3381 = vld [vmem:[%s3361 + $0x98] sm:$0xff]
  %v3382 = vld [vmem:[%s3361 + $0xa0] sm:$0x11]
  %v3383 = vld [vmem:[%s3361 + $0xa8] sm:$0x11]
  %v3406 = vunpack.c.l.b16 %v3362
  %v3407 = vunpack.c.h.b16 %v3362
  %v3408 = vunpack.c.l.b16 %v3363
  %v3409 = vunpack.c.h.b16 %v3363
  %v3410 = vunpack.c.l.b16 %v3364
  %v3411 = vunpack.c.h.b16 %v3364
  %v3412 = vunpack.c.l.b16 %v3365
  %v3413 = vunpack.c.h.b16 %v3365
  %v3414 = vunpack.c.l.b16 %v3366
  %v3415 = vunpack.c.h.b16 %v3366
  %v3416 = vunpack.c.l.b16 %v3367
  %v3417 = vunpack.c.h.b16 %v3367
  %v3418 = vunpack.c.l.b16 %v3368
  %v3419 = vunpack.c.h.b16 %v3368
  %v3420 = vunpack.c.l.b16 %v3369
  %v3421 = vunpack.c.h.b16 %v3369
  %v3422 = vunpack.c.l.b16 %v3370
  %v3423 = vunpack.c.h.b16 %v3370
  %v3424 = vunpack.c.l.b16 %v3371
  %v3425 = vunpack.c.h.b16 %v3371
  %v3426 = vunpack.c.l.b16 %v3372
  %v3427 = vunpack.c.h.b16 %v3372
  %v3428 = vunpack.c.l.b16 %v3373
  %v3429 = vunpack.c.h.b16 %v3373
  %v3430 = vunpack.c.l.b16 %v3374
  %v3431 = vunpack.c.h.b16 %v3374
  %v3432 = vunpack.c.l.b16 %v3375
  %v3433 = vunpack.c.h.b16 %v3375
  %v3434 = vunpack.c.l.b16 %v3376
  %v3435 = vunpack.c.h.b16 %v3376
  %v3436 = vunpack.c.l.b16 %v3377
  %v3437 = vunpack.c.h.b16 %v3377
  %v3438 = vunpack.c.l.b16 %v3378
  %v3439 = vunpack.c.h.b16 %v3378
  %v3440 = vunpack.c.l.b16 %v3379
  %v3441 = vunpack.c.h.b16 %v3379
  %v3442 = vunpack.c.l.b16 %v3380
  %v3443 = vunpack.c.h.b16 %v3380
  %v3444 = vunpack.c.l.b16 %v3381
  %v3445 = vunpack.c.h.b16 %v3381
  %v3446 = vunpack.c.l.b16 %v3382
  %v3447 = vunpack.c.h.b16 %v3382
  %v3448 = vunpack.c.l.b16 %v3383
  %v3449 = vunpack.c.h.b16 %v3383
  %v3450 = vpack.c.b16 %v3410, %v3406
  %v3451 = vpack.c.b16 %v3411, %v3407
  %v3452 = vpack.c.b16 %v3412, %v3408
  %v3453 = vpack.c.b16 %v3413, %v3409
  %v3454 = vpack.c.b16 %v3418, %v3414
  %v3455 = vpack.c.b16 %v3419, %v3415
  %v3456 = vpack.c.b16 %v3420, %v3416
  %v3457 = vpack.c.b16 %v3421, %v3417
  %v3458 = vpack.c.b16 %v3426, %v3422
  %v3459 = vpack.c.b16 %v3427, %v3423
  %v3460 = vpack.c.b16 %v3428, %v3424
  %v3461 = vpack.c.b16 %v3429, %v3425
  %v3462 = vpack.c.b16 %v3434, %v3430
  %v3463 = vpack.c.b16 %v3435, %v3431
  %v3464 = vpack.c.b16 %v3436, %v3432
  %v3465 = vpack.c.b16 %v3437, %v3433
  %v3466 = vpack.c.b16 %v3442, %v3438
  %v3467 = vpack.c.b16 %v3443, %v3439
  %v3468 = vpack.c.b16 %v3444, %v3440
  %v3469 = vpack.c.b16 %v3445, %v3441
  %v3470 = vpack.c.b16 %v3446, %v3446
  %v3471 = vpack.c.b16 %v3447, %v3447
  %v3472 = vpack.c.b16 %v3448, %v3448
  %v3473 = vpack.c.b16 %v3449, %v3449
  %v3493 = vsel %vm916, %v3453, 0
  %v3496 = vsel %vm916, %v3457, 0
  %v3499 = vsel %vm916, %v3461, 0
  %v3502 = vsel %vm916, %v3465, 0
  %v3505 = vsel %vm916, %v3469, 0
  %v3508 = vsel %vm916, %v3473, 0
  %3510 = vmatprep.subr.bf16.mxu0 0
  %3511 = vmatpush1.bf16.msra.mxu0 %v761
  %3512 = vmatprep.subr.bf16.mxu0 0
  %3513 = vmatpush1.bf16.msra.mxu0 %v762
  %3514 = vmatprep.subr.bf16.mxu0 0
  %3515 = vmatpush1.bf16.msra.mxu0 %v763
  %3516 = vmatprep.subr.bf16.mxu0 0
  %3517 = vmatpush1.bf16.msra.mxu0 %v764
  %3518 = vmatprep.subr.bf16.mxu0 0
  %3519 = vmatpush1.bf16.msra.mxu0 %v765
  %3520 = vmatprep.subr.bf16.mxu0 0
  %3521 = vmatpush1.bf16.msra.mxu0 %v766
  %3522 = vmatprep.subr.bf16.mxu0 0
  %3523 = vmatpush1.bf16.msra.mxu0 %v767
  %3524 = vmatprep.subr.bf16.mxu0 0
  %3525 = vmatpush1.bf16.msra.mxu0 %v768
  %3526 = vmatprep.subr.bf16.mxu0 0
  %3527 = vmatpush1.bf16.msra.mxu0 %v769
  %3528 = vmatprep.subr.bf16.mxu0 0
  %3529 = vmatpush1.bf16.msra.mxu0 %v770
  %3530 = vmatprep.subr.bf16.mxu0 0
  %3531 = vmatpush1.bf16.msra.mxu0 %v771
  %3532 = vmatprep.subr.bf16.mxu0 0
  %3533 = vmatpush1.bf16.msra.mxu0 %v772
  %3534 = vmatprep.subr.bf16.mxu0 0
  %3535 = vmatpush1.bf16.msra.mxu0 %v773
  %3536 = vmatprep.subr.bf16.mxu0 0
  %3537 = vmatpush1.bf16.msra.mxu0 %v774
  %3538 = vmatprep.subr.bf16.mxu0 0
  %3539 = vmatpush1.bf16.msra.mxu0 %v775
  %3540 = vmatprep.subr.bf16.mxu0 0
  %3541 = vmatpush1.bf16.msra.mxu0 %v776
  %3542 = vmatprep.mubr.bf16.mxu0 %v3451
  %3543 = vmatmul.mubr.bf16.gmra.mrb[0].mxu0 %v3450
  %v3544 = vpop.f32.mrb[0].mxu0
  %v3545 = vadd.f32 0.0, %v3544
  %v3546 = vpop.f32.mrb[0].mxu0
  %v3547 = vpop.f32.mrb[0].mxu0
  %v3548 = vadd.f32 0.0, %v3547
  %v3549 = vpop.f32.mrb[0].mxu0
  %3550 = vmatprep.mubr.bf16.mxu0 %v3455
  %3551 = vmatmul.mubr.bf16.gmra.mrb[0].mxu0 %v3454
  %v3552 = vpop.f32.mrb[0].mxu0
  %v3553 = vadd.f32 0.0, %v3552
  %v3554 = vpop.f32.mrb[0].mxu0
  %v3555 = vpop.f32.mrb[0].mxu0
  %v3556 = vadd.f32 0.0, %v3555
  %v3557 = vpop.f32.mrb[0].mxu0
  %3558 = vmatprep.mubr.bf16.mxu0 %v3459
  %3559 = vmatmul.mubr.bf16.gmra.mrb[0].mxu0 %v3458
  %v3560 = vpop.f32.mrb[0].mxu0
  %v3561 = vadd.f32 0.0, %v3560
  %v3562 = vpop.f32.mrb[0].mxu0
  %v3563 = vpop.f32.mrb[0].mxu0
  %v3564 = vadd.f32 0.0, %v3563
  %v3565 = vpop.f32.mrb[0].mxu0
  %3566 = vmatprep.mubr.bf16.mxu0 %v3463
  %3567 = vmatmul.mubr.bf16.gmra.mrb[0].mxu0 %v3462
  %v3568 = vpop.f32.mrb[0].mxu0
  %v3569 = vadd.f32 0.0, %v3568
  %v3570 = vpop.f32.mrb[0].mxu0
  %v3571 = vpop.f32.mrb[0].mxu0
  %v3572 = vadd.f32 0.0, %v3571
  %v3573 = vpop.f32.mrb[0].mxu0
  %3574 = vmatprep.mubr.bf16.mxu0 %v3467
  %3575 = vmatmul.mubr.bf16.gmra.mrb[0].mxu0 %v3466
  %v3576 = vpop.f32.mrb[0].mxu0
  %v3577 = vadd.f32 0.0, %v3576
  %v3578 = vpop.f32.mrb[0].mxu0
  %v3579 = vpop.f32.mrb[0].mxu0
  %v3580 = vadd.f32 0.0, %v3579
  %v3581 = vpop.f32.mrb[0].mxu0
  %3582 = vmatprep.mubr.bf16.mxu0 %v3471
  %3583 = vmatmul.mubr.bf16.gmra.mrb[0].mxu0 %v3470
  %v3584 = vpop.f32.mrb[0].mxu0
  %v3585 = vadd.f32 0.0, %v3584
  %v3586 = vpop.f32.mrb[0].mxu0
  %v3587 = vpop.f32.mrb[0].mxu0
  %v3588 = vpop.f32.mrb[0].mxu0
  %3589 = vdwg.mxu0
  %3590 = vmatprep.subr.bf16.mxu0 0
  %3591 = vmatpush1.bf16.msra.mxu0 %v777
  %3592 = vmatprep.subr.bf16.mxu0 0
  %3593 = vmatpush1.bf16.msra.mxu0 %v778
  %3594 = vmatprep.subr.bf16.mxu0 0
  %3595 = vmatpush1.bf16.msra.mxu0 %v779
  %3596 = vmatprep.subr.bf16.mxu0 0
  %3597 = vmatpush1.bf16.msra.mxu0 %v780
  %3598 = vmatprep.subr.bf16.mxu0 0
  %3599 = vmatpush1.bf16.msra.mxu0 %v781
  %3600 = vmatprep.subr.bf16.mxu0 0
  %3601 = vmatpush1.bf16.msra.mxu0 %v782
  %3602 = vmatprep.subr.bf16.mxu0 0
  %3603 = vmatpush1.bf16.msra.mxu0 %v783
  %3604 = vmatprep.subr.bf16.mxu0 0
  %3605 = vmatpush1.bf16.msra.mxu0 %v784
  %3606 = vmatprep.subr.bf16.mxu0 0
  %3607 = vmatpush1.bf16.msra.mxu0 %v785
  %3608 = vmatprep.subr.bf16.mxu0 0
  %3609 = vmatpush1.bf16.msra.mxu0 0
  %3610 = vmatprep.subr.bf16.mxu0 0
  %3611 = vmatpush1.bf16.msra.mxu0 0
  %3612 = vmatprep.subr.bf16.mxu0 0
  %3613 = vmatpush1.bf16.msra.mxu0 0
  %3614 = vmatprep.subr.bf16.mxu0 0
  %3615 = vmatpush1.bf16.msra.mxu0 0
  %3616 = vmatprep.subr.bf16.mxu0 0
  %3617 = vmatpush1.bf16.msra.mxu0 0
  %3618 = vmatprep.subr.bf16.mxu0 0
  %3619 = vmatpush1.bf16.msra.mxu0 0
  %3620 = vmatprep.subr.bf16.mxu0 0
  %3621 = vmatpush1.bf16.msra.mxu0 0
  %3622 = vmatprep.mubr.bf16.mxu0 %v3493
  %3623 = vmatmul.mubr.bf16.gmra.mrb[0].mxu0 %v3452
  %v3624 = vpop.f32.mrb[0].mxu0
  %v3625 = vadd.f32 %v3545, %v3624
  %v3626 = vpop.f32.mrb[0].mxu0
  %v3627 = vpop.f32.mrb[0].mxu0
  %v3628 = vadd.f32 %v3548, %v3627
  %v3629 = vpop.f32.mrb[0].mxu0
  %3630 = vmatprep.mubr.bf16.mxu0 %v3496
  %3631 = vmatmul.mubr.bf16.gmra.mrb[0].mxu0 %v3456
  %v3632 = vpop.f32.mrb[0].mxu0
  %v3633 = vadd.f32 %v3553, %v3632
  %v3634 = vpop.f32.mrb[0].mxu0
  %v3635 = vpop.f32.mrb[0].mxu0
  %v3636 = vadd.f32 %v3556, %v3635
  %v3637 = vpop.f32.mrb[0].mxu0
  %3638 = vmatprep.mubr.bf16.mxu0 %v3499
  %3639 = vmatmul.mubr.bf16.gmra.mrb[0].mxu0 %v3460
  %v3640 = vpop.f32.mrb[0].mxu0
  %v3641 = vadd.f32 %v3561, %v3640
  %v3642 = vpop.f32.mrb[0].mxu0
  %v3643 = vpop.f32.mrb[0].mxu0
  %v3644 = vadd.f32 %v3564, %v3643
  %v3645 = vpop.f32.mrb[0].mxu0
  %3646 = vmatprep.mubr.bf16.mxu0 %v3502
  %3647 = vmatmul.mubr.bf16.gmra.mrb[0].mxu0 %v3464
  %v3648 = vpop.f32.mrb[0].mxu0
  %v3649 = vadd.f32 %v3569, %v3648
  %v3650 = vpop.f32.mrb[0].mxu0
  %v3651 = vpop.f32.mrb[0].mxu0
  %v3652 = vadd.f32 %v3572, %v3651
  %v3653 = vpop.f32.mrb[0].mxu0
  %3654 = vmatprep.mubr.bf16.mxu0 %v3505
  %3655 = vmatmul.mubr.bf16.gmra.mrb[0].mxu0 %v3468
  %v3656 = vpop.f32.mrb[0].mxu0
  %v3657 = vadd.f32 %v3577, %v3656
  %v3658 = vpop.f32.mrb[0].mxu0
  %v3659 = vpop.f32.mrb[0].mxu0
  %v3660 = vadd.f32 %v3580, %v3659
  %v3661 = vpop.f32.mrb[0].mxu0
  %3662 = vmatprep.mubr.bf16.mxu0 %v3508
  %3663 = vmatmul.mubr.bf16.gmra.mrb[0].mxu0 %v3472
  %v3664 = vpop.f32.mrb[0].mxu0
  %v3665 = vadd.f32 %v3585, %v3664
  %v3666 = vpop.f32.mrb[0].mxu0
  %v3667 = vpop.f32.mrb[0].mxu0
  %v3668 = vpop.f32.mrb[0].mxu0
  %3669 = vdwg.mxu0
  %v3670 = vpack.c.bf16 %v3628, %v3625
  %v3671 = vpack.c.bf16 %v3636, %v3633
  %v3672 = vpack.c.bf16 %v3644, %v3641
  %v3673 = vpack.c.bf16 %v3652, %v3649
  %v3674 = vpack.c.bf16 %v3660, %v3657
  %v3675 = vpack.c.bf16 %v3665, %v3665
  %s3676 = scalar_lea.vmem %s4, 48
  %v3677 = vld [vmem:[%s3676] sm:$0xf]
  %v3678 = vld [vmem:[%s3676 + $0x4] sm:$0xf]
  %v3681 = vunpack.c.l.b16 %v3677
  %v3682 = vunpack.c.l.b16 %v3678
  %v3683 = vpack.c.b16 %v3682, %v3681
  %v3686 = vsel %vm916, %v3670, 0
  %v3689 = vsel %vm916, %v3671, 0
  %v3692 = vsel %vm916, %v3672, 0
  %v3695 = vsel %vm916, %v3673, 0
  %v3698 = vsel %vm916, %v3674, 0
  %v3701 = vsel %vm916, %v3675, 0
  %3703 = vmatprep.subr.bf16.mxu0 0
  %3704 = vmatpush1.bf16.msra.mxu0 %v3683
  %3705 = vmatprep.subr.bf16.mxu0 0
  %3706 = vmatpush1.bf16.msra.mxu0 0
  %3707 = vmatprep.subr.bf16.mxu0 0
  %3708 = vmatpush1.bf16.msra.mxu0 0
  %3709 = vmatprep.subr.bf16.mxu0 0
  %3710 = vmatpush1.bf16.msra.mxu0 0
  %3711 = vmatprep.subr.bf16.mxu0 0
  %3712 = vmatpush1.bf16.msra.mxu0 0
  %3713 = vmatprep.subr.bf16.mxu0 0
  %3714 = vmatpush1.bf16.msra.mxu0 0
  %3715 = vmatprep.subr.bf16.mxu0 0
  %3716 = vmatpush1.bf16.msra.mxu0 0
  %3717 = vmatprep.subr.bf16.mxu0 0
  %3718 = vmatpush1.bf16.msra.mxu0 0
  %3719 = vmatprep.subr.bf16.mxu0 0
  %3720 = vmatpush1.bf16.msra.mxu0 0
  %3721 = vmatprep.subr.bf16.mxu0 0
  %3722 = vmatpush1.bf16.msra.mxu0 0
  %3723 = vmatprep.subr.bf16.mxu0 0
  %3724 = vmatpush1.bf16.msra.mxu0 0
  %3725 = vmatprep.subr.bf16.mxu0 0
  %3726 = vmatpush1.bf16.msra.mxu0 0
  %3727 = vmatprep.subr.bf16.mxu0 0
  %3728 = vmatpush1.bf16.msra.mxu0 0
  %3729 = vmatprep.subr.bf16.mxu0 0
  %3730 = vmatpush1.bf16.msra.mxu0 0
  %3731 = vmatprep.subr.bf16.mxu0 0
  %3732 = vmatpush1.bf16.msra.mxu0 0
  %3733 = vmatprep.subr.bf16.mxu0 0
  %3734 = vmatpush1.bf16.msra.mxu0 0
  %3735 = vmatprep.mubr.bf16.mxu0 0
  %3736 = vmatmul.mubr.bf16.gmra.mrb[0].mxu0 %v3686
  %v3737 = vpop.f32.mrb[0].mxu0
  %v3738 = vadd.f32 0.0, %v3737
  %v3739 = vpop.f32.mrb[0].mxu0
  %v3740 = vpop.f32.mrb[0].mxu0
  %v3741 = vadd.f32 0.0, %v3740
  %v3742 = vpop.f32.mrb[0].mxu0
  %3743 = vmatprep.mubr.bf16.mxu0 0
  %3744 = vmatmul.mubr.bf16.gmra.mrb[0].mxu0 %v3689
  %v3745 = vpop.f32.mrb[0].mxu0
  %v3746 = vadd.f32 0.0, %v3745
  %v3747 = vpop.f32.mrb[0].mxu0
  %v3748 = vpop.f32.mrb[0].mxu0
  %v3749 = vadd.f32 0.0, %v3748
  %v3750 = vpop.f32.mrb[0].mxu0
  %3751 = vmatprep.mubr.bf16.mxu0 0
  %3752 = vmatmul.mubr.bf16.gmra.mrb[0].mxu0 %v3692
  %v3753 = vpop.f32.mrb[0].mxu0
  %v3754 = vadd.f32 0.0, %v3753
  %v3755 = vpop.f32.mrb[0].mxu0
  %v3756 = vpop.f32.mrb[0].mxu0
  %v3757 = vadd.f32 0.0, %v3756
  %v3758 = vpop.f32.mrb[0].mxu0
  %3759 = vmatprep.mubr.bf16.mxu0 0
  %3760 = vmatmul.mubr.bf16.gmra.mrb[0].mxu0 %v3695
  %v3761 = vpop.f32.mrb[0].mxu0
  %v3762 = vadd.f32 0.0, %v3761
  %v3763 = vpop.f32.mrb[0].mxu0
  %v3764 = vpop.f32.mrb[0].mxu0
  %v3765 = vadd.f32 0.0, %v3764
  %v3766 = vpop.f32.mrb[0].mxu0
  %3767 = vmatprep.mubr.bf16.mxu0 0
  %3768 = vmatmul.mubr.bf16.gmra.mrb[0].mxu0 %v3698
  %v3769 = vpop.f32.mrb[0].mxu0
  %v3770 = vadd.f32 0.0, %v3769
  %v3771 = vpop.f32.mrb[0].mxu0
  %v3772 = vpop.f32.mrb[0].mxu0
  %v3773 = vadd.f32 0.0, %v3772
  %v3774 = vpop.f32.mrb[0].mxu0
  %3775 = vmatprep.mubr.bf16.mxu0 0
  %3776 = vmatmul.mubr.bf16.gmra.mrb[0].mxu0 %v3701
  %v3777 = vpop.f32.mrb[0].mxu0
  %v3778 = vadd.f32 0.0, %v3777
  %v3779 = vpop.f32.mrb[0].mxu0
  %v3780 = vpop.f32.mrb[0].mxu0
  %v3781 = vpop.f32.mrb[0].mxu0
  %3782 = vdwg.mxu0
  %v3783 = vadd.f32 %v3350, %v3738
  %v3784 = vadd.f32 %v3351, %v3741
  %v3785 = vadd.f32 %v3352, %v3746
  %v3786 = vadd.f32 %v3353, %v3749
  %v3787 = vadd.f32 %v3354, %v3754
  %v3788 = vadd.f32 %v3355, %v3757
  %v3789 = vadd.f32 %v3356, %v3762
  %v3790 = vadd.f32 %v3357, %v3765
  %v3791 = vadd.f32 %v3358, %v3770
  %v3792 = vadd.f32 %v3359, %v3773
  %v3793 = vadd.f32 %v3360, %v3778
  %s3794 = scalar_lea.vmem %s3, 1232
  %v3795 = vld [vmem:[%s3794] sm:$0xff]
  %v3796 = vld [vmem:[%s3794 + $0x8] sm:$0xff]
  %v3797 = vld [vmem:[%s3794 + $0x10] sm:$0xff]
  %v3798 = vld [vmem:[%s3794 + $0x18] sm:$0xff]
  %v3799 = vld [vmem:[%s3794 + $0x20] sm:$0xff]
  %v3800 = vld [vmem:[%s3794 + $0x28] sm:$0xff]
  %v3801 = vld [vmem:[%s3794 + $0x30] sm:$0xff]
  %v3802 = vld [vmem:[%s3794 + $0x38] sm:$0xff]
  %v3803 = vld [vmem:[%s3794 + $0x40] sm:$0xff]
  %v3804 = vld [vmem:[%s3794 + $0x48] sm:$0xff]
  %v3805 = vld [vmem:[%s3794 + $0x50] sm:$0xff]
  %v3806 = vld [vmem:[%s3794 + $0x58] sm:$0xff]
  %v3807 = vld [vmem:[%s3794 + $0x60] sm:$0xff]
  %v3808 = vld [vmem:[%s3794 + $0x68] sm:$0xff]
  %v3809 = vld [vmem:[%s3794 + $0x70] sm:$0xff]
  %v3810 = vld [vmem:[%s3794 + $0x78] sm:$0xff]
  %v3811 = vld [vmem:[%s3794 + $0x80] sm:$0xff]
  %v3812 = vld [vmem:[%s3794 + $0x88] sm:$0xff]
  %v3813 = vld [vmem:[%s3794 + $0x90] sm:$0xff]
  %v3814 = vld [vmem:[%s3794 + $0x98] sm:$0xff]
  %v3815 = vld [vmem:[%s3794 + $0xa0] sm:$0x11]
  %v3816 = vld [vmem:[%s3794 + $0xa8] sm:$0x11]
  %v3839 = vunpack.c.l.b16 %v3795
  %v3840 = vunpack.c.h.b16 %v3795
  %v3841 = vunpack.c.l.b16 %v3796
  %v3842 = vunpack.c.h.b16 %v3796
  %v3843 = vunpack.c.l.b16 %v3797
  %v3844 = vunpack.c.h.b16 %v3797
  %v3845 = vunpack.c.l.b16 %v3798
  %v3846 = vunpack.c.h.b16 %v3798
  %v3847 = vunpack.c.l.b16 %v3799
  %v3848 = vunpack.c.h.b16 %v3799
  %v3849 = vunpack.c.l.b16 %v3800
  %v3850 = vunpack.c.h.b16 %v3800
  %v3851 = vunpack.c.l.b16 %v3801
  %v3852 = vunpack.c.h.b16 %v3801
  %v3853 = vunpack.c.l.b16 %v3802
  %v3854 = vunpack.c.h.b16 %v3802
  %v3855 = vunpack.c.l.b16 %v3803
  %v3856 = vunpack.c.h.b16 %v3803
  %v3857 = vunpack.c.l.b16 %v3804
  %v3858 = vunpack.c.h.b16 %v3804
  %v3859 = vunpack.c.l.b16 %v3805
  %v3860 = vunpack.c.h.b16 %v3805
  %v3861 = vunpack.c.l.b16 %v3806
  %v3862 = vunpack.c.h.b16 %v3806
  %v3863 = vunpack.c.l.b16 %v3807
  %v3864 = vunpack.c.h.b16 %v3807
  %v3865 = vunpack.c.l.b16 %v3808
  %v3866 = vunpack.c.h.b16 %v3808
  %v3867 = vunpack.c.l.b16 %v3809
  %v3868 = vunpack.c.h.b16 %v3809
  %v3869 = vunpack.c.l.b16 %v3810
  %v3870 = vunpack.c.h.b16 %v3810
  %v3871 = vunpack.c.l.b16 %v3811
  %v3872 = vunpack.c.h.b16 %v3811
  %v3873 = vunpack.c.l.b16 %v3812
  %v3874 = vunpack.c.h.b16 %v3812
  %v3875 = vunpack.c.l.b16 %v3813
  %v3876 = vunpack.c.h.b16 %v3813
  %v3877 = vunpack.c.l.b16 %v3814
  %v3878 = vunpack.c.h.b16 %v3814
  %v3879 = vunpack.c.l.b16 %v3815
  %v3880 = vunpack.c.h.b16 %v3815
  %v3881 = vunpack.c.l.b16 %v3816
  %v3882 = vunpack.c.h.b16 %v3816
  %v3883 = vpack.c.b16 %v3843, %v3839
  %v3884 = vpack.c.b16 %v3844, %v3840
  %v3885 = vpack.c.b16 %v3845, %v3841
  %v3886 = vpack.c.b16 %v3846, %v3842
  %v3887 = vpack.c.b16 %v3851, %v3847
  %v3888 = vpack.c.b16 %v3852, %v3848
  %v3889 = vpack.c.b16 %v3853, %v3849
  %v3890 = vpack.c.b16 %v3854, %v3850
  %v3891 = vpack.c.b16 %v3859, %v3855
  %v3892 = vpack.c.b16 %v3860, %v3856
  %v3893 = vpack.c.b16 %v3861, %v3857
  %v3894 = vpack.c.b16 %v3862, %v3858
  %v3895 = vpack.c.b16 %v3867, %v3863
  %v3896 = vpack.c.b16 %v3868, %v3864
  %v3897 = vpack.c.b16 %v3869, %v3865
  %v3898 = vpack.c.b16 %v3870, %v3866
  %v3899 = vpack.c.b16 %v3875, %v3871
  %v3900 = vpack.c.b16 %v3876, %v3872
  %v3901 = vpack.c.b16 %v3877, %v3873
  %v3902 = vpack.c.b16 %v3878, %v3874
  %v3903 = vpack.c.b16 %v3879, %v3879
  %v3904 = vpack.c.b16 %v3880, %v3880
  %v3905 = vpack.c.b16 %v3881, %v3881
  %v3906 = vpack.c.b16 %v3882, %v3882
  %v3926 = vsel %vm916, %v3886, 0
  %v3929 = vsel %vm916, %v3890, 0
  %v3932 = vsel %vm916, %v3894, 0
  %v3935 = vsel %vm916, %v3898, 0
  %v3938 = vsel %vm916, %v3902, 0
  %v3941 = vsel %vm916, %v3906, 0
  %3943 = vmatprep.subr.bf16.mxu0 0
  %3944 = vmatpush1.bf16.msra.mxu0 %v761
  %3945 = vmatprep.subr.bf16.mxu0 0
  %3946 = vmatpush1.bf16.msra.mxu0 %v762
  %3947 = vmatprep.subr.bf16.mxu0 0
  %3948 = vmatpush1.bf16.msra.mxu0 %v763
  %3949 = vmatprep.subr.bf16.mxu0 0
  %3950 = vmatpush1.bf16.msra.mxu0 %v764
  %3951 = vmatprep.subr.bf16.mxu0 0
  %3952 = vmatpush1.bf16.msra.mxu0 %v765
  %3953 = vmatprep.subr.bf16.mxu0 0
  %3954 = vmatpush1.bf16.msra.mxu0 %v766
  %3955 = vmatprep.subr.bf16.mxu0 0
  %3956 = vmatpush1.bf16.msra.mxu0 %v767
  %3957 = vmatprep.subr.bf16.mxu0 0
  %3958 = vmatpush1.bf16.msra.mxu0 %v768
  %3959 = vmatprep.subr.bf16.mxu0 0
  %3960 = vmatpush1.bf16.msra.mxu0 %v769
  %3961 = vmatprep.subr.bf16.mxu0 0
  %3962 = vmatpush1.bf16.msra.mxu0 %v770
  %3963 = vmatprep.subr.bf16.mxu0 0
  %3964 = vmatpush1.bf16.msra.mxu0 %v771
  %3965 = vmatprep.subr.bf16.mxu0 0
  %3966 = vmatpush1.bf16.msra.mxu0 %v772
  %3967 = vmatprep.subr.bf16.mxu0 0
  %3968 = vmatpush1.bf16.msra.mxu0 %v773
  %3969 = vmatprep.subr.bf16.mxu0 0
  %3970 = vmatpush1.bf16.msra.mxu0 %v774
  %3971 = vmatprep.subr.bf16.mxu0 0
  %3972 = vmatpush1.bf16.msra.mxu0 %v775
  %3973 = vmatprep.subr.bf16.mxu0 0
  %3974 = vmatpush1.bf16.msra.mxu0 %v776
  %3975 = vmatprep.mubr.bf16.mxu0 %v3884
  %3976 = vmatmul.mubr.bf16.gmra.mrb[0].mxu0 %v3883
  %v3977 = vpop.f32.mrb[0].mxu0
  %v3978 = vadd.f32 0.0, %v3977
  %v3979 = vpop.f32.mrb[0].mxu0
  %v3980 = vpop.f32.mrb[0].mxu0
  %v3981 = vadd.f32 0.0, %v3980
  %v3982 = vpop.f32.mrb[0].mxu0
  %3983 = vmatprep.mubr.bf16.mxu0 %v3888
  %3984 = vmatmul.mubr.bf16.gmra.mrb[0].mxu0 %v3887
  %v3985 = vpop.f32.mrb[0].mxu0
  %v3986 = vadd.f32 0.0, %v3985
  %v3987 = vpop.f32.mrb[0].mxu0
  %v3988 = vpop.f32.mrb[0].mxu0
  %v3989 = vadd.f32 0.0, %v3988
  %v3990 = vpop.f32.mrb[0].mxu0
  %3991 = vmatprep.mubr.bf16.mxu0 %v3892
  %3992 = vmatmul.mubr.bf16.gmra.mrb[0].mxu0 %v3891
  %v3993 = vpop.f32.mrb[0].mxu0
  %v3994 = vadd.f32 0.0, %v3993
  %v3995 = vpop.f32.mrb[0].mxu0
  %v3996 = vpop.f32.mrb[0].mxu0
  %v3997 = vadd.f32 0.0, %v3996
  %v3998 = vpop.f32.mrb[0].mxu0
  %3999 = vmatprep.mubr.bf16.mxu0 %v3896
  %4000 = vmatmul.mubr.bf16.gmra.mrb[0].mxu0 %v3895
  %v4001 = vpop.f32.mrb[0].mxu0
  %v4002 = vadd.f32 0.0, %v4001
  %v4003 = vpop.f32.mrb[0].mxu0
  %v4004 = vpop.f32.mrb[0].mxu0
  %v4005 = vadd.f32 0.0, %v4004
  %v4006 = vpop.f32.mrb[0].mxu0
  %4007 = vmatprep.mubr.bf16.mxu0 %v3900
  %4008 = vmatmul.mubr.bf16.gmra.mrb[0].mxu0 %v3899
  %v4009 = vpop.f32.mrb[0].mxu0
  %v4010 = vadd.f32 0.0, %v4009
  %v4011 = vpop.f32.mrb[0].mxu0
  %v4012 = vpop.f32.mrb[0].mxu0
  %v4013 = vadd.f32 0.0, %v4012
  %v4014 = vpop.f32.mrb[0].mxu0
  %4015 = vmatprep.mubr.bf16.mxu0 %v3904
  %4016 = vmatmul.mubr.bf16.gmra.mrb[0].mxu0 %v3903
  %v4017 = vpop.f32.mrb[0].mxu0
  %v4018 = vadd.f32 0.0, %v4017
  %v4019 = vpop.f32.mrb[0].mxu0
  %v4020 = vpop.f32.mrb[0].mxu0
  %v4021 = vpop.f32.mrb[0].mxu0
  %4022 = vdwg.mxu0
  %4023 = vmatprep.subr.bf16.mxu0 0
  %4024 = vmatpush1.bf16.msra.mxu0 %v777
  %4025 = vmatprep.subr.bf16.mxu0 0
  %4026 = vmatpush1.bf16.msra.mxu0 %v778
  %4027 = vmatprep.subr.bf16.mxu0 0
  %4028 = vmatpush1.bf16.msra.mxu0 %v779
  %4029 = vmatprep.subr.bf16.mxu0 0
  %4030 = vmatpush1.bf16.msra.mxu0 %v780
  %4031 = vmatprep.subr.bf16.mxu0 0
  %4032 = vmatpush1.bf16.msra.mxu0 %v781
  %4033 = vmatprep.subr.bf16.mxu0 0
  %4034 = vmatpush1.bf16.msra.mxu0 %v782
  %4035 = vmatprep.subr.bf16.mxu0 0
  %4036 = vmatpush1.bf16.msra.mxu0 %v783
  %4037 = vmatprep.subr.bf16.mxu0 0
  %4038 = vmatpush1.bf16.msra.mxu0 %v784
  %4039 = vmatprep.subr.bf16.mxu0 0
  %4040 = vmatpush1.bf16.msra.mxu0 %v785
  %4041 = vmatprep.subr.bf16.mxu0 0
  %4042 = vmatpush1.bf16.msra.mxu0 0
  %4043 = vmatprep.subr.bf16.mxu0 0
  %4044 = vmatpush1.bf16.msra.mxu0 0
  %4045 = vmatprep.subr.bf16.mxu0 0
  %4046 = vmatpush1.bf16.msra.mxu0 0
  %4047 = vmatprep.subr.bf16.mxu0 0
  %4048 = vmatpush1.bf16.msra.mxu0 0
  %4049 = vmatprep.subr.bf16.mxu0 0
  %4050 = vmatpush1.bf16.msra.mxu0 0
  %4051 = vmatprep.subr.bf16.mxu0 0
  %4052 = vmatpush1.bf16.msra.mxu0 0
  %4053 = vmatprep.subr.bf16.mxu0 0
  %4054 = vmatpush1.bf16.msra.mxu0 0
  %4055 = vmatprep.mubr.bf16.mxu0 %v3926
  %4056 = vmatmul.mubr.bf16.gmra.mrb[0].mxu0 %v3885
  %v4057 = vpop.f32.mrb[0].mxu0
  %v4058 = vadd.f32 %v3978, %v4057
  %v4059 = vpop.f32.mrb[0].mxu0
  %v4060 = vpop.f32.mrb[0].mxu0
  %v4061 = vadd.f32 %v3981, %v4060
  %v4062 = vpop.f32.mrb[0].mxu0
  %4063 = vmatprep.mubr.bf16.mxu0 %v3929
  %4064 = vmatmul.mubr.bf16.gmra.mrb[0].mxu0 %v3889
  %v4065 = vpop.f32.mrb[0].mxu0
  %v4066 = vadd.f32 %v3986, %v4065
  %v4067 = vpop.f32.mrb[0].mxu0
  %v4068 = vpop.f32.mrb[0].mxu0
  %v4069 = vadd.f32 %v3989, %v4068
  %v4070 = vpop.f32.mrb[0].mxu0
  %4071 = vmatprep.mubr.bf16.mxu0 %v3932
  %4072 = vmatmul.mubr.bf16.gmra.mrb[0].mxu0 %v3893
  %v4073 = vpop.f32.mrb[0].mxu0
  %v4074 = vadd.f32 %v3994, %v4073
  %v4075 = vpop.f32.mrb[0].mxu0
  %v4076 = vpop.f32.mrb[0].mxu0
  %v4077 = vadd.f32 %v3997, %v4076
  %v4078 = vpop.f32.mrb[0].mxu0
  %4079 = vmatprep.mubr.bf16.mxu0 %v3935
  %4080 = vmatmul.mubr.bf16.gmra.mrb[0].mxu0 %v3897
  %v4081 = vpop.f32.mrb[0].mxu0
  %v4082 = vadd.f32 %v4002, %v4081
  %v4083 = vpop.f32.mrb[0].mxu0
  %v4084 = vpop.f32.mrb[0].mxu0
  %v4085 = vadd.f32 %v4005, %v4084
  %v4086 = vpop.f32.mrb[0].mxu0
  %4087 = vmatprep.mubr.bf16.mxu0 %v3938
  %4088 = vmatmul.mubr.bf16.gmra.mrb[0].mxu0 %v3901
  %v4089 = vpop.f32.mrb[0].mxu0
  %v4090 = vadd.f32 %v4010, %v4089
  %v4091 = vpop.f32.mrb[0].mxu0
  %v4092 = vpop.f32.mrb[0].mxu0
  %v4093 = vadd.f32 %v4013, %v4092
  %v4094 = vpop.f32.mrb[0].mxu0
  %4095 = vmatprep.mubr.bf16.mxu0 %v3941
  %4096 = vmatmul.mubr.bf16.gmra.mrb[0].mxu0 %v3905
  %v4097 = vpop.f32.mrb[0].mxu0
  %v4098 = vadd.f32 %v4018, %v4097
  %v4099 = vpop.f32.mrb[0].mxu0
  %v4100 = vpop.f32.mrb[0].mxu0
  %v4101 = vpop.f32.mrb[0].mxu0
  %4102 = vdwg.mxu0
  %v4103 = vpack.c.bf16 %v4061, %v4058
  %v4104 = vpack.c.bf16 %v4069, %v4066
  %v4105 = vpack.c.bf16 %v4077, %v4074
  %v4106 = vpack.c.bf16 %v4085, %v4082
  %v4107 = vpack.c.bf16 %v4093, %v4090
  %v4108 = vpack.c.bf16 %v4098, %v4098
  %s4109 = scalar_lea.vmem %s4, 56
  %v4110 = vld [vmem:[%s4109] sm:$0xf]
  %v4111 = vld [vmem:[%s4109 + $0x4] sm:$0xf]
  %v4114 = vunpack.c.l.b16 %v4110
  %v4115 = vunpack.c.l.b16 %v4111
  %v4116 = vpack.c.b16 %v4115, %v4114
  %v4119 = vsel %vm916, %v4103, 0
  %v4122 = vsel %vm916, %v4104, 0
  %v4125 = vsel %vm916, %v4105, 0
  %v4128 = vsel %vm916, %v4106, 0
  %v4131 = vsel %vm916, %v4107, 0
  %v4134 = vsel %vm916, %v4108, 0
  %4136 = vmatprep.subr.bf16.mxu0 0
  %4137 = vmatpush1.bf16.msra.mxu0 %v4116
  %4138 = vmatprep.subr.bf16.mxu0 0
  %4139 = vmatpush1.bf16.msra.mxu0 0
  %4140 = vmatprep.subr.bf16.mxu0 0
  %4141 = vmatpush1.bf16.msra.mxu0 0
  %4142 = vmatprep.subr.bf16.mxu0 0
  %4143 = vmatpush1.bf16.msra.mxu0 0
  %4144 = vmatprep.subr.bf16.mxu0 0
  %4145 = vmatpush1.bf16.msra.mxu0 0
  %4146 = vmatprep.subr.bf16.mxu0 0
  %4147 = vmatpush1.bf16.msra.mxu0 0
  %4148 = vmatprep.subr.bf16.mxu0 0
  %4149 = vmatpush1.bf16.msra.mxu0 0
  %4150 = vmatprep.subr.bf16.mxu0 0
  %4151 = vmatpush1.bf16.msra.mxu0 0
  %4152 = vmatprep.subr.bf16.mxu0 0
  %4153 = vmatpush1.bf16.msra.mxu0 0
  %4154 = vmatprep.subr.bf16.mxu0 0
  %4155 = vmatpush1.bf16.msra.mxu0 0
  %4156 = vmatprep.subr.bf16.mxu0 0
  %4157 = vmatpush1.bf16.msra.mxu0 0
  %4158 = vmatprep.subr.bf16.mxu0 0
  %4159 = vmatpush1.bf16.msra.mxu0 0
  %4160 = vmatprep.subr.bf16.mxu0 0
  %4161 = vmatpush1.bf16.msra.mxu0 0
  %4162 = vmatprep.subr.bf16.mxu0 0
  %4163 = vmatpush1.bf16.msra.mxu0 0
  %4164 = vmatprep.subr.bf16.mxu0 0
  %4165 = vmatpush1.bf16.msra.mxu0 0
  %4166 = vmatprep.subr.bf16.mxu0 0
  %4167 = vmatpush1.bf16.msra.mxu0 0
  %4168 = vmatprep.mubr.bf16.mxu0 0
  %4169 = vmatmul.mubr.bf16.gmra.mrb[0].mxu0 %v4119
  %v4170 = vpop.f32.mrb[0].mxu0
  %v4171 = vadd.f32 0.0, %v4170
  %v4172 = vpop.f32.mrb[0].mxu0
  %v4173 = vpop.f32.mrb[0].mxu0
  %v4174 = vadd.f32 0.0, %v4173
  %v4175 = vpop.f32.mrb[0].mxu0
  %4176 = vmatprep.mubr.bf16.mxu0 0
  %4177 = vmatmul.mubr.bf16.gmra.mrb[0].mxu0 %v4122
  %v4178 = vpop.f32.mrb[0].mxu0
  %v4179 = vadd.f32 0.0, %v4178
  %v4180 = vpop.f32.mrb[0].mxu0
  %v4181 = vpop.f32.mrb[0].mxu0
  %v4182 = vadd.f32 0.0, %v4181
  %v4183 = vpop.f32.mrb[0].mxu0
  %4184 = vmatprep.mubr.bf16.mxu0 0
  %4185 = vmatmul.mubr.bf16.gmra.mrb[0].mxu0 %v4125
  %v4186 = vpop.f32.mrb[0].mxu0
  %v4187 = vadd.f32 0.0, %v4186
  %v4188 = vpop.f32.mrb[0].mxu0
  %v4189 = vpop.f32.mrb[0].mxu0
  %v4190 = vadd.f32 0.0, %v4189
  %v4191 = vpop.f32.mrb[0].mxu0
  %4192 = vmatprep.mubr.bf16.mxu0 0
  %4193 = vmatmul.mubr.bf16.gmra.mrb[0].mxu0 %v4128
  %v4194 = vpop.f32.mrb[0].mxu0
  %v4195 = vadd.f32 0.0, %v4194
  %v4196 = vpop.f32.mrb[0].mxu0
  %v4197 = vpop.f32.mrb[0].mxu0
  %v4198 = vadd.f32 0.0, %v4197
  %v4199 = vpop.f32.mrb[0].mxu0
  %4200 = vmatprep.mubr.bf16.mxu0 0
  %4201 = vmatmul.mubr.bf16.gmra.mrb[0].mxu0 %v4131
  %v4202 = vpop.f32.mrb[0].mxu0
  %v4203 = vadd.f32 0.0, %v4202
  %v4204 = vpop.f32.mrb[0].mxu0
  %v4205 = vpop.f32.mrb[0].mxu0
  %v4206 = vadd.f32 0.0, %v4205
  %v4207 = vpop.f32.mrb[0].mxu0
  %4208 = vmatprep.mubr.bf16.mxu0 0
  %4209 = vmatmul.mubr.bf16.gmra.mrb[0].mxu0 %v4134
  %v4210 = vpop.f32.mrb[0].mxu0
  %v4211 = vadd.f32 0.0, %v4210
  %v4212 = vpop.f32.mrb[0].mxu0
  %v4213 = vpop.f32.mrb[0].mxu0
  %v4214 = vpop.f32.mrb[0].mxu0
  %4215 = vdwg.mxu0
  %v4216 = vadd.f32 %v3783, %v4171
  %v4217 = vadd.f32 %v3784, %v4174
  %v4218 = vadd.f32 %v3785, %v4179
  %v4219 = vadd.f32 %v3786, %v4182
  %v4220 = vadd.f32 %v3787, %v4187
  %v4221 = vadd.f32 %v3788, %v4190
  %v4222 = vadd.f32 %v3789, %v4195
  %v4223 = vadd.f32 %v3790, %v4198
  %v4224 = vadd.f32 %v3791, %v4203
  %v4225 = vadd.f32 %v3792, %v4206
  %v4226 = vadd.f32 %v3793, %v4211
  %s4227 = scalar_lea.vmem %s3, 1408
  %v4228 = vld [vmem:[%s4227] sm:$0xff]
  %v4229 = vld [vmem:[%s4227 + $0x8] sm:$0xff]
  %v4230 = vld [vmem:[%s4227 + $0x10] sm:$0xff]
  %v4231 = vld [vmem:[%s4227 + $0x18] sm:$0xff]
  %v4232 = vld [vmem:[%s4227 + $0x20] sm:$0xff]
  %v4233 = vld [vmem:[%s4227 + $0x28] sm:$0xff]
  %v4234 = vld [vmem:[%s4227 + $0x30] sm:$0xff]
  %v4235 = vld [vmem:[%s4227 + $0x38] sm:$0xff]
  %v4236 = vld [vmem:[%s4227 + $0x40] sm:$0xff]
  %v4237 = vld [vmem:[%s4227 + $0x48] sm:$0xff]
  %v4238 = vld [vmem:[%s4227 + $0x50] sm:$0xff]
  %v4239 = vld [vmem:[%s4227 + $0x58] sm:$0xff]
  %v4240 = vld [vmem:[%s4227 + $0x60] sm:$0xff]
  %v4241 = vld [vmem:[%s4227 + $0x68] sm:$0xff]
  %v4242 = vld [vmem:[%s4227 + $0x70] sm:$0xff]
  %v4243 = vld [vmem:[%s4227 + $0x78] sm:$0xff]
  %v4244 = vld [vmem:[%s4227 + $0x80] sm:$0xff]
  %v4245 = vld [vmem:[%s4227 + $0x88] sm:$0xff]
  %v4246 = vld [vmem:[%s4227 + $0x90] sm:$0xff]
  %v4247 = vld [vmem:[%s4227 + $0x98] sm:$0xff]
  %v4248 = vld [vmem:[%s4227 + $0xa0] sm:$0x11]
  %v4249 = vld [vmem:[%s4227 + $0xa8] sm:$0x11]
  %v4272 = vunpack.c.l.b16 %v4228
  %v4273 = vunpack.c.h.b16 %v4228
  %v4274 = vunpack.c.l.b16 %v4229
  %v4275 = vunpack.c.h.b16 %v4229
  %v4276 = vunpack.c.l.b16 %v4230
  %v4277 = vunpack.c.h.b16 %v4230
  %v4278 = vunpack.c.l.b16 %v4231
  %v4279 = vunpack.c.h.b16 %v4231
  %v4280 = vunpack.c.l.b16 %v4232
  %v4281 = vunpack.c.h.b16 %v4232
  %v4282 = vunpack.c.l.b16 %v4233
  %v4283 = vunpack.c.h.b16 %v4233
  %v4284 = vunpack.c.l.b16 %v4234
  %v4285 = vunpack.c.h.b16 %v4234
  %v4286 = vunpack.c.l.b16 %v4235
  %v4287 = vunpack.c.h.b16 %v4235
  %v4288 = vunpack.c.l.b16 %v4236
  %v4289 = vunpack.c.h.b16 %v4236
  %v4290 = vunpack.c.l.b16 %v4237
  %v4291 = vunpack.c.h.b16 %v4237
  %v4292 = vunpack.c.l.b16 %v4238
  %v4293 = vunpack.c.h.b16 %v4238
  %v4294 = vunpack.c.l.b16 %v4239
  %v4295 = vunpack.c.h.b16 %v4239
  %v4296 = vunpack.c.l.b16 %v4240
  %v4297 = vunpack.c.h.b16 %v4240
  %v4298 = vunpack.c.l.b16 %v4241
  %v4299 = vunpack.c.h.b16 %v4241
  %v4300 = vunpack.c.l.b16 %v4242
  %v4301 = vunpack.c.h.b16 %v4242
  %v4302 = vunpack.c.l.b16 %v4243
  %v4303 = vunpack.c.h.b16 %v4243
  %v4304 = vunpack.c.l.b16 %v4244
  %v4305 = vunpack.c.h.b16 %v4244
  %v4306 = vunpack.c.l.b16 %v4245
  %v4307 = vunpack.c.h.b16 %v4245
  %v4308 = vunpack.c.l.b16 %v4246
  %v4309 = vunpack.c.h.b16 %v4246
  %v4310 = vunpack.c.l.b16 %v4247
  %v4311 = vunpack.c.h.b16 %v4247
  %v4312 = vunpack.c.l.b16 %v4248
  %v4313 = vunpack.c.h.b16 %v4248
  %v4314 = vunpack.c.l.b16 %v4249
  %v4315 = vunpack.c.h.b16 %v4249
  %v4316 = vpack.c.b16 %v4276, %v4272
  %v4317 = vpack.c.b16 %v4277, %v4273
  %v4318 = vpack.c.b16 %v4278, %v4274
  %v4319 = vpack.c.b16 %v4279, %v4275
  %v4320 = vpack.c.b16 %v4284, %v4280
  %v4321 = vpack.c.b16 %v4285, %v4281
  %v4322 = vpack.c.b16 %v4286, %v4282
  %v4323 = vpack.c.b16 %v4287, %v4283
  %v4324 = vpack.c.b16 %v4292, %v4288
  %v4325 = vpack.c.b16 %v4293, %v4289
  %v4326 = vpack.c.b16 %v4294, %v4290
  %v4327 = vpack.c.b16 %v4295, %v4291
  %v4328 = vpack.c.b16 %v4300, %v4296
  %v4329 = vpack.c.b16 %v4301, %v4297
  %v4330 = vpack.c.b16 %v4302, %v4298
  %v4331 = vpack.c.b16 %v4303, %v4299
  %v4332 = vpack.c.b16 %v4308, %v4304
  %v4333 = vpack.c.b16 %v4309, %v4305
  %v4334 = vpack.c.b16 %v4310, %v4306
  %v4335 = vpack.c.b16 %v4311, %v4307
  %v4336 = vpack.c.b16 %v4312, %v4312
  %v4337 = vpack.c.b16 %v4313, %v4313
  %v4338 = vpack.c.b16 %v4314, %v4314
  %v4339 = vpack.c.b16 %v4315, %v4315
  %v4359 = vsel %vm916, %v4319, 0
  %v4362 = vsel %vm916, %v4323, 0
  %v4365 = vsel %vm916, %v4327, 0
  %v4368 = vsel %vm916, %v4331, 0
  %v4371 = vsel %vm916, %v4335, 0
  %v4374 = vsel %vm916, %v4339, 0
  %4376 = vmatprep.subr.bf16.mxu0 0
  %4377 = vmatpush1.bf16.msra.mxu0 %v761
  %4378 = vmatprep.subr.bf16.mxu0 0
  %4379 = vmatpush1.bf16.msra.mxu0 %v762
  %4380 = vmatprep.subr.bf16.mxu0 0
  %4381 = vmatpush1.bf16.msra.mxu0 %v763
  %4382 = vmatprep.subr.bf16.mxu0 0
  %4383 = vmatpush1.bf16.msra.mxu0 %v764
  %4384 = vmatprep.subr.bf16.mxu0 0
  %4385 = vmatpush1.bf16.msra.mxu0 %v765
  %4386 = vmatprep.subr.bf16.mxu0 0
  %4387 = vmatpush1.bf16.msra.mxu0 %v766
  %4388 = vmatprep.subr.bf16.mxu0 0
  %4389 = vmatpush1.bf16.msra.mxu0 %v767
  %4390 = vmatprep.subr.bf16.mxu0 0
  %4391 = vmatpush1.bf16.msra.mxu0 %v768
  %4392 = vmatprep.subr.bf16.mxu0 0
  %4393 = vmatpush1.bf16.msra.mxu0 %v769
  %4394 = vmatprep.subr.bf16.mxu0 0
  %4395 = vmatpush1.bf16.msra.mxu0 %v770
  %4396 = vmatprep.subr.bf16.mxu0 0
  %4397 = vmatpush1.bf16.msra.mxu0 %v771
  %4398 = vmatprep.subr.bf16.mxu0 0
  %4399 = vmatpush1.bf16.msra.mxu0 %v772
  %4400 = vmatprep.subr.bf16.mxu0 0
  %4401 = vmatpush1.bf16.msra.mxu0 %v773
  %4402 = vmatprep.subr.bf16.mxu0 0
  %4403 = vmatpush1.bf16.msra.mxu0 %v774
  %4404 = vmatprep.subr.bf16.mxu0 0
  %4405 = vmatpush1.bf16.msra.mxu0 %v775
  %4406 = vmatprep.subr.bf16.mxu0 0
  %4407 = vmatpush1.bf16.msra.mxu0 %v776
  %4408 = vmatprep.mubr.bf16.mxu0 %v4317
  %4409 = vmatmul.mubr.bf16.gmra.mrb[0].mxu0 %v4316
  %v4410 = vpop.f32.mrb[0].mxu0
  %v4411 = vadd.f32 0.0, %v4410
  %v4412 = vpop.f32.mrb[0].mxu0
  %v4413 = vpop.f32.mrb[0].mxu0
  %v4414 = vadd.f32 0.0, %v4413
  %v4415 = vpop.f32.mrb[0].mxu0
  %4416 = vmatprep.mubr.bf16.mxu0 %v4321
  %4417 = vmatmul.mubr.bf16.gmra.mrb[0].mxu0 %v4320
  %v4418 = vpop.f32.mrb[0].mxu0
  %v4419 = vadd.f32 0.0, %v4418
  %v4420 = vpop.f32.mrb[0].mxu0
  %v4421 = vpop.f32.mrb[0].mxu0
  %v4422 = vadd.f32 0.0, %v4421
  %v4423 = vpop.f32.mrb[0].mxu0
  %4424 = vmatprep.mubr.bf16.mxu0 %v4325
  %4425 = vmatmul.mubr.bf16.gmra.mrb[0].mxu0 %v4324
  %v4426 = vpop.f32.mrb[0].mxu0
  %v4427 = vadd.f32 0.0, %v4426
  %v4428 = vpop.f32.mrb[0].mxu0
  %v4429 = vpop.f32.mrb[0].mxu0
  %v4430 = vadd.f32 0.0, %v4429
  %v4431 = vpop.f32.mrb[0].mxu0
  %4432 = vmatprep.mubr.bf16.mxu0 %v4329
  %4433 = vmatmul.mubr.bf16.gmra.mrb[0].mxu0 %v4328
  %v4434 = vpop.f32.mrb[0].mxu0
  %v4435 = vadd.f32 0.0, %v4434
  %v4436 = vpop.f32.mrb[0].mxu0
  %v4437 = vpop.f32.mrb[0].mxu0
  %v4438 = vadd.f32 0.0, %v4437
  %v4439 = vpop.f32.mrb[0].mxu0
  %4440 = vmatprep.mubr.bf16.mxu0 %v4333
  %4441 = vmatmul.mubr.bf16.gmra.mrb[0].mxu0 %v4332
  %v4442 = vpop.f32.mrb[0].mxu0
  %v4443 = vadd.f32 0.0, %v4442
  %v4444 = vpop.f32.mrb[0].mxu0
  %v4445 = vpop.f32.mrb[0].mxu0
  %v4446 = vadd.f32 0.0, %v4445
  %v4447 = vpop.f32.mrb[0].mxu0
  %4448 = vmatprep.mubr.bf16.mxu0 %v4337
  %4449 = vmatmul.mubr.bf16.gmra.mrb[0].mxu0 %v4336
  %v4450 = vpop.f32.mrb[0].mxu0
  %v4451 = vadd.f32 0.0, %v4450
  %v4452 = vpop.f32.mrb[0].mxu0
  %v4453 = vpop.f32.mrb[0].mxu0
  %v4454 = vpop.f32.mrb[0].mxu0
  %4455 = vdwg.mxu0
  %4456 = vmatprep.subr.bf16.mxu0 0
  %4457 = vmatpush1.bf16.msra.mxu0 %v777
  %4458 = vmatprep.subr.bf16.mxu0 0
  %4459 = vmatpush1.bf16.msra.mxu0 %v778
  %4460 = vmatprep.subr.bf16.mxu0 0
  %4461 = vmatpush1.bf16.msra.mxu0 %v779
  %4462 = vmatprep.subr.bf16.mxu0 0
  %4463 = vmatpush1.bf16.msra.mxu0 %v780
  %4464 = vmatprep.subr.bf16.mxu0 0
  %4465 = vmatpush1.bf16.msra.mxu0 %v781
  %4466 = vmatprep.subr.bf16.mxu0 0
  %4467 = vmatpush1.bf16.msra.mxu0 %v782
  %4468 = vmatprep.subr.bf16.mxu0 0
  %4469 = vmatpush1.bf16.msra.mxu0 %v783
  %4470 = vmatprep.subr.bf16.mxu0 0
  %4471 = vmatpush1.bf16.msra.mxu0 %v784
  %4472 = vmatprep.subr.bf16.mxu0 0
  %4473 = vmatpush1.bf16.msra.mxu0 %v785
  %4474 = vmatprep.subr.bf16.mxu0 0
  %4475 = vmatpush1.bf16.msra.mxu0 0
  %4476 = vmatprep.subr.bf16.mxu0 0
  %4477 = vmatpush1.bf16.msra.mxu0 0
  %4478 = vmatprep.subr.bf16.mxu0 0
  %4479 = vmatpush1.bf16.msra.mxu0 0
  %4480 = vmatprep.subr.bf16.mxu0 0
  %4481 = vmatpush1.bf16.msra.mxu0 0
  %4482 = vmatprep.subr.bf16.mxu0 0
  %4483 = vmatpush1.bf16.msra.mxu0 0
  %4484 = vmatprep.subr.bf16.mxu0 0
  %4485 = vmatpush1.bf16.msra.mxu0 0
  %4486 = vmatprep.subr.bf16.mxu0 0
  %4487 = vmatpush1.bf16.msra.mxu0 0
  %4488 = vmatprep.mubr.bf16.mxu0 %v4359
  %4489 = vmatmul.mubr.bf16.gmra.mrb[0].mxu0 %v4318
  %v4490 = vpop.f32.mrb[0].mxu0
  %v4491 = vadd.f32 %v4411, %v4490
  %v4492 = vpop.f32.mrb[0].mxu0
  %v4493 = vpop.f32.mrb[0].mxu0
  %v4494 = vadd.f32 %v4414, %v4493
  %v4495 = vpop.f32.mrb[0].mxu0
  %4496 = vmatprep.mubr.bf16.mxu0 %v4362
  %4497 = vmatmul.mubr.bf16.gmra.mrb[0].mxu0 %v4322
  %v4498 = vpop.f32.mrb[0].mxu0
  %v4499 = vadd.f32 %v4419, %v4498
  %v4500 = vpop.f32.mrb[0].mxu0
  %v4501 = vpop.f32.mrb[0].mxu0
  %v4502 = vadd.f32 %v4422, %v4501
  %v4503 = vpop.f32.mrb[0].mxu0
  %4504 = vmatprep.mubr.bf16.mxu0 %v4365
  %4505 = vmatmul.mubr.bf16.gmra.mrb[0].mxu0 %v4326
  %v4506 = vpop.f32.mrb[0].mxu0
  %v4507 = vadd.f32 %v4427, %v4506
  %v4508 = vpop.f32.mrb[0].mxu0
  %v4509 = vpop.f32.mrb[0].mxu0
  %v4510 = vadd.f32 %v4430, %v4509
  %v4511 = vpop.f32.mrb[0].mxu0
  %4512 = vmatprep.mubr.bf16.mxu0 %v4368
  %4513 = vmatmul.mubr.bf16.gmra.mrb[0].mxu0 %v4330
  %v4514 = vpop.f32.mrb[0].mxu0
  %v4515 = vadd.f32 %v4435, %v4514
  %v4516 = vpop.f32.mrb[0].mxu0
  %v4517 = vpop.f32.mrb[0].mxu0
  %v4518 = vadd.f32 %v4438, %v4517
  %v4519 = vpop.f32.mrb[0].mxu0
  %4520 = vmatprep.mubr.bf16.mxu0 %v4371
  %4521 = vmatmul.mubr.bf16.gmra.mrb[0].mxu0 %v4334
  %v4522 = vpop.f32.mrb[0].mxu0
  %v4523 = vadd.f32 %v4443, %v4522
  %v4524 = vpop.f32.mrb[0].mxu0
  %v4525 = vpop.f32.mrb[0].mxu0
  %v4526 = vadd.f32 %v4446, %v4525
  %v4527 = vpop.f32.mrb[0].mxu0
  %4528 = vmatprep.mubr.bf16.mxu0 %v4374
  %4529 = vmatmul.mubr.bf16.gmra.mrb[0].mxu0 %v4338
  %v4530 = vpop.f32.mrb[0].mxu0
  %v4531 = vadd.f32 %v4451, %v4530
  %v4532 = vpop.f32.mrb[0].mxu0
  %v4533 = vpop.f32.mrb[0].mxu0
  %v4534 = vpop.f32.mrb[0].mxu0
  %4535 = vdwg.mxu0
  %v4536 = vpack.c.bf16 %v4494, %v4491
  %v4537 = vpack.c.bf16 %v4502, %v4499
  %v4538 = vpack.c.bf16 %v4510, %v4507
  %v4539 = vpack.c.bf16 %v4518, %v4515
  %v4540 = vpack.c.bf16 %v4526, %v4523
  %v4541 = vpack.c.bf16 %v4531, %v4531
  %s4542 = scalar_lea.vmem %s4, 64
  %v4543 = vld [vmem:[%s4542] sm:$0xf]
  %v4544 = vld [vmem:[%s4542 + $0x4] sm:$0xf]
  %v4547 = vunpack.c.l.b16 %v4543
  %v4548 = vunpack.c.l.b16 %v4544
  %v4549 = vpack.c.b16 %v4548, %v4547
  %v4552 = vsel %vm916, %v4536, 0
  %v4555 = vsel %vm916, %v4537, 0
  %v4558 = vsel %vm916, %v4538, 0
  %v4561 = vsel %vm916, %v4539, 0
  %v4564 = vsel %vm916, %v4540, 0
  %v4567 = vsel %vm916, %v4541, 0
  %4569 = vmatprep.subr.bf16.mxu0 0
  %4570 = vmatpush1.bf16.msra.mxu0 %v4549
  %4571 = vmatprep.subr.bf16.mxu0 0
  %4572 = vmatpush1.bf16.msra.mxu0 0
  %4573 = vmatprep.subr.bf16.mxu0 0
  %4574 = vmatpush1.bf16.msra.mxu0 0
  %4575 = vmatprep.subr.bf16.mxu0 0
  %4576 = vmatpush1.bf16.msra.mxu0 0
  %4577 = vmatprep.subr.bf16.mxu0 0
  %4578 = vmatpush1.bf16.msra.mxu0 0
  %4579 = vmatprep.subr.bf16.mxu0 0
  %4580 = vmatpush1.bf16.msra.mxu0 0
  %4581 = vmatprep.subr.bf16.mxu0 0
  %4582 = vmatpush1.bf16.msra.mxu0 0
  %4583 = vmatprep.subr.bf16.mxu0 0
  %4584 = vmatpush1.bf16.msra.mxu0 0
  %4585 = vmatprep.subr.bf16.mxu0 0
  %4586 = vmatpush1.bf16.msra.mxu0 0
  %4587 = vmatprep.subr.bf16.mxu0 0
  %4588 = vmatpush1.bf16.msra.mxu0 0
  %4589 = vmatprep.subr.bf16.mxu0 0
  %4590 = vmatpush1.bf16.msra.mxu0 0
  %4591 = vmatprep.subr.bf16.mxu0 0
  %4592 = vmatpush1.bf16.msra.mxu0 0
  %4593 = vmatprep.subr.bf16.mxu0 0
  %4594 = vmatpush1.bf16.msra.mxu0 0
  %4595 = vmatprep.subr.bf16.mxu0 0
  %4596 = vmatpush1.bf16.msra.mxu0 0
  %4597 = vmatprep.subr.bf16.mxu0 0
  %4598 = vmatpush1.bf16.msra.mxu0 0
  %4599 = vmatprep.subr.bf16.mxu0 0
  %4600 = vmatpush1.bf16.msra.mxu0 0
  %4601 = vmatprep.mubr.bf16.mxu0 0
  %4602 = vmatmul.mubr.bf16.gmra.mrb[0].mxu0 %v4552
  %v4603 = vpop.f32.mrb[0].mxu0
  %v4604 = vadd.f32 0.0, %v4603
  %v4605 = vpop.f32.mrb[0].mxu0
  %v4606 = vpop.f32.mrb[0].mxu0
  %v4607 = vadd.f32 0.0, %v4606
  %v4608 = vpop.f32.mrb[0].mxu0
  %4609 = vmatprep.mubr.bf16.mxu0 0
  %4610 = vmatmul.mubr.bf16.gmra.mrb[0].mxu0 %v4555
  %v4611 = vpop.f32.mrb[0].mxu0
  %v4612 = vadd.f32 0.0, %v4611
  %v4613 = vpop.f32.mrb[0].mxu0
  %v4614 = vpop.f32.mrb[0].mxu0
  %v4615 = vadd.f32 0.0, %v4614
  %v4616 = vpop.f32.mrb[0].mxu0
  %4617 = vmatprep.mubr.bf16.mxu0 0
  %4618 = vmatmul.mubr.bf16.gmra.mrb[0].mxu0 %v4558
  %v4619 = vpop.f32.mrb[0].mxu0
  %v4620 = vadd.f32 0.0, %v4619
  %v4621 = vpop.f32.mrb[0].mxu0
  %v4622 = vpop.f32.mrb[0].mxu0
  %v4623 = vadd.f32 0.0, %v4622
  %v4624 = vpop.f32.mrb[0].mxu0
  %4625 = vmatprep.mubr.bf16.mxu0 0
  %4626 = vmatmul.mubr.bf16.gmra.mrb[0].mxu0 %v4561
  %v4627 = vpop.f32.mrb[0].mxu0
  %v4628 = vadd.f32 0.0, %v4627
  %v4629 = vpop.f32.mrb[0].mxu0
  %v4630 = vpop.f32.mrb[0].mxu0
  %v4631 = vadd.f32 0.0, %v4630
  %v4632 = vpop.f32.mrb[0].mxu0
  %4633 = vmatprep.mubr.bf16.mxu0 0
  %4634 = vmatmul.mubr.bf16.gmra.mrb[0].mxu0 %v4564
  %v4635 = vpop.f32.mrb[0].mxu0
  %v4636 = vadd.f32 0.0, %v4635
  %v4637 = vpop.f32.mrb[0].mxu0
  %v4638 = vpop.f32.mrb[0].mxu0
  %v4639 = vadd.f32 0.0, %v4638
  %v4640 = vpop.f32.mrb[0].mxu0
  %4641 = vmatprep.mubr.bf16.mxu0 0
  %4642 = vmatmul.mubr.bf16.gmra.mrb[0].mxu0 %v4567
  %v4643 = vpop.f32.mrb[0].mxu0
  %v4644 = vadd.f32 0.0, %v4643
  %v4645 = vpop.f32.mrb[0].mxu0
  %v4646 = vpop.f32.mrb[0].mxu0
  %v4647 = vpop.f32.mrb[0].mxu0
  %4648 = vdwg.mxu0
  %v4649 = vadd.f32 %v4216, %v4604
  %v4650 = vadd.f32 %v4217, %v4607
  %v4651 = vadd.f32 %v4218, %v4612
  %v4652 = vadd.f32 %v4219, %v4615
  %v4653 = vadd.f32 %v4220, %v4620
  %v4654 = vadd.f32 %v4221, %v4623
  %v4655 = vadd.f32 %v4222, %v4628
  %v4656 = vadd.f32 %v4223, %v4631
  %v4657 = vadd.f32 %v4224, %v4636
  %v4658 = vadd.f32 %v4225, %v4639
  %v4659 = vadd.f32 %v4226, %v4644
  %s4660 = scalar_lea.vmem %s3, 1584
  %v4661 = vld [vmem:[%s4660] sm:$0xff]
  %v4662 = vld [vmem:[%s4660 + $0x8] sm:$0xff]
  %v4663 = vld [vmem:[%s4660 + $0x10] sm:$0xff]
  %v4664 = vld [vmem:[%s4660 + $0x18] sm:$0xff]
  %v4665 = vld [vmem:[%s4660 + $0x20] sm:$0xff]
  %v4666 = vld [vmem:[%s4660 + $0x28] sm:$0xff]
  %v4667 = vld [vmem:[%s4660 + $0x30] sm:$0xff]
  %v4668 = vld [vmem:[%s4660 + $0x38] sm:$0xff]
  %v4669 = vld [vmem:[%s4660 + $0x40] sm:$0xff]
  %v4670 = vld [vmem:[%s4660 + $0x48] sm:$0xff]
  %v4671 = vld [vmem:[%s4660 + $0x50] sm:$0xff]
  %v4672 = vld [vmem:[%s4660 + $0x58] sm:$0xff]
  %v4673 = vld [vmem:[%s4660 + $0x60] sm:$0xff]
  %v4674 = vld [vmem:[%s4660 + $0x68] sm:$0xff]
  %v4675 = vld [vmem:[%s4660 + $0x70] sm:$0xff]
  %v4676 = vld [vmem:[%s4660 + $0x78] sm:$0xff]
  %v4677 = vld [vmem:[%s4660 + $0x80] sm:$0xff]
  %v4678 = vld [vmem:[%s4660 + $0x88] sm:$0xff]
  %v4679 = vld [vmem:[%s4660 + $0x90] sm:$0xff]
  %v4680 = vld [vmem:[%s4660 + $0x98] sm:$0xff]
  %v4681 = vld [vmem:[%s4660 + $0xa0] sm:$0x11]
  %v4682 = vld [vmem:[%s4660 + $0xa8] sm:$0x11]
  %v4705 = vunpack.c.l.b16 %v4661
  %v4706 = vunpack.c.h.b16 %v4661
  %v4707 = vunpack.c.l.b16 %v4662
  %v4708 = vunpack.c.h.b16 %v4662
  %v4709 = vunpack.c.l.b16 %v4663
  %v4710 = vunpack.c.h.b16 %v4663
  %v4711 = vunpack.c.l.b16 %v4664
  %v4712 = vunpack.c.h.b16 %v4664
  %v4713 = vunpack.c.l.b16 %v4665
  %v4714 = vunpack.c.h.b16 %v4665
  %v4715 = vunpack.c.l.b16 %v4666
  %v4716 = vunpack.c.h.b16 %v4666
  %v4717 = vunpack.c.l.b16 %v4667
  %v4718 = vunpack.c.h.b16 %v4667
  %v4719 = vunpack.c.l.b16 %v4668
  %v4720 = vunpack.c.h.b16 %v4668
  %v4721 = vunpack.c.l.b16 %v4669
  %v4722 = vunpack.c.h.b16 %v4669
  %v4723 = vunpack.c.l.b16 %v4670
  %v4724 = vunpack.c.h.b16 %v4670
  %v4725 = vunpack.c.l.b16 %v4671
  %v4726 = vunpack.c.h.b16 %v4671
  %v4727 = vunpack.c.l.b16 %v4672
  %v4728 = vunpack.c.h.b16 %v4672
  %v4729 = vunpack.c.l.b16 %v4673
  %v4730 = vunpack.c.h.b16 %v4673
  %v4731 = vunpack.c.l.b16 %v4674
  %v4732 = vunpack.c.h.b16 %v4674
  %v4733 = vunpack.c.l.b16 %v4675
  %v4734 = vunpack.c.h.b16 %v4675
  %v4735 = vunpack.c.l.b16 %v4676
  %v4736 = vunpack.c.h.b16 %v4676
  %v4737 = vunpack.c.l.b16 %v4677
  %v4738 = vunpack.c.h.b16 %v4677
  %v4739 = vunpack.c.l.b16 %v4678
  %v4740 = vunpack.c.h.b16 %v4678
  %v4741 = vunpack.c.l.b16 %v4679
  %v4742 = vunpack.c.h.b16 %v4679
  %v4743 = vunpack.c.l.b16 %v4680
  %v4744 = vunpack.c.h.b16 %v4680
  %v4745 = vunpack.c.l.b16 %v4681
  %v4746 = vunpack.c.h.b16 %v4681
  %v4747 = vunpack.c.l.b16 %v4682
  %v4748 = vunpack.c.h.b16 %v4682
  %v4749 = vpack.c.b16 %v4709, %v4705
  %v4750 = vpack.c.b16 %v4710, %v4706
  %v4751 = vpack.c.b16 %v4711, %v4707
  %v4752 = vpack.c.b16 %v4712, %v4708
  %v4753 = vpack.c.b16 %v4717, %v4713
  %v4754 = vpack.c.b16 %v4718, %v4714
  %v4755 = vpack.c.b16 %v4719, %v4715
  %v4756 = vpack.c.b16 %v4720, %v4716
  %v4757 = vpack.c.b16 %v4725, %v4721
  %v4758 = vpack.c.b16 %v4726, %v4722
  %v4759 = vpack.c.b16 %v4727, %v4723
  %v4760 = vpack.c.b16 %v4728, %v4724
  %v4761 = vpack.c.b16 %v4733, %v4729
  %v4762 = vpack.c.b16 %v4734, %v4730
  %v4763 = vpack.c.b16 %v4735, %v4731
  %v4764 = vpack.c.b16 %v4736, %v4732
  %v4765 = vpack.c.b16 %v4741, %v4737
  %v4766 = vpack.c.b16 %v4742, %v4738
  %v4767 = vpack.c.b16 %v4743, %v4739
  %v4768 = vpack.c.b16 %v4744, %v4740
  %v4769 = vpack.c.b16 %v4745, %v4745
  %v4770 = vpack.c.b16 %v4746, %v4746
  %v4771 = vpack.c.b16 %v4747, %v4747
  %v4772 = vpack.c.b16 %v4748, %v4748
  %v4792 = vsel %vm916, %v4752, 0
  %v4795 = vsel %vm916, %v4756, 0
  %v4798 = vsel %vm916, %v4760, 0
  %v4801 = vsel %vm916, %v4764, 0
  %v4804 = vsel %vm916, %v4768, 0
  %v4807 = vsel %vm916, %v4772, 0
  %4809 = vmatprep.subr.bf16.mxu0 0
  %4810 = vmatpush1.bf16.msra.mxu0 %v761
  %4811 = vmatprep.subr.bf16.mxu0 0
  %4812 = vmatpush1.bf16.msra.mxu0 %v762
  %4813 = vmatprep.subr.bf16.mxu0 0
  %4814 = vmatpush1.bf16.msra.mxu0 %v763
  %4815 = vmatprep.subr.bf16.mxu0 0
  %4816 = vmatpush1.bf16.msra.mxu0 %v764
  %4817 = vmatprep.subr.bf16.mxu0 0
  %4818 = vmatpush1.bf16.msra.mxu0 %v765
  %4819 = vmatprep.subr.bf16.mxu0 0
  %4820 = vmatpush1.bf16.msra.mxu0 %v766
  %4821 = vmatprep.subr.bf16.mxu0 0
  %4822 = vmatpush1.bf16.msra.mxu0 %v767
  %4823 = vmatprep.subr.bf16.mxu0 0
  %4824 = vmatpush1.bf16.msra.mxu0 %v768
  %4825 = vmatprep.subr.bf16.mxu0 0
  %4826 = vmatpush1.bf16.msra.mxu0 %v769
  %4827 = vmatprep.subr.bf16.mxu0 0
  %4828 = vmatpush1.bf16.msra.mxu0 %v770
  %4829 = vmatprep.subr.bf16.mxu0 0
  %4830 = vmatpush1.bf16.msra.mxu0 %v771
  %4831 = vmatprep.subr.bf16.mxu0 0
  %4832 = vmatpush1.bf16.msra.mxu0 %v772
  %4833 = vmatprep.subr.bf16.mxu0 0
  %4834 = vmatpush1.bf16.msra.mxu0 %v773
  %4835 = vmatprep.subr.bf16.mxu0 0
  %4836 = vmatpush1.bf16.msra.mxu0 %v774
  %4837 = vmatprep.subr.bf16.mxu0 0
  %4838 = vmatpush1.bf16.msra.mxu0 %v775
  %4839 = vmatprep.subr.bf16.mxu0 0
  %4840 = vmatpush1.bf16.msra.mxu0 %v776
  %4841 = vmatprep.mubr.bf16.mxu0 %v4750
  %4842 = vmatmul.mubr.bf16.gmra.mrb[0].mxu0 %v4749
  %v4843 = vpop.f32.mrb[0].mxu0
  %v4844 = vadd.f32 0.0, %v4843
  %v4845 = vpop.f32.mrb[0].mxu0
  %v4846 = vpop.f32.mrb[0].mxu0
  %v4847 = vadd.f32 0.0, %v4846
  %v4848 = vpop.f32.mrb[0].mxu0
  %4849 = vmatprep.mubr.bf16.mxu0 %v4754
  %4850 = vmatmul.mubr.bf16.gmra.mrb[0].mxu0 %v4753
  %v4851 = vpop.f32.mrb[0].mxu0
  %v4852 = vadd.f32 0.0, %v4851
  %v4853 = vpop.f32.mrb[0].mxu0
  %v4854 = vpop.f32.mrb[0].mxu0
  %v4855 = vadd.f32 0.0, %v4854
  %v4856 = vpop.f32.mrb[0].mxu0
  %4857 = vmatprep.mubr.bf16.mxu0 %v4758
  %4858 = vmatmul.mubr.bf16.gmra.mrb[0].mxu0 %v4757
  %v4859 = vpop.f32.mrb[0].mxu0
  %v4860 = vadd.f32 0.0, %v4859
  %v4861 = vpop.f32.mrb[0].mxu0
  %v4862 = vpop.f32.mrb[0].mxu0
  %v4863 = vadd.f32 0.0, %v4862
  %v4864 = vpop.f32.mrb[0].mxu0
  %4865 = vmatprep.mubr.bf16.mxu0 %v4762
  %4866 = vmatmul.mubr.bf16.gmra.mrb[0].mxu0 %v4761
  %v4867 = vpop.f32.mrb[0].mxu0
  %v4868 = vadd.f32 0.0, %v4867
  %v4869 = vpop.f32.mrb[0].mxu0
  %v4870 = vpop.f32.mrb[0].mxu0
  %v4871 = vadd.f32 0.0, %v4870
  %v4872 = vpop.f32.mrb[0].mxu0
  %4873 = vmatprep.mubr.bf16.mxu0 %v4766
  %4874 = vmatmul.mubr.bf16.gmra.mrb[0].mxu0 %v4765
  %v4875 = vpop.f32.mrb[0].mxu0
  %v4876 = vadd.f32 0.0, %v4875
  %v4877 = vpop.f32.mrb[0].mxu0
  %v4878 = vpop.f32.mrb[0].mxu0
  %v4879 = vadd.f32 0.0, %v4878
  %v4880 = vpop.f32.mrb[0].mxu0
  %4881 = vmatprep.mubr.bf16.mxu0 %v4770
  %4882 = vmatmul.mubr.bf16.gmra.mrb[0].mxu0 %v4769
  %v4883 = vpop.f32.mrb[0].mxu0
  %v4884 = vadd.f32 0.0, %v4883
  %v4885 = vpop.f32.mrb[0].mxu0
  %v4886 = vpop.f32.mrb[0].mxu0
  %v4887 = vpop.f32.mrb[0].mxu0
  %4888 = vdwg.mxu0
  %4889 = vmatprep.subr.bf16.mxu0 0
  %4890 = vmatpush1.bf16.msra.mxu0 %v777
  %4891 = vmatprep.subr.bf16.mxu0 0
  %4892 = vmatpush1.bf16.msra.mxu0 %v778
  %4893 = vmatprep.subr.bf16.mxu0 0
  %4894 = vmatpush1.bf16.msra.mxu0 %v779
  %4895 = vmatprep.subr.bf16.mxu0 0
  %4896 = vmatpush1.bf16.msra.mxu0 %v780
  %4897 = vmatprep.subr.bf16.mxu0 0
  %4898 = vmatpush1.bf16.msra.mxu0 %v781
  %4899 = vmatprep.subr.bf16.mxu0 0
  %4900 = vmatpush1.bf16.msra.mxu0 %v782
  %4901 = vmatprep.subr.bf16.mxu0 0
  %4902 = vmatpush1.bf16.msra.mxu0 %v783
  %4903 = vmatprep.subr.bf16.mxu0 0
  %4904 = vmatpush1.bf16.msra.mxu0 %v784
  %4905 = vmatprep.subr.bf16.mxu0 0
  %4906 = vmatpush1.bf16.msra.mxu0 %v785
  %4907 = vmatprep.subr.bf16.mxu0 0
  %4908 = vmatpush1.bf16.msra.mxu0 0
  %4909 = vmatprep.subr.bf16.mxu0 0
  %4910 = vmatpush1.bf16.msra.mxu0 0
  %4911 = vmatprep.subr.bf16.mxu0 0
  %4912 = vmatpush1.bf16.msra.mxu0 0
  %4913 = vmatprep.subr.bf16.mxu0 0
  %4914 = vmatpush1.bf16.msra.mxu0 0
  %4915 = vmatprep.subr.bf16.mxu0 0
  %4916 = vmatpush1.bf16.msra.mxu0 0
  %4917 = vmatprep.subr.bf16.mxu0 0
  %4918 = vmatpush1.bf16.msra.mxu0 0
  %4919 = vmatprep.subr.bf16.mxu0 0
  %4920 = vmatpush1.bf16.msra.mxu0 0
  %4921 = vmatprep.mubr.bf16.mxu0 %v4792
  %4922 = vmatmul.mubr.bf16.gmra.mrb[0].mxu0 %v4751
  %v4923 = vpop.f32.mrb[0].mxu0
  %v4924 = vadd.f32 %v4844, %v4923
  %v4925 = vpop.f32.mrb[0].mxu0
  %v4926 = vpop.f32.mrb[0].mxu0
  %v4927 = vadd.f32 %v4847, %v4926
  %v4928 = vpop.f32.mrb[0].mxu0
  %4929 = vmatprep.mubr.bf16.mxu0 %v4795
  %4930 = vmatmul.mubr.bf16.gmra.mrb[0].mxu0 %v4755
  %v4931 = vpop.f32.mrb[0].mxu0
  %v4932 = vadd.f32 %v4852, %v4931
  %v4933 = vpop.f32.mrb[0].mxu0
  %v4934 = vpop.f32.mrb[0].mxu0
  %v4935 = vadd.f32 %v4855, %v4934
  %v4936 = vpop.f32.mrb[0].mxu0
  %4937 = vmatprep.mubr.bf16.mxu0 %v4798
  %4938 = vmatmul.mubr.bf16.gmra.mrb[0].mxu0 %v4759
  %v4939 = vpop.f32.mrb[0].mxu0
  %v4940 = vadd.f32 %v4860, %v4939
  %v4941 = vpop.f32.mrb[0].mxu0
  %v4942 = vpop.f32.mrb[0].mxu0
  %v4943 = vadd.f32 %v4863, %v4942
  %v4944 = vpop.f32.mrb[0].mxu0
  %4945 = vmatprep.mubr.bf16.mxu0 %v4801
  %4946 = vmatmul.mubr.bf16.gmra.mrb[0].mxu0 %v4763
  %v4947 = vpop.f32.mrb[0].mxu0
  %v4948 = vadd.f32 %v4868, %v4947
  %v4949 = vpop.f32.mrb[0].mxu0
  %v4950 = vpop.f32.mrb[0].mxu0
  %v4951 = vadd.f32 %v4871, %v4950
  %v4952 = vpop.f32.mrb[0].mxu0
  %4953 = vmatprep.mubr.bf16.mxu0 %v4804
  %4954 = vmatmul.mubr.bf16.gmra.mrb[0].mxu0 %v4767
  %v4955 = vpop.f32.mrb[0].mxu0
  %v4956 = vadd.f32 %v4876, %v4955
  %v4957 = vpop.f32.mrb[0].mxu0
  %v4958 = vpop.f32.mrb[0].mxu0
  %v4959 = vadd.f32 %v4879, %v4958
  %v4960 = vpop.f32.mrb[0].mxu0
  %4961 = vmatprep.mubr.bf16.mxu0 %v4807
  %4962 = vmatmul.mubr.bf16.gmra.mrb[0].mxu0 %v4771
  %v4963 = vpop.f32.mrb[0].mxu0
  %v4964 = vadd.f32 %v4884, %v4963
  %v4965 = vpop.f32.mrb[0].mxu0
  %v4966 = vpop.f32.mrb[0].mxu0
  %v4967 = vpop.f32.mrb[0].mxu0
  %4968 = vdwg.mxu0
  %v4969 = vpack.c.bf16 %v4927, %v4924
  %v4970 = vpack.c.bf16 %v4935, %v4932
  %v4971 = vpack.c.bf16 %v4943, %v4940
  %v4972 = vpack.c.bf16 %v4951, %v4948
  %v4973 = vpack.c.bf16 %v4959, %v4956
  %v4974 = vpack.c.bf16 %v4964, %v4964
  %s4975 = scalar_lea.vmem %s4, 72
  %v4976 = vld [vmem:[%s4975] sm:$0xf]
  %v4977 = vld [vmem:[%s4975 + $0x4] sm:$0xf]
  %v4980 = vunpack.c.l.b16 %v4976
  %v4981 = vunpack.c.l.b16 %v4977
  %v4982 = vpack.c.b16 %v4981, %v4980
  %v4985 = vsel %vm916, %v4969, 0
  %v4988 = vsel %vm916, %v4970, 0
  %v4991 = vsel %vm916, %v4971, 0
  %v4994 = vsel %vm916, %v4972, 0
  %v4997 = vsel %vm916, %v4973, 0
  %v5000 = vsel %vm916, %v4974, 0
  %5002 = vmatprep.subr.bf16.mxu0 0
  %5003 = vmatpush1.bf16.msra.mxu0 %v4982
  %5004 = vmatprep.subr.bf16.mxu0 0
  %5005 = vmatpush1.bf16.msra.mxu0 0
  %5006 = vmatprep.subr.bf16.mxu0 0
  %5007 = vmatpush1.bf16.msra.mxu0 0
  %5008 = vmatprep.subr.bf16.mxu0 0
  %5009 = vmatpush1.bf16.msra.mxu0 0
  %5010 = vmatprep.subr.bf16.mxu0 0
  %5011 = vmatpush1.bf16.msra.mxu0 0
  %5012 = vmatprep.subr.bf16.mxu0 0
  %5013 = vmatpush1.bf16.msra.mxu0 0
  %5014 = vmatprep.subr.bf16.mxu0 0
  %5015 = vmatpush1.bf16.msra.mxu0 0
  %5016 = vmatprep.subr.bf16.mxu0 0
  %5017 = vmatpush1.bf16.msra.mxu0 0
  %5018 = vmatprep.subr.bf16.mxu0 0
  %5019 = vmatpush1.bf16.msra.mxu0 0
  %5020 = vmatprep.subr.bf16.mxu0 0
  %5021 = vmatpush1.bf16.msra.mxu0 0
  %5022 = vmatprep.subr.bf16.mxu0 0
  %5023 = vmatpush1.bf16.msra.mxu0 0
  %5024 = vmatprep.subr.bf16.mxu0 0
  %5025 = vmatpush1.bf16.msra.mxu0 0
  %5026 = vmatprep.subr.bf16.mxu0 0
  %5027 = vmatpush1.bf16.msra.mxu0 0
  %5028 = vmatprep.subr.bf16.mxu0 0
  %5029 = vmatpush1.bf16.msra.mxu0 0
  %5030 = vmatprep.subr.bf16.mxu0 0
  %5031 = vmatpush1.bf16.msra.mxu0 0
  %5032 = vmatprep.subr.bf16.mxu0 0
  %5033 = vmatpush1.bf16.msra.mxu0 0
  %5034 = vmatprep.mubr.bf16.mxu0 0
  %5035 = vmatmul.mubr.bf16.gmra.mrb[0].mxu0 %v4985
  %v5036 = vpop.f32.mrb[0].mxu0
  %v5037 = vadd.f32 0.0, %v5036
  %v5038 = vpop.f32.mrb[0].mxu0
  %v5039 = vpop.f32.mrb[0].mxu0
  %v5040 = vadd.f32 0.0, %v5039
  %v5041 = vpop.f32.mrb[0].mxu0
  %5042 = vmatprep.mubr.bf16.mxu0 0
  %5043 = vmatmul.mubr.bf16.gmra.mrb[0].mxu0 %v4988
  %v5044 = vpop.f32.mrb[0].mxu0
  %v5045 = vadd.f32 0.0, %v5044
  %v5046 = vpop.f32.mrb[0].mxu0
  %v5047 = vpop.f32.mrb[0].mxu0
  %v5048 = vadd.f32 0.0, %v5047
  %v5049 = vpop.f32.mrb[0].mxu0
  %5050 = vmatprep.mubr.bf16.mxu0 0
  %5051 = vmatmul.mubr.bf16.gmra.mrb[0].mxu0 %v4991
  %v5052 = vpop.f32.mrb[0].mxu0
  %v5053 = vadd.f32 0.0, %v5052
  %v5054 = vpop.f32.mrb[0].mxu0
  %v5055 = vpop.f32.mrb[0].mxu0
  %v5056 = vadd.f32 0.0, %v5055
  %v5057 = vpop.f32.mrb[0].mxu0
  %5058 = vmatprep.mubr.bf16.mxu0 0
  %5059 = vmatmul.mubr.bf16.gmra.mrb[0].mxu0 %v4994
  %v5060 = vpop.f32.mrb[0].mxu0
  %v5061 = vadd.f32 0.0, %v5060
  %v5062 = vpop.f32.mrb[0].mxu0
  %v5063 = vpop.f32.mrb[0].mxu0
  %v5064 = vadd.f32 0.0, %v5063
  %v5065 = vpop.f32.mrb[0].mxu0
  %5066 = vmatprep.mubr.bf16.mxu0 0
  %5067 = vmatmul.mubr.bf16.gmra.mrb[0].mxu0 %v4997
  %v5068 = vpop.f32.mrb[0].mxu0
  %v5069 = vadd.f32 0.0, %v5068
  %v5070 = vpop.f32.mrb[0].mxu0
  %v5071 = vpop.f32.mrb[0].mxu0
  %v5072 = vadd.f32 0.0, %v5071
  %v5073 = vpop.f32.mrb[0].mxu0
  %5074 = vmatprep.mubr.bf16.mxu0 0
  %5075 = vmatmul.mubr.bf16.gmra.mrb[0].mxu0 %v5000
  %v5076 = vpop.f32.mrb[0].mxu0
  %v5077 = vadd.f32 0.0, %v5076
  %v5078 = vpop.f32.mrb[0].mxu0
  %v5079 = vpop.f32.mrb[0].mxu0
  %v5080 = vpop.f32.mrb[0].mxu0
  %5081 = vdwg.mxu0
  %v5082 = vadd.f32 %v4649, %v5037
  %v5083 = vadd.f32 %v4650, %v5040
  %v5084 = vadd.f32 %v4651, %v5045
  %v5085 = vadd.f32 %v4652, %v5048
  %v5086 = vadd.f32 %v4653, %v5053
  %v5087 = vadd.f32 %v4654, %v5056
  %v5088 = vadd.f32 %v4655, %v5061
  %v5089 = vadd.f32 %v4656, %v5064
  %v5090 = vadd.f32 %v4657, %v5069
  %v5091 = vadd.f32 %v4658, %v5072
  %v5092 = vadd.f32 %v4659, %v5077
  %s5093 = scalar_lea.vmem %s3, 1760
  %v5094 = vld [vmem:[%s5093] sm:$0xff]
  %v5095 = vld [vmem:[%s5093 + $0x8] sm:$0xff]
  %v5096 = vld [vmem:[%s5093 + $0x10] sm:$0xff]
  %v5097 = vld [vmem:[%s5093 + $0x18] sm:$0xff]
  %v5098 = vld [vmem:[%s5093 + $0x20] sm:$0xff]
  %v5099 = vld [vmem:[%s5093 + $0x28] sm:$0xff]
  %v5100 = vld [vmem:[%s5093 + $0x30] sm:$0xff]
  %v5101 = vld [vmem:[%s5093 + $0x38] sm:$0xff]
  %v5102 = vld [vmem:[%s5093 + $0x40] sm:$0xff]
  %v5103 = vld [vmem:[%s5093 + $0x48] sm:$0xff]
  %v5104 = vld [vmem:[%s5093 + $0x50] sm:$0xff]
  %v5105 = vld [vmem:[%s5093 + $0x58] sm:$0xff]
  %v5106 = vld [vmem:[%s5093 + $0x60] sm:$0xff]
  %v5107 = vld [vmem:[%s5093 + $0x68] sm:$0xff]
  %v5108 = vld [vmem:[%s5093 + $0x70] sm:$0xff]
  %v5109 = vld [vmem:[%s5093 + $0x78] sm:$0xff]
  %v5110 = vld [vmem:[%s5093 + $0x80] sm:$0xff]
  %v5111 = vld [vmem:[%s5093 + $0x88] sm:$0xff]
  %v5112 = vld [vmem:[%s5093 + $0x90] sm:$0xff]
  %v5113 = vld [vmem:[%s5093 + $0x98] sm:$0xff]
  %v5114 = vld [vmem:[%s5093 + $0xa0] sm:$0x11]
  %v5115 = vld [vmem:[%s5093 + $0xa8] sm:$0x11]
  %v5138 = vunpack.c.l.b16 %v5094
  %v5139 = vunpack.c.h.b16 %v5094
  %v5140 = vunpack.c.l.b16 %v5095
  %v5141 = vunpack.c.h.b16 %v5095
  %v5142 = vunpack.c.l.b16 %v5096
  %v5143 = vunpack.c.h.b16 %v5096
  %v5144 = vunpack.c.l.b16 %v5097
  %v5145 = vunpack.c.h.b16 %v5097
  %v5146 = vunpack.c.l.b16 %v5098
  %v5147 = vunpack.c.h.b16 %v5098
  %v5148 = vunpack.c.l.b16 %v5099
  %v5149 = vunpack.c.h.b16 %v5099
  %v5150 = vunpack.c.l.b16 %v5100
  %v5151 = vunpack.c.h.b16 %v5100
  %v5152 = vunpack.c.l.b16 %v5101
  %v5153 = vunpack.c.h.b16 %v5101
  %v5154 = vunpack.c.l.b16 %v5102
  %v5155 = vunpack.c.h.b16 %v5102
  %v5156 = vunpack.c.l.b16 %v5103
  %v5157 = vunpack.c.h.b16 %v5103
  %v5158 = vunpack.c.l.b16 %v5104
  %v5159 = vunpack.c.h.b16 %v5104
  %v5160 = vunpack.c.l.b16 %v5105
  %v5161 = vunpack.c.h.b16 %v5105
  %v5162 = vunpack.c.l.b16 %v5106
  %v5163 = vunpack.c.h.b16 %v5106
  %v5164 = vunpack.c.l.b16 %v5107
  %v5165 = vunpack.c.h.b16 %v5107
  %v5166 = vunpack.c.l.b16 %v5108
  %v5167 = vunpack.c.h.b16 %v5108
  %v5168 = vunpack.c.l.b16 %v5109
  %v5169 = vunpack.c.h.b16 %v5109
  %v5170 = vunpack.c.l.b16 %v5110
  %v5171 = vunpack.c.h.b16 %v5110
  %v5172 = vunpack.c.l.b16 %v5111
  %v5173 = vunpack.c.h.b16 %v5111
  %v5174 = vunpack.c.l.b16 %v5112
  %v5175 = vunpack.c.h.b16 %v5112
  %v5176 = vunpack.c.l.b16 %v5113
  %v5177 = vunpack.c.h.b16 %v5113
  %v5178 = vunpack.c.l.b16 %v5114
  %v5179 = vunpack.c.h.b16 %v5114
  %v5180 = vunpack.c.l.b16 %v5115
  %v5181 = vunpack.c.h.b16 %v5115
  %v5182 = vpack.c.b16 %v5142, %v5138
  %v5183 = vpack.c.b16 %v5143, %v5139
  %v5184 = vpack.c.b16 %v5144, %v5140
  %v5185 = vpack.c.b16 %v5145, %v5141
  %v5186 = vpack.c.b16 %v5150, %v5146
  %v5187 = vpack.c.b16 %v5151, %v5147
  %v5188 = vpack.c.b16 %v5152, %v5148
  %v5189 = vpack.c.b16 %v5153, %v5149
  %v5190 = vpack.c.b16 %v5158, %v5154
  %v5191 = vpack.c.b16 %v5159, %v5155
  %v5192 = vpack.c.b16 %v5160, %v5156
  %v5193 = vpack.c.b16 %v5161, %v5157
  %v5194 = vpack.c.b16 %v5166, %v5162
  %v5195 = vpack.c.b16 %v5167, %v5163
  %v5196 = vpack.c.b16 %v5168, %v5164
  %v5197 = vpack.c.b16 %v5169, %v5165
  %v5198 = vpack.c.b16 %v5174, %v5170
  %v5199 = vpack.c.b16 %v5175, %v5171
  %v5200 = vpack.c.b16 %v5176, %v5172
  %v5201 = vpack.c.b16 %v5177, %v5173
  %v5202 = vpack.c.b16 %v5178, %v5178
  %v5203 = vpack.c.b16 %v5179, %v5179
  %v5204 = vpack.c.b16 %v5180, %v5180
  %v5205 = vpack.c.b16 %v5181, %v5181
  %v5225 = vsel %vm916, %v5185, 0
  %v5228 = vsel %vm916, %v5189, 0
  %v5231 = vsel %vm916, %v5193, 0
  %v5234 = vsel %vm916, %v5197, 0
  %v5237 = vsel %vm916, %v5201, 0
  %v5240 = vsel %vm916, %v5205, 0
  %5242 = vmatprep.subr.bf16.mxu0 0
  %5243 = vmatpush1.bf16.msra.mxu0 %v761
  %5244 = vmatprep.subr.bf16.mxu0 0
  %5245 = vmatpush1.bf16.msra.mxu0 %v762
  %5246 = vmatprep.subr.bf16.mxu0 0
  %5247 = vmatpush1.bf16.msra.mxu0 %v763
  %5248 = vmatprep.subr.bf16.mxu0 0
  %5249 = vmatpush1.bf16.msra.mxu0 %v764
  %5250 = vmatprep.subr.bf16.mxu0 0
  %5251 = vmatpush1.bf16.msra.mxu0 %v765
  %5252 = vmatprep.subr.bf16.mxu0 0
  %5253 = vmatpush1.bf16.msra.mxu0 %v766
  %5254 = vmatprep.subr.bf16.mxu0 0
  %5255 = vmatpush1.bf16.msra.mxu0 %v767
  %5256 = vmatprep.subr.bf16.mxu0 0
  %5257 = vmatpush1.bf16.msra.mxu0 %v768
  %5258 = vmatprep.subr.bf16.mxu0 0
  %5259 = vmatpush1.bf16.msra.mxu0 %v769
  %5260 = vmatprep.subr.bf16.mxu0 0
  %5261 = vmatpush1.bf16.msra.mxu0 %v770
  %5262 = vmatprep.subr.bf16.mxu0 0
  %5263 = vmatpush1.bf16.msra.mxu0 %v771
  %5264 = vmatprep.subr.bf16.mxu0 0
  %5265 = vmatpush1.bf16.msra.mxu0 %v772
  %5266 = vmatprep.subr.bf16.mxu0 0
  %5267 = vmatpush1.bf16.msra.mxu0 %v773
  %5268 = vmatprep.subr.bf16.mxu0 0
  %5269 = vmatpush1.bf16.msra.mxu0 %v774
  %5270 = vmatprep.subr.bf16.mxu0 0
  %5271 = vmatpush1.bf16.msra.mxu0 %v775
  %5272 = vmatprep.subr.bf16.mxu0 0
  %5273 = vmatpush1.bf16.msra.mxu0 %v776
  %5274 = vmatprep.mubr.bf16.mxu0 %v5183
  %5275 = vmatmul.mubr.bf16.gmra.mrb[0].mxu0 %v5182
  %v5276 = vpop.f32.mrb[0].mxu0
  %v5277 = vadd.f32 0.0, %v5276
  %v5278 = vpop.f32.mrb[0].mxu0
  %v5279 = vpop.f32.mrb[0].mxu0
  %v5280 = vadd.f32 0.0, %v5279
  %v5281 = vpop.f32.mrb[0].mxu0
  %5282 = vmatprep.mubr.bf16.mxu0 %v5187
  %5283 = vmatmul.mubr.bf16.gmra.mrb[0].mxu0 %v5186
  %v5284 = vpop.f32.mrb[0].mxu0
  %v5285 = vadd.f32 0.0, %v5284
  %v5286 = vpop.f32.mrb[0].mxu0
  %v5287 = vpop.f32.mrb[0].mxu0
  %v5288 = vadd.f32 0.0, %v5287
  %v5289 = vpop.f32.mrb[0].mxu0
  %5290 = vmatprep.mubr.bf16.mxu0 %v5191
  %5291 = vmatmul.mubr.bf16.gmra.mrb[0].mxu0 %v5190
  %v5292 = vpop.f32.mrb[0].mxu0
  %v5293 = vadd.f32 0.0, %v5292
  %v5294 = vpop.f32.mrb[0].mxu0
  %v5295 = vpop.f32.mrb[0].mxu0
  %v5296 = vadd.f32 0.0, %v5295
  %v5297 = vpop.f32.mrb[0].mxu0
  %5298 = vmatprep.mubr.bf16.mxu0 %v5195
  %5299 = vmatmul.mubr.bf16.gmra.mrb[0].mxu0 %v5194
  %v5300 = vpop.f32.mrb[0].mxu0
  %v5301 = vadd.f32 0.0, %v5300
  %v5302 = vpop.f32.mrb[0].mxu0
  %v5303 = vpop.f32.mrb[0].mxu0
  %v5304 = vadd.f32 0.0, %v5303
  %v5305 = vpop.f32.mrb[0].mxu0
  %5306 = vmatprep.mubr.bf16.mxu0 %v5199
  %5307 = vmatmul.mubr.bf16.gmra.mrb[0].mxu0 %v5198
  %v5308 = vpop.f32.mrb[0].mxu0
  %v5309 = vadd.f32 0.0, %v5308
  %v5310 = vpop.f32.mrb[0].mxu0
  %v5311 = vpop.f32.mrb[0].mxu0
  %v5312 = vadd.f32 0.0, %v5311
  %v5313 = vpop.f32.mrb[0].mxu0
  %5314 = vmatprep.mubr.bf16.mxu0 %v5203
  %5315 = vmatmul.mubr.bf16.gmra.mrb[0].mxu0 %v5202
  %v5316 = vpop.f32.mrb[0].mxu0
  %v5317 = vadd.f32 0.0, %v5316
  %v5318 = vpop.f32.mrb[0].mxu0
  %v5319 = vpop.f32.mrb[0].mxu0
  %v5320 = vpop.f32.mrb[0].mxu0
  %5321 = vdwg.mxu0
  %5322 = vmatprep.subr.bf16.mxu0 0
  %5323 = vmatpush1.bf16.msra.mxu0 %v777
  %5324 = vmatprep.subr.bf16.mxu0 0
  %5325 = vmatpush1.bf16.msra.mxu0 %v778
  %5326 = vmatprep.subr.bf16.mxu0 0
  %5327 = vmatpush1.bf16.msra.mxu0 %v779
  %5328 = vmatprep.subr.bf16.mxu0 0
  %5329 = vmatpush1.bf16.msra.mxu0 %v780
  %5330 = vmatprep.subr.bf16.mxu0 0
  %5331 = vmatpush1.bf16.msra.mxu0 %v781
  %5332 = vmatprep.subr.bf16.mxu0 0
  %5333 = vmatpush1.bf16.msra.mxu0 %v782
  %5334 = vmatprep.subr.bf16.mxu0 0
  %5335 = vmatpush1.bf16.msra.mxu0 %v783
  %5336 = vmatprep.subr.bf16.mxu0 0
  %5337 = vmatpush1.bf16.msra.mxu0 %v784
  %5338 = vmatprep.subr.bf16.mxu0 0
  %5339 = vmatpush1.bf16.msra.mxu0 %v785
  %5340 = vmatprep.subr.bf16.mxu0 0
  %5341 = vmatpush1.bf16.msra.mxu0 0
  %5342 = vmatprep.subr.bf16.mxu0 0
  %5343 = vmatpush1.bf16.msra.mxu0 0
  %5344 = vmatprep.subr.bf16.mxu0 0
  %5345 = vmatpush1.bf16.msra.mxu0 0
  %5346 = vmatprep.subr.bf16.mxu0 0
  %5347 = vmatpush1.bf16.msra.mxu0 0
  %5348 = vmatprep.subr.bf16.mxu0 0
  %5349 = vmatpush1.bf16.msra.mxu0 0
  %5350 = vmatprep.subr.bf16.mxu0 0
  %5351 = vmatpush1.bf16.msra.mxu0 0
  %5352 = vmatprep.subr.bf16.mxu0 0
  %5353 = vmatpush1.bf16.msra.mxu0 0
  %5354 = vmatprep.mubr.bf16.mxu0 %v5225
  %5355 = vmatmul.mubr.bf16.gmra.mrb[0].mxu0 %v5184
  %v5356 = vpop.f32.mrb[0].mxu0
  %v5357 = vadd.f32 %v5277, %v5356
  %v5358 = vpop.f32.mrb[0].mxu0
  %v5359 = vpop.f32.mrb[0].mxu0
  %v5360 = vadd.f32 %v5280, %v5359
  %v5361 = vpop.f32.mrb[0].mxu0
  %5362 = vmatprep.mubr.bf16.mxu0 %v5228
  %5363 = vmatmul.mubr.bf16.gmra.mrb[0].mxu0 %v5188
  %v5364 = vpop.f32.mrb[0].mxu0
  %v5365 = vadd.f32 %v5285, %v5364
  %v5366 = vpop.f32.mrb[0].mxu0
  %v5367 = vpop.f32.mrb[0].mxu0
  %v5368 = vadd.f32 %v5288, %v5367
  %v5369 = vpop.f32.mrb[0].mxu0
  %5370 = vmatprep.mubr.bf16.mxu0 %v5231
  %5371 = vmatmul.mubr.bf16.gmra.mrb[0].mxu0 %v5192
  %v5372 = vpop.f32.mrb[0].mxu0
  %v5373 = vadd.f32 %v5293, %v5372
  %v5374 = vpop.f32.mrb[0].mxu0
  %v5375 = vpop.f32.mrb[0].mxu0
  %v5376 = vadd.f32 %v5296, %v5375
  %v5377 = vpop.f32.mrb[0].mxu0
  %5378 = vmatprep.mubr.bf16.mxu0 %v5234
  %5379 = vmatmul.mubr.bf16.gmra.mrb[0].mxu0 %v5196
  %v5380 = vpop.f32.mrb[0].mxu0
  %v5381 = vadd.f32 %v5301, %v5380
  %v5382 = vpop.f32.mrb[0].mxu0
  %v5383 = vpop.f32.mrb[0].mxu0
  %v5384 = vadd.f32 %v5304, %v5383
  %v5385 = vpop.f32.mrb[0].mxu0
  %5386 = vmatprep.mubr.bf16.mxu0 %v5237
  %5387 = vmatmul.mubr.bf16.gmra.mrb[0].mxu0 %v5200
  %v5388 = vpop.f32.mrb[0].mxu0
  %v5389 = vadd.f32 %v5309, %v5388
  %v5390 = vpop.f32.mrb[0].mxu0
  %v5391 = vpop.f32.mrb[0].mxu0
  %v5392 = vadd.f32 %v5312, %v5391
  %v5393 = vpop.f32.mrb[0].mxu0
  %5394 = vmatprep.mubr.bf16.mxu0 %v5240
  %5395 = vmatmul.mubr.bf16.gmra.mrb[0].mxu0 %v5204
  %v5396 = vpop.f32.mrb[0].mxu0
  %v5397 = vadd.f32 %v5317, %v5396
  %v5398 = vpop.f32.mrb[0].mxu0
  %v5399 = vpop.f32.mrb[0].mxu0
  %v5400 = vpop.f32.mrb[0].mxu0
  %5401 = vdwg.mxu0
  %v5402 = vpack.c.bf16 %v5360, %v5357
  %v5403 = vpack.c.bf16 %v5368, %v5365
  %v5404 = vpack.c.bf16 %v5376, %v5373
  %v5405 = vpack.c.bf16 %v5384, %v5381
  %v5406 = vpack.c.bf16 %v5392, %v5389
  %v5407 = vpack.c.bf16 %v5397, %v5397
  %s5408 = scalar_lea.vmem %s4, 80
  %v5409 = vld [vmem:[%s5408] sm:$0xf]
  %v5410 = vld [vmem:[%s5408 + $0x4] sm:$0xf]
  %v5413 = vunpack.c.l.b16 %v5409
  %v5414 = vunpack.c.l.b16 %v5410
  %v5415 = vpack.c.b16 %v5414, %v5413
  %v5418 = vsel %vm916, %v5402, 0
  %v5421 = vsel %vm916, %v5403, 0
  %v5424 = vsel %vm916, %v5404, 0
  %v5427 = vsel %vm916, %v5405, 0
  %v5430 = vsel %vm916, %v5406, 0
  %v5433 = vsel %vm916, %v5407, 0
  %5435 = vmatprep.subr.bf16.mxu0 0
  %5436 = vmatpush1.bf16.msra.mxu0 %v5415
  %5437 = vmatprep.subr.bf16.mxu0 0
  %5438 = vmatpush1.bf16.msra.mxu0 0
  %5439 = vmatprep.subr.bf16.mxu0 0
  %5440 = vmatpush1.bf16.msra.mxu0 0
  %5441 = vmatprep.subr.bf16.mxu0 0
  %5442 = vmatpush1.bf16.msra.mxu0 0
  %5443 = vmatprep.subr.bf16.mxu0 0
  %5444 = vmatpush1.bf16.msra.mxu0 0
  %5445 = vmatprep.subr.bf16.mxu0 0
  %5446 = vmatpush1.bf16.msra.mxu0 0
  %5447 = vmatprep.subr.bf16.mxu0 0
  %5448 = vmatpush1.bf16.msra.mxu0 0
  %5449 = vmatprep.subr.bf16.mxu0 0
  %5450 = vmatpush1.bf16.msra.mxu0 0
  %5451 = vmatprep.subr.bf16.mxu0 0
  %5452 = vmatpush1.bf16.msra.mxu0 0
  %5453 = vmatprep.subr.bf16.mxu0 0
  %5454 = vmatpush1.bf16.msra.mxu0 0
  %5455 = vmatprep.subr.bf16.mxu0 0
  %5456 = vmatpush1.bf16.msra.mxu0 0
  %5457 = vmatprep.subr.bf16.mxu0 0
  %5458 = vmatpush1.bf16.msra.mxu0 0
  %5459 = vmatprep.subr.bf16.mxu0 0
  %5460 = vmatpush1.bf16.msra.mxu0 0
  %5461 = vmatprep.subr.bf16.mxu0 0
  %5462 = vmatpush1.bf16.msra.mxu0 0
  %5463 = vmatprep.subr.bf16.mxu0 0
  %5464 = vmatpush1.bf16.msra.mxu0 0
  %5465 = vmatprep.subr.bf16.mxu0 0
  %5466 = vmatpush1.bf16.msra.mxu0 0
  %5467 = vmatprep.mubr.bf16.mxu0 0
  %5468 = vmatmul.mubr.bf16.gmra.mrb[0].mxu0 %v5418
  %v5469 = vpop.f32.mrb[0].mxu0
  %v5470 = vadd.f32 0.0, %v5469
  %v5471 = vpop.f32.mrb[0].mxu0
  %v5472 = vpop.f32.mrb[0].mxu0
  %v5473 = vadd.f32 0.0, %v5472
  %v5474 = vpop.f32.mrb[0].mxu0
  %5475 = vmatprep.mubr.bf16.mxu0 0
  %5476 = vmatmul.mubr.bf16.gmra.mrb[0].mxu0 %v5421
  %v5477 = vpop.f32.mrb[0].mxu0
  %v5478 = vadd.f32 0.0, %v5477
  %v5479 = vpop.f32.mrb[0].mxu0
  %v5480 = vpop.f32.mrb[0].mxu0
  %v5481 = vadd.f32 0.0, %v5480
  %v5482 = vpop.f32.mrb[0].mxu0
  %5483 = vmatprep.mubr.bf16.mxu0 0
  %5484 = vmatmul.mubr.bf16.gmra.mrb[0].mxu0 %v5424
  %v5485 = vpop.f32.mrb[0].mxu0
  %v5486 = vadd.f32 0.0, %v5485
  %v5487 = vpop.f32.mrb[0].mxu0
  %v5488 = vpop.f32.mrb[0].mxu0
  %v5489 = vadd.f32 0.0, %v5488
  %v5490 = vpop.f32.mrb[0].mxu0
  %5491 = vmatprep.mubr.bf16.mxu0 0
  %5492 = vmatmul.mubr.bf16.gmra.mrb[0].mxu0 %v5427
  %v5493 = vpop.f32.mrb[0].mxu0
  %v5494 = vadd.f32 0.0, %v5493
  %v5495 = vpop.f32.mrb[0].mxu0
  %v5496 = vpop.f32.mrb[0].mxu0
  %v5497 = vadd.f32 0.0, %v5496
  %v5498 = vpop.f32.mrb[0].mxu0
  %5499 = vmatprep.mubr.bf16.mxu0 0
  %5500 = vmatmul.mubr.bf16.gmra.mrb[0].mxu0 %v5430
  %v5501 = vpop.f32.mrb[0].mxu0
  %v5502 = vadd.f32 0.0, %v5501
  %v5503 = vpop.f32.mrb[0].mxu0
  %v5504 = vpop.f32.mrb[0].mxu0
  %v5505 = vadd.f32 0.0, %v5504
  %v5506 = vpop.f32.mrb[0].mxu0
  %5507 = vmatprep.mubr.bf16.mxu0 0
  %5508 = vmatmul.mubr.bf16.gmra.mrb[0].mxu0 %v5433
  %v5509 = vpop.f32.mrb[0].mxu0
  %v5510 = vadd.f32 0.0, %v5509
  %v5511 = vpop.f32.mrb[0].mxu0
  %v5512 = vpop.f32.mrb[0].mxu0
  %v5513 = vpop.f32.mrb[0].mxu0
  %5514 = vdwg.mxu0
  %v5515 = vadd.f32 %v5082, %v5470
  %v5516 = vadd.f32 %v5083, %v5473
  %v5517 = vadd.f32 %v5084, %v5478
  %v5518 = vadd.f32 %v5085, %v5481
  %v5519 = vadd.f32 %v5086, %v5486
  %v5520 = vadd.f32 %v5087, %v5489
  %v5521 = vadd.f32 %v5088, %v5494
  %v5522 = vadd.f32 %v5089, %v5497
  %v5523 = vadd.f32 %v5090, %v5502
  %v5524 = vadd.f32 %v5091, %v5505
  %v5525 = vadd.f32 %v5092, %v5510
  %s5526 = scalar_lea.vmem %s3, 1936
  %v5527 = vld [vmem:[%s5526] sm:$0xff]
  %v5528 = vld [vmem:[%s5526 + $0x8] sm:$0xff]
  %v5529 = vld [vmem:[%s5526 + $0x10] sm:$0xff]
  %v5530 = vld [vmem:[%s5526 + $0x18] sm:$0xff]
  %v5531 = vld [vmem:[%s5526 + $0x20] sm:$0xff]
  %v5532 = vld [vmem:[%s5526 + $0x28] sm:$0xff]
  %v5533 = vld [vmem:[%s5526 + $0x30] sm:$0xff]
  %v5534 = vld [vmem:[%s5526 + $0x38] sm:$0xff]
  %v5535 = vld [vmem:[%s5526 + $0x40] sm:$0xff]
  %v5536 = vld [vmem:[%s5526 + $0x48] sm:$0xff]
  %v5537 = vld [vmem:[%s5526 + $0x50] sm:$0xff]
  %v5538 = vld [vmem:[%s5526 + $0x58] sm:$0xff]
  %v5539 = vld [vmem:[%s5526 + $0x60] sm:$0xff]
  %v5540 = vld [vmem:[%s5526 + $0x68] sm:$0xff]
  %v5541 = vld [vmem:[%s5526 + $0x70] sm:$0xff]
  %v5542 = vld [vmem:[%s5526 + $0x78] sm:$0xff]
  %v5543 = vld [vmem:[%s5526 + $0x80] sm:$0xff]
  %v5544 = vld [vmem:[%s5526 + $0x88] sm:$0xff]
  %v5545 = vld [vmem:[%s5526 + $0x90] sm:$0xff]
  %v5546 = vld [vmem:[%s5526 + $0x98] sm:$0xff]
  %v5547 = vld [vmem:[%s5526 + $0xa0] sm:$0x11]
  %v5548 = vld [vmem:[%s5526 + $0xa8] sm:$0x11]
  %v5571 = vunpack.c.l.b16 %v5527
  %v5572 = vunpack.c.h.b16 %v5527
  %v5573 = vunpack.c.l.b16 %v5528
  %v5574 = vunpack.c.h.b16 %v5528
  %v5575 = vunpack.c.l.b16 %v5529
  %v5576 = vunpack.c.h.b16 %v5529
  %v5577 = vunpack.c.l.b16 %v5530
  %v5578 = vunpack.c.h.b16 %v5530
  %v5579 = vunpack.c.l.b16 %v5531
  %v5580 = vunpack.c.h.b16 %v5531
  %v5581 = vunpack.c.l.b16 %v5532
  %v5582 = vunpack.c.h.b16 %v5532
  %v5583 = vunpack.c.l.b16 %v5533
  %v5584 = vunpack.c.h.b16 %v5533
  %v5585 = vunpack.c.l.b16 %v5534
  %v5586 = vunpack.c.h.b16 %v5534
  %v5587 = vunpack.c.l.b16 %v5535
  %v5588 = vunpack.c.h.b16 %v5535
  %v5589 = vunpack.c.l.b16 %v5536
  %v5590 = vunpack.c.h.b16 %v5536
  %v5591 = vunpack.c.l.b16 %v5537
  %v5592 = vunpack.c.h.b16 %v5537
  %v5593 = vunpack.c.l.b16 %v5538
  %v5594 = vunpack.c.h.b16 %v5538
  %v5595 = vunpack.c.l.b16 %v5539
  %v5596 = vunpack.c.h.b16 %v5539
  %v5597 = vunpack.c.l.b16 %v5540
  %v5598 = vunpack.c.h.b16 %v5540
  %v5599 = vunpack.c.l.b16 %v5541
  %v5600 = vunpack.c.h.b16 %v5541
  %v5601 = vunpack.c.l.b16 %v5542
  %v5602 = vunpack.c.h.b16 %v5542
  %v5603 = vunpack.c.l.b16 %v5543
  %v5604 = vunpack.c.h.b16 %v5543
  %v5605 = vunpack.c.l.b16 %v5544
  %v5606 = vunpack.c.h.b16 %v5544
  %v5607 = vunpack.c.l.b16 %v5545
  %v5608 = vunpack.c.h.b16 %v5545
  %v5609 = vunpack.c.l.b16 %v5546
  %v5610 = vunpack.c.h.b16 %v5546
  %v5611 = vunpack.c.l.b16 %v5547
  %v5612 = vunpack.c.h.b16 %v5547
  %v5613 = vunpack.c.l.b16 %v5548
  %v5614 = vunpack.c.h.b16 %v5548
  %v5615 = vpack.c.b16 %v5575, %v5571
  %v5616 = vpack.c.b16 %v5576, %v5572
  %v5617 = vpack.c.b16 %v5577, %v5573
  %v5618 = vpack.c.b16 %v5578, %v5574
  %v5619 = vpack.c.b16 %v5583, %v5579
  %v5620 = vpack.c.b16 %v5584, %v5580
  %v5621 = vpack.c.b16 %v5585, %v5581
  %v5622 = vpack.c.b16 %v5586, %v5582
  %v5623 = vpack.c.b16 %v5591, %v5587
  %v5624 = vpack.c.b16 %v5592, %v5588
  %v5625 = vpack.c.b16 %v5593, %v5589
  %v5626 = vpack.c.b16 %v5594, %v5590
  %v5627 = vpack.c.b16 %v5599, %v5595
  %v5628 = vpack.c.b16 %v5600, %v5596
  %v5629 = vpack.c.b16 %v5601, %v5597
  %v5630 = vpack.c.b16 %v5602, %v5598
  %v5631 = vpack.c.b16 %v5607, %v5603
  %v5632 = vpack.c.b16 %v5608, %v5604
  %v5633 = vpack.c.b16 %v5609, %v5605
  %v5634 = vpack.c.b16 %v5610, %v5606
  %v5635 = vpack.c.b16 %v5611, %v5611
  %v5636 = vpack.c.b16 %v5612, %v5612
  %v5637 = vpack.c.b16 %v5613, %v5613
  %v5638 = vpack.c.b16 %v5614, %v5614
  %v5658 = vsel %vm916, %v5618, 0
  %v5661 = vsel %vm916, %v5622, 0
  %v5664 = vsel %vm916, %v5626, 0
  %v5667 = vsel %vm916, %v5630, 0
  %v5670 = vsel %vm916, %v5634, 0
  %v5673 = vsel %vm916, %v5638, 0
  %5675 = vmatprep.subr.bf16.mxu0 0
  %5676 = vmatpush1.bf16.msra.mxu0 %v761
  %5677 = vmatprep.subr.bf16.mxu0 0
  %5678 = vmatpush1.bf16.msra.mxu0 %v762
  %5679 = vmatprep.subr.bf16.mxu0 0
  %5680 = vmatpush1.bf16.msra.mxu0 %v763
  %5681 = vmatprep.subr.bf16.mxu0 0
  %5682 = vmatpush1.bf16.msra.mxu0 %v764
  %5683 = vmatprep.subr.bf16.mxu0 0
  %5684 = vmatpush1.bf16.msra.mxu0 %v765
  %5685 = vmatprep.subr.bf16.mxu0 0
  %5686 = vmatpush1.bf16.msra.mxu0 %v766
  %5687 = vmatprep.subr.bf16.mxu0 0
  %5688 = vmatpush1.bf16.msra.mxu0 %v767
  %5689 = vmatprep.subr.bf16.mxu0 0
  %5690 = vmatpush1.bf16.msra.mxu0 %v768
  %5691 = vmatprep.subr.bf16.mxu0 0
  %5692 = vmatpush1.bf16.msra.mxu0 %v769
  %5693 = vmatprep.subr.bf16.mxu0 0
  %5694 = vmatpush1.bf16.msra.mxu0 %v770
  %5695 = vmatprep.subr.bf16.mxu0 0
  %5696 = vmatpush1.bf16.msra.mxu0 %v771
  %5697 = vmatprep.subr.bf16.mxu0 0
  %5698 = vmatpush1.bf16.msra.mxu0 %v772
  %5699 = vmatprep.subr.bf16.mxu0 0
  %5700 = vmatpush1.bf16.msra.mxu0 %v773
  %5701 = vmatprep.subr.bf16.mxu0 0
  %5702 = vmatpush1.bf16.msra.mxu0 %v774
  %5703 = vmatprep.subr.bf16.mxu0 0
  %5704 = vmatpush1.bf16.msra.mxu0 %v775
  %5705 = vmatprep.subr.bf16.mxu0 0
  %5706 = vmatpush1.bf16.msra.mxu0 %v776
  %5707 = vmatprep.mubr.bf16.mxu0 %v5616
  %5708 = vmatmul.mubr.bf16.gmra.mrb[0].mxu0 %v5615
  %v5709 = vpop.f32.mrb[0].mxu0
  %v5710 = vadd.f32 0.0, %v5709
  %v5711 = vpop.f32.mrb[0].mxu0
  %v5712 = vpop.f32.mrb[0].mxu0
  %v5713 = vadd.f32 0.0, %v5712
  %v5714 = vpop.f32.mrb[0].mxu0
  %5715 = vmatprep.mubr.bf16.mxu0 %v5620
  %5716 = vmatmul.mubr.bf16.gmra.mrb[0].mxu0 %v5619
  %v5717 = vpop.f32.mrb[0].mxu0
  %v5718 = vadd.f32 0.0, %v5717
  %v5719 = vpop.f32.mrb[0].mxu0
  %v5720 = vpop.f32.mrb[0].mxu0
  %v5721 = vadd.f32 0.0, %v5720
  %v5722 = vpop.f32.mrb[0].mxu0
  %5723 = vmatprep.mubr.bf16.mxu0 %v5624
  %5724 = vmatmul.mubr.bf16.gmra.mrb[0].mxu0 %v5623
  %v5725 = vpop.f32.mrb[0].mxu0
  %v5726 = vadd.f32 0.0, %v5725
  %v5727 = vpop.f32.mrb[0].mxu0
  %v5728 = vpop.f32.mrb[0].mxu0
  %v5729 = vadd.f32 0.0, %v5728
  %v5730 = vpop.f32.mrb[0].mxu0
  %5731 = vmatprep.mubr.bf16.mxu0 %v5628
  %5732 = vmatmul.mubr.bf16.gmra.mrb[0].mxu0 %v5627
  %v5733 = vpop.f32.mrb[0].mxu0
  %v5734 = vadd.f32 0.0, %v5733
  %v5735 = vpop.f32.mrb[0].mxu0
  %v5736 = vpop.f32.mrb[0].mxu0
  %v5737 = vadd.f32 0.0, %v5736
  %v5738 = vpop.f32.mrb[0].mxu0
  %5739 = vmatprep.mubr.bf16.mxu0 %v5632
  %5740 = vmatmul.mubr.bf16.gmra.mrb[0].mxu0 %v5631
  %v5741 = vpop.f32.mrb[0].mxu0
  %v5742 = vadd.f32 0.0, %v5741
  %v5743 = vpop.f32.mrb[0].mxu0
  %v5744 = vpop.f32.mrb[0].mxu0
  %v5745 = vadd.f32 0.0, %v5744
  %v5746 = vpop.f32.mrb[0].mxu0
  %5747 = vmatprep.mubr.bf16.mxu0 %v5636
  %5748 = vmatmul.mubr.bf16.gmra.mrb[0].mxu0 %v5635
  %v5749 = vpop.f32.mrb[0].mxu0
  %v5750 = vadd.f32 0.0, %v5749
  %v5751 = vpop.f32.mrb[0].mxu0
  %v5752 = vpop.f32.mrb[0].mxu0
  %v5753 = vpop.f32.mrb[0].mxu0
  %5754 = vdwg.mxu0
  %5755 = vmatprep.subr.bf16.mxu0 0
  %5756 = vmatpush1.bf16.msra.mxu0 %v777
  %5757 = vmatprep.subr.bf16.mxu0 0
  %5758 = vmatpush1.bf16.msra.mxu0 %v778
  %5759 = vmatprep.subr.bf16.mxu0 0
  %5760 = vmatpush1.bf16.msra.mxu0 %v779
  %5761 = vmatprep.subr.bf16.mxu0 0
  %5762 = vmatpush1.bf16.msra.mxu0 %v780
  %5763 = vmatprep.subr.bf16.mxu0 0
  %5764 = vmatpush1.bf16.msra.mxu0 %v781
  %5765 = vmatprep.subr.bf16.mxu0 0
  %5766 = vmatpush1.bf16.msra.mxu0 %v782
  %5767 = vmatprep.subr.bf16.mxu0 0
  %5768 = vmatpush1.bf16.msra.mxu0 %v783
  %5769 = vmatprep.subr.bf16.mxu0 0
  %5770 = vmatpush1.bf16.msra.mxu0 %v784
  %5771 = vmatprep.subr.bf16.mxu0 0
  %5772 = vmatpush1.bf16.msra.mxu0 %v785
  %5773 = vmatprep.subr.bf16.mxu0 0
  %5774 = vmatpush1.bf16.msra.mxu0 0
  %5775 = vmatprep.subr.bf16.mxu0 0
  %5776 = vmatpush1.bf16.msra.mxu0 0
  %5777 = vmatprep.subr.bf16.mxu0 0
  %5778 = vmatpush1.bf16.msra.mxu0 0
  %5779 = vmatprep.subr.bf16.mxu0 0
  %5780 = vmatpush1.bf16.msra.mxu0 0
  %5781 = vmatprep.subr.bf16.mxu0 0
  %5782 = vmatpush1.bf16.msra.mxu0 0
  %5783 = vmatprep.subr.bf16.mxu0 0
  %5784 = vmatpush1.bf16.msra.mxu0 0
  %5785 = vmatprep.subr.bf16.mxu0 0
  %5786 = vmatpush1.bf16.msra.mxu0 0
  %5787 = vmatprep.mubr.bf16.mxu0 %v5658
  %5788 = vmatmul.mubr.bf16.gmra.mrb[0].mxu0 %v5617
  %v5789 = vpop.f32.mrb[0].mxu0
  %v5790 = vadd.f32 %v5710, %v5789
  %v5791 = vpop.f32.mrb[0].mxu0
  %v5792 = vpop.f32.mrb[0].mxu0
  %v5793 = vadd.f32 %v5713, %v5792
  %v5794 = vpop.f32.mrb[0].mxu0
  %5795 = vmatprep.mubr.bf16.mxu0 %v5661
  %5796 = vmatmul.mubr.bf16.gmra.mrb[0].mxu0 %v5621
  %v5797 = vpop.f32.mrb[0].mxu0
  %v5798 = vadd.f32 %v5718, %v5797
  %v5799 = vpop.f32.mrb[0].mxu0
  %v5800 = vpop.f32.mrb[0].mxu0
  %v5801 = vadd.f32 %v5721, %v5800
  %v5802 = vpop.f32.mrb[0].mxu0
  %5803 = vmatprep.mubr.bf16.mxu0 %v5664
  %5804 = vmatmul.mubr.bf16.gmra.mrb[0].mxu0 %v5625
  %v5805 = vpop.f32.mrb[0].mxu0
  %v5806 = vadd.f32 %v5726, %v5805
  %v5807 = vpop.f32.mrb[0].mxu0
  %v5808 = vpop.f32.mrb[0].mxu0
  %v5809 = vadd.f32 %v5729, %v5808
  %v5810 = vpop.f32.mrb[0].mxu0
  %5811 = vmatprep.mubr.bf16.mxu0 %v5667
  %5812 = vmatmul.mubr.bf16.gmra.mrb[0].mxu0 %v5629
  %v5813 = vpop.f32.mrb[0].mxu0
  %v5814 = vadd.f32 %v5734, %v5813
  %v5815 = vpop.f32.mrb[0].mxu0
  %v5816 = vpop.f32.mrb[0].mxu0
  %v5817 = vadd.f32 %v5737, %v5816
  %v5818 = vpop.f32.mrb[0].mxu0
  %5819 = vmatprep.mubr.bf16.mxu0 %v5670
  %5820 = vmatmul.mubr.bf16.gmra.mrb[0].mxu0 %v5633
  %v5821 = vpop.f32.mrb[0].mxu0
  %v5822 = vadd.f32 %v5742, %v5821
  %v5823 = vpop.f32.mrb[0].mxu0
  %v5824 = vpop.f32.mrb[0].mxu0
  %v5825 = vadd.f32 %v5745, %v5824
  %v5826 = vpop.f32.mrb[0].mxu0
  %5827 = vmatprep.mubr.bf16.mxu0 %v5673
  %5828 = vmatmul.mubr.bf16.gmra.mrb[0].mxu0 %v5637
  %v5829 = vpop.f32.mrb[0].mxu0
  %v5830 = vadd.f32 %v5750, %v5829
  %v5831 = vpop.f32.mrb[0].mxu0
  %v5832 = vpop.f32.mrb[0].mxu0
  %v5833 = vpop.f32.mrb[0].mxu0
  %5834 = vdwg.mxu0
  %v5835 = vpack.c.bf16 %v5793, %v5790
  %v5836 = vpack.c.bf16 %v5801, %v5798
  %v5837 = vpack.c.bf16 %v5809, %v5806
  %v5838 = vpack.c.bf16 %v5817, %v5814
  %v5839 = vpack.c.bf16 %v5825, %v5822
  %v5840 = vpack.c.bf16 %v5830, %v5830
  %s5841 = scalar_lea.vmem %s4, 88
  %v5842 = vld [vmem:[%s5841] sm:$0xf]
  %v5843 = vld [vmem:[%s5841 + $0x4] sm:$0xf]
  %v5846 = vunpack.c.l.b16 %v5842
  %v5847 = vunpack.c.l.b16 %v5843
  %v5848 = vpack.c.b16 %v5847, %v5846
  %v5851 = vsel %vm916, %v5835, 0
  %v5854 = vsel %vm916, %v5836, 0
  %v5857 = vsel %vm916, %v5837, 0
  %v5860 = vsel %vm916, %v5838, 0
  %v5863 = vsel %vm916, %v5839, 0
  %v5866 = vsel %vm916, %v5840, 0
  %5868 = vmatprep.subr.bf16.mxu0 0
  %5869 = vmatpush1.bf16.msra.mxu0 %v5848
  %5870 = vmatprep.subr.bf16.mxu0 0
  %5871 = vmatpush1.bf16.msra.mxu0 0
  %5872 = vmatprep.subr.bf16.mxu0 0
  %5873 = vmatpush1.bf16.msra.mxu0 0
  %5874 = vmatprep.subr.bf16.mxu0 0
  %5875 = vmatpush1.bf16.msra.mxu0 0
  %5876 = vmatprep.subr.bf16.mxu0 0
  %5877 = vmatpush1.bf16.msra.mxu0 0
  %5878 = vmatprep.subr.bf16.mxu0 0
  %5879 = vmatpush1.bf16.msra.mxu0 0
  %5880 = vmatprep.subr.bf16.mxu0 0
  %5881 = vmatpush1.bf16.msra.mxu0 0
  %5882 = vmatprep.subr.bf16.mxu0 0
  %5883 = vmatpush1.bf16.msra.mxu0 0
  %5884 = vmatprep.subr.bf16.mxu0 0
  %5885 = vmatpush1.bf16.msra.mxu0 0
  %5886 = vmatprep.subr.bf16.mxu0 0
  %5887 = vmatpush1.bf16.msra.mxu0 0
  %5888 = vmatprep.subr.bf16.mxu0 0
  %5889 = vmatpush1.bf16.msra.mxu0 0
  %5890 = vmatprep.subr.bf16.mxu0 0
  %5891 = vmatpush1.bf16.msra.mxu0 0
  %5892 = vmatprep.subr.bf16.mxu0 0
  %5893 = vmatpush1.bf16.msra.mxu0 0
  %5894 = vmatprep.subr.bf16.mxu0 0
  %5895 = vmatpush1.bf16.msra.mxu0 0
  %5896 = vmatprep.subr.bf16.mxu0 0
  %5897 = vmatpush1.bf16.msra.mxu0 0
  %5898 = vmatprep.subr.bf16.mxu0 0
  %5899 = vmatpush1.bf16.msra.mxu0 0
  %5900 = vmatprep.mubr.bf16.mxu0 0
  %5901 = vmatmul.mubr.bf16.gmra.mrb[0].mxu0 %v5851
  %v5902 = vpop.f32.mrb[0].mxu0
  %v5903 = vadd.f32 0.0, %v5902
  %v5904 = vpop.f32.mrb[0].mxu0
  %v5905 = vpop.f32.mrb[0].mxu0
  %v5906 = vadd.f32 0.0, %v5905
  %v5907 = vpop.f32.mrb[0].mxu0
  %5908 = vmatprep.mubr.bf16.mxu0 0
  %5909 = vmatmul.mubr.bf16.gmra.mrb[0].mxu0 %v5854
  %v5910 = vpop.f32.mrb[0].mxu0
  %v5911 = vadd.f32 0.0, %v5910
  %v5912 = vpop.f32.mrb[0].mxu0
  %v5913 = vpop.f32.mrb[0].mxu0
  %v5914 = vadd.f32 0.0, %v5913
  %v5915 = vpop.f32.mrb[0].mxu0
  %5916 = vmatprep.mubr.bf16.mxu0 0
  %5917 = vmatmul.mubr.bf16.gmra.mrb[0].mxu0 %v5857
  %v5918 = vpop.f32.mrb[0].mxu0
  %v5919 = vadd.f32 0.0, %v5918
  %v5920 = vpop.f32.mrb[0].mxu0
  %v5921 = vpop.f32.mrb[0].mxu0
  %v5922 = vadd.f32 0.0, %v5921
  %v5923 = vpop.f32.mrb[0].mxu0
  %5924 = vmatprep.mubr.bf16.mxu0 0
  %5925 = vmatmul.mubr.bf16.gmra.mrb[0].mxu0 %v5860
  %v5926 = vpop.f32.mrb[0].mxu0
  %v5927 = vadd.f32 0.0, %v5926
  %v5928 = vpop.f32.mrb[0].mxu0
  %v5929 = vpop.f32.mrb[0].mxu0
  %v5930 = vadd.f32 0.0, %v5929
  %v5931 = vpop.f32.mrb[0].mxu0
  %5932 = vmatprep.mubr.bf16.mxu0 0
  %5933 = vmatmul.mubr.bf16.gmra.mrb[0].mxu0 %v5863
  %v5934 = vpop.f32.mrb[0].mxu0
  %v5935 = vadd.f32 0.0, %v5934
  %v5936 = vpop.f32.mrb[0].mxu0
  %v5937 = vpop.f32.mrb[0].mxu0
  %v5938 = vadd.f32 0.0, %v5937
  %v5939 = vpop.f32.mrb[0].mxu0
  %5940 = vmatprep.mubr.bf16.mxu0 0
  %5941 = vmatmul.mubr.bf16.gmra.mrb[0].mxu0 %v5866
  %v5942 = vpop.f32.mrb[0].mxu0
  %v5943 = vadd.f32 0.0, %v5942
  %v5944 = vpop.f32.mrb[0].mxu0
  %v5945 = vpop.f32.mrb[0].mxu0
  %v5946 = vpop.f32.mrb[0].mxu0
  %5947 = vdwg.mxu0
  %v5948 = vadd.f32 %v5515, %v5903
  %v5949 = vadd.f32 %v5516, %v5906
  %v5950 = vadd.f32 %v5517, %v5911
  %v5951 = vadd.f32 %v5518, %v5914
  %v5952 = vadd.f32 %v5519, %v5919
  %v5953 = vadd.f32 %v5520, %v5922
  %v5954 = vadd.f32 %v5521, %v5927
  %v5955 = vadd.f32 %v5522, %v5930
  %v5956 = vadd.f32 %v5523, %v5935
  %v5957 = vadd.f32 %v5524, %v5938
  %v5958 = vadd.f32 %v5525, %v5943
  %s5959 = scalar_lea.vmem %s3, 2112
  %v5960 = vld [vmem:[%s5959] sm:$0xff]
  %v5961 = vld [vmem:[%s5959 + $0x8] sm:$0xff]
  %v5962 = vld [vmem:[%s5959 + $0x10] sm:$0xff]
  %v5963 = vld [vmem:[%s5959 + $0x18] sm:$0xff]
  %v5964 = vld [vmem:[%s5959 + $0x20] sm:$0xff]
  %v5965 = vld [vmem:[%s5959 + $0x28] sm:$0xff]
  %v5966 = vld [vmem:[%s5959 + $0x30] sm:$0xff]
  %v5967 = vld [vmem:[%s5959 + $0x38] sm:$0xff]
  %v5968 = vld [vmem:[%s5959 + $0x40] sm:$0xff]
  %v5969 = vld [vmem:[%s5959 + $0x48] sm:$0xff]
  %v5970 = vld [vmem:[%s5959 + $0x50] sm:$0xff]
  %v5971 = vld [vmem:[%s5959 + $0x58] sm:$0xff]
  %v5972 = vld [vmem:[%s5959 + $0x60] sm:$0xff]
  %v5973 = vld [vmem:[%s5959 + $0x68] sm:$0xff]
  %v5974 = vld [vmem:[%s5959 + $0x70] sm:$0xff]
  %v5975 = vld [vmem:[%s5959 + $0x78] sm:$0xff]
  %v5976 = vld [vmem:[%s5959 + $0x80] sm:$0xff]
  %v5977 = vld [vmem:[%s5959 + $0x88] sm:$0xff]
  %v5978 = vld [vmem:[%s5959 + $0x90] sm:$0xff]
  %v5979 = vld [vmem:[%s5959 + $0x98] sm:$0xff]
  %v5980 = vld [vmem:[%s5959 + $0xa0] sm:$0x11]
  %v5981 = vld [vmem:[%s5959 + $0xa8] sm:$0x11]
  %v6004 = vunpack.c.l.b16 %v5960
  %v6005 = vunpack.c.h.b16 %v5960
  %v6006 = vunpack.c.l.b16 %v5961
  %v6007 = vunpack.c.h.b16 %v5961
  %v6008 = vunpack.c.l.b16 %v5962
  %v6009 = vunpack.c.h.b16 %v5962
  %v6010 = vunpack.c.l.b16 %v5963
  %v6011 = vunpack.c.h.b16 %v5963
  %v6012 = vunpack.c.l.b16 %v5964
  %v6013 = vunpack.c.h.b16 %v5964
  %v6014 = vunpack.c.l.b16 %v5965
  %v6015 = vunpack.c.h.b16 %v5965
  %v6016 = vunpack.c.l.b16 %v5966
  %v6017 = vunpack.c.h.b16 %v5966
  %v6018 = vunpack.c.l.b16 %v5967
  %v6019 = vunpack.c.h.b16 %v5967
  %v6020 = vunpack.c.l.b16 %v5968
  %v6021 = vunpack.c.h.b16 %v5968
  %v6022 = vunpack.c.l.b16 %v5969
  %v6023 = vunpack.c.h.b16 %v5969
  %v6024 = vunpack.c.l.b16 %v5970
  %v6025 = vunpack.c.h.b16 %v5970
  %v6026 = vunpack.c.l.b16 %v5971
  %v6027 = vunpack.c.h.b16 %v5971
  %v6028 = vunpack.c.l.b16 %v5972
  %v6029 = vunpack.c.h.b16 %v5972
  %v6030 = vunpack.c.l.b16 %v5973
  %v6031 = vunpack.c.h.b16 %v5973
  %v6032 = vunpack.c.l.b16 %v5974
  %v6033 = vunpack.c.h.b16 %v5974
  %v6034 = vunpack.c.l.b16 %v5975
  %v6035 = vunpack.c.h.b16 %v5975
  %v6036 = vunpack.c.l.b16 %v5976
  %v6037 = vunpack.c.h.b16 %v5976
  %v6038 = vunpack.c.l.b16 %v5977
  %v6039 = vunpack.c.h.b16 %v5977
  %v6040 = vunpack.c.l.b16 %v5978
  %v6041 = vunpack.c.h.b16 %v5978
  %v6042 = vunpack.c.l.b16 %v5979
  %v6043 = vunpack.c.h.b16 %v5979
  %v6044 = vunpack.c.l.b16 %v5980
  %v6045 = vunpack.c.h.b16 %v5980
  %v6046 = vunpack.c.l.b16 %v5981
  %v6047 = vunpack.c.h.b16 %v5981
  %v6048 = vpack.c.b16 %v6008, %v6004
  %v6049 = vpack.c.b16 %v6009, %v6005
  %v6050 = vpack.c.b16 %v6010, %v6006
  %v6051 = vpack.c.b16 %v6011, %v6007
  %v6052 = vpack.c.b16 %v6016, %v6012
  %v6053 = vpack.c.b16 %v6017, %v6013
  %v6054 = vpack.c.b16 %v6018, %v6014
  %v6055 = vpack.c.b16 %v6019, %v6015
  %v6056 = vpack.c.b16 %v6024, %v6020
  %v6057 = vpack.c.b16 %v6025, %v6021
  %v6058 = vpack.c.b16 %v6026, %v6022
  %v6059 = vpack.c.b16 %v6027, %v6023
  %v6060 = vpack.c.b16 %v6032, %v6028
  %v6061 = vpack.c.b16 %v6033, %v6029
  %v6062 = vpack.c.b16 %v6034, %v6030
  %v6063 = vpack.c.b16 %v6035, %v6031
  %v6064 = vpack.c.b16 %v6040, %v6036
  %v6065 = vpack.c.b16 %v6041, %v6037
  %v6066 = vpack.c.b16 %v6042, %v6038
  %v6067 = vpack.c.b16 %v6043, %v6039
  %v6068 = vpack.c.b16 %v6044, %v6044
  %v6069 = vpack.c.b16 %v6045, %v6045
  %v6070 = vpack.c.b16 %v6046, %v6046
  %v6071 = vpack.c.b16 %v6047, %v6047
  %v6091 = vsel %vm916, %v6051, 0
  %v6094 = vsel %vm916, %v6055, 0
  %v6097 = vsel %vm916, %v6059, 0
  %v6100 = vsel %vm916, %v6063, 0
  %v6103 = vsel %vm916, %v6067, 0
  %v6106 = vsel %vm916, %v6071, 0
  %6108 = vmatprep.subr.bf16.mxu0 0
  %6109 = vmatpush1.bf16.msra.mxu0 %v761
  %6110 = vmatprep.subr.bf16.mxu0 0
  %6111 = vmatpush1.bf16.msra.mxu0 %v762
  %6112 = vmatprep.subr.bf16.mxu0 0
  %6113 = vmatpush1.bf16.msra.mxu0 %v763
  %6114 = vmatprep.subr.bf16.mxu0 0
  %6115 = vmatpush1.bf16.msra.mxu0 %v764
  %6116 = vmatprep.subr.bf16.mxu0 0
  %6117 = vmatpush1.bf16.msra.mxu0 %v765
  %6118 = vmatprep.subr.bf16.mxu0 0
  %6119 = vmatpush1.bf16.msra.mxu0 %v766
  %6120 = vmatprep.subr.bf16.mxu0 0
  %6121 = vmatpush1.bf16.msra.mxu0 %v767
  %6122 = vmatprep.subr.bf16.mxu0 0
  %6123 = vmatpush1.bf16.msra.mxu0 %v768
  %6124 = vmatprep.subr.bf16.mxu0 0
  %6125 = vmatpush1.bf16.msra.mxu0 %v769
  %6126 = vmatprep.subr.bf16.mxu0 0
  %6127 = vmatpush1.bf16.msra.mxu0 %v770
  %6128 = vmatprep.subr.bf16.mxu0 0
  %6129 = vmatpush1.bf16.msra.mxu0 %v771
  %6130 = vmatprep.subr.bf16.mxu0 0
  %6131 = vmatpush1.bf16.msra.mxu0 %v772
  %6132 = vmatprep.subr.bf16.mxu0 0
  %6133 = vmatpush1.bf16.msra.mxu0 %v773
  %6134 = vmatprep.subr.bf16.mxu0 0
  %6135 = vmatpush1.bf16.msra.mxu0 %v774
  %6136 = vmatprep.subr.bf16.mxu0 0
  %6137 = vmatpush1.bf16.msra.mxu0 %v775
  %6138 = vmatprep.subr.bf16.mxu0 0
  %6139 = vmatpush1.bf16.msra.mxu0 %v776
  %6140 = vmatprep.mubr.bf16.mxu0 %v6049
  %6141 = vmatmul.mubr.bf16.gmra.mrb[0].mxu0 %v6048
  %v6142 = vpop.f32.mrb[0].mxu0
  %v6143 = vadd.f32 0.0, %v6142
  %v6144 = vpop.f32.mrb[0].mxu0
  %v6145 = vpop.f32.mrb[0].mxu0
  %v6146 = vadd.f32 0.0, %v6145
  %v6147 = vpop.f32.mrb[0].mxu0
  %6148 = vmatprep.mubr.bf16.mxu0 %v6053
  %6149 = vmatmul.mubr.bf16.gmra.mrb[0].mxu0 %v6052
  %v6150 = vpop.f32.mrb[0].mxu0
  %v6151 = vadd.f32 0.0, %v6150
  %v6152 = vpop.f32.mrb[0].mxu0
  %v6153 = vpop.f32.mrb[0].mxu0
  %v6154 = vadd.f32 0.0, %v6153
  %v6155 = vpop.f32.mrb[0].mxu0
  %6156 = vmatprep.mubr.bf16.mxu0 %v6057
  %6157 = vmatmul.mubr.bf16.gmra.mrb[0].mxu0 %v6056
  %v6158 = vpop.f32.mrb[0].mxu0
  %v6159 = vadd.f32 0.0, %v6158
  %v6160 = vpop.f32.mrb[0].mxu0
  %v6161 = vpop.f32.mrb[0].mxu0
  %v6162 = vadd.f32 0.0, %v6161
  %v6163 = vpop.f32.mrb[0].mxu0
  %6164 = vmatprep.mubr.bf16.mxu0 %v6061
  %6165 = vmatmul.mubr.bf16.gmra.mrb[0].mxu0 %v6060
  %v6166 = vpop.f32.mrb[0].mxu0
  %v6167 = vadd.f32 0.0, %v6166
  %v6168 = vpop.f32.mrb[0].mxu0
  %v6169 = vpop.f32.mrb[0].mxu0
  %v6170 = vadd.f32 0.0, %v6169
  %v6171 = vpop.f32.mrb[0].mxu0
  %6172 = vmatprep.mubr.bf16.mxu0 %v6065
  %6173 = vmatmul.mubr.bf16.gmra.mrb[0].mxu0 %v6064
  %v6174 = vpop.f32.mrb[0].mxu0
  %v6175 = vadd.f32 0.0, %v6174
  %v6176 = vpop.f32.mrb[0].mxu0
  %v6177 = vpop.f32.mrb[0].mxu0
  %v6178 = vadd.f32 0.0, %v6177
  %v6179 = vpop.f32.mrb[0].mxu0
  %6180 = vmatprep.mubr.bf16.mxu0 %v6069
  %6181 = vmatmul.mubr.bf16.gmra.mrb[0].mxu0 %v6068
  %v6182 = vpop.f32.mrb[0].mxu0
  %v6183 = vadd.f32 0.0, %v6182
  %v6184 = vpop.f32.mrb[0].mxu0
  %v6185 = vpop.f32.mrb[0].mxu0
  %v6186 = vpop.f32.mrb[0].mxu0
  %6187 = vdwg.mxu0
  %6188 = vmatprep.subr.bf16.mxu0 0
  %6189 = vmatpush1.bf16.msra.mxu0 %v777
  %6190 = vmatprep.subr.bf16.mxu0 0
  %6191 = vmatpush1.bf16.msra.mxu0 %v778
  %6192 = vmatprep.subr.bf16.mxu0 0
  %6193 = vmatpush1.bf16.msra.mxu0 %v779
  %6194 = vmatprep.subr.bf16.mxu0 0
  %6195 = vmatpush1.bf16.msra.mxu0 %v780
  %6196 = vmatprep.subr.bf16.mxu0 0
  %6197 = vmatpush1.bf16.msra.mxu0 %v781
  %6198 = vmatprep.subr.bf16.mxu0 0
  %6199 = vmatpush1.bf16.msra.mxu0 %v782
  %6200 = vmatprep.subr.bf16.mxu0 0
  %6201 = vmatpush1.bf16.msra.mxu0 %v783
  %6202 = vmatprep.subr.bf16.mxu0 0
  %6203 = vmatpush1.bf16.msra.mxu0 %v784
  %6204 = vmatprep.subr.bf16.mxu0 0
  %6205 = vmatpush1.bf16.msra.mxu0 %v785
  %6206 = vmatprep.subr.bf16.mxu0 0
  %6207 = vmatpush1.bf16.msra.mxu0 0
  %6208 = vmatprep.subr.bf16.mxu0 0
  %6209 = vmatpush1.bf16.msra.mxu0 0
  %6210 = vmatprep.subr.bf16.mxu0 0
  %6211 = vmatpush1.bf16.msra.mxu0 0
  %6212 = vmatprep.subr.bf16.mxu0 0
  %6213 = vmatpush1.bf16.msra.mxu0 0
  %6214 = vmatprep.subr.bf16.mxu0 0
  %6215 = vmatpush1.bf16.msra.mxu0 0
  %6216 = vmatprep.subr.bf16.mxu0 0
  %6217 = vmatpush1.bf16.msra.mxu0 0
  %6218 = vmatprep.subr.bf16.mxu0 0
  %6219 = vmatpush1.bf16.msra.mxu0 0
  %6220 = vmatprep.mubr.bf16.mxu0 %v6091
  %6221 = vmatmul.mubr.bf16.gmra.mrb[0].mxu0 %v6050
  %v6222 = vpop.f32.mrb[0].mxu0
  %v6223 = vadd.f32 %v6143, %v6222
  %v6224 = vpop.f32.mrb[0].mxu0
  %v6225 = vpop.f32.mrb[0].mxu0
  %v6226 = vadd.f32 %v6146, %v6225
  %v6227 = vpop.f32.mrb[0].mxu0
  %6228 = vmatprep.mubr.bf16.mxu0 %v6094
  %6229 = vmatmul.mubr.bf16.gmra.mrb[0].mxu0 %v6054
  %v6230 = vpop.f32.mrb[0].mxu0
  %v6231 = vadd.f32 %v6151, %v6230
  %v6232 = vpop.f32.mrb[0].mxu0
  %v6233 = vpop.f32.mrb[0].mxu0
  %v6234 = vadd.f32 %v6154, %v6233
  %v6235 = vpop.f32.mrb[0].mxu0
  %6236 = vmatprep.mubr.bf16.mxu0 %v6097
  %6237 = vmatmul.mubr.bf16.gmra.mrb[0].mxu0 %v6058
  %v6238 = vpop.f32.mrb[0].mxu0
  %v6239 = vadd.f32 %v6159, %v6238
  %v6240 = vpop.f32.mrb[0].mxu0
  %v6241 = vpop.f32.mrb[0].mxu0
  %v6242 = vadd.f32 %v6162, %v6241
  %v6243 = vpop.f32.mrb[0].mxu0
  %6244 = vmatprep.mubr.bf16.mxu0 %v6100
  %6245 = vmatmul.mubr.bf16.gmra.mrb[0].mxu0 %v6062
  %v6246 = vpop.f32.mrb[0].mxu0
  %v6247 = vadd.f32 %v6167, %v6246
  %v6248 = vpop.f32.mrb[0].mxu0
  %v6249 = vpop.f32.mrb[0].mxu0
  %v6250 = vadd.f32 %v6170, %v6249
  %v6251 = vpop.f32.mrb[0].mxu0
  %6252 = vmatprep.mubr.bf16.mxu0 %v6103
  %6253 = vmatmul.mubr.bf16.gmra.mrb[0].mxu0 %v6066
  %v6254 = vpop.f32.mrb[0].mxu0
  %v6255 = vadd.f32 %v6175, %v6254
  %v6256 = vpop.f32.mrb[0].mxu0
  %v6257 = vpop.f32.mrb[0].mxu0
  %v6258 = vadd.f32 %v6178, %v6257
  %v6259 = vpop.f32.mrb[0].mxu0
  %6260 = vmatprep.mubr.bf16.mxu0 %v6106
  %6261 = vmatmul.mubr.bf16.gmra.mrb[0].mxu0 %v6070
  %v6262 = vpop.f32.mrb[0].mxu0
  %v6263 = vadd.f32 %v6183, %v6262
  %v6264 = vpop.f32.mrb[0].mxu0
  %v6265 = vpop.f32.mrb[0].mxu0
  %v6266 = vpop.f32.mrb[0].mxu0
  %6267 = vdwg.mxu0
  %v6268 = vpack.c.bf16 %v6226, %v6223
  %v6269 = vpack.c.bf16 %v6234, %v6231
  %v6270 = vpack.c.bf16 %v6242, %v6239
  %v6271 = vpack.c.bf16 %v6250, %v6247
  %v6272 = vpack.c.bf16 %v6258, %v6255
  %v6273 = vpack.c.bf16 %v6263, %v6263
  %s6274 = scalar_lea.vmem %s4, 96
  %v6275 = vld [vmem:[%s6274] sm:$0xf]
  %v6276 = vld [vmem:[%s6274 + $0x4] sm:$0xf]
  %v6279 = vunpack.c.l.b16 %v6275
  %v6280 = vunpack.c.l.b16 %v6276
  %v6281 = vpack.c.b16 %v6280, %v6279
  %v6284 = vsel %vm916, %v6268, 0
  %v6287 = vsel %vm916, %v6269, 0
  %v6290 = vsel %vm916, %v6270, 0
  %v6293 = vsel %vm916, %v6271, 0
  %v6296 = vsel %vm916, %v6272, 0
  %v6299 = vsel %vm916, %v6273, 0
  %6301 = vmatprep.subr.bf16.mxu0 0
  %6302 = vmatpush1.bf16.msra.mxu0 %v6281
  %6303 = vmatprep.subr.bf16.mxu0 0
  %6304 = vmatpush1.bf16.msra.mxu0 0
  %6305 = vmatprep.subr.bf16.mxu0 0
  %6306 = vmatpush1.bf16.msra.mxu0 0
  %6307 = vmatprep.subr.bf16.mxu0 0
  %6308 = vmatpush1.bf16.msra.mxu0 0
  %6309 = vmatprep.subr.bf16.mxu0 0
  %6310 = vmatpush1.bf16.msra.mxu0 0
  %6311 = vmatprep.subr.bf16.mxu0 0
  %6312 = vmatpush1.bf16.msra.mxu0 0
  %6313 = vmatprep.subr.bf16.mxu0 0
  %6314 = vmatpush1.bf16.msra.mxu0 0
  %6315 = vmatprep.subr.bf16.mxu0 0
  %6316 = vmatpush1.bf16.msra.mxu0 0
  %6317 = vmatprep.subr.bf16.mxu0 0
  %6318 = vmatpush1.bf16.msra.mxu0 0
  %6319 = vmatprep.subr.bf16.mxu0 0
  %6320 = vmatpush1.bf16.msra.mxu0 0
  %6321 = vmatprep.subr.bf16.mxu0 0
  %6322 = vmatpush1.bf16.msra.mxu0 0
  %6323 = vmatprep.subr.bf16.mxu0 0
  %6324 = vmatpush1.bf16.msra.mxu0 0
  %6325 = vmatprep.subr.bf16.mxu0 0
  %6326 = vmatpush1.bf16.msra.mxu0 0
  %6327 = vmatprep.subr.bf16.mxu0 0
  %6328 = vmatpush1.bf16.msra.mxu0 0
  %6329 = vmatprep.subr.bf16.mxu0 0
  %6330 = vmatpush1.bf16.msra.mxu0 0
  %6331 = vmatprep.subr.bf16.mxu0 0
  %6332 = vmatpush1.bf16.msra.mxu0 0
  %6333 = vmatprep.mubr.bf16.mxu0 0
  %6334 = vmatmul.mubr.bf16.gmra.mrb[0].mxu0 %v6284
  %v6335 = vpop.f32.mrb[0].mxu0
  %v6336 = vadd.f32 0.0, %v6335
  %v6337 = vpop.f32.mrb[0].mxu0
  %v6338 = vpop.f32.mrb[0].mxu0
  %v6339 = vadd.f32 0.0, %v6338
  %v6340 = vpop.f32.mrb[0].mxu0
  %6341 = vmatprep.mubr.bf16.mxu0 0
  %6342 = vmatmul.mubr.bf16.gmra.mrb[0].mxu0 %v6287
  %v6343 = vpop.f32.mrb[0].mxu0
  %v6344 = vadd.f32 0.0, %v6343
  %v6345 = vpop.f32.mrb[0].mxu0
  %v6346 = vpop.f32.mrb[0].mxu0
  %v6347 = vadd.f32 0.0, %v6346
  %v6348 = vpop.f32.mrb[0].mxu0
  %6349 = vmatprep.mubr.bf16.mxu0 0
  %6350 = vmatmul.mubr.bf16.gmra.mrb[0].mxu0 %v6290
  %v6351 = vpop.f32.mrb[0].mxu0
  %v6352 = vadd.f32 0.0, %v6351
  %v6353 = vpop.f32.mrb[0].mxu0
  %v6354 = vpop.f32.mrb[0].mxu0
  %v6355 = vadd.f32 0.0, %v6354
  %v6356 = vpop.f32.mrb[0].mxu0
  %6357 = vmatprep.mubr.bf16.mxu0 0
  %6358 = vmatmul.mubr.bf16.gmra.mrb[0].mxu0 %v6293
  %v6359 = vpop.f32.mrb[0].mxu0
  %v6360 = vadd.f32 0.0, %v6359
  %v6361 = vpop.f32.mrb[0].mxu0
  %v6362 = vpop.f32.mrb[0].mxu0
  %v6363 = vadd.f32 0.0, %v6362
  %v6364 = vpop.f32.mrb[0].mxu0
  %6365 = vmatprep.mubr.bf16.mxu0 0
  %6366 = vmatmul.mubr.bf16.gmra.mrb[0].mxu0 %v6296
  %v6367 = vpop.f32.mrb[0].mxu0
  %v6368 = vadd.f32 0.0, %v6367
  %v6369 = vpop.f32.mrb[0].mxu0
  %v6370 = vpop.f32.mrb[0].mxu0
  %v6371 = vadd.f32 0.0, %v6370
  %v6372 = vpop.f32.mrb[0].mxu0
  %6373 = vmatprep.mubr.bf16.mxu0 0
  %6374 = vmatmul.mubr.bf16.gmra.mrb[0].mxu0 %v6299
  %v6375 = vpop.f32.mrb[0].mxu0
  %v6376 = vadd.f32 0.0, %v6375
  %v6377 = vpop.f32.mrb[0].mxu0
  %v6378 = vpop.f32.mrb[0].mxu0
  %v6379 = vpop.f32.mrb[0].mxu0
  %6380 = vdwg.mxu0
  %v6381 = vadd.f32 %v5948, %v6336
  %v6382 = vadd.f32 %v5949, %v6339
  %v6383 = vadd.f32 %v5950, %v6344
  %v6384 = vadd.f32 %v5951, %v6347
  %v6385 = vadd.f32 %v5952, %v6352
  %v6386 = vadd.f32 %v5953, %v6355
  %v6387 = vadd.f32 %v5954, %v6360
  %v6388 = vadd.f32 %v5955, %v6363
  %v6389 = vadd.f32 %v5956, %v6368
  %v6390 = vadd.f32 %v5957, %v6371
  %v6391 = vadd.f32 %v5958, %v6376
  %s6392 = scalar_lea.vmem %s3, 2288
  %v6393 = vld [vmem:[%s6392] sm:$0xff]
  %v6394 = vld [vmem:[%s6392 + $0x8] sm:$0xff]
  %v6395 = vld [vmem:[%s6392 + $0x10] sm:$0xff]
  %v6396 = vld [vmem:[%s6392 + $0x18] sm:$0xff]
  %v6397 = vld [vmem:[%s6392 + $0x20] sm:$0xff]
  %v6398 = vld [vmem:[%s6392 + $0x28] sm:$0xff]
  %v6399 = vld [vmem:[%s6392 + $0x30] sm:$0xff]
  %v6400 = vld [vmem:[%s6392 + $0x38] sm:$0xff]
  %v6401 = vld [vmem:[%s6392 + $0x40] sm:$0xff]
  %v6402 = vld [vmem:[%s6392 + $0x48] sm:$0xff]
  %v6403 = vld [vmem:[%s6392 + $0x50] sm:$0xff]
  %v6404 = vld [vmem:[%s6392 + $0x58] sm:$0xff]
  %v6405 = vld [vmem:[%s6392 + $0x60] sm:$0xff]
  %v6406 = vld [vmem:[%s6392 + $0x68] sm:$0xff]
  %v6407 = vld [vmem:[%s6392 + $0x70] sm:$0xff]
  %v6408 = vld [vmem:[%s6392 + $0x78] sm:$0xff]
  %v6409 = vld [vmem:[%s6392 + $0x80] sm:$0xff]
  %v6410 = vld [vmem:[%s6392 + $0x88] sm:$0xff]
  %v6411 = vld [vmem:[%s6392 + $0x90] sm:$0xff]
  %v6412 = vld [vmem:[%s6392 + $0x98] sm:$0xff]
  %v6413 = vld [vmem:[%s6392 + $0xa0] sm:$0x11]
  %v6414 = vld [vmem:[%s6392 + $0xa8] sm:$0x11]
  %v6437 = vunpack.c.l.b16 %v6393
  %v6438 = vunpack.c.h.b16 %v6393
  %v6439 = vunpack.c.l.b16 %v6394
  %v6440 = vunpack.c.h.b16 %v6394
  %v6441 = vunpack.c.l.b16 %v6395
  %v6442 = vunpack.c.h.b16 %v6395
  %v6443 = vunpack.c.l.b16 %v6396
  %v6444 = vunpack.c.h.b16 %v6396
  %v6445 = vunpack.c.l.b16 %v6397
  %v6446 = vunpack.c.h.b16 %v6397
  %v6447 = vunpack.c.l.b16 %v6398
  %v6448 = vunpack.c.h.b16 %v6398
  %v6449 = vunpack.c.l.b16 %v6399
  %v6450 = vunpack.c.h.b16 %v6399
  %v6451 = vunpack.c.l.b16 %v6400
  %v6452 = vunpack.c.h.b16 %v6400
  %v6453 = vunpack.c.l.b16 %v6401
  %v6454 = vunpack.c.h.b16 %v6401
  %v6455 = vunpack.c.l.b16 %v6402
  %v6456 = vunpack.c.h.b16 %v6402
  %v6457 = vunpack.c.l.b16 %v6403
  %v6458 = vunpack.c.h.b16 %v6403
  %v6459 = vunpack.c.l.b16 %v6404
  %v6460 = vunpack.c.h.b16 %v6404
  %v6461 = vunpack.c.l.b16 %v6405
  %v6462 = vunpack.c.h.b16 %v6405
  %v6463 = vunpack.c.l.b16 %v6406
  %v6464 = vunpack.c.h.b16 %v6406
  %v6465 = vunpack.c.l.b16 %v6407
  %v6466 = vunpack.c.h.b16 %v6407
  %v6467 = vunpack.c.l.b16 %v6408
  %v6468 = vunpack.c.h.b16 %v6408
  %v6469 = vunpack.c.l.b16 %v6409
  %v6470 = vunpack.c.h.b16 %v6409
  %v6471 = vunpack.c.l.b16 %v6410
  %v6472 = vunpack.c.h.b16 %v6410
  %v6473 = vunpack.c.l.b16 %v6411
  %v6474 = vunpack.c.h.b16 %v6411
  %v6475 = vunpack.c.l.b16 %v6412
  %v6476 = vunpack.c.h.b16 %v6412
  %v6477 = vunpack.c.l.b16 %v6413
  %v6478 = vunpack.c.h.b16 %v6413
  %v6479 = vunpack.c.l.b16 %v6414
  %v6480 = vunpack.c.h.b16 %v6414
  %v6481 = vpack.c.b16 %v6441, %v6437
  %v6482 = vpack.c.b16 %v6442, %v6438
  %v6483 = vpack.c.b16 %v6443, %v6439
  %v6484 = vpack.c.b16 %v6444, %v6440
  %v6485 = vpack.c.b16 %v6449, %v6445
  %v6486 = vpack.c.b16 %v6450, %v6446
  %v6487 = vpack.c.b16 %v6451, %v6447
  %v6488 = vpack.c.b16 %v6452, %v6448
  %v6489 = vpack.c.b16 %v6457, %v6453
  %v6490 = vpack.c.b16 %v6458, %v6454
  %v6491 = vpack.c.b16 %v6459, %v6455
  %v6492 = vpack.c.b16 %v6460, %v6456
  %v6493 = vpack.c.b16 %v6465, %v6461
  %v6494 = vpack.c.b16 %v6466, %v6462
  %v6495 = vpack.c.b16 %v6467, %v6463
  %v6496 = vpack.c.b16 %v6468, %v6464
  %v6497 = vpack.c.b16 %v6473, %v6469
  %v6498 = vpack.c.b16 %v6474, %v6470
  %v6499 = vpack.c.b16 %v6475, %v6471
  %v6500 = vpack.c.b16 %v6476, %v6472
  %v6501 = vpack.c.b16 %v6477, %v6477
  %v6502 = vpack.c.b16 %v6478, %v6478
  %v6503 = vpack.c.b16 %v6479, %v6479
  %v6504 = vpack.c.b16 %v6480, %v6480
  %v6524 = vsel %vm916, %v6484, 0
  %v6527 = vsel %vm916, %v6488, 0
  %v6530 = vsel %vm916, %v6492, 0
  %v6533 = vsel %vm916, %v6496, 0
  %v6536 = vsel %vm916, %v6500, 0
  %v6539 = vsel %vm916, %v6504, 0
  %6541 = vmatprep.subr.bf16.mxu0 0
  %6542 = vmatpush1.bf16.msra.mxu0 %v761
  %6543 = vmatprep.subr.bf16.mxu0 0
  %6544 = vmatpush1.bf16.msra.mxu0 %v762
  %6545 = vmatprep.subr.bf16.mxu0 0
  %6546 = vmatpush1.bf16.msra.mxu0 %v763
  %6547 = vmatprep.subr.bf16.mxu0 0
  %6548 = vmatpush1.bf16.msra.mxu0 %v764
  %6549 = vmatprep.subr.bf16.mxu0 0
  %6550 = vmatpush1.bf16.msra.mxu0 %v765
  %6551 = vmatprep.subr.bf16.mxu0 0
  %6552 = vmatpush1.bf16.msra.mxu0 %v766
  %6553 = vmatprep.subr.bf16.mxu0 0
  %6554 = vmatpush1.bf16.msra.mxu0 %v767
  %6555 = vmatprep.subr.bf16.mxu0 0
  %6556 = vmatpush1.bf16.msra.mxu0 %v768
  %6557 = vmatprep.subr.bf16.mxu0 0
  %6558 = vmatpush1.bf16.msra.mxu0 %v769
  %6559 = vmatprep.subr.bf16.mxu0 0
  %6560 = vmatpush1.bf16.msra.mxu0 %v770
  %6561 = vmatprep.subr.bf16.mxu0 0
  %6562 = vmatpush1.bf16.msra.mxu0 %v771
  %6563 = vmatprep.subr.bf16.mxu0 0
  %6564 = vmatpush1.bf16.msra.mxu0 %v772
  %6565 = vmatprep.subr.bf16.mxu0 0
  %6566 = vmatpush1.bf16.msra.mxu0 %v773
  %6567 = vmatprep.subr.bf16.mxu0 0
  %6568 = vmatpush1.bf16.msra.mxu0 %v774
  %6569 = vmatprep.subr.bf16.mxu0 0
  %6570 = vmatpush1.bf16.msra.mxu0 %v775
  %6571 = vmatprep.subr.bf16.mxu0 0
  %6572 = vmatpush1.bf16.msra.mxu0 %v776
  %6573 = vmatprep.mubr.bf16.mxu0 %v6482
  %6574 = vmatmul.mubr.bf16.gmra.mrb[0].mxu0 %v6481
  %v6575 = vpop.f32.mrb[0].mxu0
  %v6576 = vadd.f32 0.0, %v6575
  %v6577 = vpop.f32.mrb[0].mxu0
  %v6578 = vpop.f32.mrb[0].mxu0
  %v6579 = vadd.f32 0.0, %v6578
  %v6580 = vpop.f32.mrb[0].mxu0
  %6581 = vmatprep.mubr.bf16.mxu0 %v6486
  %6582 = vmatmul.mubr.bf16.gmra.mrb[0].mxu0 %v6485
  %v6583 = vpop.f32.mrb[0].mxu0
  %v6584 = vadd.f32 0.0, %v6583
  %v6585 = vpop.f32.mrb[0].mxu0
  %v6586 = vpop.f32.mrb[0].mxu0
  %v6587 = vadd.f32 0.0, %v6586
  %v6588 = vpop.f32.mrb[0].mxu0
  %6589 = vmatprep.mubr.bf16.mxu0 %v6490
  %6590 = vmatmul.mubr.bf16.gmra.mrb[0].mxu0 %v6489
  %v6591 = vpop.f32.mrb[0].mxu0
  %v6592 = vadd.f32 0.0, %v6591
  %v6593 = vpop.f32.mrb[0].mxu0
  %v6594 = vpop.f32.mrb[0].mxu0
  %v6595 = vadd.f32 0.0, %v6594
  %v6596 = vpop.f32.mrb[0].mxu0
  %6597 = vmatprep.mubr.bf16.mxu0 %v6494
  %6598 = vmatmul.mubr.bf16.gmra.mrb[0].mxu0 %v6493
  %v6599 = vpop.f32.mrb[0].mxu0
  %v6600 = vadd.f32 0.0, %v6599
  %v6601 = vpop.f32.mrb[0].mxu0
  %v6602 = vpop.f32.mrb[0].mxu0
  %v6603 = vadd.f32 0.0, %v6602
  %v6604 = vpop.f32.mrb[0].mxu0
  %6605 = vmatprep.mubr.bf16.mxu0 %v6498
  %6606 = vmatmul.mubr.bf16.gmra.mrb[0].mxu0 %v6497
  %v6607 = vpop.f32.mrb[0].mxu0
  %v6608 = vadd.f32 0.0, %v6607
  %v6609 = vpop.f32.mrb[0].mxu0
  %v6610 = vpop.f32.mrb[0].mxu0
  %v6611 = vadd.f32 0.0, %v6610
  %v6612 = vpop.f32.mrb[0].mxu0
  %6613 = vmatprep.mubr.bf16.mxu0 %v6502
  %6614 = vmatmul.mubr.bf16.gmra.mrb[0].mxu0 %v6501
  %v6615 = vpop.f32.mrb[0].mxu0
  %v6616 = vadd.f32 0.0, %v6615
  %v6617 = vpop.f32.mrb[0].mxu0
  %v6618 = vpop.f32.mrb[0].mxu0
  %v6619 = vpop.f32.mrb[0].mxu0
  %6620 = vdwg.mxu0
  %6621 = vmatprep.subr.bf16.mxu0 0
  %6622 = vmatpush1.bf16.msra.mxu0 %v777
  %6623 = vmatprep.subr.bf16.mxu0 0
  %6624 = vmatpush1.bf16.msra.mxu0 %v778
  %6625 = vmatprep.subr.bf16.mxu0 0
  %6626 = vmatpush1.bf16.msra.mxu0 %v779
  %6627 = vmatprep.subr.bf16.mxu0 0
  %6628 = vmatpush1.bf16.msra.mxu0 %v780
  %6629 = vmatprep.subr.bf16.mxu0 0
  %6630 = vmatpush1.bf16.msra.mxu0 %v781
  %6631 = vmatprep.subr.bf16.mxu0 0
  %6632 = vmatpush1.bf16.msra.mxu0 %v782
  %6633 = vmatprep.subr.bf16.mxu0 0
  %6634 = vmatpush1.bf16.msra.mxu0 %v783
  %6635 = vmatprep.subr.bf16.mxu0 0
  %6636 = vmatpush1.bf16.msra.mxu0 %v784
  %6637 = vmatprep.subr.bf16.mxu0 0
  %6638 = vmatpush1.bf16.msra.mxu0 %v785
  %6639 = vmatprep.subr.bf16.mxu0 0
  %6640 = vmatpush1.bf16.msra.mxu0 0
  %6641 = vmatprep.subr.bf16.mxu0 0
  %6642 = vmatpush1.bf16.msra.mxu0 0
  %6643 = vmatprep.subr.bf16.mxu0 0
  %6644 = vmatpush1.bf16.msra.mxu0 0
  %6645 = vmatprep.subr.bf16.mxu0 0
  %6646 = vmatpush1.bf16.msra.mxu0 0
  %6647 = vmatprep.subr.bf16.mxu0 0
  %6648 = vmatpush1.bf16.msra.mxu0 0
  %6649 = vmatprep.subr.bf16.mxu0 0
  %6650 = vmatpush1.bf16.msra.mxu0 0
  %6651 = vmatprep.subr.bf16.mxu0 0
  %6652 = vmatpush1.bf16.msra.mxu0 0
  %6653 = vmatprep.mubr.bf16.mxu0 %v6524
  %6654 = vmatmul.mubr.bf16.gmra.mrb[0].mxu0 %v6483
  %v6655 = vpop.f32.mrb[0].mxu0
  %v6656 = vadd.f32 %v6576, %v6655
  %v6657 = vpop.f32.mrb[0].mxu0
  %v6658 = vpop.f32.mrb[0].mxu0
  %v6659 = vadd.f32 %v6579, %v6658
  %v6660 = vpop.f32.mrb[0].mxu0
  %6661 = vmatprep.mubr.bf16.mxu0 %v6527
  %6662 = vmatmul.mubr.bf16.gmra.mrb[0].mxu0 %v6487
  %v6663 = vpop.f32.mrb[0].mxu0
  %v6664 = vadd.f32 %v6584, %v6663
  %v6665 = vpop.f32.mrb[0].mxu0
  %v6666 = vpop.f32.mrb[0].mxu0
  %v6667 = vadd.f32 %v6587, %v6666
  %v6668 = vpop.f32.mrb[0].mxu0
  %6669 = vmatprep.mubr.bf16.mxu0 %v6530
  %6670 = vmatmul.mubr.bf16.gmra.mrb[0].mxu0 %v6491
  %v6671 = vpop.f32.mrb[0].mxu0
  %v6672 = vadd.f32 %v6592, %v6671
  %v6673 = vpop.f32.mrb[0].mxu0
  %v6674 = vpop.f32.mrb[0].mxu0
  %v6675 = vadd.f32 %v6595, %v6674
  %v6676 = vpop.f32.mrb[0].mxu0
  %6677 = vmatprep.mubr.bf16.mxu0 %v6533
  %6678 = vmatmul.mubr.bf16.gmra.mrb[0].mxu0 %v6495
  %v6679 = vpop.f32.mrb[0].mxu0
  %v6680 = vadd.f32 %v6600, %v6679
  %v6681 = vpop.f32.mrb[0].mxu0
  %v6682 = vpop.f32.mrb[0].mxu0
  %v6683 = vadd.f32 %v6603, %v6682
  %v6684 = vpop.f32.mrb[0].mxu0
  %6685 = vmatprep.mubr.bf16.mxu0 %v6536
  %6686 = vmatmul.mubr.bf16.gmra.mrb[0].mxu0 %v6499
  %v6687 = vpop.f32.mrb[0].mxu0
  %v6688 = vadd.f32 %v6608, %v6687
  %v6689 = vpop.f32.mrb[0].mxu0
  %v6690 = vpop.f32.mrb[0].mxu0
  %v6691 = vadd.f32 %v6611, %v6690
  %v6692 = vpop.f32.mrb[0].mxu0
  %6693 = vmatprep.mubr.bf16.mxu0 %v6539
  %6694 = vmatmul.mubr.bf16.gmra.mrb[0].mxu0 %v6503
  %v6695 = vpop.f32.mrb[0].mxu0
  %v6696 = vadd.f32 %v6616, %v6695
  %v6697 = vpop.f32.mrb[0].mxu0
  %v6698 = vpop.f32.mrb[0].mxu0
  %v6699 = vpop.f32.mrb[0].mxu0
  %6700 = vdwg.mxu0
  %v6701 = vpack.c.bf16 %v6659, %v6656
  %v6702 = vpack.c.bf16 %v6667, %v6664
  %v6703 = vpack.c.bf16 %v6675, %v6672
  %v6704 = vpack.c.bf16 %v6683, %v6680
  %v6705 = vpack.c.bf16 %v6691, %v6688
  %v6706 = vpack.c.bf16 %v6696, %v6696
  %s6707 = scalar_lea.vmem %s4, 104
  %v6708 = vld [vmem:[%s6707] sm:$0xf]
  %v6709 = vld [vmem:[%s6707 + $0x4] sm:$0xf]
  %v6712 = vunpack.c.l.b16 %v6708
  %v6713 = vunpack.c.l.b16 %v6709
  %v6714 = vpack.c.b16 %v6713, %v6712
  %v6717 = vsel %vm916, %v6701, 0
  %v6720 = vsel %vm916, %v6702, 0
  %v6723 = vsel %vm916, %v6703, 0
  %v6726 = vsel %vm916, %v6704, 0
  %v6729 = vsel %vm916, %v6705, 0
  %v6732 = vsel %vm916, %v6706, 0
  %6734 = vmatprep.subr.bf16.mxu0 0
  %6735 = vmatpush1.bf16.msra.mxu0 %v6714
  %6736 = vmatprep.subr.bf16.mxu0 0
  %6737 = vmatpush1.bf16.msra.mxu0 0
  %6738 = vmatprep.subr.bf16.mxu0 0
  %6739 = vmatpush1.bf16.msra.mxu0 0
  %6740 = vmatprep.subr.bf16.mxu0 0
  %6741 = vmatpush1.bf16.msra.mxu0 0
  %6742 = vmatprep.subr.bf16.mxu0 0
  %6743 = vmatpush1.bf16.msra.mxu0 0
  %6744 = vmatprep.subr.bf16.mxu0 0
  %6745 = vmatpush1.bf16.msra.mxu0 0
  %6746 = vmatprep.subr.bf16.mxu0 0
  %6747 = vmatpush1.bf16.msra.mxu0 0
  %6748 = vmatprep.subr.bf16.mxu0 0
  %6749 = vmatpush1.bf16.msra.mxu0 0
  %6750 = vmatprep.subr.bf16.mxu0 0
  %6751 = vmatpush1.bf16.msra.mxu0 0
  %6752 = vmatprep.subr.bf16.mxu0 0
  %6753 = vmatpush1.bf16.msra.mxu0 0
  %6754 = vmatprep.subr.bf16.mxu0 0
  %6755 = vmatpush1.bf16.msra.mxu0 0
  %6756 = vmatprep.subr.bf16.mxu0 0
  %6757 = vmatpush1.bf16.msra.mxu0 0
  %6758 = vmatprep.subr.bf16.mxu0 0
  %6759 = vmatpush1.bf16.msra.mxu0 0
  %6760 = vmatprep.subr.bf16.mxu0 0
  %6761 = vmatpush1.bf16.msra.mxu0 0
  %6762 = vmatprep.subr.bf16.mxu0 0
  %6763 = vmatpush1.bf16.msra.mxu0 0
  %6764 = vmatprep.subr.bf16.mxu0 0
  %6765 = vmatpush1.bf16.msra.mxu0 0
  %6766 = vmatprep.mubr.bf16.mxu0 0
  %6767 = vmatmul.mubr.bf16.gmra.mrb[0].mxu0 %v6717
  %v6768 = vpop.f32.mrb[0].mxu0
  %v6769 = vadd.f32 0.0, %v6768
  %v6770 = vpop.f32.mrb[0].mxu0
  %v6771 = vpop.f32.mrb[0].mxu0
  %v6772 = vadd.f32 0.0, %v6771
  %v6773 = vpop.f32.mrb[0].mxu0
  %6774 = vmatprep.mubr.bf16.mxu0 0
  %6775 = vmatmul.mubr.bf16.gmra.mrb[0].mxu0 %v6720
  %v6776 = vpop.f32.mrb[0].mxu0
  %v6777 = vadd.f32 0.0, %v6776
  %v6778 = vpop.f32.mrb[0].mxu0
  %v6779 = vpop.f32.mrb[0].mxu0
  %v6780 = vadd.f32 0.0, %v6779
  %v6781 = vpop.f32.mrb[0].mxu0
  %6782 = vmatprep.mubr.bf16.mxu0 0
  %6783 = vmatmul.mubr.bf16.gmra.mrb[0].mxu0 %v6723
  %v6784 = vpop.f32.mrb[0].mxu0
  %v6785 = vadd.f32 0.0, %v6784
  %v6786 = vpop.f32.mrb[0].mxu0
  %v6787 = vpop.f32.mrb[0].mxu0
  %v6788 = vadd.f32 0.0, %v6787
  %v6789 = vpop.f32.mrb[0].mxu0
  %6790 = vmatprep.mubr.bf16.mxu0 0
  %6791 = vmatmul.mubr.bf16.gmra.mrb[0].mxu0 %v6726
  %v6792 = vpop.f32.mrb[0].mxu0
  %v6793 = vadd.f32 0.0, %v6792
  %v6794 = vpop.f32.mrb[0].mxu0
  %v6795 = vpop.f32.mrb[0].mxu0
  %v6796 = vadd.f32 0.0, %v6795
  %v6797 = vpop.f32.mrb[0].mxu0
  %6798 = vmatprep.mubr.bf16.mxu0 0
  %6799 = vmatmul.mubr.bf16.gmra.mrb[0].mxu0 %v6729
  %v6800 = vpop.f32.mrb[0].mxu0
  %v6801 = vadd.f32 0.0, %v6800
  %v6802 = vpop.f32.mrb[0].mxu0
  %v6803 = vpop.f32.mrb[0].mxu0
  %v6804 = vadd.f32 0.0, %v6803
  %v6805 = vpop.f32.mrb[0].mxu0
  %6806 = vmatprep.mubr.bf16.mxu0 0
  %6807 = vmatmul.mubr.bf16.gmra.mrb[0].mxu0 %v6732
  %v6808 = vpop.f32.mrb[0].mxu0
  %v6809 = vadd.f32 0.0, %v6808
  %v6810 = vpop.f32.mrb[0].mxu0
  %v6811 = vpop.f32.mrb[0].mxu0
  %v6812 = vpop.f32.mrb[0].mxu0
  %6813 = vdwg.mxu0
  %v6814 = vadd.f32 %v6381, %v6769
  %v6815 = vadd.f32 %v6382, %v6772
  %v6816 = vadd.f32 %v6383, %v6777
  %v6817 = vadd.f32 %v6384, %v6780
  %v6818 = vadd.f32 %v6385, %v6785
  %v6819 = vadd.f32 %v6386, %v6788
  %v6820 = vadd.f32 %v6387, %v6793
  %v6821 = vadd.f32 %v6388, %v6796
  %v6822 = vadd.f32 %v6389, %v6801
  %v6823 = vadd.f32 %v6390, %v6804
  %v6824 = vadd.f32 %v6391, %v6809
  %s6825 = scalar_lea.vmem %s3, 2464
  %v6826 = vld [vmem:[%s6825] sm:$0xff]
  %v6827 = vld [vmem:[%s6825 + $0x8] sm:$0xff]
  %v6828 = vld [vmem:[%s6825 + $0x10] sm:$0xff]
  %v6829 = vld [vmem:[%s6825 + $0x18] sm:$0xff]
  %v6830 = vld [vmem:[%s6825 + $0x20] sm:$0xff]
  %v6831 = vld [vmem:[%s6825 + $0x28] sm:$0xff]
  %v6832 = vld [vmem:[%s6825 + $0x30] sm:$0xff]
  %v6833 = vld [vmem:[%s6825 + $0x38] sm:$0xff]
  %v6834 = vld [vmem:[%s6825 + $0x40] sm:$0xff]
  %v6835 = vld [vmem:[%s6825 + $0x48] sm:$0xff]
  %v6836 = vld [vmem:[%s6825 + $0x50] sm:$0xff]
  %v6837 = vld [vmem:[%s6825 + $0x58] sm:$0xff]
  %v6838 = vld [vmem:[%s6825 + $0x60] sm:$0xff]
  %v6839 = vld [vmem:[%s6825 + $0x68] sm:$0xff]
  %v6840 = vld [vmem:[%s6825 + $0x70] sm:$0xff]
  %v6841 = vld [vmem:[%s6825 + $0x78] sm:$0xff]
  %v6842 = vld [vmem:[%s6825 + $0x80] sm:$0xff]
  %v6843 = vld [vmem:[%s6825 + $0x88] sm:$0xff]
  %v6844 = vld [vmem:[%s6825 + $0x90] sm:$0xff]
  %v6845 = vld [vmem:[%s6825 + $0x98] sm:$0xff]
  %v6846 = vld [vmem:[%s6825 + $0xa0] sm:$0x11]
  %v6847 = vld [vmem:[%s6825 + $0xa8] sm:$0x11]
  %v6870 = vunpack.c.l.b16 %v6826
  %v6871 = vunpack.c.h.b16 %v6826
  %v6872 = vunpack.c.l.b16 %v6827
  %v6873 = vunpack.c.h.b16 %v6827
  %v6874 = vunpack.c.l.b16 %v6828
  %v6875 = vunpack.c.h.b16 %v6828
  %v6876 = vunpack.c.l.b16 %v6829
  %v6877 = vunpack.c.h.b16 %v6829
  %v6878 = vunpack.c.l.b16 %v6830
  %v6879 = vunpack.c.h.b16 %v6830
  %v6880 = vunpack.c.l.b16 %v6831
  %v6881 = vunpack.c.h.b16 %v6831
  %v6882 = vunpack.c.l.b16 %v6832
  %v6883 = vunpack.c.h.b16 %v6832
  %v6884 = vunpack.c.l.b16 %v6833
  %v6885 = vunpack.c.h.b16 %v6833
  %v6886 = vunpack.c.l.b16 %v6834
  %v6887 = vunpack.c.h.b16 %v6834
  %v6888 = vunpack.c.l.b16 %v6835
  %v6889 = vunpack.c.h.b16 %v6835
  %v6890 = vunpack.c.l.b16 %v6836
  %v6891 = vunpack.c.h.b16 %v6836
  %v6892 = vunpack.c.l.b16 %v6837
  %v6893 = vunpack.c.h.b16 %v6837
  %v6894 = vunpack.c.l.b16 %v6838
  %v6895 = vunpack.c.h.b16 %v6838
  %v6896 = vunpack.c.l.b16 %v6839
  %v6897 = vunpack.c.h.b16 %v6839
  %v6898 = vunpack.c.l.b16 %v6840
  %v6899 = vunpack.c.h.b16 %v6840
  %v6900 = vunpack.c.l.b16 %v6841
  %v6901 = vunpack.c.h.b16 %v6841
  %v6902 = vunpack.c.l.b16 %v6842
  %v6903 = vunpack.c.h.b16 %v6842
  %v6904 = vunpack.c.l.b16 %v6843
  %v6905 = vunpack.c.h.b16 %v6843
  %v6906 = vunpack.c.l.b16 %v6844
  %v6907 = vunpack.c.h.b16 %v6844
  %v6908 = vunpack.c.l.b16 %v6845
  %v6909 = vunpack.c.h.b16 %v6845
  %v6910 = vunpack.c.l.b16 %v6846
  %v6911 = vunpack.c.h.b16 %v6846
  %v6912 = vunpack.c.l.b16 %v6847
  %v6913 = vunpack.c.h.b16 %v6847
  %v6914 = vpack.c.b16 %v6874, %v6870
  %v6915 = vpack.c.b16 %v6875, %v6871
  %v6916 = vpack.c.b16 %v6876, %v6872
  %v6917 = vpack.c.b16 %v6877, %v6873
  %v6918 = vpack.c.b16 %v6882, %v6878
  %v6919 = vpack.c.b16 %v6883, %v6879
  %v6920 = vpack.c.b16 %v6884, %v6880
  %v6921 = vpack.c.b16 %v6885, %v6881
  %v6922 = vpack.c.b16 %v6890, %v6886
  %v6923 = vpack.c.b16 %v6891, %v6887
  %v6924 = vpack.c.b16 %v6892, %v6888
  %v6925 = vpack.c.b16 %v6893, %v6889
  %v6926 = vpack.c.b16 %v6898, %v6894
  %v6927 = vpack.c.b16 %v6899, %v6895
  %v6928 = vpack.c.b16 %v6900, %v6896
  %v6929 = vpack.c.b16 %v6901, %v6897
  %v6930 = vpack.c.b16 %v6906, %v6902
  %v6931 = vpack.c.b16 %v6907, %v6903
  %v6932 = vpack.c.b16 %v6908, %v6904
  %v6933 = vpack.c.b16 %v6909, %v6905
  %v6934 = vpack.c.b16 %v6910, %v6910
  %v6935 = vpack.c.b16 %v6911, %v6911
  %v6936 = vpack.c.b16 %v6912, %v6912
  %v6937 = vpack.c.b16 %v6913, %v6913
  %v6957 = vsel %vm916, %v6917, 0
  %v6960 = vsel %vm916, %v6921, 0
  %v6963 = vsel %vm916, %v6925, 0
  %v6966 = vsel %vm916, %v6929, 0
  %v6969 = vsel %vm916, %v6933, 0
  %v6972 = vsel %vm916, %v6937, 0
  %6974 = vmatprep.subr.bf16.mxu0 0
  %6975 = vmatpush1.bf16.msra.mxu0 %v761
  %6976 = vmatprep.subr.bf16.mxu0 0
  %6977 = vmatpush1.bf16.msra.mxu0 %v762
  %6978 = vmatprep.subr.bf16.mxu0 0
  %6979 = vmatpush1.bf16.msra.mxu0 %v763
  %6980 = vmatprep.subr.bf16.mxu0 0
  %6981 = vmatpush1.bf16.msra.mxu0 %v764
  %6982 = vmatprep.subr.bf16.mxu0 0
  %6983 = vmatpush1.bf16.msra.mxu0 %v765
  %6984 = vmatprep.subr.bf16.mxu0 0
  %6985 = vmatpush1.bf16.msra.mxu0 %v766
  %6986 = vmatprep.subr.bf16.mxu0 0
  %6987 = vmatpush1.bf16.msra.mxu0 %v767
  %6988 = vmatprep.subr.bf16.mxu0 0
  %6989 = vmatpush1.bf16.msra.mxu0 %v768
  %6990 = vmatprep.subr.bf16.mxu0 0
  %6991 = vmatpush1.bf16.msra.mxu0 %v769
  %6992 = vmatprep.subr.bf16.mxu0 0
  %6993 = vmatpush1.bf16.msra.mxu0 %v770
  %6994 = vmatprep.subr.bf16.mxu0 0
  %6995 = vmatpush1.bf16.msra.mxu0 %v771
  %6996 = vmatprep.subr.bf16.mxu0 0
  %6997 = vmatpush1.bf16.msra.mxu0 %v772
  %6998 = vmatprep.subr.bf16.mxu0 0
  %6999 = vmatpush1.bf16.msra.mxu0 %v773
  %7000 = vmatprep.subr.bf16.mxu0 0
  %7001 = vmatpush1.bf16.msra.mxu0 %v774
  %7002 = vmatprep.subr.bf16.mxu0 0
  %7003 = vmatpush1.bf16.msra.mxu0 %v775
  %7004 = vmatprep.subr.bf16.mxu0 0
  %7005 = vmatpush1.bf16.msra.mxu0 %v776
  %7006 = vmatprep.mubr.bf16.mxu0 %v6915
  %7007 = vmatmul.mubr.bf16.gmra.mrb[0].mxu0 %v6914
  %v7008 = vpop.f32.mrb[0].mxu0
  %v7009 = vadd.f32 0.0, %v7008
  %v7010 = vpop.f32.mrb[0].mxu0
  %v7011 = vpop.f32.mrb[0].mxu0
  %v7012 = vadd.f32 0.0, %v7011
  %v7013 = vpop.f32.mrb[0].mxu0
  %7014 = vmatprep.mubr.bf16.mxu0 %v6919
  %7015 = vmatmul.mubr.bf16.gmra.mrb[0].mxu0 %v6918
  %v7016 = vpop.f32.mrb[0].mxu0
  %v7017 = vadd.f32 0.0, %v7016
  %v7018 = vpop.f32.mrb[0].mxu0
  %v7019 = vpop.f32.mrb[0].mxu0
  %v7020 = vadd.f32 0.0, %v7019
  %v7021 = vpop.f32.mrb[0].mxu0
  %7022 = vmatprep.mubr.bf16.mxu0 %v6923
  %7023 = vmatmul.mubr.bf16.gmra.mrb[0].mxu0 %v6922
  %v7024 = vpop.f32.mrb[0].mxu0
  %v7025 = vadd.f32 0.0, %v7024
  %v7026 = vpop.f32.mrb[0].mxu0
  %v7027 = vpop.f32.mrb[0].mxu0
  %v7028 = vadd.f32 0.0, %v7027
  %v7029 = vpop.f32.mrb[0].mxu0
  %7030 = vmatprep.mubr.bf16.mxu0 %v6927
  %7031 = vmatmul.mubr.bf16.gmra.mrb[0].mxu0 %v6926
  %v7032 = vpop.f32.mrb[0].mxu0
  %v7033 = vadd.f32 0.0, %v7032
  %v7034 = vpop.f32.mrb[0].mxu0
  %v7035 = vpop.f32.mrb[0].mxu0
  %v7036 = vadd.f32 0.0, %v7035
  %v7037 = vpop.f32.mrb[0].mxu0
  %7038 = vmatprep.mubr.bf16.mxu0 %v6931
  %7039 = vmatmul.mubr.bf16.gmra.mrb[0].mxu0 %v6930
  %v7040 = vpop.f32.mrb[0].mxu0
  %v7041 = vadd.f32 0.0, %v7040
  %v7042 = vpop.f32.mrb[0].mxu0
  %v7043 = vpop.f32.mrb[0].mxu0
  %v7044 = vadd.f32 0.0, %v7043
  %v7045 = vpop.f32.mrb[0].mxu0
  %7046 = vmatprep.mubr.bf16.mxu0 %v6935
  %7047 = vmatmul.mubr.bf16.gmra.mrb[0].mxu0 %v6934
  %v7048 = vpop.f32.mrb[0].mxu0
  %v7049 = vadd.f32 0.0, %v7048
  %v7050 = vpop.f32.mrb[0].mxu0
  %v7051 = vpop.f32.mrb[0].mxu0
  %v7052 = vpop.f32.mrb[0].mxu0
  %7053 = vdwg.mxu0
  %7054 = vmatprep.subr.bf16.mxu0 0
  %7055 = vmatpush1.bf16.msra.mxu0 %v777
  %7056 = vmatprep.subr.bf16.mxu0 0
  %7057 = vmatpush1.bf16.msra.mxu0 %v778
  %7058 = vmatprep.subr.bf16.mxu0 0
  %7059 = vmatpush1.bf16.msra.mxu0 %v779
  %7060 = vmatprep.subr.bf16.mxu0 0
  %7061 = vmatpush1.bf16.msra.mxu0 %v780
  %7062 = vmatprep.subr.bf16.mxu0 0
  %7063 = vmatpush1.bf16.msra.mxu0 %v781
  %7064 = vmatprep.subr.bf16.mxu0 0
  %7065 = vmatpush1.bf16.msra.mxu0 %v782
  %7066 = vmatprep.subr.bf16.mxu0 0
  %7067 = vmatpush1.bf16.msra.mxu0 %v783
  %7068 = vmatprep.subr.bf16.mxu0 0
  %7069 = vmatpush1.bf16.msra.mxu0 %v784
  %7070 = vmatprep.subr.bf16.mxu0 0
  %7071 = vmatpush1.bf16.msra.mxu0 %v785
  %7072 = vmatprep.subr.bf16.mxu0 0
  %7073 = vmatpush1.bf16.msra.mxu0 0
  %7074 = vmatprep.subr.bf16.mxu0 0
  %7075 = vmatpush1.bf16.msra.mxu0 0
  %7076 = vmatprep.subr.bf16.mxu0 0
  %7077 = vmatpush1.bf16.msra.mxu0 0
  %7078 = vmatprep.subr.bf16.mxu0 0
  %7079 = vmatpush1.bf16.msra.mxu0 0
  %7080 = vmatprep.subr.bf16.mxu0 0
  %7081 = vmatpush1.bf16.msra.mxu0 0
  %7082 = vmatprep.subr.bf16.mxu0 0
  %7083 = vmatpush1.bf16.msra.mxu0 0
  %7084 = vmatprep.subr.bf16.mxu0 0
  %7085 = vmatpush1.bf16.msra.mxu0 0
  %7086 = vmatprep.mubr.bf16.mxu0 %v6957
  %7087 = vmatmul.mubr.bf16.gmra.mrb[0].mxu0 %v6916
  %v7088 = vpop.f32.mrb[0].mxu0
  %v7089 = vadd.f32 %v7009, %v7088
  %v7090 = vpop.f32.mrb[0].mxu0
  %v7091 = vpop.f32.mrb[0].mxu0
  %v7092 = vadd.f32 %v7012, %v7091
  %v7093 = vpop.f32.mrb[0].mxu0
  %7094 = vmatprep.mubr.bf16.mxu0 %v6960
  %7095 = vmatmul.mubr.bf16.gmra.mrb[0].mxu0 %v6920
  %v7096 = vpop.f32.mrb[0].mxu0
  %v7097 = vadd.f32 %v7017, %v7096
  %v7098 = vpop.f32.mrb[0].mxu0
  %v7099 = vpop.f32.mrb[0].mxu0
  %v7100 = vadd.f32 %v7020, %v7099
  %v7101 = vpop.f32.mrb[0].mxu0
  %7102 = vmatprep.mubr.bf16.mxu0 %v6963
  %7103 = vmatmul.mubr.bf16.gmra.mrb[0].mxu0 %v6924
  %v7104 = vpop.f32.mrb[0].mxu0
  %v7105 = vadd.f32 %v7025, %v7104
  %v7106 = vpop.f32.mrb[0].mxu0
  %v7107 = vpop.f32.mrb[0].mxu0
  %v7108 = vadd.f32 %v7028, %v7107
  %v7109 = vpop.f32.mrb[0].mxu0
  %7110 = vmatprep.mubr.bf16.mxu0 %v6966
  %7111 = vmatmul.mubr.bf16.gmra.mrb[0].mxu0 %v6928
  %v7112 = vpop.f32.mrb[0].mxu0
  %v7113 = vadd.f32 %v7033, %v7112
  %v7114 = vpop.f32.mrb[0].mxu0
  %v7115 = vpop.f32.mrb[0].mxu0
  %v7116 = vadd.f32 %v7036, %v7115
  %v7117 = vpop.f32.mrb[0].mxu0
  %7118 = vmatprep.mubr.bf16.mxu0 %v6969
  %7119 = vmatmul.mubr.bf16.gmra.mrb[0].mxu0 %v6932
  %v7120 = vpop.f32.mrb[0].mxu0
  %v7121 = vadd.f32 %v7041, %v7120
  %v7122 = vpop.f32.mrb[0].mxu0
  %v7123 = vpop.f32.mrb[0].mxu0
  %v7124 = vadd.f32 %v7044, %v7123
  %v7125 = vpop.f32.mrb[0].mxu0
  %7126 = vmatprep.mubr.bf16.mxu0 %v6972
  %7127 = vmatmul.mubr.bf16.gmra.mrb[0].mxu0 %v6936
  %v7128 = vpop.f32.mrb[0].mxu0
  %v7129 = vadd.f32 %v7049, %v7128
  %v7130 = vpop.f32.mrb[0].mxu0
  %v7131 = vpop.f32.mrb[0].mxu0
  %v7132 = vpop.f32.mrb[0].mxu0
  %7133 = vdwg.mxu0
  %v7134 = vpack.c.bf16 %v7092, %v7089
  %v7135 = vpack.c.bf16 %v7100, %v7097
  %v7136 = vpack.c.bf16 %v7108, %v7105
  %v7137 = vpack.c.bf16 %v7116, %v7113
  %v7138 = vpack.c.bf16 %v7124, %v7121
  %v7139 = vpack.c.bf16 %v7129, %v7129
  %s7140 = scalar_lea.vmem %s4, 112
  %v7141 = vld [vmem:[%s7140] sm:$0xf]
  %v7142 = vld [vmem:[%s7140 + $0x4] sm:$0xf]
  %v7145 = vunpack.c.l.b16 %v7141
  %v7146 = vunpack.c.l.b16 %v7142
  %v7147 = vpack.c.b16 %v7146, %v7145
  %v7150 = vsel %vm916, %v7134, 0
  %v7153 = vsel %vm916, %v7135, 0
  %v7156 = vsel %vm916, %v7136, 0
  %v7159 = vsel %vm916, %v7137, 0
  %v7162 = vsel %vm916, %v7138, 0
  %v7165 = vsel %vm916, %v7139, 0
  %7167 = vmatprep.subr.bf16.mxu0 0
  %7168 = vmatpush1.bf16.msra.mxu0 %v7147
  %7169 = vmatprep.subr.bf16.mxu0 0
  %7170 = vmatpush1.bf16.msra.mxu0 0
  %7171 = vmatprep.subr.bf16.mxu0 0
  %7172 = vmatpush1.bf16.msra.mxu0 0
  %7173 = vmatprep.subr.bf16.mxu0 0
  %7174 = vmatpush1.bf16.msra.mxu0 0
  %7175 = vmatprep.subr.bf16.mxu0 0
  %7176 = vmatpush1.bf16.msra.mxu0 0
  %7177 = vmatprep.subr.bf16.mxu0 0
  %7178 = vmatpush1.bf16.msra.mxu0 0
  %7179 = vmatprep.subr.bf16.mxu0 0
  %7180 = vmatpush1.bf16.msra.mxu0 0
  %7181 = vmatprep.subr.bf16.mxu0 0
  %7182 = vmatpush1.bf16.msra.mxu0 0
  %7183 = vmatprep.subr.bf16.mxu0 0
  %7184 = vmatpush1.bf16.msra.mxu0 0
  %7185 = vmatprep.subr.bf16.mxu0 0
  %7186 = vmatpush1.bf16.msra.mxu0 0
  %7187 = vmatprep.subr.bf16.mxu0 0
  %7188 = vmatpush1.bf16.msra.mxu0 0
  %7189 = vmatprep.subr.bf16.mxu0 0
  %7190 = vmatpush1.bf16.msra.mxu0 0
  %7191 = vmatprep.subr.bf16.mxu0 0
  %7192 = vmatpush1.bf16.msra.mxu0 0
  %7193 = vmatprep.subr.bf16.mxu0 0
  %7194 = vmatpush1.bf16.msra.mxu0 0
  %7195 = vmatprep.subr.bf16.mxu0 0
  %7196 = vmatpush1.bf16.msra.mxu0 0
  %7197 = vmatprep.subr.bf16.mxu0 0
  %7198 = vmatpush1.bf16.msra.mxu0 0
  %7199 = vmatprep.mubr.bf16.mxu0 0
  %7200 = vmatmul.mubr.bf16.gmra.mrb[0].mxu0 %v7150
  %v7201 = vpop.f32.mrb[0].mxu0
  %v7202 = vadd.f32 0.0, %v7201
  %v7203 = vpop.f32.mrb[0].mxu0
  %v7204 = vpop.f32.mrb[0].mxu0
  %v7205 = vadd.f32 0.0, %v7204
  %v7206 = vpop.f32.mrb[0].mxu0
  %7207 = vmatprep.mubr.bf16.mxu0 0
  %7208 = vmatmul.mubr.bf16.gmra.mrb[0].mxu0 %v7153
  %v7209 = vpop.f32.mrb[0].mxu0
  %v7210 = vadd.f32 0.0, %v7209
  %v7211 = vpop.f32.mrb[0].mxu0
  %v7212 = vpop.f32.mrb[0].mxu0
  %v7213 = vadd.f32 0.0, %v7212
  %v7214 = vpop.f32.mrb[0].mxu0
  %7215 = vmatprep.mubr.bf16.mxu0 0
  %7216 = vmatmul.mubr.bf16.gmra.mrb[0].mxu0 %v7156
  %v7217 = vpop.f32.mrb[0].mxu0
  %v7218 = vadd.f32 0.0, %v7217
  %v7219 = vpop.f32.mrb[0].mxu0
  %v7220 = vpop.f32.mrb[0].mxu0
  %v7221 = vadd.f32 0.0, %v7220
  %v7222 = vpop.f32.mrb[0].mxu0
  %7223 = vmatprep.mubr.bf16.mxu0 0
  %7224 = vmatmul.mubr.bf16.gmra.mrb[0].mxu0 %v7159
  %v7225 = vpop.f32.mrb[0].mxu0
  %v7226 = vadd.f32 0.0, %v7225
  %v7227 = vpop.f32.mrb[0].mxu0
  %v7228 = vpop.f32.mrb[0].mxu0
  %v7229 = vadd.f32 0.0, %v7228
  %v7230 = vpop.f32.mrb[0].mxu0
  %7231 = vmatprep.mubr.bf16.mxu0 0
  %7232 = vmatmul.mubr.bf16.gmra.mrb[0].mxu0 %v7162
  %v7233 = vpop.f32.mrb[0].mxu0
  %v7234 = vadd.f32 0.0, %v7233
  %v7235 = vpop.f32.mrb[0].mxu0
  %v7236 = vpop.f32.mrb[0].mxu0
  %v7237 = vadd.f32 0.0, %v7236
  %v7238 = vpop.f32.mrb[0].mxu0
  %7239 = vmatprep.mubr.bf16.mxu0 0
  %7240 = vmatmul.mubr.bf16.gmra.mrb[0].mxu0 %v7165
  %v7241 = vpop.f32.mrb[0].mxu0
  %v7242 = vadd.f32 0.0, %v7241
  %v7243 = vpop.f32.mrb[0].mxu0
  %v7244 = vpop.f32.mrb[0].mxu0
  %v7245 = vpop.f32.mrb[0].mxu0
  %7246 = vdwg.mxu0
  %v7247 = vadd.f32 %v6814, %v7202
  %v7248 = vadd.f32 %v6815, %v7205
  %v7249 = vadd.f32 %v6816, %v7210
  %v7250 = vadd.f32 %v6817, %v7213
  %v7251 = vadd.f32 %v6818, %v7218
  %v7252 = vadd.f32 %v6819, %v7221
  %v7253 = vadd.f32 %v6820, %v7226
  %v7254 = vadd.f32 %v6821, %v7229
  %v7255 = vadd.f32 %v6822, %v7234
  %v7256 = vadd.f32 %v6823, %v7237
  %v7257 = vadd.f32 %v6824, %v7242
  %s7258 = scalar_lea.vmem %s3, 2640
  %v7259 = vld [vmem:[%s7258] sm:$0xff]
  %v7260 = vld [vmem:[%s7258 + $0x8] sm:$0xff]
  %v7261 = vld [vmem:[%s7258 + $0x10] sm:$0xff]
  %v7262 = vld [vmem:[%s7258 + $0x18] sm:$0xff]
  %v7263 = vld [vmem:[%s7258 + $0x20] sm:$0xff]
  %v7264 = vld [vmem:[%s7258 + $0x28] sm:$0xff]
  %v7265 = vld [vmem:[%s7258 + $0x30] sm:$0xff]
  %v7266 = vld [vmem:[%s7258 + $0x38] sm:$0xff]
  %v7267 = vld [vmem:[%s7258 + $0x40] sm:$0xff]
  %v7268 = vld [vmem:[%s7258 + $0x48] sm:$0xff]
  %v7269 = vld [vmem:[%s7258 + $0x50] sm:$0xff]
  %v7270 = vld [vmem:[%s7258 + $0x58] sm:$0xff]
  %v7271 = vld [vmem:[%s7258 + $0x60] sm:$0xff]
  %v7272 = vld [vmem:[%s7258 + $0x68] sm:$0xff]
  %v7273 = vld [vmem:[%s7258 + $0x70] sm:$0xff]
  %v7274 = vld [vmem:[%s7258 + $0x78] sm:$0xff]
  %v7275 = vld [vmem:[%s7258 + $0x80] sm:$0xff]
  %v7276 = vld [vmem:[%s7258 + $0x88] sm:$0xff]
  %v7277 = vld [vmem:[%s7258 + $0x90] sm:$0xff]
  %v7278 = vld [vmem:[%s7258 + $0x98] sm:$0xff]
  %v7279 = vld [vmem:[%s7258 + $0xa0] sm:$0x11]
  %v7280 = vld [vmem:[%s7258 + $0xa8] sm:$0x11]
  %v7303 = vunpack.c.l.b16 %v7259
  %v7304 = vunpack.c.h.b16 %v7259
  %v7305 = vunpack.c.l.b16 %v7260
  %v7306 = vunpack.c.h.b16 %v7260
  %v7307 = vunpack.c.l.b16 %v7261
  %v7308 = vunpack.c.h.b16 %v7261
  %v7309 = vunpack.c.l.b16 %v7262
  %v7310 = vunpack.c.h.b16 %v7262
  %v7311 = vunpack.c.l.b16 %v7263
  %v7312 = vunpack.c.h.b16 %v7263
  %v7313 = vunpack.c.l.b16 %v7264
  %v7314 = vunpack.c.h.b16 %v7264
  %v7315 = vunpack.c.l.b16 %v7265
  %v7316 = vunpack.c.h.b16 %v7265
  %v7317 = vunpack.c.l.b16 %v7266
  %v7318 = vunpack.c.h.b16 %v7266
  %v7319 = vunpack.c.l.b16 %v7267
  %v7320 = vunpack.c.h.b16 %v7267
  %v7321 = vunpack.c.l.b16 %v7268
  %v7322 = vunpack.c.h.b16 %v7268
  %v7323 = vunpack.c.l.b16 %v7269
  %v7324 = vunpack.c.h.b16 %v7269
  %v7325 = vunpack.c.l.b16 %v7270
  %v7326 = vunpack.c.h.b16 %v7270
  %v7327 = vunpack.c.l.b16 %v7271
  %v7328 = vunpack.c.h.b16 %v7271
  %v7329 = vunpack.c.l.b16 %v7272
  %v7330 = vunpack.c.h.b16 %v7272
  %v7331 = vunpack.c.l.b16 %v7273
  %v7332 = vunpack.c.h.b16 %v7273
  %v7333 = vunpack.c.l.b16 %v7274
  %v7334 = vunpack.c.h.b16 %v7274
  %v7335 = vunpack.c.l.b16 %v7275
  %v7336 = vunpack.c.h.b16 %v7275
  %v7337 = vunpack.c.l.b16 %v7276
  %v7338 = vunpack.c.h.b16 %v7276
  %v7339 = vunpack.c.l.b16 %v7277
  %v7340 = vunpack.c.h.b16 %v7277
  %v7341 = vunpack.c.l.b16 %v7278
  %v7342 = vunpack.c.h.b16 %v7278
  %v7343 = vunpack.c.l.b16 %v7279
  %v7344 = vunpack.c.h.b16 %v7279
  %v7345 = vunpack.c.l.b16 %v7280
  %v7346 = vunpack.c.h.b16 %v7280
  %v7347 = vpack.c.b16 %v7307, %v7303
  %v7348 = vpack.c.b16 %v7308, %v7304
  %v7349 = vpack.c.b16 %v7309, %v7305
  %v7350 = vpack.c.b16 %v7310, %v7306
  %v7351 = vpack.c.b16 %v7315, %v7311
  %v7352 = vpack.c.b16 %v7316, %v7312
  %v7353 = vpack.c.b16 %v7317, %v7313
  %v7354 = vpack.c.b16 %v7318, %v7314
  %v7355 = vpack.c.b16 %v7323, %v7319
  %v7356 = vpack.c.b16 %v7324, %v7320
  %v7357 = vpack.c.b16 %v7325, %v7321
  %v7358 = vpack.c.b16 %v7326, %v7322
  %v7359 = vpack.c.b16 %v7331, %v7327
  %v7360 = vpack.c.b16 %v7332, %v7328
  %v7361 = vpack.c.b16 %v7333, %v7329
  %v7362 = vpack.c.b16 %v7334, %v7330
  %v7363 = vpack.c.b16 %v7339, %v7335
  %v7364 = vpack.c.b16 %v7340, %v7336
  %v7365 = vpack.c.b16 %v7341, %v7337
  %v7366 = vpack.c.b16 %v7342, %v7338
  %v7367 = vpack.c.b16 %v7343, %v7343
  %v7368 = vpack.c.b16 %v7344, %v7344
  %v7369 = vpack.c.b16 %v7345, %v7345
  %v7370 = vpack.c.b16 %v7346, %v7346
  %v7390 = vsel %vm916, %v7350, 0
  %v7393 = vsel %vm916, %v7354, 0
  %v7396 = vsel %vm916, %v7358, 0
  %v7399 = vsel %vm916, %v7362, 0
  %v7402 = vsel %vm916, %v7366, 0
  %v7405 = vsel %vm916, %v7370, 0
  %7407 = vmatprep.subr.bf16.mxu0 0
  %7408 = vmatpush1.bf16.msra.mxu0 %v761
  %7409 = vmatprep.subr.bf16.mxu0 0
  %7410 = vmatpush1.bf16.msra.mxu0 %v762
  %7411 = vmatprep.subr.bf16.mxu0 0
  %7412 = vmatpush1.bf16.msra.mxu0 %v763
  %7413 = vmatprep.subr.bf16.mxu0 0
  %7414 = vmatpush1.bf16.msra.mxu0 %v764
  %7415 = vmatprep.subr.bf16.mxu0 0
  %7416 = vmatpush1.bf16.msra.mxu0 %v765
  %7417 = vmatprep.subr.bf16.mxu0 0
  %7418 = vmatpush1.bf16.msra.mxu0 %v766
  %7419 = vmatprep.subr.bf16.mxu0 0
  %7420 = vmatpush1.bf16.msra.mxu0 %v767
  %7421 = vmatprep.subr.bf16.mxu0 0
  %7422 = vmatpush1.bf16.msra.mxu0 %v768
  %7423 = vmatprep.subr.bf16.mxu0 0
  %7424 = vmatpush1.bf16.msra.mxu0 %v769
  %7425 = vmatprep.subr.bf16.mxu0 0
  %7426 = vmatpush1.bf16.msra.mxu0 %v770
  %7427 = vmatprep.subr.bf16.mxu0 0
  %7428 = vmatpush1.bf16.msra.mxu0 %v771
  %7429 = vmatprep.subr.bf16.mxu0 0
  %7430 = vmatpush1.bf16.msra.mxu0 %v772
  %7431 = vmatprep.subr.bf16.mxu0 0
  %7432 = vmatpush1.bf16.msra.mxu0 %v773
  %7433 = vmatprep.subr.bf16.mxu0 0
  %7434 = vmatpush1.bf16.msra.mxu0 %v774
  %7435 = vmatprep.subr.bf16.mxu0 0
  %7436 = vmatpush1.bf16.msra.mxu0 %v775
  %7437 = vmatprep.subr.bf16.mxu0 0
  %7438 = vmatpush1.bf16.msra.mxu0 %v776
  %7439 = vmatprep.mubr.bf16.mxu0 %v7348
  %7440 = vmatmul.mubr.bf16.gmra.mrb[0].mxu0 %v7347
  %v7441 = vpop.f32.mrb[0].mxu0
  %v7442 = vadd.f32 0.0, %v7441
  %v7443 = vpop.f32.mrb[0].mxu0
  %v7444 = vpop.f32.mrb[0].mxu0
  %v7445 = vadd.f32 0.0, %v7444
  %v7446 = vpop.f32.mrb[0].mxu0
  %7447 = vmatprep.mubr.bf16.mxu0 %v7352
  %7448 = vmatmul.mubr.bf16.gmra.mrb[0].mxu0 %v7351
  %v7449 = vpop.f32.mrb[0].mxu0
  %v7450 = vadd.f32 0.0, %v7449
  %v7451 = vpop.f32.mrb[0].mxu0
  %v7452 = vpop.f32.mrb[0].mxu0
  %v7453 = vadd.f32 0.0, %v7452
  %v7454 = vpop.f32.mrb[0].mxu0
  %7455 = vmatprep.mubr.bf16.mxu0 %v7356
  %7456 = vmatmul.mubr.bf16.gmra.mrb[0].mxu0 %v7355
  %v7457 = vpop.f32.mrb[0].mxu0
  %v7458 = vadd.f32 0.0, %v7457
  %v7459 = vpop.f32.mrb[0].mxu0
  %v7460 = vpop.f32.mrb[0].mxu0
  %v7461 = vadd.f32 0.0, %v7460
  %v7462 = vpop.f32.mrb[0].mxu0
  %7463 = vmatprep.mubr.bf16.mxu0 %v7360
  %7464 = vmatmul.mubr.bf16.gmra.mrb[0].mxu0 %v7359
  %v7465 = vpop.f32.mrb[0].mxu0
  %v7466 = vadd.f32 0.0, %v7465
  %v7467 = vpop.f32.mrb[0].mxu0
  %v7468 = vpop.f32.mrb[0].mxu0
  %v7469 = vadd.f32 0.0, %v7468
  %v7470 = vpop.f32.mrb[0].mxu0
  %7471 = vmatprep.mubr.bf16.mxu0 %v7364
  %7472 = vmatmul.mubr.bf16.gmra.mrb[0].mxu0 %v7363
  %v7473 = vpop.f32.mrb[0].mxu0
  %v7474 = vadd.f32 0.0, %v7473
  %v7475 = vpop.f32.mrb[0].mxu0
  %v7476 = vpop.f32.mrb[0].mxu0
  %v7477 = vadd.f32 0.0, %v7476
  %v7478 = vpop.f32.mrb[0].mxu0
  %7479 = vmatprep.mubr.bf16.mxu0 %v7368
  %7480 = vmatmul.mubr.bf16.gmra.mrb[0].mxu0 %v7367
  %v7481 = vpop.f32.mrb[0].mxu0
  %v7482 = vadd.f32 0.0, %v7481
  %v7483 = vpop.f32.mrb[0].mxu0
  %v7484 = vpop.f32.mrb[0].mxu0
  %v7485 = vpop.f32.mrb[0].mxu0
  %7486 = vdwg.mxu0
  %7487 = vmatprep.subr.bf16.mxu0 0
  %7488 = vmatpush1.bf16.msra.mxu0 %v777
  %7489 = vmatprep.subr.bf16.mxu0 0
  %7490 = vmatpush1.bf16.msra.mxu0 %v778
  %7491 = vmatprep.subr.bf16.mxu0 0
  %7492 = vmatpush1.bf16.msra.mxu0 %v779
  %7493 = vmatprep.subr.bf16.mxu0 0
  %7494 = vmatpush1.bf16.msra.mxu0 %v780
  %7495 = vmatprep.subr.bf16.mxu0 0
  %7496 = vmatpush1.bf16.msra.mxu0 %v781
  %7497 = vmatprep.subr.bf16.mxu0 0
  %7498 = vmatpush1.bf16.msra.mxu0 %v782
  %7499 = vmatprep.subr.bf16.mxu0 0
  %7500 = vmatpush1.bf16.msra.mxu0 %v783
  %7501 = vmatprep.subr.bf16.mxu0 0
  %7502 = vmatpush1.bf16.msra.mxu0 %v784
  %7503 = vmatprep.subr.bf16.mxu0 0
  %7504 = vmatpush1.bf16.msra.mxu0 %v785
  %7505 = vmatprep.subr.bf16.mxu0 0
  %7506 = vmatpush1.bf16.msra.mxu0 0
  %7507 = vmatprep.subr.bf16.mxu0 0
  %7508 = vmatpush1.bf16.msra.mxu0 0
  %7509 = vmatprep.subr.bf16.mxu0 0
  %7510 = vmatpush1.bf16.msra.mxu0 0
  %7511 = vmatprep.subr.bf16.mxu0 0
  %7512 = vmatpush1.bf16.msra.mxu0 0
  %7513 = vmatprep.subr.bf16.mxu0 0
  %7514 = vmatpush1.bf16.msra.mxu0 0
  %7515 = vmatprep.subr.bf16.mxu0 0
  %7516 = vmatpush1.bf16.msra.mxu0 0
  %7517 = vmatprep.subr.bf16.mxu0 0
  %7518 = vmatpush1.bf16.msra.mxu0 0
  %7519 = vmatprep.mubr.bf16.mxu0 %v7390
  %7520 = vmatmul.mubr.bf16.gmra.mrb[0].mxu0 %v7349
  %v7521 = vpop.f32.mrb[0].mxu0
  %v7522 = vadd.f32 %v7442, %v7521
  %v7523 = vpop.f32.mrb[0].mxu0
  %v7524 = vpop.f32.mrb[0].mxu0
  %v7525 = vadd.f32 %v7445, %v7524
  %v7526 = vpop.f32.mrb[0].mxu0
  %7527 = vmatprep.mubr.bf16.mxu0 %v7393
  %7528 = vmatmul.mubr.bf16.gmra.mrb[0].mxu0 %v7353
  %v7529 = vpop.f32.mrb[0].mxu0
  %v7530 = vadd.f32 %v7450, %v7529
  %v7531 = vpop.f32.mrb[0].mxu0
  %v7532 = vpop.f32.mrb[0].mxu0
  %v7533 = vadd.f32 %v7453, %v7532
  %v7534 = vpop.f32.mrb[0].mxu0
  %7535 = vmatprep.mubr.bf16.mxu0 %v7396
  %7536 = vmatmul.mubr.bf16.gmra.mrb[0].mxu0 %v7357
  %v7537 = vpop.f32.mrb[0].mxu0
  %v7538 = vadd.f32 %v7458, %v7537
  %v7539 = vpop.f32.mrb[0].mxu0
  %v7540 = vpop.f32.mrb[0].mxu0
  %v7541 = vadd.f32 %v7461, %v7540
  %v7542 = vpop.f32.mrb[0].mxu0
  %7543 = vmatprep.mubr.bf16.mxu0 %v7399
  %7544 = vmatmul.mubr.bf16.gmra.mrb[0].mxu0 %v7361
  %v7545 = vpop.f32.mrb[0].mxu0
  %v7546 = vadd.f32 %v7466, %v7545
  %v7547 = vpop.f32.mrb[0].mxu0
  %v7548 = vpop.f32.mrb[0].mxu0
  %v7549 = vadd.f32 %v7469, %v7548
  %v7550 = vpop.f32.mrb[0].mxu0
  %7551 = vmatprep.mubr.bf16.mxu0 %v7402
  %7552 = vmatmul.mubr.bf16.gmra.mrb[0].mxu0 %v7365
  %v7553 = vpop.f32.mrb[0].mxu0
  %v7554 = vadd.f32 %v7474, %v7553
  %v7555 = vpop.f32.mrb[0].mxu0
  %v7556 = vpop.f32.mrb[0].mxu0
  %v7557 = vadd.f32 %v7477, %v7556
  %v7558 = vpop.f32.mrb[0].mxu0
  %7559 = vmatprep.mubr.bf16.mxu0 %v7405
  %7560 = vmatmul.mubr.bf16.gmra.mrb[0].mxu0 %v7369
  %v7561 = vpop.f32.mrb[0].mxu0
  %v7562 = vadd.f32 %v7482, %v7561
  %v7563 = vpop.f32.mrb[0].mxu0
  %v7564 = vpop.f32.mrb[0].mxu0
  %v7565 = vpop.f32.mrb[0].mxu0
  %7566 = vdwg.mxu0
  %v7567 = vpack.c.bf16 %v7525, %v7522
  %v7568 = vpack.c.bf16 %v7533, %v7530
  %v7569 = vpack.c.bf16 %v7541, %v7538
  %v7570 = vpack.c.bf16 %v7549, %v7546
  %v7571 = vpack.c.bf16 %v7557, %v7554
  %v7572 = vpack.c.bf16 %v7562, %v7562
  %s7573 = scalar_lea.vmem %s4, 120
  %v7574 = vld [vmem:[%s7573] sm:$0xf]
  %v7575 = vld [vmem:[%s7573 + $0x4] sm:$0xf]
  %v7578 = vunpack.c.l.b16 %v7574
  %v7579 = vunpack.c.l.b16 %v7575
  %v7580 = vpack.c.b16 %v7579, %v7578
  %v7583 = vsel %vm916, %v7567, 0
  %v7586 = vsel %vm916, %v7568, 0
  %v7589 = vsel %vm916, %v7569, 0
  %v7592 = vsel %vm916, %v7570, 0
  %v7595 = vsel %vm916, %v7571, 0
  %v7598 = vsel %vm916, %v7572, 0
  %7600 = vmatprep.subr.bf16.mxu0 0
  %7601 = vmatpush1.bf16.msra.mxu0 %v7580
  %7602 = vmatprep.subr.bf16.mxu0 0
  %7603 = vmatpush1.bf16.msra.mxu0 0
  %7604 = vmatprep.subr.bf16.mxu0 0
  %7605 = vmatpush1.bf16.msra.mxu0 0
  %7606 = vmatprep.subr.bf16.mxu0 0
  %7607 = vmatpush1.bf16.msra.mxu0 0
  %7608 = vmatprep.subr.bf16.mxu0 0
  %7609 = vmatpush1.bf16.msra.mxu0 0
  %7610 = vmatprep.subr.bf16.mxu0 0
  %7611 = vmatpush1.bf16.msra.mxu0 0
  %7612 = vmatprep.subr.bf16.mxu0 0
  %7613 = vmatpush1.bf16.msra.mxu0 0
  %7614 = vmatprep.subr.bf16.mxu0 0
  %7615 = vmatpush1.bf16.msra.mxu0 0
  %7616 = vmatprep.subr.bf16.mxu0 0
  %7617 = vmatpush1.bf16.msra.mxu0 0
  %7618 = vmatprep.subr.bf16.mxu0 0
  %7619 = vmatpush1.bf16.msra.mxu0 0
  %7620 = vmatprep.subr.bf16.mxu0 0
  %7621 = vmatpush1.bf16.msra.mxu0 0
  %7622 = vmatprep.subr.bf16.mxu0 0
  %7623 = vmatpush1.bf16.msra.mxu0 0
  %7624 = vmatprep.subr.bf16.mxu0 0
  %7625 = vmatpush1.bf16.msra.mxu0 0
  %7626 = vmatprep.subr.bf16.mxu0 0
  %7627 = vmatpush1.bf16.msra.mxu0 0
  %7628 = vmatprep.subr.bf16.mxu0 0
  %7629 = vmatpush1.bf16.msra.mxu0 0
  %7630 = vmatprep.subr.bf16.mxu0 0
  %7631 = vmatpush1.bf16.msra.mxu0 0
  %7632 = vmatprep.mubr.bf16.mxu0 0
  %7633 = vmatmul.mubr.bf16.gmra.mrb[0].mxu0 %v7583
  %v7634 = vpop.f32.mrb[0].mxu0
  %v7635 = vadd.f32 0.0, %v7634
  %v7636 = vpop.f32.mrb[0].mxu0
  %v7637 = vpop.f32.mrb[0].mxu0
  %v7638 = vadd.f32 0.0, %v7637
  %v7639 = vpop.f32.mrb[0].mxu0
  %7640 = vmatprep.mubr.bf16.mxu0 0
  %7641 = vmatmul.mubr.bf16.gmra.mrb[0].mxu0 %v7586
  %v7642 = vpop.f32.mrb[0].mxu0
  %v7643 = vadd.f32 0.0, %v7642
  %v7644 = vpop.f32.mrb[0].mxu0
  %v7645 = vpop.f32.mrb[0].mxu0
  %v7646 = vadd.f32 0.0, %v7645
  %v7647 = vpop.f32.mrb[0].mxu0
  %7648 = vmatprep.mubr.bf16.mxu0 0
  %7649 = vmatmul.mubr.bf16.gmra.mrb[0].mxu0 %v7589
  %v7650 = vpop.f32.mrb[0].mxu0
  %v7651 = vadd.f32 0.0, %v7650
  %v7652 = vpop.f32.mrb[0].mxu0
  %v7653 = vpop.f32.mrb[0].mxu0
  %v7654 = vadd.f32 0.0, %v7653
  %v7655 = vpop.f32.mrb[0].mxu0
  %7656 = vmatprep.mubr.bf16.mxu0 0
  %7657 = vmatmul.mubr.bf16.gmra.mrb[0].mxu0 %v7592
  %v7658 = vpop.f32.mrb[0].mxu0
  %v7659 = vadd.f32 0.0, %v7658
  %v7660 = vpop.f32.mrb[0].mxu0
  %v7661 = vpop.f32.mrb[0].mxu0
  %v7662 = vadd.f32 0.0, %v7661
  %v7663 = vpop.f32.mrb[0].mxu0
  %7664 = vmatprep.mubr.bf16.mxu0 0
  %7665 = vmatmul.mubr.bf16.gmra.mrb[0].mxu0 %v7595
  %v7666 = vpop.f32.mrb[0].mxu0
  %v7667 = vadd.f32 0.0, %v7666
  %v7668 = vpop.f32.mrb[0].mxu0
  %v7669 = vpop.f32.mrb[0].mxu0
  %v7670 = vadd.f32 0.0, %v7669
  %v7671 = vpop.f32.mrb[0].mxu0
  %7672 = vmatprep.mubr.bf16.mxu0 0
  %7673 = vmatmul.mubr.bf16.gmra.mrb[0].mxu0 %v7598
  %v7674 = vpop.f32.mrb[0].mxu0
  %v7675 = vadd.f32 0.0, %v7674
  %v7676 = vpop.f32.mrb[0].mxu0
  %v7677 = vpop.f32.mrb[0].mxu0
  %v7678 = vpop.f32.mrb[0].mxu0
  %7679 = vdwg.mxu0
  %v7680 = vadd.f32 %v7247, %v7635
  %v7681 = vadd.f32 %v7248, %v7638
  %v7682 = vadd.f32 %v7249, %v7643
  %v7683 = vadd.f32 %v7250, %v7646
  %v7684 = vadd.f32 %v7251, %v7651
  %v7685 = vadd.f32 %v7252, %v7654
  %v7686 = vadd.f32 %v7253, %v7659
  %v7687 = vadd.f32 %v7254, %v7662
  %v7688 = vadd.f32 %v7255, %v7667
  %v7689 = vadd.f32 %v7256, %v7670
  %v7690 = vadd.f32 %v7257, %v7675
  %v7691 = vld [vmem:[%s5] sm:$0x1]
  %v7693 = vlaneseq
  %v7694 = vshrl.u32 %v7693, 7
  %v7695 = vsub.s32 0, %v7694
  %v7696 = vrot.slane %v7691, %v7695
  %v7698 = vadd.f32 %v7680, %v7696
  %v7699 = vadd.f32 %v7681, %v7696
  %v7700 = vadd.f32 %v7682, %v7696
  %v7701 = vadd.f32 %v7683, %v7696
  %v7702 = vadd.f32 %v7684, %v7696
  %v7703 = vadd.f32 %v7685, %v7696
  %v7704 = vadd.f32 %v7686, %v7696
  %v7705 = vadd.f32 %v7687, %v7696
  %v7706 = vadd.f32 %v7688, %v7696
  %v7707 = vadd.f32 %v7689, %v7696
  %v7708 = vadd.f32 %v7690, %v7696
  %v7709 = vmax.f32 %v7698, 0.0
  %v7710 = vmax.f32 %v7699, 0.0
  %v7711 = vmax.f32 %v7700, 0.0
  %v7712 = vmax.f32 %v7701, 0.0
  %v7713 = vmax.f32 %v7702, 0.0
  %v7714 = vmax.f32 %v7703, 0.0
  %v7715 = vmax.f32 %v7704, 0.0
  %v7716 = vmax.f32 %v7705, 0.0
  %v7717 = vmax.f32 %v7706, 0.0
  %v7718 = vmax.f32 %v7707, 0.0
  %v7719 = vmax.f32 %v7708, 0.0
  %vm7720 = vcmask 261120
  %7721 = vst.msk [vmem:[%s6] sm:$0xff] %vm7720, %v7709
  %7722 = vst.msk [vmem:[%s6 + $0x8] sm:$0xff] %vm7720, %v7710
  %7723 = vst.msk [vmem:[%s6 + $0x10] sm:$0xff] %vm7720, %v7711
  %7724 = vst.msk [vmem:[%s6 + $0x18] sm:$0xff] %vm7720, %v7712
  %7725 = vst.msk [vmem:[%s6 + $0x20] sm:$0xff] %vm7720, %v7713
  %7726 = vst.msk [vmem:[%s6 + $0x28] sm:$0xff] %vm7720, %v7714
  %7727 = vst.msk [vmem:[%s6 + $0x30] sm:$0xff] %vm7720, %v7715
  %7728 = vst.msk [vmem:[%s6 + $0x38] sm:$0xff] %vm7720, %v7716
  %7729 = vst.msk [vmem:[%s6 + $0x40] sm:$0xff] %vm7720, %v7717
  %7730 = vst.msk [vmem:[%s6 + $0x48] sm:$0xff] %vm7720, %v7718
  %vm7731 = vcmask 253952
  %7732 = vst.msk [vmem:[%s6 + $0x50] sm:$0x1] %vm7731, %v7719
  // Predicated region
  $region26: #{fun_forward.3} parent=0 // pred_check
    _
  $region27: #{fun_forward.3} parent=0 // pred_check_branch
    %7734 = sbr.rel (0) target = $region29
  $region28: #{fun_forward.3} parent=0 // pred_region
    _
  $region29: #{fun_forward.3} parent=0 // pred_fallthru
    _
  // Predicated region
  $region30: #{fun_forward.3} parent=0 // pred_check
    _
  $region31: #{fun_forward.3} parent=0 // pred_check_branch
    %7736 = sbr.rel (0) target = $region33
  $region32: #{fun_forward.3} parent=0 // pred_region
    _
  $region33: #{fun_forward.3} parent=0 // pred_fallthru
    _

// kernel: fun_forward.4
$region0: #{fun_forward.4}
  #allocation0 [shape = 'u32[]', space=smem, size = 0x4, offset = 0x4, fixed_abs, tag = 'smem constant byte address 0x4 - core index']
  #allocation1 [shape = 'u32[144,128]{1,0:T(1,128)}', space=vmem, size = 0x12000, scoped, tag = 'internal scratch']
  #allocation2 [shape = 'f32[1,1]{1,0:T(1,128)S(1)}', space=vmem, size = 0x200, scoped, tag = 'scoped memory for fun_forward.4']
  %s0 = inlined_call_operand.vmem [shape: bf16[1,2592], index: 0, kind: input, shape index: {}]
  %s1 = inlined_call_operand.vmem [shape: bf16[2592,64], index: 1, kind: input, shape index: {}]
  %s2 = inlined_call_operand.vmem [shape: f32[1,64], index: 2, kind: input, shape index: {}]
  %s3 = inlined_call_operand.vmem [shape: bf16[64,64], index: 3, kind: input, shape index: {}]
  %s4 = inlined_call_operand.vmem [shape: f32[1,64], index: 4, kind: input, shape index: {}]
  %s5 = inlined_call_operand.vmem [shape: f32[1,64], index: 5, kind: input, shape index: {}]
  %s6 = inlined_call_operand.vmem [shape: f32[1,64], index: 6, kind: input, shape index: {}]
  %s7 = inlined_call_operand.vmem [shape: bf16[4,64,64], index: 7, kind: input, shape index: {}]
  %s8 = inlined_call_operand.vmem [shape: bf16[4,64,64], index: 8, kind: input, shape index: {}]
  %s9 = inlined_call_operand.vmem [shape: f32[4,1,64], index: 9, kind: input, shape index: {}]
  %s10 = inlined_call_operand.vmem [shape: bf16[64,50], index: 10, kind: input, shape index: {}]
  %s11 = inlined_call_operand.vmem [shape: f32[1,50], index: 11, kind: input, shape index: {}]
  %s12 = inlined_call_operand.vmem [shape: f32[1,50], index: 12, kind: input, shape index: {}]
  %s13 = inlined_call_operand.<no memory space> [shape: f32[1,1], index: 13, kind: input, shape index: {}]
  %s14 = inlined_call_operand.vmem [shape: f32[1,64], index: 14, kind: output, shape index: {0}]
  %s15 = inlined_call_operand.hbm [shape: f32[1,64], index: 15, kind: output, shape index: {1}]
  %s16 = inlined_call_operand.vmem [shape: f32[1,64], index: 16, kind: output, shape index: {2}]
  %s17 = inlined_call_operand.hbm [shape: f32[1,64], index: 17, kind: output, shape index: {3}]
  %s18 = inlined_call_operand.hbm [shape: f32[1,64], index: 18, kind: output, shape index: {4}]
  %s19 = inlined_call_operand.hbm [shape: f32[1,1], index: 19, kind: output, shape index: {5}]
  %20 = xla_tuple %s14, %s15, %s16, %s17, %s18, %s19
  %s21 = sld [smem:[#allocation0]]
  $region106: #{fun_forward.4} parent=0
    _
  %s23 = ssub.s32 1, %s21
  %s24 = scalar_select 0, %s23, %s21
  %v25 = vstv %s13
  %26 = vst [vmem:[#allocation2] sm:$0x1] %v25
  $region1: #{fun_forward.4} parent=0
    #allocation3 [shape = 'u8[512]{0}', space=vmem, size = 0x400, scoped, tag = 'output window, operand 1, single buffered']
    #allocation4 [shape = 's32[1]{0}', space=sflag, size = 0x4, scoped, tag = 'scoped memory for fun_forward.4']
    #allocation5 [shape = 'u8[512]{0}', space=vmem, size = 0x400, scoped, tag = 'output window, operand 3, single buffered']
    #allocation6 [shape = 's32[1]{0}', space=sflag, size = 0x4, scoped, tag = 'scoped memory for fun_forward.4']
    #allocation7 [shape = 'u8[512]{0}', space=vmem, size = 0x400, scoped, tag = 'output window, operand 4, single buffered']
    #allocation8 [shape = 'u8[512]{0}', space=vmem, size = 0x400, scoped, tag = 'output window, operand 5, single buffered']
    #allocation9 [shape = 's32[1]{0}', space=sflag, size = 0x4, scoped, tag = 'scoped memory for fun_forward.4']
    %27 = vsyncpa [#allocation4], 0
    %28 = vsyncpa [#allocation6], 0
    %29 = vsyncpa [#allocation9], 0
    // Predicated region
    $region2: #{fun_forward.4} parent=1 // pred_check
      _
    $region3: #{fun_forward.4} parent=1 // pred_check_branch
      %31 = sbr.rel (0) target = $region5
    $region4: #{fun_forward.4} parent=1 // pred_region
      _
    $region5: #{fun_forward.4} parent=1 // pred_fallthru
      _
    // Predicated region
    $region6: #{fun_forward.4} parent=1 // pred_check
      _
    $region7: #{fun_forward.4} parent=1 // pred_check_branch
      %33 = sbr.rel (0) target = $region9
    $region8: #{fun_forward.4} parent=1 // pred_region
      _
    $region9: #{fun_forward.4} parent=1 // pred_fallthru
      _
    // Predicated region
    $region10: #{fun_forward.4} parent=1 // pred_check
      _
    $region11: #{fun_forward.4} parent=1 // pred_check_branch
      %35 = sbr.rel (0) target = $region13
    $region12: #{fun_forward.4} parent=1 // pred_region
      _
    $region13: #{fun_forward.4} parent=1 // pred_fallthru
      _
    // Predicated region
    $region14: #{fun_forward.4} parent=1 // pred_check
      _
    $region15: #{fun_forward.4} parent=1 // pred_check_branch
      %37 = sbr.rel (0) target = $region17
    $region16: #{fun_forward.4} parent=1 // pred_region
      _
    $region17: #{fun_forward.4} parent=1 // pred_fallthru
      _
    // Predicated region
    $region18: #{fun_forward.4} parent=1 // pred_check
      _
    $region19: #{fun_forward.4} parent=1 // pred_check_branch
      %39 = sbr.rel (0) target = $region21
    $region20: #{fun_forward.4} parent=1 // pred_region
      _
    $region21: #{fun_forward.4} parent=1 // pred_fallthru
      _
    // Predicated region
    $region22: #{fun_forward.4} parent=1 // pred_check
      _
    $region23: #{fun_forward.4} parent=1 // pred_check_branch
      %41 = sbr.rel (0) target = $region25
    $region24: #{fun_forward.4} parent=1 // pred_region
      _
    $region25: #{fun_forward.4} parent=1 // pred_fallthru
      _
    // Predicated region
    $region26: #{fun_forward.4} parent=1 // pred_check
      _
    $region27: #{fun_forward.4} parent=1 // pred_check_branch
      %43 = sbr.rel (0) target = $region29
    $region28: #{fun_forward.4} parent=1 // pred_region
      _
    $region29: #{fun_forward.4} parent=1 // pred_fallthru
      _
    // Predicated region
    $region30: #{fun_forward.4} parent=1 // pred_check
      _
    $region31: #{fun_forward.4} parent=1 // pred_check_branch
      %45 = sbr.rel (0) target = $region33
    $region32: #{fun_forward.4} parent=1 // pred_region
      _
    $region33: #{fun_forward.4} parent=1 // pred_fallthru
      _
    // Predicated region
    $region34: #{fun_forward.4} parent=1 // pred_check
      _
    $region35: #{fun_forward.4} parent=1 // pred_check_branch
      %47 = sbr.rel (0) target = $region37
    $region36: #{fun_forward.4} parent=1 // pred_region
      _
    $region37: #{fun_forward.4} parent=1 // pred_fallthru
      _
    // Predicated region
    $region38: #{fun_forward.4} parent=1 // pred_check
      _
    $region39: #{fun_forward.4} parent=1 // pred_check_branch
      %49 = sbr.rel (0) target = $region41
    $region40: #{fun_forward.4} parent=1 // pred_region
      _
    $region41: #{fun_forward.4} parent=1 // pred_fallthru
      _
    // Predicated region
    $region42: #{fun_forward.4} parent=1 // pred_check
      _
    $region43: #{fun_forward.4} parent=1 // pred_check_branch
      %51 = sbr.rel (0) target = $region45
    $region44: #{fun_forward.4} parent=1 // pred_region
      _
    $region45: #{fun_forward.4} parent=1 // pred_fallthru
      _
    // Predicated region
    $region46: #{fun_forward.4} parent=1 // pred_check
      _
    $region47: #{fun_forward.4} parent=1 // pred_check_branch
      %53 = sbr.rel (0) target = $region49
    $region48: #{fun_forward.4} parent=1 // pred_region
      _
    $region49: #{fun_forward.4} parent=1 // pred_fallthru
      _
    // Predicated region
    $region50: #{fun_forward.4} parent=1 // pred_check
      _
    $region51: #{fun_forward.4} parent=1 // pred_check_branch
      %55 = sbr.rel (0) target = $region53
    $region52: #{fun_forward.4} parent=1 // pred_region
      _
    $region53: #{fun_forward.4} parent=1 // pred_fallthru
      _
    // Predicated region
    $region54: #{fun_forward.4} parent=1 // pred_check
      _
    $region55: #{fun_forward.4} parent=1 // pred_check_branch
      %57 = sbr.rel (0) target = $region57
    $region56: #{fun_forward.4} parent=1 // pred_region
      _
    $region57: #{fun_forward.4} parent=1 // pred_fallthru
      _
    %v59 = vld [vmem:[%s0] sm:$0xff]
    %v60 = vld [vmem:[%s0 + $0x8] sm:$0xff]
    %v61 = vld [vmem:[%s0 + $0x10] sm:$0x1f]
    %v62 = vld [vmem:[%s1] sm:$0xf]
    %v63 = vld [vmem:[%s1 + $0x4] sm:$0xf]
    %v64 = vld [vmem:[%s1 + $0x8] sm:$0xf]
    %v65 = vld [vmem:[%s1 + $0xc] sm:$0xf]
    %v66 = vld [vmem:[%s1 + $0x10] sm:$0xf]
    %v67 = vld [vmem:[%s1 + $0x14] sm:$0xf]
    %v68 = vld [vmem:[%s1 + $0x18] sm:$0xf]
    %v69 = vld [vmem:[%s1 + $0x1c] sm:$0xf]
    %v70 = vld [vmem:[%s1 + $0x20] sm:$0xf]
    %v71 = vld [vmem:[%s1 + $0x24] sm:$0xf]
    %v72 = vld [vmem:[%s1 + $0x28] sm:$0xf]
    %v73 = vld [vmem:[%s1 + $0x2c] sm:$0xf]
    %v74 = vld [vmem:[%s1 + $0x30] sm:$0xf]
    %v75 = vld [vmem:[%s1 + $0x34] sm:$0xf]
    %v76 = vld [vmem:[%s1 + $0x38] sm:$0xf]
    %v77 = vld [vmem:[%s1 + $0x3c] sm:$0xf]
    %v78 = vld [vmem:[%s1 + $0x40] sm:$0xf]
    %v79 = vld [vmem:[%s1 + $0x44] sm:$0xf]
    %v80 = vld [vmem:[%s1 + $0x48] sm:$0xf]
    %v81 = vld [vmem:[%s1 + $0x4c] sm:$0xf]
    %v82 = vld [vmem:[%s1 + $0x50] sm:$0xf]
    %v83 = vld [vmem:[%s1 + $0x54] sm:$0xf]
    %v84 = vld [vmem:[%s1 + $0x58] sm:$0xf]
    %v85 = vld [vmem:[%s1 + $0x5c] sm:$0xf]
    %v86 = vld [vmem:[%s1 + $0x60] sm:$0xf]
    %v87 = vld [vmem:[%s1 + $0x64] sm:$0xf]
    %v88 = vld [vmem:[%s1 + $0x68] sm:$0xf]
    %v89 = vld [vmem:[%s1 + $0x6c] sm:$0xf]
    %v90 = vld [vmem:[%s1 + $0x70] sm:$0xf]
    %v91 = vld [vmem:[%s1 + $0x74] sm:$0xf]
    %v92 = vld [vmem:[%s1 + $0x78] sm:$0xf]
    %v93 = vld [vmem:[%s1 + $0x7c] sm:$0xf]
    %v94 = vld [vmem:[%s1 + $0x80] sm:$0xf]
    %v95 = vld [vmem:[%s1 + $0x84] sm:$0xf]
    %v96 = vld [vmem:[%s1 + $0x88] sm:$0xf]
    %v97 = vld [vmem:[%s1 + $0x8c] sm:$0xf]
    %v98 = vld [vmem:[%s1 + $0x90] sm:$0xf]
    %v99 = vld [vmem:[%s1 + $0x94] sm:$0xf]
    %v100 = vld [vmem:[%s1 + $0x98] sm:$0xf]
    %v101 = vld [vmem:[%s1 + $0x9c] sm:$0xf]
    %v102 = vld [vmem:[%s1 + $0xa0] sm:$0xf]
    %v103 = vld [vmem:[%s1 + $0xa4] sm:$0xf]
    %v104 = vld [vmem:[%s1 + $0xa8] sm:$0xf]
    %v105 = vld [vmem:[%s1 + $0xac] sm:$0xf]
    %v106 = vld [vmem:[%s1 + $0xb0] sm:$0xf]
    %v107 = vld [vmem:[%s1 + $0xb4] sm:$0xf]
    %v108 = vld [vmem:[%s1 + $0xb8] sm:$0xf]
    %v109 = vld [vmem:[%s1 + $0xbc] sm:$0xf]
    %v110 = vld [vmem:[%s1 + $0xc0] sm:$0xf]
    %v111 = vld [vmem:[%s1 + $0xc4] sm:$0xf]
    %v112 = vld [vmem:[%s1 + $0xc8] sm:$0xf]
    %v113 = vld [vmem:[%s1 + $0xcc] sm:$0xf]
    %v114 = vld [vmem:[%s1 + $0xd0] sm:$0xf]
    %v115 = vld [vmem:[%s1 + $0xd4] sm:$0xf]
    %v116 = vld [vmem:[%s1 + $0xd8] sm:$0xf]
    %v117 = vld [vmem:[%s1 + $0xdc] sm:$0xf]
    %v118 = vld [vmem:[%s1 + $0xe0] sm:$0xf]
    %v119 = vld [vmem:[%s1 + $0xe4] sm:$0xf]
    %v120 = vld [vmem:[%s1 + $0xe8] sm:$0xf]
    %v121 = vld [vmem:[%s1 + $0xec] sm:$0xf]
    %v122 = vld [vmem:[%s1 + $0xf0] sm:$0xf]
    %v123 = vld [vmem:[%s1 + $0xf4] sm:$0xf]
    %v124 = vld [vmem:[%s1 + $0xf8] sm:$0xf]
    %v125 = vld [vmem:[%s1 + $0xfc] sm:$0xf]
    %v126 = vld [vmem:[%s1 + $0x100] sm:$0xf]
    %v127 = vld [vmem:[%s1 + $0x104] sm:$0xf]
    %v128 = vld [vmem:[%s1 + $0x108] sm:$0xf]
    %v129 = vld [vmem:[%s1 + $0x10c] sm:$0xf]
    %v130 = vld [vmem:[%s1 + $0x110] sm:$0xf]
    %v131 = vld [vmem:[%s1 + $0x114] sm:$0xf]
    %v132 = vld [vmem:[%s1 + $0x118] sm:$0xf]
    %v133 = vld [vmem:[%s1 + $0x11c] sm:$0xf]
    %v134 = vld [vmem:[%s1 + $0x120] sm:$0xf]
    %v135 = vld [vmem:[%s1 + $0x124] sm:$0xf]
    %v136 = vld [vmem:[%s1 + $0x128] sm:$0xf]
    %v137 = vld [vmem:[%s1 + $0x12c] sm:$0xf]
    %v138 = vld [vmem:[%s1 + $0x130] sm:$0xf]
    %v139 = vld [vmem:[%s1 + $0x134] sm:$0xf]
    %v140 = vld [vmem:[%s1 + $0x138] sm:$0xf]
    %v141 = vld [vmem:[%s1 + $0x13c] sm:$0xf]
    %v142 = vld [vmem:[%s1 + $0x140] sm:$0xf]
    %v143 = vld [vmem:[%s1 + $0x144] sm:$0xf]
    %v144 = vld [vmem:[%s1 + $0x148] sm:$0xf]
    %v145 = vld [vmem:[%s1 + $0x14c] sm:$0xf]
    %v146 = vld [vmem:[%s1 + $0x150] sm:$0xf]
    %v147 = vld [vmem:[%s1 + $0x154] sm:$0xf]
    %v148 = vld [vmem:[%s1 + $0x158] sm:$0xf]
    %v149 = vld [vmem:[%s1 + $0x15c] sm:$0xf]
    %v150 = vld [vmem:[%s1 + $0x160] sm:$0xf]
    %v151 = vld [vmem:[%s1 + $0x164] sm:$0xf]
    %v152 = vld [vmem:[%s1 + $0x168] sm:$0xf]
    %v153 = vld [vmem:[%s1 + $0x16c] sm:$0xf]
    %v154 = vld [vmem:[%s1 + $0x170] sm:$0xf]
    %v155 = vld [vmem:[%s1 + $0x174] sm:$0xf]
    %v156 = vld [vmem:[%s1 + $0x178] sm:$0xf]
    %v157 = vld [vmem:[%s1 + $0x17c] sm:$0xf]
    %v158 = vld [vmem:[%s1 + $0x180] sm:$0xf]
    %v159 = vld [vmem:[%s1 + $0x184] sm:$0xf]
    %v160 = vld [vmem:[%s1 + $0x188] sm:$0xf]
    %v161 = vld [vmem:[%s1 + $0x18c] sm:$0xf]
    %v162 = vld [vmem:[%s1 + $0x190] sm:$0xf]
    %v163 = vld [vmem:[%s1 + $0x194] sm:$0xf]
    %v164 = vld [vmem:[%s1 + $0x198] sm:$0xf]
    %v165 = vld [vmem:[%s1 + $0x19c] sm:$0xf]
    %v166 = vld [vmem:[%s1 + $0x1a0] sm:$0xf]
    %v167 = vld [vmem:[%s1 + $0x1a4] sm:$0xf]
    %v168 = vld [vmem:[%s1 + $0x1a8] sm:$0xf]
    %v169 = vld [vmem:[%s1 + $0x1ac] sm:$0xf]
    %v170 = vld [vmem:[%s1 + $0x1b0] sm:$0xf]
    %v171 = vld [vmem:[%s1 + $0x1b4] sm:$0xf]
    %v172 = vld [vmem:[%s1 + $0x1b8] sm:$0xf]
    %v173 = vld [vmem:[%s1 + $0x1bc] sm:$0xf]
    %v174 = vld [vmem:[%s1 + $0x1c0] sm:$0xf]
    %v175 = vld [vmem:[%s1 + $0x1c4] sm:$0xf]
    %v176 = vld [vmem:[%s1 + $0x1c8] sm:$0xf]
    %v177 = vld [vmem:[%s1 + $0x1cc] sm:$0xf]
    %v178 = vld [vmem:[%s1 + $0x1d0] sm:$0xf]
    %v179 = vld [vmem:[%s1 + $0x1d4] sm:$0xf]
    %v180 = vld [vmem:[%s1 + $0x1d8] sm:$0xf]
    %v181 = vld [vmem:[%s1 + $0x1dc] sm:$0xf]
    %v182 = vld [vmem:[%s1 + $0x1e0] sm:$0xf]
    %v183 = vld [vmem:[%s1 + $0x1e4] sm:$0xf]
    %v184 = vld [vmem:[%s1 + $0x1e8] sm:$0xf]
    %v185 = vld [vmem:[%s1 + $0x1ec] sm:$0xf]
    %v186 = vld [vmem:[%s1 + $0x1f0] sm:$0xf]
    %v187 = vld [vmem:[%s1 + $0x1f4] sm:$0xf]
    %v188 = vld [vmem:[%s1 + $0x1f8] sm:$0xf]
    %v189 = vld [vmem:[%s1 + $0x1fc] sm:$0xf]
    %v190 = vld [vmem:[%s1 + $0x200] sm:$0xf]
    %v191 = vld [vmem:[%s1 + $0x204] sm:$0xf]
    %v192 = vld [vmem:[%s1 + $0x208] sm:$0xf]
    %v193 = vld [vmem:[%s1 + $0x20c] sm:$0xf]
    %v194 = vld [vmem:[%s1 + $0x210] sm:$0xf]
    %v195 = vld [vmem:[%s1 + $0x214] sm:$0xf]
    %v196 = vld [vmem:[%s1 + $0x218] sm:$0xf]
    %v197 = vld [vmem:[%s1 + $0x21c] sm:$0xf]
    %v198 = vld [vmem:[%s1 + $0x220] sm:$0xf]
    %v199 = vld [vmem:[%s1 + $0x224] sm:$0xf]
    %v200 = vld [vmem:[%s1 + $0x228] sm:$0xf]
    %v201 = vld [vmem:[%s1 + $0x22c] sm:$0xf]
    %v202 = vld [vmem:[%s1 + $0x230] sm:$0xf]
    %v203 = vld [vmem:[%s1 + $0x234] sm:$0xf]
    %v204 = vld [vmem:[%s1 + $0x238] sm:$0xf]
    %v205 = vld [vmem:[%s1 + $0x23c] sm:$0xf]
    %v206 = vld [vmem:[%s1 + $0x240] sm:$0xf]
    %v207 = vld [vmem:[%s1 + $0x244] sm:$0xf]
    %v208 = vld [vmem:[%s1 + $0x248] sm:$0xf]
    %v209 = vld [vmem:[%s1 + $0x24c] sm:$0xf]
    %v210 = vld [vmem:[%s1 + $0x250] sm:$0xf]
    %v211 = vld [vmem:[%s1 + $0x254] sm:$0xf]
    %v212 = vld [vmem:[%s1 + $0x258] sm:$0xf]
    %v213 = vld [vmem:[%s1 + $0x25c] sm:$0xf]
    %v214 = vld [vmem:[%s1 + $0x260] sm:$0xf]
    %v215 = vld [vmem:[%s1 + $0x264] sm:$0xf]
    %v216 = vld [vmem:[%s1 + $0x268] sm:$0xf]
    %v217 = vld [vmem:[%s1 + $0x26c] sm:$0xf]
    %v218 = vld [vmem:[%s1 + $0x270] sm:$0xf]
    %v219 = vld [vmem:[%s1 + $0x274] sm:$0xf]
    %v220 = vld [vmem:[%s1 + $0x278] sm:$0xf]
    %v221 = vld [vmem:[%s1 + $0x27c] sm:$0xf]
    %v222 = vld [vmem:[%s1 + $0x280] sm:$0xf]
    %v223 = vld [vmem:[%s1 + $0x284] sm:$0xf]
    %v224 = vld [vmem:[%s1 + $0x288] sm:$0xf]
    %v225 = vld [vmem:[%s1 + $0x28c] sm:$0xf]
    %v226 = vld [vmem:[%s1 + $0x290] sm:$0xf]
    %v227 = vld [vmem:[%s1 + $0x294] sm:$0xf]
    %v228 = vld [vmem:[%s1 + $0x298] sm:$0xf]
    %v229 = vld [vmem:[%s1 + $0x29c] sm:$0xf]
    %v230 = vld [vmem:[%s1 + $0x2a0] sm:$0xf]
    %v231 = vld [vmem:[%s1 + $0x2a4] sm:$0xf]
    %v232 = vld [vmem:[%s1 + $0x2a8] sm:$0xf]
    %v233 = vld [vmem:[%s1 + $0x2ac] sm:$0xf]
    %v234 = vld [vmem:[%s1 + $0x2b0] sm:$0xf]
    %v235 = vld [vmem:[%s1 + $0x2b4] sm:$0xf]
    %v236 = vld [vmem:[%s1 + $0x2b8] sm:$0xf]
    %v237 = vld [vmem:[%s1 + $0x2bc] sm:$0xf]
    %v238 = vld [vmem:[%s1 + $0x2c0] sm:$0xf]
    %v239 = vld [vmem:[%s1 + $0x2c4] sm:$0xf]
    %v240 = vld [vmem:[%s1 + $0x2c8] sm:$0xf]
    %v241 = vld [vmem:[%s1 + $0x2cc] sm:$0xf]
    %v242 = vld [vmem:[%s1 + $0x2d0] sm:$0xf]
    %v243 = vld [vmem:[%s1 + $0x2d4] sm:$0xf]
    %v244 = vld [vmem:[%s1 + $0x2d8] sm:$0xf]
    %v245 = vld [vmem:[%s1 + $0x2dc] sm:$0xf]
    %v246 = vld [vmem:[%s1 + $0x2e0] sm:$0xf]
    %v247 = vld [vmem:[%s1 + $0x2e4] sm:$0xf]
    %v248 = vld [vmem:[%s1 + $0x2e8] sm:$0xf]
    %v249 = vld [vmem:[%s1 + $0x2ec] sm:$0xf]
    %v250 = vld [vmem:[%s1 + $0x2f0] sm:$0xf]
    %v251 = vld [vmem:[%s1 + $0x2f4] sm:$0xf]
    %v252 = vld [vmem:[%s1 + $0x2f8] sm:$0xf]
    %v253 = vld [vmem:[%s1 + $0x2fc] sm:$0xf]
    %v254 = vld [vmem:[%s1 + $0x300] sm:$0xf]
    %v255 = vld [vmem:[%s1 + $0x304] sm:$0xf]
    %v256 = vld [vmem:[%s1 + $0x308] sm:$0xf]
    %v257 = vld [vmem:[%s1 + $0x30c] sm:$0xf]
    %v258 = vld [vmem:[%s1 + $0x310] sm:$0xf]
    %v259 = vld [vmem:[%s1 + $0x314] sm:$0xf]
    %v260 = vld [vmem:[%s1 + $0x318] sm:$0xf]
    %v261 = vld [vmem:[%s1 + $0x31c] sm:$0xf]
    %v262 = vld [vmem:[%s1 + $0x320] sm:$0xf]
    %v263 = vld [vmem:[%s1 + $0x324] sm:$0xf]
    %v264 = vld [vmem:[%s1 + $0x328] sm:$0xf]
    %v265 = vld [vmem:[%s1 + $0x32c] sm:$0xf]
    %v266 = vld [vmem:[%s1 + $0x330] sm:$0xf]
    %v267 = vld [vmem:[%s1 + $0x334] sm:$0xf]
    %v268 = vld [vmem:[%s1 + $0x338] sm:$0xf]
    %v269 = vld [vmem:[%s1 + $0x33c] sm:$0xf]
    %v270 = vld [vmem:[%s1 + $0x340] sm:$0xf]
    %v271 = vld [vmem:[%s1 + $0x344] sm:$0xf]
    %v272 = vld [vmem:[%s1 + $0x348] sm:$0xf]
    %v273 = vld [vmem:[%s1 + $0x34c] sm:$0xf]
    %v274 = vld [vmem:[%s1 + $0x350] sm:$0xf]
    %v275 = vld [vmem:[%s1 + $0x354] sm:$0xf]
    %v276 = vld [vmem:[%s1 + $0x358] sm:$0xf]
    %v277 = vld [vmem:[%s1 + $0x35c] sm:$0xf]
    %v278 = vld [vmem:[%s1 + $0x360] sm:$0xf]
    %v279 = vld [vmem:[%s1 + $0x364] sm:$0xf]
    %v280 = vld [vmem:[%s1 + $0x368] sm:$0xf]
    %v281 = vld [vmem:[%s1 + $0x36c] sm:$0xf]
    %v282 = vld [vmem:[%s1 + $0x370] sm:$0xf]
    %v283 = vld [vmem:[%s1 + $0x374] sm:$0xf]
    %v284 = vld [vmem:[%s1 + $0x378] sm:$0xf]
    %v285 = vld [vmem:[%s1 + $0x37c] sm:$0xf]
    %v286 = vld [vmem:[%s1 + $0x380] sm:$0xf]
    %v287 = vld [vmem:[%s1 + $0x384] sm:$0xf]
    %v288 = vld [vmem:[%s1 + $0x388] sm:$0xf]
    %v289 = vld [vmem:[%s1 + $0x38c] sm:$0xf]
    %v290 = vld [vmem:[%s1 + $0x390] sm:$0xf]
    %v291 = vld [vmem:[%s1 + $0x394] sm:$0xf]
    %v292 = vld [vmem:[%s1 + $0x398] sm:$0xf]
    %v293 = vld [vmem:[%s1 + $0x39c] sm:$0xf]
    %v294 = vld [vmem:[%s1 + $0x3a0] sm:$0xf]
    %v295 = vld [vmem:[%s1 + $0x3a4] sm:$0xf]
    %v296 = vld [vmem:[%s1 + $0x3a8] sm:$0xf]
    %v297 = vld [vmem:[%s1 + $0x3ac] sm:$0xf]
    %v298 = vld [vmem:[%s1 + $0x3b0] sm:$0xf]
    %v299 = vld [vmem:[%s1 + $0x3b4] sm:$0xf]
    %v300 = vld [vmem:[%s1 + $0x3b8] sm:$0xf]
    %v301 = vld [vmem:[%s1 + $0x3bc] sm:$0xf]
    %v302 = vld [vmem:[%s1 + $0x3c0] sm:$0xf]
    %v303 = vld [vmem:[%s1 + $0x3c4] sm:$0xf]
    %v304 = vld [vmem:[%s1 + $0x3c8] sm:$0xf]
    %v305 = vld [vmem:[%s1 + $0x3cc] sm:$0xf]
    %v306 = vld [vmem:[%s1 + $0x3d0] sm:$0xf]
    %v307 = vld [vmem:[%s1 + $0x3d4] sm:$0xf]
    %v308 = vld [vmem:[%s1 + $0x3d8] sm:$0xf]
    %v309 = vld [vmem:[%s1 + $0x3dc] sm:$0xf]
    %v310 = vld [vmem:[%s1 + $0x3e0] sm:$0xf]
    %v311 = vld [vmem:[%s1 + $0x3e4] sm:$0xf]
    %v312 = vld [vmem:[%s1 + $0x3e8] sm:$0xf]
    %v313 = vld [vmem:[%s1 + $0x3ec] sm:$0xf]
    %v314 = vld [vmem:[%s1 + $0x3f0] sm:$0xf]
    %v315 = vld [vmem:[%s1 + $0x3f4] sm:$0xf]
    %v316 = vld [vmem:[%s1 + $0x3f8] sm:$0xf]
    %v317 = vld [vmem:[%s1 + $0x3fc] sm:$0xf]
    %v318 = vld [vmem:[%s1 + $0x400] sm:$0xf]
    %v319 = vld [vmem:[%s1 + $0x404] sm:$0xf]
    %v320 = vld [vmem:[%s1 + $0x408] sm:$0xf]
    %v321 = vld [vmem:[%s1 + $0x40c] sm:$0xf]
    %v322 = vld [vmem:[%s1 + $0x410] sm:$0xf]
    %v323 = vld [vmem:[%s1 + $0x414] sm:$0xf]
    %v324 = vld [vmem:[%s1 + $0x418] sm:$0xf]
    %v325 = vld [vmem:[%s1 + $0x41c] sm:$0xf]
    %v326 = vld [vmem:[%s1 + $0x420] sm:$0xf]
    %v327 = vld [vmem:[%s1 + $0x424] sm:$0xf]
    %v328 = vld [vmem:[%s1 + $0x428] sm:$0xf]
    %v329 = vld [vmem:[%s1 + $0x42c] sm:$0xf]
    %v330 = vld [vmem:[%s1 + $0x430] sm:$0xf]
    %v331 = vld [vmem:[%s1 + $0x434] sm:$0xf]
    %v332 = vld [vmem:[%s1 + $0x438] sm:$0xf]
    %v333 = vld [vmem:[%s1 + $0x43c] sm:$0xf]
    %v334 = vld [vmem:[%s1 + $0x440] sm:$0xf]
    %v335 = vld [vmem:[%s1 + $0x444] sm:$0xf]
    %v336 = vld [vmem:[%s1 + $0x448] sm:$0xf]
    %v337 = vld [vmem:[%s1 + $0x44c] sm:$0xf]
    %v338 = vld [vmem:[%s1 + $0x450] sm:$0xf]
    %v339 = vld [vmem:[%s1 + $0x454] sm:$0xf]
    %v340 = vld [vmem:[%s1 + $0x458] sm:$0xf]
    %v341 = vld [vmem:[%s1 + $0x45c] sm:$0xf]
    %v342 = vld [vmem:[%s1 + $0x460] sm:$0xf]
    %v343 = vld [vmem:[%s1 + $0x464] sm:$0xf]
    %v344 = vld [vmem:[%s1 + $0x468] sm:$0xf]
    %v345 = vld [vmem:[%s1 + $0x46c] sm:$0xf]
    %v346 = vld [vmem:[%s1 + $0x470] sm:$0xf]
    %v347 = vld [vmem:[%s1 + $0x474] sm:$0xf]
    %v348 = vld [vmem:[%s1 + $0x478] sm:$0xf]
    %v349 = vld [vmem:[%s1 + $0x47c] sm:$0xf]
    %v350 = vld [vmem:[%s1 + $0x480] sm:$0xf]
    %v351 = vld [vmem:[%s1 + $0x484] sm:$0xf]
    %v352 = vld [vmem:[%s1 + $0x488] sm:$0xf]
    %v353 = vld [vmem:[%s1 + $0x48c] sm:$0xf]
    %v354 = vld [vmem:[%s1 + $0x490] sm:$0xf]
    %v355 = vld [vmem:[%s1 + $0x494] sm:$0xf]
    %v356 = vld [vmem:[%s1 + $0x498] sm:$0xf]
    %v357 = vld [vmem:[%s1 + $0x49c] sm:$0xf]
    %v358 = vld [vmem:[%s1 + $0x4a0] sm:$0xf]
    %v359 = vld [vmem:[%s1 + $0x4a4] sm:$0xf]
    %v360 = vld [vmem:[%s1 + $0x4a8] sm:$0xf]
    %v361 = vld [vmem:[%s1 + $0x4ac] sm:$0xf]
    %v362 = vld [vmem:[%s1 + $0x4b0] sm:$0xf]
    %v363 = vld [vmem:[%s1 + $0x4b4] sm:$0xf]
    %v364 = vld [vmem:[%s1 + $0x4b8] sm:$0xf]
    %v365 = vld [vmem:[%s1 + $0x4bc] sm:$0xf]
    %v366 = vld [vmem:[%s1 + $0x4c0] sm:$0xf]
    %v367 = vld [vmem:[%s1 + $0x4c4] sm:$0xf]
    %v368 = vld [vmem:[%s1 + $0x4c8] sm:$0xf]
    %v369 = vld [vmem:[%s1 + $0x4cc] sm:$0xf]
    %v370 = vld [vmem:[%s1 + $0x4d0] sm:$0xf]
    %v371 = vld [vmem:[%s1 + $0x4d4] sm:$0xf]
    %v372 = vld [vmem:[%s1 + $0x4d8] sm:$0xf]
    %v373 = vld [vmem:[%s1 + $0x4dc] sm:$0xf]
    %v374 = vld [vmem:[%s1 + $0x4e0] sm:$0xf]
    %v375 = vld [vmem:[%s1 + $0x4e4] sm:$0xf]
    %v376 = vld [vmem:[%s1 + $0x4e8] sm:$0xf]
    %v377 = vld [vmem:[%s1 + $0x4ec] sm:$0xf]
    %v378 = vld [vmem:[%s1 + $0x4f0] sm:$0xf]
    %v379 = vld [vmem:[%s1 + $0x4f4] sm:$0xf]
    %v380 = vld [vmem:[%s1 + $0x4f8] sm:$0xf]
    %v381 = vld [vmem:[%s1 + $0x4fc] sm:$0xf]
    %v382 = vld [vmem:[%s1 + $0x500] sm:$0xf]
    %v383 = vld [vmem:[%s1 + $0x504] sm:$0xf]
    %v384 = vld [vmem:[%s1 + $0x508] sm:$0xf]
    %v385 = vld [vmem:[%s1 + $0x50c] sm:$0xf]
    %v386 = vld [vmem:[%s2] sm:$0x1]
    %v390 = vcombine.high %v59, %v59
    %v392 = vunpack.c.l.s4 1966171168
    %v393 = vunpack.c.0.s8 %v392
    %v394 = vlaneseq
    %v395 = vshrl.u32 %v394, 7
    %v396 = vsub.s32 %v393, %v395
    %v397 = vrot.slane %v59, %v396
    %v399 = vunpack.c.l.s4 1966171168
    %v400 = vunpack.c.0.s8 %v399
    %v401 = vlaneseq
    %v402 = vshrl.u32 %v401, 7
    %v403 = vsub.s32 %v400, %v402
    %v404 = vrot.slane %v390, %v403
    %v405 = vcombine.high %v397, %v397
    %v406 = vcombine.high %v404, %v404
    %v408 = vunpack.c.l.s4 1966171168
    %v409 = vunpack.c.0.s8 %v408
    %v410 = vlaneseq
    %v411 = vshrl.u32 %v410, 7
    %v412 = vsub.s32 %v409, %v411
    %v413 = vrot.slane %v397, %v412
    %v415 = vunpack.c.l.s4 1966171168
    %v416 = vunpack.c.0.s8 %v415
    %v417 = vlaneseq
    %v418 = vshrl.u32 %v417, 7
    %v419 = vsub.s32 %v416, %v418
    %v420 = vrot.slane %v404, %v419
    %v422 = vunpack.c.l.s4 1966171168
    %v423 = vunpack.c.0.s8 %v422
    %v424 = vlaneseq
    %v425 = vshrl.u32 %v424, 7
    %v426 = vsub.s32 %v423, %v425
    %v427 = vrot.slane %v405, %v426
    %v429 = vunpack.c.l.s4 1966171168
    %v430 = vunpack.c.0.s8 %v429
    %v431 = vlaneseq
    %v432 = vshrl.u32 %v431, 7
    %v433 = vsub.s32 %v430, %v432
    %v434 = vrot.slane %v406, %v433
    %v435 = vcombine.high %v413, %v413
    %v436 = vcombine.high %v420, %v420
    %v437 = vcombine.high %v427, %v427
    %v438 = vcombine.high %v434, %v434
    %v439 = vcombine.high %v60, %v60
    %v441 = vunpack.c.l.s4 1966171168
    %v442 = vunpack.c.0.s8 %v441
    %v443 = vlaneseq
    %v444 = vshrl.u32 %v443, 7
    %v445 = vsub.s32 %v442, %v444
    %v446 = vrot.slane %v60, %v445
    %v448 = vunpack.c.l.s4 1966171168
    %v449 = vunpack.c.0.s8 %v448
    %v450 = vlaneseq
    %v451 = vshrl.u32 %v450, 7
    %v452 = vsub.s32 %v449, %v451
    %v453 = vrot.slane %v439, %v452
    %v454 = vcombine.high %v446, %v446
    %v455 = vcombine.high %v453, %v453
    %v457 = vunpack.c.l.s4 1966171168
    %v458 = vunpack.c.0.s8 %v457
    %v459 = vlaneseq
    %v460 = vshrl.u32 %v459, 7
    %v461 = vsub.s32 %v458, %v460
    %v462 = vrot.slane %v446, %v461
    %v464 = vunpack.c.l.s4 1966171168
    %v465 = vunpack.c.0.s8 %v464
    %v466 = vlaneseq
    %v467 = vshrl.u32 %v466, 7
    %v468 = vsub.s32 %v465, %v467
    %v469 = vrot.slane %v453, %v468
    %v471 = vunpack.c.l.s4 1966171168
    %v472 = vunpack.c.0.s8 %v471
    %v473 = vlaneseq
    %v474 = vshrl.u32 %v473, 7
    %v475 = vsub.s32 %v472, %v474
    %v476 = vrot.slane %v454, %v475
    %v478 = vunpack.c.l.s4 1966171168
    %v479 = vunpack.c.0.s8 %v478
    %v480 = vlaneseq
    %v481 = vshrl.u32 %v480, 7
    %v482 = vsub.s32 %v479, %v481
    %v483 = vrot.slane %v455, %v482
    %v484 = vcombine.high %v462, %v462
    %v485 = vcombine.high %v469, %v469
    %v486 = vcombine.high %v476, %v476
    %v487 = vcombine.high %v483, %v483
    %v488 = vcombine.high %v61, %v61
    %v490 = vunpack.c.l.s4 1966171168
    %v491 = vunpack.c.0.s8 %v490
    %v492 = vlaneseq
    %v493 = vshrl.u32 %v492, 7
    %v494 = vsub.s32 %v491, %v493
    %v495 = vrot.slane %v61, %v494
    %v497 = vunpack.c.l.s4 1966171168
    %v498 = vunpack.c.0.s8 %v497
    %v499 = vlaneseq
    %v500 = vshrl.u32 %v499, 7
    %v501 = vsub.s32 %v498, %v500
    %v502 = vrot.slane %v488, %v501
    %v503 = vcombine.high %v495, %v495
    %v505 = vunpack.c.l.s4 1966171168
    %v506 = vunpack.c.0.s8 %v505
    %v507 = vlaneseq
    %v508 = vshrl.u32 %v507, 7
    %v509 = vsub.s32 %v506, %v508
    %v510 = vrot.slane %v495, %v509
    %v512 = vunpack.c.l.s4 1966171168
    %v513 = vunpack.c.0.s8 %v512
    %v514 = vlaneseq
    %v515 = vshrl.u32 %v514, 7
    %v516 = vsub.s32 %v513, %v515
    %v517 = vrot.slane %v502, %v516
    %v519 = vunpack.c.l.s4 1966171168
    %v520 = vunpack.c.0.s8 %v519
    %v521 = vlaneseq
    %v522 = vshrl.u32 %v521, 7
    %v523 = vsub.s32 %v520, %v522
    %v524 = vrot.slane %v503, %v523
    %v525 = vcombine.high %v510, %v510
    %v526 = vcombine.high %v524, %v524
    %v871 = vunpack.c.l.b16 %v62
    %v872 = vunpack.c.l.b16 %v63
    %v873 = vunpack.c.l.b16 %v64
    %v874 = vunpack.c.l.b16 %v65
    %v875 = vunpack.c.l.b16 %v66
    %v876 = vunpack.c.l.b16 %v67
    %v877 = vunpack.c.l.b16 %v68
    %v878 = vunpack.c.l.b16 %v69
    %v879 = vunpack.c.l.b16 %v70
    %v880 = vunpack.c.l.b16 %v71
    %v881 = vunpack.c.l.b16 %v72
    %v882 = vunpack.c.l.b16 %v73
    %v883 = vunpack.c.l.b16 %v74
    %v884 = vunpack.c.l.b16 %v75
    %v885 = vunpack.c.l.b16 %v76
    %v886 = vunpack.c.l.b16 %v77
    %v887 = vunpack.c.l.b16 %v78
    %v888 = vunpack.c.l.b16 %v79
    %v889 = vunpack.c.l.b16 %v80
    %v890 = vunpack.c.l.b16 %v81
    %v891 = vunpack.c.l.b16 %v82
    %v892 = vunpack.c.l.b16 %v83
    %v893 = vunpack.c.l.b16 %v84
    %v894 = vunpack.c.l.b16 %v85
    %v895 = vunpack.c.l.b16 %v86
    %v896 = vunpack.c.l.b16 %v87
    %v897 = vunpack.c.l.b16 %v88
    %v898 = vunpack.c.l.b16 %v89
    %v899 = vunpack.c.l.b16 %v90
    %v900 = vunpack.c.l.b16 %v91
    %v901 = vunpack.c.l.b16 %v92
    %v902 = vunpack.c.l.b16 %v93
    %v903 = vunpack.c.l.b16 %v94
    %v904 = vunpack.c.l.b16 %v95
    %v905 = vunpack.c.l.b16 %v96
    %v906 = vunpack.c.l.b16 %v97
    %v907 = vunpack.c.l.b16 %v98
    %v908 = vunpack.c.l.b16 %v99
    %v909 = vunpack.c.l.b16 %v100
    %v910 = vunpack.c.l.b16 %v101
    %v911 = vunpack.c.l.b16 %v102
    %v912 = vunpack.c.l.b16 %v103
    %v913 = vunpack.c.l.b16 %v104
    %v914 = vunpack.c.l.b16 %v105
    %v915 = vunpack.c.l.b16 %v106
    %v916 = vunpack.c.l.b16 %v107
    %v917 = vunpack.c.l.b16 %v108
    %v918 = vunpack.c.l.b16 %v109
    %v919 = vunpack.c.l.b16 %v110
    %v920 = vunpack.c.l.b16 %v111
    %v921 = vunpack.c.l.b16 %v112
    %v922 = vunpack.c.l.b16 %v113
    %v923 = vunpack.c.l.b16 %v114
    %v924 = vunpack.c.l.b16 %v115
    %v925 = vunpack.c.l.b16 %v116
    %v926 = vunpack.c.l.b16 %v117
    %v927 = vunpack.c.l.b16 %v118
    %v928 = vunpack.c.l.b16 %v119
    %v929 = vunpack.c.l.b16 %v120
    %v930 = vunpack.c.l.b16 %v121
    %v931 = vunpack.c.l.b16 %v122
    %v932 = vunpack.c.l.b16 %v123
    %v933 = vunpack.c.l.b16 %v124
    %v934 = vunpack.c.l.b16 %v125
    %v935 = vunpack.c.l.b16 %v126
    %v936 = vunpack.c.l.b16 %v127
    %v937 = vunpack.c.l.b16 %v128
    %v938 = vunpack.c.l.b16 %v129
    %v939 = vunpack.c.l.b16 %v130
    %v940 = vunpack.c.l.b16 %v131
    %v941 = vunpack.c.l.b16 %v132
    %v942 = vunpack.c.l.b16 %v133
    %v943 = vunpack.c.l.b16 %v134
    %v944 = vunpack.c.l.b16 %v135
    %v945 = vunpack.c.l.b16 %v136
    %v946 = vunpack.c.l.b16 %v137
    %v947 = vunpack.c.l.b16 %v138
    %v948 = vunpack.c.l.b16 %v139
    %v949 = vunpack.c.l.b16 %v140
    %v950 = vunpack.c.l.b16 %v141
    %v951 = vunpack.c.l.b16 %v142
    %v952 = vunpack.c.l.b16 %v143
    %v953 = vunpack.c.l.b16 %v144
    %v954 = vunpack.c.l.b16 %v145
    %v955 = vunpack.c.l.b16 %v146
    %v956 = vunpack.c.l.b16 %v147
    %v957 = vunpack.c.l.b16 %v148
    %v958 = vunpack.c.l.b16 %v149
    %v959 = vunpack.c.l.b16 %v150
    %v960 = vunpack.c.l.b16 %v151
    %v961 = vunpack.c.l.b16 %v152
    %v962 = vunpack.c.l.b16 %v153
    %v963 = vunpack.c.l.b16 %v154
    %v964 = vunpack.c.l.b16 %v155
    %v965 = vunpack.c.l.b16 %v156
    %v966 = vunpack.c.l.b16 %v157
    %v967 = vunpack.c.l.b16 %v158
    %v968 = vunpack.c.l.b16 %v159
    %v969 = vunpack.c.l.b16 %v160
    %v970 = vunpack.c.l.b16 %v161
    %v971 = vunpack.c.l.b16 %v162
    %v972 = vunpack.c.l.b16 %v163
    %v973 = vunpack.c.l.b16 %v164
    %v974 = vunpack.c.l.b16 %v165
    %v975 = vunpack.c.l.b16 %v166
    %v976 = vunpack.c.l.b16 %v167
    %v977 = vunpack.c.l.b16 %v168
    %v978 = vunpack.c.l.b16 %v169
    %v979 = vunpack.c.l.b16 %v170
    %v980 = vunpack.c.l.b16 %v171
    %v981 = vunpack.c.l.b16 %v172
    %v982 = vunpack.c.l.b16 %v173
    %v983 = vunpack.c.l.b16 %v174
    %v984 = vunpack.c.l.b16 %v175
    %v985 = vunpack.c.l.b16 %v176
    %v986 = vunpack.c.l.b16 %v177
    %v987 = vunpack.c.l.b16 %v178
    %v988 = vunpack.c.l.b16 %v179
    %v989 = vunpack.c.l.b16 %v180
    %v990 = vunpack.c.l.b16 %v181
    %v991 = vunpack.c.l.b16 %v182
    %v992 = vunpack.c.l.b16 %v183
    %v993 = vunpack.c.l.b16 %v184
    %v994 = vunpack.c.l.b16 %v185
    %v995 = vunpack.c.l.b16 %v186
    %v996 = vunpack.c.l.b16 %v187
    %v997 = vunpack.c.l.b16 %v188
    %v998 = vunpack.c.l.b16 %v189
    %v999 = vunpack.c.l.b16 %v190
    %v1000 = vunpack.c.l.b16 %v191
    %v1001 = vunpack.c.l.b16 %v192
    %v1002 = vunpack.c.l.b16 %v193
    %v1003 = vunpack.c.l.b16 %v194
    %v1004 = vunpack.c.l.b16 %v195
    %v1005 = vunpack.c.l.b16 %v196
    %v1006 = vunpack.c.l.b16 %v197
    %v1007 = vunpack.c.l.b16 %v198
    %v1008 = vunpack.c.l.b16 %v199
    %v1009 = vunpack.c.l.b16 %v200
    %v1010 = vunpack.c.l.b16 %v201
    %v1011 = vunpack.c.l.b16 %v202
    %v1012 = vunpack.c.l.b16 %v203
    %v1013 = vunpack.c.l.b16 %v204
    %v1014 = vunpack.c.l.b16 %v205
    %v1015 = vunpack.c.l.b16 %v206
    %v1016 = vunpack.c.l.b16 %v207
    %v1017 = vunpack.c.l.b16 %v208
    %v1018 = vunpack.c.l.b16 %v209
    %v1019 = vunpack.c.l.b16 %v210
    %v1020 = vunpack.c.l.b16 %v211
    %v1021 = vunpack.c.l.b16 %v212
    %v1022 = vunpack.c.l.b16 %v213
    %v1023 = vunpack.c.l.b16 %v214
    %v1024 = vunpack.c.l.b16 %v215
    %v1025 = vunpack.c.l.b16 %v216
    %v1026 = vunpack.c.l.b16 %v217
    %v1027 = vunpack.c.l.b16 %v218
    %v1028 = vunpack.c.l.b16 %v219
    %v1029 = vunpack.c.l.b16 %v220
    %v1030 = vunpack.c.l.b16 %v221
    %v1031 = vunpack.c.l.b16 %v222
    %v1032 = vunpack.c.l.b16 %v223
    %v1033 = vunpack.c.l.b16 %v224
    %v1034 = vunpack.c.l.b16 %v225
    %v1035 = vunpack.c.l.b16 %v226
    %v1036 = vunpack.c.l.b16 %v227
    %v1037 = vunpack.c.l.b16 %v228
    %v1038 = vunpack.c.l.b16 %v229
    %v1039 = vunpack.c.l.b16 %v230
    %v1040 = vunpack.c.l.b16 %v231
    %v1041 = vunpack.c.l.b16 %v232
    %v1042 = vunpack.c.l.b16 %v233
    %v1043 = vunpack.c.l.b16 %v234
    %v1044 = vunpack.c.l.b16 %v235
    %v1045 = vunpack.c.l.b16 %v236
    %v1046 = vunpack.c.l.b16 %v237
    %v1047 = vunpack.c.l.b16 %v238
    %v1048 = vunpack.c.l.b16 %v239
    %v1049 = vunpack.c.l.b16 %v240
    %v1050 = vunpack.c.l.b16 %v241
    %v1051 = vunpack.c.l.b16 %v242
    %v1052 = vunpack.c.l.b16 %v243
    %v1053 = vunpack.c.l.b16 %v244
    %v1054 = vunpack.c.l.b16 %v245
    %v1055 = vunpack.c.l.b16 %v246
    %v1056 = vunpack.c.l.b16 %v247
    %v1057 = vunpack.c.l.b16 %v248
    %v1058 = vunpack.c.l.b16 %v249
    %v1059 = vunpack.c.l.b16 %v250
    %v1060 = vunpack.c.l.b16 %v251
    %v1061 = vunpack.c.l.b16 %v252
    %v1062 = vunpack.c.l.b16 %v253
    %v1063 = vunpack.c.l.b16 %v254
    %v1064 = vunpack.c.l.b16 %v255
    %v1065 = vunpack.c.l.b16 %v256
    %v1066 = vunpack.c.l.b16 %v257
    %v1067 = vunpack.c.l.b16 %v258
    %v1068 = vunpack.c.l.b16 %v259
    %v1069 = vunpack.c.l.b16 %v260
    %v1070 = vunpack.c.l.b16 %v261
    %v1071 = vunpack.c.l.b16 %v262
    %v1072 = vunpack.c.l.b16 %v263
    %v1073 = vunpack.c.l.b16 %v264
    %v1074 = vunpack.c.l.b16 %v265
    %v1075 = vunpack.c.l.b16 %v266
    %v1076 = vunpack.c.l.b16 %v267
    %v1077 = vunpack.c.l.b16 %v268
    %v1078 = vunpack.c.l.b16 %v269
    %v1079 = vunpack.c.l.b16 %v270
    %v1080 = vunpack.c.l.b16 %v271
    %v1081 = vunpack.c.l.b16 %v272
    %v1082 = vunpack.c.l.b16 %v273
    %v1083 = vunpack.c.l.b16 %v274
    %v1084 = vunpack.c.l.b16 %v275
    %v1085 = vunpack.c.l.b16 %v276
    %v1086 = vunpack.c.l.b16 %v277
    %v1087 = vunpack.c.l.b16 %v278
    %v1088 = vunpack.c.l.b16 %v279
    %v1089 = vunpack.c.l.b16 %v280
    %v1090 = vunpack.c.l.b16 %v281
    %v1091 = vunpack.c.l.b16 %v282
    %v1092 = vunpack.c.l.b16 %v283
    %v1093 = vunpack.c.l.b16 %v284
    %v1094 = vunpack.c.l.b16 %v285
    %v1095 = vunpack.c.l.b16 %v286
    %v1096 = vunpack.c.l.b16 %v287
    %v1097 = vunpack.c.l.b16 %v288
    %v1098 = vunpack.c.l.b16 %v289
    %v1099 = vunpack.c.l.b16 %v290
    %v1100 = vunpack.c.l.b16 %v291
    %v1101 = vunpack.c.l.b16 %v292
    %v1102 = vunpack.c.l.b16 %v293
    %v1103 = vunpack.c.l.b16 %v294
    %v1104 = vunpack.c.l.b16 %v295
    %v1105 = vunpack.c.l.b16 %v296
    %v1106 = vunpack.c.l.b16 %v297
    %v1107 = vunpack.c.l.b16 %v298
    %v1108 = vunpack.c.l.b16 %v299
    %v1109 = vunpack.c.l.b16 %v300
    %v1110 = vunpack.c.l.b16 %v301
    %v1111 = vunpack.c.l.b16 %v302
    %v1112 = vunpack.c.l.b16 %v303
    %v1113 = vunpack.c.l.b16 %v304
    %v1114 = vunpack.c.l.b16 %v305
    %v1115 = vunpack.c.l.b16 %v306
    %v1116 = vunpack.c.l.b16 %v307
    %v1117 = vunpack.c.l.b16 %v308
    %v1118 = vunpack.c.l.b16 %v309
    %v1119 = vunpack.c.l.b16 %v310
    %v1120 = vunpack.c.l.b16 %v311
    %v1121 = vunpack.c.l.b16 %v312
    %v1122 = vunpack.c.l.b16 %v313
    %v1123 = vunpack.c.l.b16 %v314
    %v1124 = vunpack.c.l.b16 %v315
    %v1125 = vunpack.c.l.b16 %v316
    %v1126 = vunpack.c.l.b16 %v317
    %v1127 = vunpack.c.l.b16 %v318
    %v1128 = vunpack.c.l.b16 %v319
    %v1129 = vunpack.c.l.b16 %v320
    %v1130 = vunpack.c.l.b16 %v321
    %v1131 = vunpack.c.l.b16 %v322
    %v1132 = vunpack.c.l.b16 %v323
    %v1133 = vunpack.c.l.b16 %v324
    %v1134 = vunpack.c.l.b16 %v325
    %v1135 = vunpack.c.l.b16 %v326
    %v1136 = vunpack.c.l.b16 %v327
    %v1137 = vunpack.c.l.b16 %v328
    %v1138 = vunpack.c.l.b16 %v329
    %v1139 = vunpack.c.l.b16 %v330
    %v1140 = vunpack.c.l.b16 %v331
    %v1141 = vunpack.c.l.b16 %v332
    %v1142 = vunpack.c.l.b16 %v333
    %v1143 = vunpack.c.l.b16 %v334
    %v1144 = vunpack.c.l.b16 %v335
    %v1145 = vunpack.c.l.b16 %v336
    %v1146 = vunpack.c.l.b16 %v337
    %v1147 = vunpack.c.l.b16 %v338
    %v1148 = vunpack.c.l.b16 %v339
    %v1149 = vunpack.c.l.b16 %v340
    %v1150 = vunpack.c.l.b16 %v341
    %v1151 = vunpack.c.l.b16 %v342
    %v1152 = vunpack.c.l.b16 %v343
    %v1153 = vunpack.c.l.b16 %v344
    %v1154 = vunpack.c.l.b16 %v345
    %v1155 = vunpack.c.l.b16 %v346
    %v1156 = vunpack.c.l.b16 %v347
    %v1157 = vunpack.c.l.b16 %v348
    %v1158 = vunpack.c.l.b16 %v349
    %v1159 = vunpack.c.l.b16 %v350
    %v1160 = vunpack.c.l.b16 %v351
    %v1161 = vunpack.c.l.b16 %v352
    %v1162 = vunpack.c.l.b16 %v353
    %v1163 = vunpack.c.l.b16 %v354
    %v1164 = vunpack.c.l.b16 %v355
    %v1165 = vunpack.c.l.b16 %v356
    %v1166 = vunpack.c.l.b16 %v357
    %v1167 = vunpack.c.l.b16 %v358
    %v1168 = vunpack.c.l.b16 %v359
    %v1169 = vunpack.c.l.b16 %v360
    %v1170 = vunpack.c.l.b16 %v361
    %v1171 = vunpack.c.l.b16 %v362
    %v1172 = vunpack.c.l.b16 %v363
    %v1173 = vunpack.c.l.b16 %v364
    %v1174 = vunpack.c.l.b16 %v365
    %v1175 = vunpack.c.l.b16 %v366
    %v1176 = vunpack.c.l.b16 %v367
    %v1177 = vunpack.c.l.b16 %v368
    %v1178 = vunpack.c.l.b16 %v369
    %v1179 = vunpack.c.l.b16 %v370
    %v1180 = vunpack.c.l.b16 %v371
    %v1181 = vunpack.c.l.b16 %v372
    %v1182 = vunpack.c.l.b16 %v373
    %v1183 = vunpack.c.l.b16 %v374
    %v1184 = vunpack.c.l.b16 %v375
    %v1185 = vunpack.c.l.b16 %v376
    %v1186 = vunpack.c.l.b16 %v377
    %v1187 = vunpack.c.l.b16 %v378
    %v1188 = vunpack.c.l.b16 %v379
    %v1189 = vunpack.c.l.b16 %v380
    %v1190 = vunpack.c.l.b16 %v381
    %v1191 = vunpack.c.l.b16 %v382
    %v1192 = vunpack.c.l.b16 %v383
    %v1193 = vunpack.c.l.b16 %v384
    %v1194 = vunpack.c.l.b16 %v385
    %v1195 = vpack.c.b16 %v872, %v871
    %v1196 = vpack.c.b16 %v874, %v873
    %v1197 = vpack.c.b16 %v876, %v875
    %v1198 = vpack.c.b16 %v878, %v877
    %v1199 = vpack.c.b16 %v880, %v879
    %v1200 = vpack.c.b16 %v882, %v881
    %v1201 = vpack.c.b16 %v884, %v883
    %v1202 = vpack.c.b16 %v886, %v885
    %v1203 = vpack.c.b16 %v888, %v887
    %v1204 = vpack.c.b16 %v890, %v889
    %v1205 = vpack.c.b16 %v892, %v891
    %v1206 = vpack.c.b16 %v894, %v893
    %v1207 = vpack.c.b16 %v896, %v895
    %v1208 = vpack.c.b16 %v898, %v897
    %v1209 = vpack.c.b16 %v900, %v899
    %v1210 = vpack.c.b16 %v902, %v901
    %v1211 = vpack.c.b16 %v904, %v903
    %v1212 = vpack.c.b16 %v906, %v905
    %v1213 = vpack.c.b16 %v908, %v907
    %v1214 = vpack.c.b16 %v910, %v909
    %v1215 = vpack.c.b16 %v912, %v911
    %v1216 = vpack.c.b16 %v914, %v913
    %v1217 = vpack.c.b16 %v916, %v915
    %v1218 = vpack.c.b16 %v918, %v917
    %v1219 = vpack.c.b16 %v920, %v919
    %v1220 = vpack.c.b16 %v922, %v921
    %v1221 = vpack.c.b16 %v924, %v923
    %v1222 = vpack.c.b16 %v926, %v925
    %v1223 = vpack.c.b16 %v928, %v927
    %v1224 = vpack.c.b16 %v930, %v929
    %v1225 = vpack.c.b16 %v932, %v931
    %v1226 = vpack.c.b16 %v934, %v933
    %v1227 = vpack.c.b16 %v936, %v935
    %v1228 = vpack.c.b16 %v938, %v937
    %v1229 = vpack.c.b16 %v940, %v939
    %v1230 = vpack.c.b16 %v942, %v941
    %v1231 = vpack.c.b16 %v944, %v943
    %v1232 = vpack.c.b16 %v946, %v945
    %v1233 = vpack.c.b16 %v948, %v947
    %v1234 = vpack.c.b16 %v950, %v949
    %v1235 = vpack.c.b16 %v952, %v951
    %v1236 = vpack.c.b16 %v954, %v953
    %v1237 = vpack.c.b16 %v956, %v955
    %v1238 = vpack.c.b16 %v958, %v957
    %v1239 = vpack.c.b16 %v960, %v959
    %v1240 = vpack.c.b16 %v962, %v961
    %v1241 = vpack.c.b16 %v964, %v963
    %v1242 = vpack.c.b16 %v966, %v965
    %v1243 = vpack.c.b16 %v968, %v967
    %v1244 = vpack.c.b16 %v970, %v969
    %v1245 = vpack.c.b16 %v972, %v971
    %v1246 = vpack.c.b16 %v974, %v973
    %v1247 = vpack.c.b16 %v976, %v975
    %v1248 = vpack.c.b16 %v978, %v977
    %v1249 = vpack.c.b16 %v980, %v979
    %v1250 = vpack.c.b16 %v982, %v981
    %v1251 = vpack.c.b16 %v984, %v983
    %v1252 = vpack.c.b16 %v986, %v985
    %v1253 = vpack.c.b16 %v988, %v987
    %v1254 = vpack.c.b16 %v990, %v989
    %v1255 = vpack.c.b16 %v992, %v991
    %v1256 = vpack.c.b16 %v994, %v993
    %v1257 = vpack.c.b16 %v996, %v995
    %v1258 = vpack.c.b16 %v998, %v997
    %v1259 = vpack.c.b16 %v1000, %v999
    %v1260 = vpack.c.b16 %v1002, %v1001
    %v1261 = vpack.c.b16 %v1004, %v1003
    %v1262 = vpack.c.b16 %v1006, %v1005
    %v1263 = vpack.c.b16 %v1008, %v1007
    %v1264 = vpack.c.b16 %v1010, %v1009
    %v1265 = vpack.c.b16 %v1012, %v1011
    %v1266 = vpack.c.b16 %v1014, %v1013
    %v1267 = vpack.c.b16 %v1016, %v1015
    %v1268 = vpack.c.b16 %v1018, %v1017
    %v1269 = vpack.c.b16 %v1020, %v1019
    %v1270 = vpack.c.b16 %v1022, %v1021
    %v1271 = vpack.c.b16 %v1024, %v1023
    %v1272 = vpack.c.b16 %v1026, %v1025
    %v1273 = vpack.c.b16 %v1028, %v1027
    %v1274 = vpack.c.b16 %v1030, %v1029
    %v1275 = vpack.c.b16 %v1032, %v1031
    %v1276 = vpack.c.b16 %v1034, %v1033
    %v1277 = vpack.c.b16 %v1036, %v1035
    %v1278 = vpack.c.b16 %v1038, %v1037
    %v1279 = vpack.c.b16 %v1040, %v1039
    %v1280 = vpack.c.b16 %v1042, %v1041
    %v1281 = vpack.c.b16 %v1044, %v1043
    %v1282 = vpack.c.b16 %v1046, %v1045
    %v1283 = vpack.c.b16 %v1048, %v1047
    %v1284 = vpack.c.b16 %v1050, %v1049
    %v1285 = vpack.c.b16 %v1052, %v1051
    %v1286 = vpack.c.b16 %v1054, %v1053
    %v1287 = vpack.c.b16 %v1056, %v1055
    %v1288 = vpack.c.b16 %v1058, %v1057
    %v1289 = vpack.c.b16 %v1060, %v1059
    %v1290 = vpack.c.b16 %v1062, %v1061
    %v1291 = vpack.c.b16 %v1064, %v1063
    %v1292 = vpack.c.b16 %v1066, %v1065
    %v1293 = vpack.c.b16 %v1068, %v1067
    %v1294 = vpack.c.b16 %v1070, %v1069
    %v1295 = vpack.c.b16 %v1072, %v1071
    %v1296 = vpack.c.b16 %v1074, %v1073
    %v1297 = vpack.c.b16 %v1076, %v1075
    %v1298 = vpack.c.b16 %v1078, %v1077
    %v1299 = vpack.c.b16 %v1080, %v1079
    %v1300 = vpack.c.b16 %v1082, %v1081
    %v1301 = vpack.c.b16 %v1084, %v1083
    %v1302 = vpack.c.b16 %v1086, %v1085
    %v1303 = vpack.c.b16 %v1088, %v1087
    %v1304 = vpack.c.b16 %v1090, %v1089
    %v1305 = vpack.c.b16 %v1092, %v1091
    %v1306 = vpack.c.b16 %v1094, %v1093
    %v1307 = vpack.c.b16 %v1096, %v1095
    %v1308 = vpack.c.b16 %v1098, %v1097
    %v1309 = vpack.c.b16 %v1100, %v1099
    %v1310 = vpack.c.b16 %v1102, %v1101
    %v1311 = vpack.c.b16 %v1104, %v1103
    %v1312 = vpack.c.b16 %v1106, %v1105
    %v1313 = vpack.c.b16 %v1108, %v1107
    %v1314 = vpack.c.b16 %v1110, %v1109
    %v1315 = vpack.c.b16 %v1112, %v1111
    %v1316 = vpack.c.b16 %v1114, %v1113
    %v1317 = vpack.c.b16 %v1116, %v1115
    %v1318 = vpack.c.b16 %v1118, %v1117
    %v1319 = vpack.c.b16 %v1120, %v1119
    %v1320 = vpack.c.b16 %v1122, %v1121
    %v1321 = vpack.c.b16 %v1124, %v1123
    %v1322 = vpack.c.b16 %v1126, %v1125
    %v1323 = vpack.c.b16 %v1128, %v1127
    %v1324 = vpack.c.b16 %v1130, %v1129
    %v1325 = vpack.c.b16 %v1132, %v1131
    %v1326 = vpack.c.b16 %v1134, %v1133
    %v1327 = vpack.c.b16 %v1136, %v1135
    %v1328 = vpack.c.b16 %v1138, %v1137
    %v1329 = vpack.c.b16 %v1140, %v1139
    %v1330 = vpack.c.b16 %v1142, %v1141
    %v1331 = vpack.c.b16 %v1144, %v1143
    %v1332 = vpack.c.b16 %v1146, %v1145
    %v1333 = vpack.c.b16 %v1148, %v1147
    %v1334 = vpack.c.b16 %v1150, %v1149
    %v1335 = vpack.c.b16 %v1152, %v1151
    %v1336 = vpack.c.b16 %v1154, %v1153
    %v1337 = vpack.c.b16 %v1156, %v1155
    %v1338 = vpack.c.b16 %v1158, %v1157
    %v1339 = vpack.c.b16 %v1160, %v1159
    %v1340 = vpack.c.b16 %v1162, %v1161
    %v1341 = vpack.c.b16 %v1164, %v1163
    %v1342 = vpack.c.b16 %v1166, %v1165
    %v1343 = vpack.c.b16 %v1168, %v1167
    %v1344 = vpack.c.b16 %v1170, %v1169
    %v1345 = vpack.c.b16 %v1172, %v1171
    %v1346 = vpack.c.b16 %v1174, %v1173
    %v1347 = vpack.c.b16 %v1176, %v1175
    %v1348 = vpack.c.b16 %v1178, %v1177
    %v1349 = vpack.c.b16 %v1180, %v1179
    %v1350 = vpack.c.b16 %v1182, %v1181
    %v1351 = vpack.c.b16 %v1184, %v1183
    %v1352 = vpack.c.b16 %v1186, %v1185
    %v1353 = vpack.c.b16 %v1188, %v1187
    %v1354 = vpack.c.b16 %v1190, %v1189
    %v1355 = vpack.c.b16 %v1192, %v1191
    %v1356 = vpack.c.b16 %v1194, %v1193
    %vm1519 = vcmask 261120
    %v1521 = vsel %vm1519, %v517, 0
    %1523 = vmatprep.subr.bf16.mxu0 0
    %1524 = vmatpush1.bf16.msra.mxu0 %v1195
    %1525 = vmatprep.subr.bf16.mxu0 0
    %1526 = vmatpush1.bf16.msra.mxu0 %v1196
    %1527 = vmatprep.subr.bf16.mxu0 0
    %1528 = vmatpush1.bf16.msra.mxu0 %v1197
    %1529 = vmatprep.subr.bf16.mxu0 0
    %1530 = vmatpush1.bf16.msra.mxu0 %v1198
    %1531 = vmatprep.subr.bf16.mxu0 0
    %1532 = vmatpush1.bf16.msra.mxu0 %v1199
    %1533 = vmatprep.subr.bf16.mxu0 0
    %1534 = vmatpush1.bf16.msra.mxu0 %v1200
    %1535 = vmatprep.subr.bf16.mxu0 0
    %1536 = vmatpush1.bf16.msra.mxu0 %v1201
    %1537 = vmatprep.subr.bf16.mxu0 0
    %1538 = vmatpush1.bf16.msra.mxu0 %v1202
    %1539 = vmatprep.subr.bf16.mxu0 0
    %1540 = vmatpush1.bf16.msra.mxu0 %v1203
    %1541 = vmatprep.subr.bf16.mxu0 0
    %1542 = vmatpush1.bf16.msra.mxu0 %v1204
    %1543 = vmatprep.subr.bf16.mxu0 0
    %1544 = vmatpush1.bf16.msra.mxu0 %v1205
    %1545 = vmatprep.subr.bf16.mxu0 0
    %1546 = vmatpush1.bf16.msra.mxu0 %v1206
    %1547 = vmatprep.subr.bf16.mxu0 0
    %1548 = vmatpush1.bf16.msra.mxu0 %v1207
    %1549 = vmatprep.subr.bf16.mxu0 0
    %1550 = vmatpush1.bf16.msra.mxu0 %v1208
    %1551 = vmatprep.subr.bf16.mxu0 0
    %1552 = vmatpush1.bf16.msra.mxu0 %v1209
    %1553 = vmatprep.subr.bf16.mxu0 0
    %1554 = vmatpush1.bf16.msra.mxu0 %v1210
    %1555 = vmatprep.mubr.bf16.mxu0 %v427
    %1556 = vmatmul.mubr.bf16.gmra.mrb[0].mxu0 %v413
    %v1557 = vpop.f32.mrb[0].mxu0
    %v1558 = vadd.f32 %v386, %v1557
    %v1559 = vpop.f32.mrb[0].mxu0
    %v1560 = vpop.f32.mrb[0].mxu0
    %v1561 = vpop.f32.mrb[0].mxu0
    %1562 = vdwg.mxu0
    %1563 = vmatprep.subr.bf16.mxu0 0
    %1564 = vmatpush1.bf16.msra.mxu0 %v1211
    %1565 = vmatprep.subr.bf16.mxu0 0
    %1566 = vmatpush1.bf16.msra.mxu0 %v1212
    %1567 = vmatprep.subr.bf16.mxu0 0
    %1568 = vmatpush1.bf16.msra.mxu0 %v1213
    %1569 = vmatprep.subr.bf16.mxu0 0
    %1570 = vmatpush1.bf16.msra.mxu0 %v1214
    %1571 = vmatprep.subr.bf16.mxu0 0
    %1572 = vmatpush1.bf16.msra.mxu0 %v1215
    %1573 = vmatprep.subr.bf16.mxu0 0
    %1574 = vmatpush1.bf16.msra.mxu0 %v1216
    %1575 = vmatprep.subr.bf16.mxu0 0
    %1576 = vmatpush1.bf16.msra.mxu0 %v1217
    %1577 = vmatprep.subr.bf16.mxu0 0
    %1578 = vmatpush1.bf16.msra.mxu0 %v1218
    %1579 = vmatprep.subr.bf16.mxu0 0
    %1580 = vmatpush1.bf16.msra.mxu0 %v1219
    %1581 = vmatprep.subr.bf16.mxu0 0
    %1582 = vmatpush1.bf16.msra.mxu0 %v1220
    %1583 = vmatprep.subr.bf16.mxu0 0
    %1584 = vmatpush1.bf16.msra.mxu0 %v1221
    %1585 = vmatprep.subr.bf16.mxu0 0
    %1586 = vmatpush1.bf16.msra.mxu0 %v1222
    %1587 = vmatprep.subr.bf16.mxu0 0
    %1588 = vmatpush1.bf16.msra.mxu0 %v1223
    %1589 = vmatprep.subr.bf16.mxu0 0
    %1590 = vmatpush1.bf16.msra.mxu0 %v1224
    %1591 = vmatprep.subr.bf16.mxu0 0
    %1592 = vmatpush1.bf16.msra.mxu0 %v1225
    %1593 = vmatprep.subr.bf16.mxu0 0
    %1594 = vmatpush1.bf16.msra.mxu0 %v1226
    %1595 = vmatprep.mubr.bf16.mxu0 %v437
    %1596 = vmatmul.mubr.bf16.gmra.mrb[0].mxu0 %v435
    %v1597 = vpop.f32.mrb[0].mxu0
    %v1598 = vadd.f32 %v1558, %v1597
    %v1599 = vpop.f32.mrb[0].mxu0
    %v1600 = vpop.f32.mrb[0].mxu0
    %v1601 = vpop.f32.mrb[0].mxu0
    %1602 = vdwg.mxu0
    %1603 = vmatprep.subr.bf16.mxu0 0
    %1604 = vmatpush1.bf16.msra.mxu0 %v1227
    %1605 = vmatprep.subr.bf16.mxu0 0
    %1606 = vmatpush1.bf16.msra.mxu0 %v1228
    %1607 = vmatprep.subr.bf16.mxu0 0
    %1608 = vmatpush1.bf16.msra.mxu0 %v1229
    %1609 = vmatprep.subr.bf16.mxu0 0
    %1610 = vmatpush1.bf16.msra.mxu0 %v1230
    %1611 = vmatprep.subr.bf16.mxu0 0
    %1612 = vmatpush1.bf16.msra.mxu0 %v1231
    %1613 = vmatprep.subr.bf16.mxu0 0
    %1614 = vmatpush1.bf16.msra.mxu0 %v1232
    %1615 = vmatprep.subr.bf16.mxu0 0
    %1616 = vmatpush1.bf16.msra.mxu0 %v1233
    %1617 = vmatprep.subr.bf16.mxu0 0
    %1618 = vmatpush1.bf16.msra.mxu0 %v1234
    %1619 = vmatprep.subr.bf16.mxu0 0
    %1620 = vmatpush1.bf16.msra.mxu0 %v1235
    %1621 = vmatprep.subr.bf16.mxu0 0
    %1622 = vmatpush1.bf16.msra.mxu0 %v1236
    %1623 = vmatprep.subr.bf16.mxu0 0
    %1624 = vmatpush1.bf16.msra.mxu0 %v1237
    %1625 = vmatprep.subr.bf16.mxu0 0
    %1626 = vmatpush1.bf16.msra.mxu0 %v1238
    %1627 = vmatprep.subr.bf16.mxu0 0
    %1628 = vmatpush1.bf16.msra.mxu0 %v1239
    %1629 = vmatprep.subr.bf16.mxu0 0
    %1630 = vmatpush1.bf16.msra.mxu0 %v1240
    %1631 = vmatprep.subr.bf16.mxu0 0
    %1632 = vmatpush1.bf16.msra.mxu0 %v1241
    %1633 = vmatprep.subr.bf16.mxu0 0
    %1634 = vmatpush1.bf16.msra.mxu0 %v1242
    %1635 = vmatprep.mubr.bf16.mxu0 %v434
    %1636 = vmatmul.mubr.bf16.gmra.mrb[0].mxu0 %v420
    %v1637 = vpop.f32.mrb[0].mxu0
    %v1638 = vadd.f32 %v1598, %v1637
    %v1639 = vpop.f32.mrb[0].mxu0
    %v1640 = vpop.f32.mrb[0].mxu0
    %v1641 = vpop.f32.mrb[0].mxu0
    %1642 = vdwg.mxu0
    %1643 = vmatprep.subr.bf16.mxu0 0
    %1644 = vmatpush1.bf16.msra.mxu0 %v1243
    %1645 = vmatprep.subr.bf16.mxu0 0
    %1646 = vmatpush1.bf16.msra.mxu0 %v1244
    %1647 = vmatprep.subr.bf16.mxu0 0
    %1648 = vmatpush1.bf16.msra.mxu0 %v1245
    %1649 = vmatprep.subr.bf16.mxu0 0
    %1650 = vmatpush1.bf16.msra.mxu0 %v1246
    %1651 = vmatprep.subr.bf16.mxu0 0
    %1652 = vmatpush1.bf16.msra.mxu0 %v1247
    %1653 = vmatprep.subr.bf16.mxu0 0
    %1654 = vmatpush1.bf16.msra.mxu0 %v1248
    %1655 = vmatprep.subr.bf16.mxu0 0
    %1656 = vmatpush1.bf16.msra.mxu0 %v1249
    %1657 = vmatprep.subr.bf16.mxu0 0
    %1658 = vmatpush1.bf16.msra.mxu0 %v1250
    %1659 = vmatprep.subr.bf16.mxu0 0
    %1660 = vmatpush1.bf16.msra.mxu0 %v1251
    %1661 = vmatprep.subr.bf16.mxu0 0
    %1662 = vmatpush1.bf16.msra.mxu0 %v1252
    %1663 = vmatprep.subr.bf16.mxu0 0
    %1664 = vmatpush1.bf16.msra.mxu0 %v1253
    %1665 = vmatprep.subr.bf16.mxu0 0
    %1666 = vmatpush1.bf16.msra.mxu0 %v1254
    %1667 = vmatprep.subr.bf16.mxu0 0
    %1668 = vmatpush1.bf16.msra.mxu0 %v1255
    %1669 = vmatprep.subr.bf16.mxu0 0
    %1670 = vmatpush1.bf16.msra.mxu0 %v1256
    %1671 = vmatprep.subr.bf16.mxu0 0
    %1672 = vmatpush1.bf16.msra.mxu0 %v1257
    %1673 = vmatprep.subr.bf16.mxu0 0
    %1674 = vmatpush1.bf16.msra.mxu0 %v1258
    %1675 = vmatprep.mubr.bf16.mxu0 %v438
    %1676 = vmatmul.mubr.bf16.gmra.mrb[0].mxu0 %v436
    %v1677 = vpop.f32.mrb[0].mxu0
    %v1678 = vadd.f32 %v1638, %v1677
    %v1679 = vpop.f32.mrb[0].mxu0
    %v1680 = vpop.f32.mrb[0].mxu0
    %v1681 = vpop.f32.mrb[0].mxu0
    %1682 = vdwg.mxu0
    %1683 = vmatprep.subr.bf16.mxu0 0
    %1684 = vmatpush1.bf16.msra.mxu0 %v1259
    %1685 = vmatprep.subr.bf16.mxu0 0
    %1686 = vmatpush1.bf16.msra.mxu0 %v1260
    %1687 = vmatprep.subr.bf16.mxu0 0
    %1688 = vmatpush1.bf16.msra.mxu0 %v1261
    %1689 = vmatprep.subr.bf16.mxu0 0
    %1690 = vmatpush1.bf16.msra.mxu0 %v1262
    %1691 = vmatprep.subr.bf16.mxu0 0
    %1692 = vmatpush1.bf16.msra.mxu0 %v1263
    %1693 = vmatprep.subr.bf16.mxu0 0
    %1694 = vmatpush1.bf16.msra.mxu0 %v1264
    %1695 = vmatprep.subr.bf16.mxu0 0
    %1696 = vmatpush1.bf16.msra.mxu0 %v1265
    %1697 = vmatprep.subr.bf16.mxu0 0
    %1698 = vmatpush1.bf16.msra.mxu0 %v1266
    %1699 = vmatprep.subr.bf16.mxu0 0
    %1700 = vmatpush1.bf16.msra.mxu0 %v1267
    %1701 = vmatprep.subr.bf16.mxu0 0
    %1702 = vmatpush1.bf16.msra.mxu0 %v1268
    %1703 = vmatprep.subr.bf16.mxu0 0
    %1704 = vmatpush1.bf16.msra.mxu0 %v1269
    %1705 = vmatprep.subr.bf16.mxu0 0
    %1706 = vmatpush1.bf16.msra.mxu0 %v1270
    %1707 = vmatprep.subr.bf16.mxu0 0
    %1708 = vmatpush1.bf16.msra.mxu0 %v1271
    %1709 = vmatprep.subr.bf16.mxu0 0
    %1710 = vmatpush1.bf16.msra.mxu0 %v1272
    %1711 = vmatprep.subr.bf16.mxu0 0
    %1712 = vmatpush1.bf16.msra.mxu0 %v1273
    %1713 = vmatprep.subr.bf16.mxu0 0
    %1714 = vmatpush1.bf16.msra.mxu0 %v1274
    %1715 = vmatprep.mubr.bf16.mxu0 %v476
    %1716 = vmatmul.mubr.bf16.gmra.mrb[0].mxu0 %v462
    %v1717 = vpop.f32.mrb[0].mxu0
    %v1718 = vadd.f32 %v1678, %v1717
    %v1719 = vpop.f32.mrb[0].mxu0
    %v1720 = vpop.f32.mrb[0].mxu0
    %v1721 = vpop.f32.mrb[0].mxu0
    %1722 = vdwg.mxu0
    %1723 = vmatprep.subr.bf16.mxu0 0
    %1724 = vmatpush1.bf16.msra.mxu0 %v1275
    %1725 = vmatprep.subr.bf16.mxu0 0
    %1726 = vmatpush1.bf16.msra.mxu0 %v1276
    %1727 = vmatprep.subr.bf16.mxu0 0
    %1728 = vmatpush1.bf16.msra.mxu0 %v1277
    %1729 = vmatprep.subr.bf16.mxu0 0
    %1730 = vmatpush1.bf16.msra.mxu0 %v1278
    %1731 = vmatprep.subr.bf16.mxu0 0
    %1732 = vmatpush1.bf16.msra.mxu0 %v1279
    %1733 = vmatprep.subr.bf16.mxu0 0
    %1734 = vmatpush1.bf16.msra.mxu0 %v1280
    %1735 = vmatprep.subr.bf16.mxu0 0
    %1736 = vmatpush1.bf16.msra.mxu0 %v1281
    %1737 = vmatprep.subr.bf16.mxu0 0
    %1738 = vmatpush1.bf16.msra.mxu0 %v1282
    %1739 = vmatprep.subr.bf16.mxu0 0
    %1740 = vmatpush1.bf16.msra.mxu0 %v1283
    %1741 = vmatprep.subr.bf16.mxu0 0
    %1742 = vmatpush1.bf16.msra.mxu0 %v1284
    %1743 = vmatprep.subr.bf16.mxu0 0
    %1744 = vmatpush1.bf16.msra.mxu0 %v1285
    %1745 = vmatprep.subr.bf16.mxu0 0
    %1746 = vmatpush1.bf16.msra.mxu0 %v1286
    %1747 = vmatprep.subr.bf16.mxu0 0
    %1748 = vmatpush1.bf16.msra.mxu0 %v1287
    %1749 = vmatprep.subr.bf16.mxu0 0
    %1750 = vmatpush1.bf16.msra.mxu0 %v1288
    %1751 = vmatprep.subr.bf16.mxu0 0
    %1752 = vmatpush1.bf16.msra.mxu0 %v1289
    %1753 = vmatprep.subr.bf16.mxu0 0
    %1754 = vmatpush1.bf16.msra.mxu0 %v1290
    %1755 = vmatprep.mubr.bf16.mxu0 %v486
    %1756 = vmatmul.mubr.bf16.gmra.mrb[0].mxu0 %v484
    %v1757 = vpop.f32.mrb[0].mxu0
    %v1758 = vadd.f32 %v1718, %v1757
    %v1759 = vpop.f32.mrb[0].mxu0
    %v1760 = vpop.f32.mrb[0].mxu0
    %v1761 = vpop.f32.mrb[0].mxu0
    %1762 = vdwg.mxu0
    %1763 = vmatprep.subr.bf16.mxu0 0
    %1764 = vmatpush1.bf16.msra.mxu0 %v1291
    %1765 = vmatprep.subr.bf16.mxu0 0
    %1766 = vmatpush1.bf16.msra.mxu0 %v1292
    %1767 = vmatprep.subr.bf16.mxu0 0
    %1768 = vmatpush1.bf16.msra.mxu0 %v1293
    %1769 = vmatprep.subr.bf16.mxu0 0
    %1770 = vmatpush1.bf16.msra.mxu0 %v1294
    %1771 = vmatprep.subr.bf16.mxu0 0
    %1772 = vmatpush1.bf16.msra.mxu0 %v1295
    %1773 = vmatprep.subr.bf16.mxu0 0
    %1774 = vmatpush1.bf16.msra.mxu0 %v1296
    %1775 = vmatprep.subr.bf16.mxu0 0
    %1776 = vmatpush1.bf16.msra.mxu0 %v1297
    %1777 = vmatprep.subr.bf16.mxu0 0
    %1778 = vmatpush1.bf16.msra.mxu0 %v1298
    %1779 = vmatprep.subr.bf16.mxu0 0
    %1780 = vmatpush1.bf16.msra.mxu0 %v1299
    %1781 = vmatprep.subr.bf16.mxu0 0
    %1782 = vmatpush1.bf16.msra.mxu0 %v1300
    %1783 = vmatprep.subr.bf16.mxu0 0
    %1784 = vmatpush1.bf16.msra.mxu0 %v1301
    %1785 = vmatprep.subr.bf16.mxu0 0
    %1786 = vmatpush1.bf16.msra.mxu0 %v1302
    %1787 = vmatprep.subr.bf16.mxu0 0
    %1788 = vmatpush1.bf16.msra.mxu0 %v1303
    %1789 = vmatprep.subr.bf16.mxu0 0
    %1790 = vmatpush1.bf16.msra.mxu0 %v1304
    %1791 = vmatprep.subr.bf16.mxu0 0
    %1792 = vmatpush1.bf16.msra.mxu0 %v1305
    %1793 = vmatprep.subr.bf16.mxu0 0
    %1794 = vmatpush1.bf16.msra.mxu0 %v1306
    %1795 = vmatprep.mubr.bf16.mxu0 %v483
    %1796 = vmatmul.mubr.bf16.gmra.mrb[0].mxu0 %v469
    %v1797 = vpop.f32.mrb[0].mxu0
    %v1798 = vadd.f32 %v1758, %v1797
    %v1799 = vpop.f32.mrb[0].mxu0
    %v1800 = vpop.f32.mrb[0].mxu0
    %v1801 = vpop.f32.mrb[0].mxu0
    %1802 = vdwg.mxu0
    %1803 = vmatprep.subr.bf16.mxu0 0
    %1804 = vmatpush1.bf16.msra.mxu0 %v1307
    %1805 = vmatprep.subr.bf16.mxu0 0
    %1806 = vmatpush1.bf16.msra.mxu0 %v1308
    %1807 = vmatprep.subr.bf16.mxu0 0
    %1808 = vmatpush1.bf16.msra.mxu0 %v1309
    %1809 = vmatprep.subr.bf16.mxu0 0
    %1810 = vmatpush1.bf16.msra.mxu0 %v1310
    %1811 = vmatprep.subr.bf16.mxu0 0
    %1812 = vmatpush1.bf16.msra.mxu0 %v1311
    %1813 = vmatprep.subr.bf16.mxu0 0
    %1814 = vmatpush1.bf16.msra.mxu0 %v1312
    %1815 = vmatprep.subr.bf16.mxu0 0
    %1816 = vmatpush1.bf16.msra.mxu0 %v1313
    %1817 = vmatprep.subr.bf16.mxu0 0
    %1818 = vmatpush1.bf16.msra.mxu0 %v1314
    %1819 = vmatprep.subr.bf16.mxu0 0
    %1820 = vmatpush1.bf16.msra.mxu0 %v1315
    %1821 = vmatprep.subr.bf16.mxu0 0
    %1822 = vmatpush1.bf16.msra.mxu0 %v1316
    %1823 = vmatprep.subr.bf16.mxu0 0
    %1824 = vmatpush1.bf16.msra.mxu0 %v1317
    %1825 = vmatprep.subr.bf16.mxu0 0
    %1826 = vmatpush1.bf16.msra.mxu0 %v1318
    %1827 = vmatprep.subr.bf16.mxu0 0
    %1828 = vmatpush1.bf16.msra.mxu0 %v1319
    %1829 = vmatprep.subr.bf16.mxu0 0
    %1830 = vmatpush1.bf16.msra.mxu0 %v1320
    %1831 = vmatprep.subr.bf16.mxu0 0
    %1832 = vmatpush1.bf16.msra.mxu0 %v1321
    %1833 = vmatprep.subr.bf16.mxu0 0
    %1834 = vmatpush1.bf16.msra.mxu0 %v1322
    %1835 = vmatprep.mubr.bf16.mxu0 %v487
    %1836 = vmatmul.mubr.bf16.gmra.mrb[0].mxu0 %v485
    %v1837 = vpop.f32.mrb[0].mxu0
    %v1838 = vadd.f32 %v1798, %v1837
    %v1839 = vpop.f32.mrb[0].mxu0
    %v1840 = vpop.f32.mrb[0].mxu0
    %v1841 = vpop.f32.mrb[0].mxu0
    %1842 = vdwg.mxu0
    %1843 = vmatprep.subr.bf16.mxu0 0
    %1844 = vmatpush1.bf16.msra.mxu0 %v1323
    %1845 = vmatprep.subr.bf16.mxu0 0
    %1846 = vmatpush1.bf16.msra.mxu0 %v1324
    %1847 = vmatprep.subr.bf16.mxu0 0
    %1848 = vmatpush1.bf16.msra.mxu0 %v1325
    %1849 = vmatprep.subr.bf16.mxu0 0
    %1850 = vmatpush1.bf16.msra.mxu0 %v1326
    %1851 = vmatprep.subr.bf16.mxu0 0
    %1852 = vmatpush1.bf16.msra.mxu0 %v1327
    %1853 = vmatprep.subr.bf16.mxu0 0
    %1854 = vmatpush1.bf16.msra.mxu0 %v1328
    %1855 = vmatprep.subr.bf16.mxu0 0
    %1856 = vmatpush1.bf16.msra.mxu0 %v1329
    %1857 = vmatprep.subr.bf16.mxu0 0
    %1858 = vmatpush1.bf16.msra.mxu0 %v1330
    %1859 = vmatprep.subr.bf16.mxu0 0
    %1860 = vmatpush1.bf16.msra.mxu0 %v1331
    %1861 = vmatprep.subr.bf16.mxu0 0
    %1862 = vmatpush1.bf16.msra.mxu0 %v1332
    %1863 = vmatprep.subr.bf16.mxu0 0
    %1864 = vmatpush1.bf16.msra.mxu0 %v1333
    %1865 = vmatprep.subr.bf16.mxu0 0
    %1866 = vmatpush1.bf16.msra.mxu0 %v1334
    %1867 = vmatprep.subr.bf16.mxu0 0
    %1868 = vmatpush1.bf16.msra.mxu0 %v1335
    %1869 = vmatprep.subr.bf16.mxu0 0
    %1870 = vmatpush1.bf16.msra.mxu0 %v1336
    %1871 = vmatprep.subr.bf16.mxu0 0
    %1872 = vmatpush1.bf16.msra.mxu0 %v1337
    %1873 = vmatprep.subr.bf16.mxu0 0
    %1874 = vmatpush1.bf16.msra.mxu0 %v1338
    %1875 = vmatprep.mubr.bf16.mxu0 %v524
    %1876 = vmatmul.mubr.bf16.gmra.mrb[0].mxu0 %v510
    %v1877 = vpop.f32.mrb[0].mxu0
    %v1878 = vadd.f32 %v1838, %v1877
    %v1879 = vpop.f32.mrb[0].mxu0
    %v1880 = vpop.f32.mrb[0].mxu0
    %v1881 = vpop.f32.mrb[0].mxu0
    %1882 = vdwg.mxu0
    %1883 = vmatprep.subr.bf16.mxu0 0
    %1884 = vmatpush1.bf16.msra.mxu0 %v1339
    %1885 = vmatprep.subr.bf16.mxu0 0
    %1886 = vmatpush1.bf16.msra.mxu0 %v1340
    %1887 = vmatprep.subr.bf16.mxu0 0
    %1888 = vmatpush1.bf16.msra.mxu0 %v1341
    %1889 = vmatprep.subr.bf16.mxu0 0
    %1890 = vmatpush1.bf16.msra.mxu0 %v1342
    %1891 = vmatprep.subr.bf16.mxu0 0
    %1892 = vmatpush1.bf16.msra.mxu0 %v1343
    %1893 = vmatprep.subr.bf16.mxu0 0
    %1894 = vmatpush1.bf16.msra.mxu0 %v1344
    %1895 = vmatprep.subr.bf16.mxu0 0
    %1896 = vmatpush1.bf16.msra.mxu0 %v1345
    %1897 = vmatprep.subr.bf16.mxu0 0
    %1898 = vmatpush1.bf16.msra.mxu0 %v1346
    %1899 = vmatprep.subr.bf16.mxu0 0
    %1900 = vmatpush1.bf16.msra.mxu0 %v1347
    %1901 = vmatprep.subr.bf16.mxu0 0
    %1902 = vmatpush1.bf16.msra.mxu0 %v1348
    %1903 = vmatprep.subr.bf16.mxu0 0
    %1904 = vmatpush1.bf16.msra.mxu0 %v1349
    %1905 = vmatprep.subr.bf16.mxu0 0
    %1906 = vmatpush1.bf16.msra.mxu0 %v1350
    %1907 = vmatprep.subr.bf16.mxu0 0
    %1908 = vmatpush1.bf16.msra.mxu0 %v1351
    %1909 = vmatprep.subr.bf16.mxu0 0
    %1910 = vmatpush1.bf16.msra.mxu0 %v1352
    %1911 = vmatprep.subr.bf16.mxu0 0
    %1912 = vmatpush1.bf16.msra.mxu0 %v1353
    %1913 = vmatprep.subr.bf16.mxu0 0
    %1914 = vmatpush1.bf16.msra.mxu0 %v1354
    %1915 = vmatprep.mubr.bf16.mxu0 %v526
    %1916 = vmatmul.mubr.bf16.gmra.mrb[0].mxu0 %v525
    %v1917 = vpop.f32.mrb[0].mxu0
    %v1918 = vadd.f32 %v1878, %v1917
    %v1919 = vpop.f32.mrb[0].mxu0
    %v1920 = vpop.f32.mrb[0].mxu0
    %v1921 = vpop.f32.mrb[0].mxu0
    %1922 = vdwg.mxu0
    %1923 = vmatprep.subr.bf16.mxu0 0
    %1924 = vmatpush1.bf16.msra.mxu0 %v1355
    %1925 = vmatprep.subr.bf16.mxu0 0
    %1926 = vmatpush1.bf16.msra.mxu0 %v1356
    %1927 = vmatprep.subr.bf16.mxu0 0
    %1928 = vmatpush1.bf16.msra.mxu0 0
    %1929 = vmatprep.subr.bf16.mxu0 0
    %1930 = vmatpush1.bf16.msra.mxu0 0
    %1931 = vmatprep.subr.bf16.mxu0 0
    %1932 = vmatpush1.bf16.msra.mxu0 0
    %1933 = vmatprep.subr.bf16.mxu0 0
    %1934 = vmatpush1.bf16.msra.mxu0 0
    %1935 = vmatprep.subr.bf16.mxu0 0
    %1936 = vmatpush1.bf16.msra.mxu0 0
    %1937 = vmatprep.subr.bf16.mxu0 0
    %1938 = vmatpush1.bf16.msra.mxu0 0
    %1939 = vmatprep.subr.bf16.mxu0 0
    %1940 = vmatpush1.bf16.msra.mxu0 0
    %1941 = vmatprep.subr.bf16.mxu0 0
    %1942 = vmatpush1.bf16.msra.mxu0 0
    %1943 = vmatprep.subr.bf16.mxu0 0
    %1944 = vmatpush1.bf16.msra.mxu0 0
    %1945 = vmatprep.subr.bf16.mxu0 0
    %1946 = vmatpush1.bf16.msra.mxu0 0
    %1947 = vmatprep.subr.bf16.mxu0 0
    %1948 = vmatpush1.bf16.msra.mxu0 0
    %1949 = vmatprep.subr.bf16.mxu0 0
    %1950 = vmatpush1.bf16.msra.mxu0 0
    %1951 = vmatprep.subr.bf16.mxu0 0
    %1952 = vmatpush1.bf16.msra.mxu0 0
    %1953 = vmatprep.subr.bf16.mxu0 0
    %1954 = vmatpush1.bf16.msra.mxu0 0
    %1955 = vmatprep.mubr.bf16.mxu0 0
    %1956 = vmatmul.mubr.bf16.gmra.mrb[0].mxu0 %v1521
    %v1957 = vpop.f32.mrb[0].mxu0
    %v1958 = vadd.f32 %v1918, %v1957
    %v1959 = vpop.f32.mrb[0].mxu0
    %v1960 = vpop.f32.mrb[0].mxu0
    %v1961 = vpop.f32.mrb[0].mxu0
    %1962 = vdwg.mxu0
    %v1963 = vmax.f32 %v1958, 0.0
    %vm1964 = vcmask 516096
    %1965 = vst.msk [vmem:[%s14] sm:$0x1] %vm1964, %v1963
    %v1966 = vpack.c.bf16 %v1963, %v1963
    %v1967 = vld [vmem:[%s3] sm:$0xf]
    %v1968 = vld [vmem:[%s3 + $0x4] sm:$0xf]
    %v1969 = vld [vmem:[%s3 + $0x8] sm:$0xf]
    %v1970 = vld [vmem:[%s3 + $0xc] sm:$0xf]
    %v1971 = vld [vmem:[%s3 + $0x10] sm:$0xf]
    %v1972 = vld [vmem:[%s3 + $0x14] sm:$0xf]
    %v1973 = vld [vmem:[%s3 + $0x18] sm:$0xf]
    %v1974 = vld [vmem:[%s3 + $0x1c] sm:$0xf]
    %v1975 = vld [vmem:[%s4] sm:$0x1]
    %v1984 = vunpack.c.l.b16 %v1967
    %v1985 = vunpack.c.l.b16 %v1968
    %v1986 = vunpack.c.l.b16 %v1969
    %v1987 = vunpack.c.l.b16 %v1970
    %v1988 = vunpack.c.l.b16 %v1971
    %v1989 = vunpack.c.l.b16 %v1972
    %v1990 = vunpack.c.l.b16 %v1973
    %v1991 = vunpack.c.l.b16 %v1974
    %v1992 = vpack.c.b16 %v1985, %v1984
    %v1993 = vpack.c.b16 %v1987, %v1986
    %v1994 = vpack.c.b16 %v1989, %v1988
    %v1995 = vpack.c.b16 %v1991, %v1990
    %vm2000 = vcmask 523264
    %v2002 = vsel %vm2000, %v1966, 0
    %2004 = vmatprep.subr.bf16.mxu0 0
    %2005 = vmatpush1.bf16.msra.mxu0 %v1992
    %2006 = vmatprep.subr.bf16.mxu0 0
    %2007 = vmatpush1.bf16.msra.mxu0 %v1993
    %2008 = vmatprep.subr.bf16.mxu0 0
    %2009 = vmatpush1.bf16.msra.mxu0 %v1994
    %2010 = vmatprep.subr.bf16.mxu0 0
    %2011 = vmatpush1.bf16.msra.mxu0 %v1995
    %2012 = vmatprep.subr.bf16.mxu0 0
    %2013 = vmatpush1.bf16.msra.mxu0 0
    %2014 = vmatprep.subr.bf16.mxu0 0
    %2015 = vmatpush1.bf16.msra.mxu0 0
    %2016 = vmatprep.subr.bf16.mxu0 0
    %2017 = vmatpush1.bf16.msra.mxu0 0
    %2018 = vmatprep.subr.bf16.mxu0 0
    %2019 = vmatpush1.bf16.msra.mxu0 0
    %2020 = vmatprep.subr.bf16.mxu0 0
    %2021 = vmatpush1.bf16.msra.mxu0 0
    %2022 = vmatprep.subr.bf16.mxu0 0
    %2023 = vmatpush1.bf16.msra.mxu0 0
    %2024 = vmatprep.subr.bf16.mxu0 0
    %2025 = vmatpush1.bf16.msra.mxu0 0
    %2026 = vmatprep.subr.bf16.mxu0 0
    %2027 = vmatpush1.bf16.msra.mxu0 0
    %2028 = vmatprep.subr.bf16.mxu0 0
    %2029 = vmatpush1.bf16.msra.mxu0 0
    %2030 = vmatprep.subr.bf16.mxu0 0
    %2031 = vmatpush1.bf16.msra.mxu0 0
    %2032 = vmatprep.subr.bf16.mxu0 0
    %2033 = vmatpush1.bf16.msra.mxu0 0
    %2034 = vmatprep.subr.bf16.mxu0 0
    %2035 = vmatpush1.bf16.msra.mxu0 0
    %2036 = vmatprep.mubr.bf16.mxu0 0
    %2037 = vmatmul.mubr.bf16.gmra.mrb[0].mxu0 %v2002
    %v2038 = vpop.f32.mrb[0].mxu0
    %v2039 = vadd.f32 %v1975, %v2038
    %v2040 = vpop.f32.mrb[0].mxu0
    %v2041 = vpop.f32.mrb[0].mxu0
    %v2042 = vpop.f32.mrb[0].mxu0
    %2043 = vdwg.mxu0
    %v2044 = vmax.f32 %v2039, 0.0
    %2045 = vst.msk [vmem:[#allocation3] sm:$0x1] %vm1964, %v2044
    %v2046 = vpack.c.bf16 %v2044, %v2044
    %v2047 = vld [vmem:[%s5] sm:$0x1]
    %v2048 = vpack.c.bf16 %v2047, %v2047
    %v2049 = vld [vmem:[%s6] sm:$0x1]
    %v2050 = vld [vmem:[%s7] sm:$0xf]
    %v2051 = vld [vmem:[%s7 + $0x4] sm:$0xf]
    %v2052 = vld [vmem:[%s7 + $0x8] sm:$0xf]
    %v2053 = vld [vmem:[%s7 + $0xc] sm:$0xf]
    %v2054 = vld [vmem:[%s7 + $0x10] sm:$0xf]
    %v2055 = vld [vmem:[%s7 + $0x14] sm:$0xf]
    %v2056 = vld [vmem:[%s7 + $0x18] sm:$0xf]
    %v2057 = vld [vmem:[%s7 + $0x1c] sm:$0xf]
    %v2058 = vld [vmem:[%s8] sm:$0xf]
    %v2059 = vld [vmem:[%s8 + $0x4] sm:$0xf]
    %v2060 = vld [vmem:[%s8 + $0x8] sm:$0xf]
    %v2061 = vld [vmem:[%s8 + $0xc] sm:$0xf]
    %v2062 = vld [vmem:[%s8 + $0x10] sm:$0xf]
    %v2063 = vld [vmem:[%s8 + $0x14] sm:$0xf]
    %v2064 = vld [vmem:[%s8 + $0x18] sm:$0xf]
    %v2065 = vld [vmem:[%s8 + $0x1c] sm:$0xf]
    %v2074 = vunpack.c.l.b16 %v2058
    %v2075 = vunpack.c.l.b16 %v2059
    %v2076 = vunpack.c.l.b16 %v2060
    %v2077 = vunpack.c.l.b16 %v2061
    %v2078 = vunpack.c.l.b16 %v2062
    %v2079 = vunpack.c.l.b16 %v2063
    %v2080 = vunpack.c.l.b16 %v2064
    %v2081 = vunpack.c.l.b16 %v2065
    %v2082 = vpack.c.b16 %v2075, %v2074
    %v2083 = vpack.c.b16 %v2077, %v2076
    %v2084 = vpack.c.b16 %v2079, %v2078
    %v2085 = vpack.c.b16 %v2081, %v2080
    %v2091 = vsel %vm2000, %v2048, 0
    %2093 = vmatprep.subr.bf16.mxu0 0
    %2094 = vmatpush1.bf16.msra.mxu0 %v2082
    %2095 = vmatprep.subr.bf16.mxu0 0
    %2096 = vmatpush1.bf16.msra.mxu0 %v2083
    %2097 = vmatprep.subr.bf16.mxu0 0
    %2098 = vmatpush1.bf16.msra.mxu0 %v2084
    %2099 = vmatprep.subr.bf16.mxu0 0
    %2100 = vmatpush1.bf16.msra.mxu0 %v2085
    %2101 = vmatprep.subr.bf16.mxu0 0
    %2102 = vmatpush1.bf16.msra.mxu0 0
    %2103 = vmatprep.subr.bf16.mxu0 0
    %2104 = vmatpush1.bf16.msra.mxu0 0
    %2105 = vmatprep.subr.bf16.mxu0 0
    %2106 = vmatpush1.bf16.msra.mxu0 0
    %2107 = vmatprep.subr.bf16.mxu0 0
    %2108 = vmatpush1.bf16.msra.mxu0 0
    %2109 = vmatprep.subr.bf16.mxu0 0
    %2110 = vmatpush1.bf16.msra.mxu0 0
    %2111 = vmatprep.subr.bf16.mxu0 0
    %2112 = vmatpush1.bf16.msra.mxu0 0
    %2113 = vmatprep.subr.bf16.mxu0 0
    %2114 = vmatpush1.bf16.msra.mxu0 0
    %2115 = vmatprep.subr.bf16.mxu0 0
    %2116 = vmatpush1.bf16.msra.mxu0 0
    %2117 = vmatprep.subr.bf16.mxu0 0
    %2118 = vmatpush1.bf16.msra.mxu0 0
    %2119 = vmatprep.subr.bf16.mxu0 0
    %2120 = vmatpush1.bf16.msra.mxu0 0
    %2121 = vmatprep.subr.bf16.mxu0 0
    %2122 = vmatpush1.bf16.msra.mxu0 0
    %2123 = vmatprep.subr.bf16.mxu0 0
    %2124 = vmatpush1.bf16.msra.mxu0 0
    %2125 = vmatprep.mubr.bf16.mxu0 0
    %2126 = vmatmul.mubr.bf16.gmra.mrb[0].mxu0 %v2091
    %v2127 = vpop.f32.mrb[0].mxu0
    %v2128 = vadd.f32 0.0, %v2127
    %v2129 = vpop.f32.mrb[0].mxu0
    %v2130 = vpop.f32.mrb[0].mxu0
    %v2131 = vpop.f32.mrb[0].mxu0
    %2132 = vdwg.mxu0
    %v2141 = vunpack.c.l.b16 %v2050
    %v2142 = vunpack.c.l.b16 %v2051
    %v2143 = vunpack.c.l.b16 %v2052
    %v2144 = vunpack.c.l.b16 %v2053
    %v2145 = vunpack.c.l.b16 %v2054
    %v2146 = vunpack.c.l.b16 %v2055
    %v2147 = vunpack.c.l.b16 %v2056
    %v2148 = vunpack.c.l.b16 %v2057
    %v2149 = vpack.c.b16 %v2142, %v2141
    %v2150 = vpack.c.b16 %v2144, %v2143
    %v2151 = vpack.c.b16 %v2146, %v2145
    %v2152 = vpack.c.b16 %v2148, %v2147
    %v2158 = vsel %vm2000, %v2046, 0
    %2160 = vmatprep.subr.bf16.mxu0 0
    %2161 = vmatpush1.bf16.msra.mxu0 %v2149
    %2162 = vmatprep.subr.bf16.mxu0 0
    %2163 = vmatpush1.bf16.msra.mxu0 %v2150
    %2164 = vmatprep.subr.bf16.mxu0 0
    %2165 = vmatpush1.bf16.msra.mxu0 %v2151
    %2166 = vmatprep.subr.bf16.mxu0 0
    %2167 = vmatpush1.bf16.msra.mxu0 %v2152
    %2168 = vmatprep.subr.bf16.mxu0 0
    %2169 = vmatpush1.bf16.msra.mxu0 0
    %2170 = vmatprep.subr.bf16.mxu0 0
    %2171 = vmatpush1.bf16.msra.mxu0 0
    %2172 = vmatprep.subr.bf16.mxu0 0
    %2173 = vmatpush1.bf16.msra.mxu0 0
    %2174 = vmatprep.subr.bf16.mxu0 0
    %2175 = vmatpush1.bf16.msra.mxu0 0
    %2176 = vmatprep.subr.bf16.mxu0 0
    %2177 = vmatpush1.bf16.msra.mxu0 0
    %2178 = vmatprep.subr.bf16.mxu0 0
    %2179 = vmatpush1.bf16.msra.mxu0 0
    %2180 = vmatprep.subr.bf16.mxu0 0
    %2181 = vmatpush1.bf16.msra.mxu0 0
    %2182 = vmatprep.subr.bf16.mxu0 0
    %2183 = vmatpush1.bf16.msra.mxu0 0
    %2184 = vmatprep.subr.bf16.mxu0 0
    %2185 = vmatpush1.bf16.msra.mxu0 0
    %2186 = vmatprep.subr.bf16.mxu0 0
    %2187 = vmatpush1.bf16.msra.mxu0 0
    %2188 = vmatprep.subr.bf16.mxu0 0
    %2189 = vmatpush1.bf16.msra.mxu0 0
    %2190 = vmatprep.subr.bf16.mxu0 0
    %2191 = vmatpush1.bf16.msra.mxu0 0
    %2192 = vmatprep.mubr.bf16.mxu0 0
    %2193 = vmatmul.mubr.bf16.gmra.mrb[0].mxu0 %v2158
    %v2194 = vpop.f32.mrb[0].mxu0
    %v2195 = vadd.f32 %v2128, %v2194
    %v2196 = vpop.f32.mrb[0].mxu0
    %v2197 = vpop.f32.mrb[0].mxu0
    %v2198 = vpop.f32.mrb[0].mxu0
    %2199 = vdwg.mxu0
    %v2200 = vld [vmem:[%s9] sm:$0x1]
    %v2201 = vadd.f32 %v2195, %v2200
    %s2202 = scalar_lea.vmem %s7, 32
    %v2203 = vld [vmem:[%s2202] sm:$0xf]
    %v2204 = vld [vmem:[%s2202 + $0x4] sm:$0xf]
    %v2205 = vld [vmem:[%s2202 + $0x8] sm:$0xf]
    %v2206 = vld [vmem:[%s2202 + $0xc] sm:$0xf]
    %v2207 = vld [vmem:[%s2202 + $0x10] sm:$0xf]
    %v2208 = vld [vmem:[%s2202 + $0x14] sm:$0xf]
    %v2209 = vld [vmem:[%s2202 + $0x18] sm:$0xf]
    %v2210 = vld [vmem:[%s2202 + $0x1c] sm:$0xf]
    %s2211 = scalar_lea.vmem %s8, 32
    %v2212 = vld [vmem:[%s2211] sm:$0xf]
    %v2213 = vld [vmem:[%s2211 + $0x4] sm:$0xf]
    %v2214 = vld [vmem:[%s2211 + $0x8] sm:$0xf]
    %v2215 = vld [vmem:[%s2211 + $0xc] sm:$0xf]
    %v2216 = vld [vmem:[%s2211 + $0x10] sm:$0xf]
    %v2217 = vld [vmem:[%s2211 + $0x14] sm:$0xf]
    %v2218 = vld [vmem:[%s2211 + $0x18] sm:$0xf]
    %v2219 = vld [vmem:[%s2211 + $0x1c] sm:$0xf]
    %v2228 = vunpack.c.l.b16 %v2212
    %v2229 = vunpack.c.l.b16 %v2213
    %v2230 = vunpack.c.l.b16 %v2214
    %v2231 = vunpack.c.l.b16 %v2215
    %v2232 = vunpack.c.l.b16 %v2216
    %v2233 = vunpack.c.l.b16 %v2217
    %v2234 = vunpack.c.l.b16 %v2218
    %v2235 = vunpack.c.l.b16 %v2219
    %v2236 = vpack.c.b16 %v2229, %v2228
    %v2237 = vpack.c.b16 %v2231, %v2230
    %v2238 = vpack.c.b16 %v2233, %v2232
    %v2239 = vpack.c.b16 %v2235, %v2234
    %2244 = vmatprep.subr.bf16.mxu0 0
    %2245 = vmatpush1.bf16.msra.mxu0 %v2236
    %2246 = vmatprep.subr.bf16.mxu0 0
    %2247 = vmatpush1.bf16.msra.mxu0 %v2237
    %2248 = vmatprep.subr.bf16.mxu0 0
    %2249 = vmatpush1.bf16.msra.mxu0 %v2238
    %2250 = vmatprep.subr.bf16.mxu0 0
    %2251 = vmatpush1.bf16.msra.mxu0 %v2239
    %2252 = vmatprep.subr.bf16.mxu0 0
    %2253 = vmatpush1.bf16.msra.mxu0 0
    %2254 = vmatprep.subr.bf16.mxu0 0
    %2255 = vmatpush1.bf16.msra.mxu0 0
    %2256 = vmatprep.subr.bf16.mxu0 0
    %2257 = vmatpush1.bf16.msra.mxu0 0
    %2258 = vmatprep.subr.bf16.mxu0 0
    %2259 = vmatpush1.bf16.msra.mxu0 0
    %2260 = vmatprep.subr.bf16.mxu0 0
    %2261 = vmatpush1.bf16.msra.mxu0 0
    %2262 = vmatprep.subr.bf16.mxu0 0
    %2263 = vmatpush1.bf16.msra.mxu0 0
    %2264 = vmatprep.subr.bf16.mxu0 0
    %2265 = vmatpush1.bf16.msra.mxu0 0
    %2266 = vmatprep.subr.bf16.mxu0 0
    %2267 = vmatpush1.bf16.msra.mxu0 0
    %2268 = vmatprep.subr.bf16.mxu0 0
    %2269 = vmatpush1.bf16.msra.mxu0 0
    %2270 = vmatprep.subr.bf16.mxu0 0
    %2271 = vmatpush1.bf16.msra.mxu0 0
    %2272 = vmatprep.subr.bf16.mxu0 0
    %2273 = vmatpush1.bf16.msra.mxu0 0
    %2274 = vmatprep.subr.bf16.mxu0 0
    %2275 = vmatpush1.bf16.msra.mxu0 0
    %2276 = vmatprep.mubr.bf16.mxu0 0
    %2277 = vmatmul.mubr.bf16.gmra.mrb[0].mxu0 %v2091
    %v2278 = vpop.f32.mrb[0].mxu0
    %v2279 = vadd.f32 0.0, %v2278
    %v2280 = vpop.f32.mrb[0].mxu0
    %v2281 = vpop.f32.mrb[0].mxu0
    %v2282 = vpop.f32.mrb[0].mxu0
    %2283 = vdwg.mxu0
    %v2292 = vunpack.c.l.b16 %v2203
    %v2293 = vunpack.c.l.b16 %v2204
    %v2294 = vunpack.c.l.b16 %v2205
    %v2295 = vunpack.c.l.b16 %v2206
    %v2296 = vunpack.c.l.b16 %v2207
    %v2297 = vunpack.c.l.b16 %v2208
    %v2298 = vunpack.c.l.b16 %v2209
    %v2299 = vunpack.c.l.b16 %v2210
    %v2300 = vpack.c.b16 %v2293, %v2292
    %v2301 = vpack.c.b16 %v2295, %v2294
    %v2302 = vpack.c.b16 %v2297, %v2296
    %v2303 = vpack.c.b16 %v2299, %v2298
    %2308 = vmatprep.subr.bf16.mxu0 0
    %2309 = vmatpush1.bf16.msra.mxu0 %v2300
    %2310 = vmatprep.subr.bf16.mxu0 0
    %2311 = vmatpush1.bf16.msra.mxu0 %v2301
    %2312 = vmatprep.subr.bf16.mxu0 0
    %2313 = vmatpush1.bf16.msra.mxu0 %v2302
    %2314 = vmatprep.subr.bf16.mxu0 0
    %2315 = vmatpush1.bf16.msra.mxu0 %v2303
    %2316 = vmatprep.subr.bf16.mxu0 0
    %2317 = vmatpush1.bf16.msra.mxu0 0
    %2318 = vmatprep.subr.bf16.mxu0 0
    %2319 = vmatpush1.bf16.msra.mxu0 0
    %2320 = vmatprep.subr.bf16.mxu0 0
    %2321 = vmatpush1.bf16.msra.mxu0 0
    %2322 = vmatprep.subr.bf16.mxu0 0
    %2323 = vmatpush1.bf16.msra.mxu0 0
    %2324 = vmatprep.subr.bf16.mxu0 0
    %2325 = vmatpush1.bf16.msra.mxu0 0
    %2326 = vmatprep.subr.bf16.mxu0 0
    %2327 = vmatpush1.bf16.msra.mxu0 0
    %2328 = vmatprep.subr.bf16.mxu0 0
    %2329 = vmatpush1.bf16.msra.mxu0 0
    %2330 = vmatprep.subr.bf16.mxu0 0
    %2331 = vmatpush1.bf16.msra.mxu0 0
    %2332 = vmatprep.subr.bf16.mxu0 0
    %2333 = vmatpush1.bf16.msra.mxu0 0
    %2334 = vmatprep.subr.bf16.mxu0 0
    %2335 = vmatpush1.bf16.msra.mxu0 0
    %2336 = vmatprep.subr.bf16.mxu0 0
    %2337 = vmatpush1.bf16.msra.mxu0 0
    %2338 = vmatprep.subr.bf16.mxu0 0
    %2339 = vmatpush1.bf16.msra.mxu0 0
    %2340 = vmatprep.mubr.bf16.mxu0 0
    %2341 = vmatmul.mubr.bf16.gmra.mrb[0].mxu0 %v2158
    %v2342 = vpop.f32.mrb[0].mxu0
    %v2343 = vadd.f32 %v2279, %v2342
    %v2344 = vpop.f32.mrb[0].mxu0
    %v2345 = vpop.f32.mrb[0].mxu0
    %v2346 = vpop.f32.mrb[0].mxu0
    %2347 = vdwg.mxu0
    %s2348 = scalar_lea.vmem %s9, 1
    %v2349 = vld [vmem:[%s2348] sm:$0x1]
    %v2350 = vadd.f32 %v2343, %v2349
    %s2351 = scalar_lea.vmem %s7, 64
    %v2352 = vld [vmem:[%s2351] sm:$0xf]
    %v2353 = vld [vmem:[%s2351 + $0x4] sm:$0xf]
    %v2354 = vld [vmem:[%s2351 + $0x8] sm:$0xf]
    %v2355 = vld [vmem:[%s2351 + $0xc] sm:$0xf]
    %v2356 = vld [vmem:[%s2351 + $0x10] sm:$0xf]
    %v2357 = vld [vmem:[%s2351 + $0x14] sm:$0xf]
    %v2358 = vld [vmem:[%s2351 + $0x18] sm:$0xf]
    %v2359 = vld [vmem:[%s2351 + $0x1c] sm:$0xf]
    %s2360 = scalar_lea.vmem %s8, 64
    %v2361 = vld [vmem:[%s2360] sm:$0xf]
    %v2362 = vld [vmem:[%s2360 + $0x4] sm:$0xf]
    %v2363 = vld [vmem:[%s2360 + $0x8] sm:$0xf]
    %v2364 = vld [vmem:[%s2360 + $0xc] sm:$0xf]
    %v2365 = vld [vmem:[%s2360 + $0x10] sm:$0xf]
    %v2366 = vld [vmem:[%s2360 + $0x14] sm:$0xf]
    %v2367 = vld [vmem:[%s2360 + $0x18] sm:$0xf]
    %v2368 = vld [vmem:[%s2360 + $0x1c] sm:$0xf]
    %v2377 = vunpack.c.l.b16 %v2361
    %v2378 = vunpack.c.l.b16 %v2362
    %v2379 = vunpack.c.l.b16 %v2363
    %v2380 = vunpack.c.l.b16 %v2364
    %v2381 = vunpack.c.l.b16 %v2365
    %v2382 = vunpack.c.l.b16 %v2366
    %v2383 = vunpack.c.l.b16 %v2367
    %v2384 = vunpack.c.l.b16 %v2368
    %v2385 = vpack.c.b16 %v2378, %v2377
    %v2386 = vpack.c.b16 %v2380, %v2379
    %v2387 = vpack.c.b16 %v2382, %v2381
    %v2388 = vpack.c.b16 %v2384, %v2383
    %2393 = vmatprep.subr.bf16.mxu0 0
    %2394 = vmatpush1.bf16.msra.mxu0 %v2385
    %2395 = vmatprep.subr.bf16.mxu0 0
    %2396 = vmatpush1.bf16.msra.mxu0 %v2386
    %2397 = vmatprep.subr.bf16.mxu0 0
    %2398 = vmatpush1.bf16.msra.mxu0 %v2387
    %2399 = vmatprep.subr.bf16.mxu0 0
    %2400 = vmatpush1.bf16.msra.mxu0 %v2388
    %2401 = vmatprep.subr.bf16.mxu0 0
    %2402 = vmatpush1.bf16.msra.mxu0 0
    %2403 = vmatprep.subr.bf16.mxu0 0
    %2404 = vmatpush1.bf16.msra.mxu0 0
    %2405 = vmatprep.subr.bf16.mxu0 0
    %2406 = vmatpush1.bf16.msra.mxu0 0
    %2407 = vmatprep.subr.bf16.mxu0 0
    %2408 = vmatpush1.bf16.msra.mxu0 0
    %2409 = vmatprep.subr.bf16.mxu0 0
    %2410 = vmatpush1.bf16.msra.mxu0 0
    %2411 = vmatprep.subr.bf16.mxu0 0
    %2412 = vmatpush1.bf16.msra.mxu0 0
    %2413 = vmatprep.subr.bf16.mxu0 0
    %2414 = vmatpush1.bf16.msra.mxu0 0
    %2415 = vmatprep.subr.bf16.mxu0 0
    %2416 = vmatpush1.bf16.msra.mxu0 0
    %2417 = vmatprep.subr.bf16.mxu0 0
    %2418 = vmatpush1.bf16.msra.mxu0 0
    %2419 = vmatprep.subr.bf16.mxu0 0
    %2420 = vmatpush1.bf16.msra.mxu0 0
    %2421 = vmatprep.subr.bf16.mxu0 0
    %2422 = vmatpush1.bf16.msra.mxu0 0
    %2423 = vmatprep.subr.bf16.mxu0 0
    %2424 = vmatpush1.bf16.msra.mxu0 0
    %2425 = vmatprep.mubr.bf16.mxu0 0
    %2426 = vmatmul.mubr.bf16.gmra.mrb[0].mxu0 %v2091
    %v2427 = vpop.f32.mrb[0].mxu0
    %v2428 = vadd.f32 0.0, %v2427
    %v2429 = vpop.f32.mrb[0].mxu0
    %v2430 = vpop.f32.mrb[0].mxu0
    %v2431 = vpop.f32.mrb[0].mxu0
    %2432 = vdwg.mxu0
    %v2441 = vunpack.c.l.b16 %v2352
    %v2442 = vunpack.c.l.b16 %v2353
    %v2443 = vunpack.c.l.b16 %v2354
    %v2444 = vunpack.c.l.b16 %v2355
    %v2445 = vunpack.c.l.b16 %v2356
    %v2446 = vunpack.c.l.b16 %v2357
    %v2447 = vunpack.c.l.b16 %v2358
    %v2448 = vunpack.c.l.b16 %v2359
    %v2449 = vpack.c.b16 %v2442, %v2441
    %v2450 = vpack.c.b16 %v2444, %v2443
    %v2451 = vpack.c.b16 %v2446, %v2445
    %v2452 = vpack.c.b16 %v2448, %v2447
    %2457 = vmatprep.subr.bf16.mxu0 0
    %2458 = vmatpush1.bf16.msra.mxu0 %v2449
    %2459 = vmatprep.subr.bf16.mxu0 0
    %2460 = vmatpush1.bf16.msra.mxu0 %v2450
    %2461 = vmatprep.subr.bf16.mxu0 0
    %2462 = vmatpush1.bf16.msra.mxu0 %v2451
    %2463 = vmatprep.subr.bf16.mxu0 0
    %2464 = vmatpush1.bf16.msra.mxu0 %v2452
    %2465 = vmatprep.subr.bf16.mxu0 0
    %2466 = vmatpush1.bf16.msra.mxu0 0
    %2467 = vmatprep.subr.bf16.mxu0 0
    %2468 = vmatpush1.bf16.msra.mxu0 0
    %2469 = vmatprep.subr.bf16.mxu0 0
    %2470 = vmatpush1.bf16.msra.mxu0 0
    %2471 = vmatprep.subr.bf16.mxu0 0
    %2472 = vmatpush1.bf16.msra.mxu0 0
    %2473 = vmatprep.subr.bf16.mxu0 0
    %2474 = vmatpush1.bf16.msra.mxu0 0
    %2475 = vmatprep.subr.bf16.mxu0 0
    %2476 = vmatpush1.bf16.msra.mxu0 0
    %2477 = vmatprep.subr.bf16.mxu0 0
    %2478 = vmatpush1.bf16.msra.mxu0 0
    %2479 = vmatprep.subr.bf16.mxu0 0
    %2480 = vmatpush1.bf16.msra.mxu0 0
    %2481 = vmatprep.subr.bf16.mxu0 0
    %2482 = vmatpush1.bf16.msra.mxu0 0
    %2483 = vmatprep.subr.bf16.mxu0 0
    %2484 = vmatpush1.bf16.msra.mxu0 0
    %2485 = vmatprep.subr.bf16.mxu0 0
    %2486 = vmatpush1.bf16.msra.mxu0 0
    %2487 = vmatprep.subr.bf16.mxu0 0
    %2488 = vmatpush1.bf16.msra.mxu0 0
    %2489 = vmatprep.mubr.bf16.mxu0 0
    %2490 = vmatmul.mubr.bf16.gmra.mrb[0].mxu0 %v2158
    %v2491 = vpop.f32.mrb[0].mxu0
    %v2492 = vadd.f32 %v2428, %v2491
    %v2493 = vpop.f32.mrb[0].mxu0
    %v2494 = vpop.f32.mrb[0].mxu0
    %v2495 = vpop.f32.mrb[0].mxu0
    %2496 = vdwg.mxu0
    %s2497 = scalar_lea.vmem %s9, 2
    %v2498 = vld [vmem:[%s2497] sm:$0x1]
    %v2499 = vadd.f32 %v2492, %v2498
    %s2500 = scalar_lea.vmem %s7, 96
    %v2501 = vld [vmem:[%s2500] sm:$0xf]
    %v2502 = vld [vmem:[%s2500 + $0x4] sm:$0xf]
    %v2503 = vld [vmem:[%s2500 + $0x8] sm:$0xf]
    %v2504 = vld [vmem:[%s2500 + $0xc] sm:$0xf]
    %v2505 = vld [vmem:[%s2500 + $0x10] sm:$0xf]
    %v2506 = vld [vmem:[%s2500 + $0x14] sm:$0xf]
    %v2507 = vld [vmem:[%s2500 + $0x18] sm:$0xf]
    %v2508 = vld [vmem:[%s2500 + $0x1c] sm:$0xf]
    %s2509 = scalar_lea.vmem %s8, 96
    %v2510 = vld [vmem:[%s2509] sm:$0xf]
    %v2511 = vld [vmem:[%s2509 + $0x4] sm:$0xf]
    %v2512 = vld [vmem:[%s2509 + $0x8] sm:$0xf]
    %v2513 = vld [vmem:[%s2509 + $0xc] sm:$0xf]
    %v2514 = vld [vmem:[%s2509 + $0x10] sm:$0xf]
    %v2515 = vld [vmem:[%s2509 + $0x14] sm:$0xf]
    %v2516 = vld [vmem:[%s2509 + $0x18] sm:$0xf]
    %v2517 = vld [vmem:[%s2509 + $0x1c] sm:$0xf]
    %v2526 = vunpack.c.l.b16 %v2510
    %v2527 = vunpack.c.l.b16 %v2511
    %v2528 = vunpack.c.l.b16 %v2512
    %v2529 = vunpack.c.l.b16 %v2513
    %v2530 = vunpack.c.l.b16 %v2514
    %v2531 = vunpack.c.l.b16 %v2515
    %v2532 = vunpack.c.l.b16 %v2516
    %v2533 = vunpack.c.l.b16 %v2517
    %v2534 = vpack.c.b16 %v2527, %v2526
    %v2535 = vpack.c.b16 %v2529, %v2528
    %v2536 = vpack.c.b16 %v2531, %v2530
    %v2537 = vpack.c.b16 %v2533, %v2532
    %2542 = vmatprep.subr.bf16.mxu0 0
    %2543 = vmatpush1.bf16.msra.mxu0 %v2534
    %2544 = vmatprep.subr.bf16.mxu0 0
    %2545 = vmatpush1.bf16.msra.mxu0 %v2535
    %2546 = vmatprep.subr.bf16.mxu0 0
    %2547 = vmatpush1.bf16.msra.mxu0 %v2536
    %2548 = vmatprep.subr.bf16.mxu0 0
    %2549 = vmatpush1.bf16.msra.mxu0 %v2537
    %2550 = vmatprep.subr.bf16.mxu0 0
    %2551 = vmatpush1.bf16.msra.mxu0 0
    %2552 = vmatprep.subr.bf16.mxu0 0
    %2553 = vmatpush1.bf16.msra.mxu0 0
    %2554 = vmatprep.subr.bf16.mxu0 0
    %2555 = vmatpush1.bf16.msra.mxu0 0
    %2556 = vmatprep.subr.bf16.mxu0 0
    %2557 = vmatpush1.bf16.msra.mxu0 0
    %2558 = vmatprep.subr.bf16.mxu0 0
    %2559 = vmatpush1.bf16.msra.mxu0 0
    %2560 = vmatprep.subr.bf16.mxu0 0
    %2561 = vmatpush1.bf16.msra.mxu0 0
    %2562 = vmatprep.subr.bf16.mxu0 0
    %2563 = vmatpush1.bf16.msra.mxu0 0
    %2564 = vmatprep.subr.bf16.mxu0 0
    %2565 = vmatpush1.bf16.msra.mxu0 0
    %2566 = vmatprep.subr.bf16.mxu0 0
    %2567 = vmatpush1.bf16.msra.mxu0 0
    %2568 = vmatprep.subr.bf16.mxu0 0
    %2569 = vmatpush1.bf16.msra.mxu0 0
    %2570 = vmatprep.subr.bf16.mxu0 0
    %2571 = vmatpush1.bf16.msra.mxu0 0
    %2572 = vmatprep.subr.bf16.mxu0 0
    %2573 = vmatpush1.bf16.msra.mxu0 0
    %2574 = vmatprep.mubr.bf16.mxu0 0
    %2575 = vmatmul.mubr.bf16.gmra.mrb[0].mxu0 %v2091
    %v2576 = vpop.f32.mrb[0].mxu0
    %v2577 = vadd.f32 0.0, %v2576
    %v2578 = vpop.f32.mrb[0].mxu0
    %v2579 = vpop.f32.mrb[0].mxu0
    %v2580 = vpop.f32.mrb[0].mxu0
    %2581 = vdwg.mxu0
    %v2590 = vunpack.c.l.b16 %v2501
    %v2591 = vunpack.c.l.b16 %v2502
    %v2592 = vunpack.c.l.b16 %v2503
    %v2593 = vunpack.c.l.b16 %v2504
    %v2594 = vunpack.c.l.b16 %v2505
    %v2595 = vunpack.c.l.b16 %v2506
    %v2596 = vunpack.c.l.b16 %v2507
    %v2597 = vunpack.c.l.b16 %v2508
    %v2598 = vpack.c.b16 %v2591, %v2590
    %v2599 = vpack.c.b16 %v2593, %v2592
    %v2600 = vpack.c.b16 %v2595, %v2594
    %v2601 = vpack.c.b16 %v2597, %v2596
    %2606 = vmatprep.subr.bf16.mxu0 0
    %2607 = vmatpush1.bf16.msra.mxu0 %v2598
    %2608 = vmatprep.subr.bf16.mxu0 0
    %2609 = vmatpush1.bf16.msra.mxu0 %v2599
    %2610 = vmatprep.subr.bf16.mxu0 0
    %2611 = vmatpush1.bf16.msra.mxu0 %v2600
    %2612 = vmatprep.subr.bf16.mxu0 0
    %2613 = vmatpush1.bf16.msra.mxu0 %v2601
    %2614 = vmatprep.subr.bf16.mxu0 0
    %2615 = vmatpush1.bf16.msra.mxu0 0
    %2616 = vmatprep.subr.bf16.mxu0 0
    %2617 = vmatpush1.bf16.msra.mxu0 0
    %2618 = vmatprep.subr.bf16.mxu0 0
    %2619 = vmatpush1.bf16.msra.mxu0 0
    %2620 = vmatprep.subr.bf16.mxu0 0
    %2621 = vmatpush1.bf16.msra.mxu0 0
    %2622 = vmatprep.subr.bf16.mxu0 0
    %2623 = vmatpush1.bf16.msra.mxu0 0
    %2624 = vmatprep.subr.bf16.mxu0 0
    %2625 = vmatpush1.bf16.msra.mxu0 0
    %2626 = vmatprep.subr.bf16.mxu0 0
    %2627 = vmatpush1.bf16.msra.mxu0 0
    %2628 = vmatprep.subr.bf16.mxu0 0
    %2629 = vmatpush1.bf16.msra.mxu0 0
    %2630 = vmatprep.subr.bf16.mxu0 0
    %2631 = vmatpush1.bf16.msra.mxu0 0
    %2632 = vmatprep.subr.bf16.mxu0 0
    %2633 = vmatpush1.bf16.msra.mxu0 0
    %2634 = vmatprep.subr.bf16.mxu0 0
    %2635 = vmatpush1.bf16.msra.mxu0 0
    %2636 = vmatprep.subr.bf16.mxu0 0
    %2637 = vmatpush1.bf16.msra.mxu0 0
    %2638 = vmatprep.mubr.bf16.mxu0 0
    %2639 = vmatmul.mubr.bf16.gmra.mrb[0].mxu0 %v2158
    %v2640 = vpop.f32.mrb[0].mxu0
    %v2641 = vadd.f32 %v2577, %v2640
    %v2642 = vpop.f32.mrb[0].mxu0
    %v2643 = vpop.f32.mrb[0].mxu0
    %v2644 = vpop.f32.mrb[0].mxu0
    %2645 = vdwg.mxu0
    %s2646 = scalar_lea.vmem %s9, 3
    %v2647 = vld [vmem:[%s2646] sm:$0x1]
    %v2648 = vadd.f32 %v2641, %v2647
    %v2649 = vxor.u32 %v2201, 2147483648
    %v2650 = vmul.f32 %v2649, 1.442695
    %v2651 = vpow.pop %v2650
    %v2652 = vadd.f32 %v2651, 1.0
    %v2653 = vrcp.pop %v2652
    %v2654 = vmul.f32 1.0, %v2653
    %v2655 = vxor.u32 %v2350, 2147483648
    %v2656 = vmul.f32 %v2655, 1.442695
    %v2657 = vpow.pop %v2656
    %v2658 = vadd.f32 %v2657, 1.0
    %v2659 = vrcp.pop %v2658
    %v2660 = vmul.f32 1.0, %v2659
    %v2661 = vtanh.pop %v2499
    %v2662 = vxor.u32 %v2648, 2147483648
    %v2663 = vmul.f32 %v2662, 1.442695
    %v2664 = vpow.pop %v2663
    %v2665 = vadd.f32 %v2664, 1.0
    %v2666 = vrcp.pop %v2665
    %v2667 = vmul.f32 1.0, %v2666
    %v2668 = vmul.f32 %v2660, %v2049
    %v2669 = vmul.f32 %v2654, %v2661
    %v2670 = vadd.f32 %v2668, %v2669
    %v2671 = vtanh.pop %v2670
    %v2672 = vmul.f32 %v2667, %v2671
    %2673 = vst.msk [vmem:[#allocation5] sm:$0x1] %vm1964, %v2672
    %2674 = vst.msk [vmem:[#allocation7] sm:$0x1] %vm1964, %v2670
    %v2675 = vpack.c.bf16 %v2672, %v2672
    %v2676 = vld [vmem:[%s10] sm:$0xf]
    %v2677 = vld [vmem:[%s10 + $0x4] sm:$0xf]
    %v2678 = vld [vmem:[%s10 + $0x8] sm:$0xf]
    %v2679 = vld [vmem:[%s10 + $0xc] sm:$0xf]
    %v2680 = vld [vmem:[%s10 + $0x10] sm:$0xf]
    %v2681 = vld [vmem:[%s10 + $0x14] sm:$0xf]
    %v2682 = vld [vmem:[%s10 + $0x18] sm:$0xf]
    %v2683 = vld [vmem:[%s10 + $0x1c] sm:$0xf]
    %v2684 = vld [vmem:[%s11] sm:$0x1]
    %v2693 = vunpack.c.l.b16 %v2676
    %v2694 = vunpack.c.l.b16 %v2677
    %v2695 = vunpack.c.l.b16 %v2678
    %v2696 = vunpack.c.l.b16 %v2679
    %v2697 = vunpack.c.l.b16 %v2680
    %v2698 = vunpack.c.l.b16 %v2681
    %v2699 = vunpack.c.l.b16 %v2682
    %v2700 = vunpack.c.l.b16 %v2683
    %v2701 = vpack.c.b16 %v2694, %v2693
    %v2702 = vpack.c.b16 %v2696, %v2695
    %v2703 = vpack.c.b16 %v2698, %v2697
    %v2704 = vpack.c.b16 %v2700, %v2699
    %v2710 = vsel %vm2000, %v2675, 0
    %2712 = vmatprep.subr.bf16.mxu0 0
    %2713 = vmatpush1.bf16.msra.mxu0 %v2701
    %2714 = vmatprep.subr.bf16.mxu0 0
    %2715 = vmatpush1.bf16.msra.mxu0 %v2702
    %2716 = vmatprep.subr.bf16.mxu0 0
    %2717 = vmatpush1.bf16.msra.mxu0 %v2703
    %2718 = vmatprep.subr.bf16.mxu0 0
    %2719 = vmatpush1.bf16.msra.mxu0 %v2704
    %2720 = vmatprep.subr.bf16.mxu0 0
    %2721 = vmatpush1.bf16.msra.mxu0 0
    %2722 = vmatprep.subr.bf16.mxu0 0
    %2723 = vmatpush1.bf16.msra.mxu0 0
    %2724 = vmatprep.subr.bf16.mxu0 0
    %2725 = vmatpush1.bf16.msra.mxu0 0
    %2726 = vmatprep.subr.bf16.mxu0 0
    %2727 = vmatpush1.bf16.msra.mxu0 0
    %2728 = vmatprep.subr.bf16.mxu0 0
    %2729 = vmatpush1.bf16.msra.mxu0 0
    %2730 = vmatprep.subr.bf16.mxu0 0
    %2731 = vmatpush1.bf16.msra.mxu0 0
    %2732 = vmatprep.subr.bf16.mxu0 0
    %2733 = vmatpush1.bf16.msra.mxu0 0
    %2734 = vmatprep.subr.bf16.mxu0 0
    %2735 = vmatpush1.bf16.msra.mxu0 0
    %2736 = vmatprep.subr.bf16.mxu0 0
    %2737 = vmatpush1.bf16.msra.mxu0 0
    %2738 = vmatprep.subr.bf16.mxu0 0
    %2739 = vmatpush1.bf16.msra.mxu0 0
    %2740 = vmatprep.subr.bf16.mxu0 0
    %2741 = vmatpush1.bf16.msra.mxu0 0
    %2742 = vmatprep.subr.bf16.mxu0 0
    %2743 = vmatpush1.bf16.msra.mxu0 0
    %2744 = vmatprep.mubr.bf16.mxu0 0
    %2745 = vmatmul.mubr.bf16.gmra.mrb[0].mxu0 %v2710
    %v2746 = vpop.f32.mrb[0].mxu0
    %v2747 = vadd.f32 %v2684, %v2746
    %v2748 = vpop.f32.mrb[0].mxu0
    %v2749 = vpop.f32.mrb[0].mxu0
    %v2750 = vpop.f32.mrb[0].mxu0
    %2751 = vdwg.mxu0
    %v2752 = vmax.f32 %v2747, 0.0
    %v2753 = vld [vmem:[%s12] sm:$0x1]
    %v2754 = vmul.f32 %v2752, %v2753
    %vm2755 = vcmask 401408
    %v2756 = vsel %vm2755, %v2754, 0.0
    %2757 = vadd.xlane.f32.xlu0 %v2756
    %v2758 = vpop.xlane.xlu0 %2757
    %v2759 = vld [vmem:[#allocation2] sm:$0x1]
    %v2760 = vadd.f32 %v2758, %v2759
    %vm2761 = vcmask 0
    %2762 = vst.msk [vmem:[#allocation8] sm:$0x1] %vm2761, %v2760
    %v2763 = vmul.f32 %v2672, %v2672
    %v2764 = vsel %vm1964, %v2763, 0.0
    %2765 = vadd.xlane.f32.xlu0 %v2764
    %v2766 = vpop.xlane.xlu0 %2765
    %v2767 = vadd.f32 %v2766, 1e-12
    %v2768 = vrsqrt.pop %v2767
    %v2769 = vmul.f32 %v2672, %v2768
    %2770 = vst.msk [vmem:[%s16] sm:$0x1] %vm1964, %v2769
    // Predicated region
    $region58: #{fun_forward.4} parent=1 // pred_check
      _
    $region59: #{fun_forward.4} parent=1 // pred_check_branch
      %2772 = sbr.rel (0) target = $region61
    $region60: #{fun_forward.4} parent=1 // pred_region
      _
    $region61: #{fun_forward.4} parent=1 // pred_fallthru
      _
    // Predicated region
    $region62: #{fun_forward.4} parent=1 // pred_check
      _
    $region63: #{fun_forward.4} parent=1 // pred_check_branch
      %2774 = sbr.rel (0) target = $region65
    $region64: #{fun_forward.4} parent=1 // pred_region
      %s2776 = ssub.s32 16, 16
      %2777 = vsyncadd [#allocation4], %s2776
      %s2779 = sshll.u32 [#allocation3], 4
      %s2780 = int_to_ptr.vmem [resolvable:$true] %s2779
      %2782 = dma.vmem_to_hbm [thread:$0]  %s2780, 16, %s15, [#allocation4]
    $region65: #{fun_forward.4} parent=1 // pred_fallthru
      _
    // Predicated region
    $region66: #{fun_forward.4} parent=1 // pred_check
      _
    $region67: #{fun_forward.4} parent=1 // pred_check_branch
      %2784 = sbr.rel (0) target = $region69
    $region68: #{fun_forward.4} parent=1 // pred_region
      _
    $region69: #{fun_forward.4} parent=1 // pred_fallthru
      _
    // Predicated region
    $region70: #{fun_forward.4} parent=1 // pred_check
      _
    $region71: #{fun_forward.4} parent=1 // pred_check_branch
      %2786 = sbr.rel (0) target = $region73
    $region72: #{fun_forward.4} parent=1 // pred_region
      %s2788 = ssub.s32 16, 16
      %2789 = vsyncadd [#allocation6], %s2788
      %s2791 = sshll.u32 [#allocation5], 4
      %s2792 = int_to_ptr.vmem [resolvable:$true] %s2791
      %2794 = dma.vmem_to_hbm [thread:$0]  %s2792, 16, %s17, [#allocation6]
    $region73: #{fun_forward.4} parent=1 // pred_fallthru
      _
    // Predicated region
    $region74: #{fun_forward.4} parent=1 // pred_check
      _
    $region75: #{fun_forward.4} parent=1 // pred_check_branch
      %2796 = sbr.rel (0) target = $region77
    $region76: #{fun_forward.4} parent=1 // pred_region
      %s2798 = ssub.s32 16, 16
      %2799 = vsyncadd [#allocation6], %s2798
      %s2801 = sshll.u32 [#allocation7], 4
      %s2802 = int_to_ptr.vmem [resolvable:$true] %s2801
      %2804 = dma.vmem_to_hbm [thread:$0]  %s2802, 16, %s18, [#allocation6]
    $region77: #{fun_forward.4} parent=1 // pred_fallthru
      _
    // Predicated region
    $region78: #{fun_forward.4} parent=1 // pred_check
      _
    $region79: #{fun_forward.4} parent=1 // pred_check_branch
      %2806 = sbr.rel (0) target = $region81
    $region80: #{fun_forward.4} parent=1 // pred_region
      %s2808 = ssub.s32 16, 16
      %2809 = vsyncadd [#allocation9], %s2808
      %s2811 = sshll.u32 [#allocation8], 4
      %s2812 = int_to_ptr.vmem [resolvable:$true] %s2811
      %2814 = dma.vmem_to_hbm [thread:$0]  %s2812, 16, %s19, [#allocation9]
    $region81: #{fun_forward.4} parent=1 // pred_fallthru
      _
    // Predicated region
    $region82: #{fun_forward.4} parent=1 // pred_check
      _
    $region83: #{fun_forward.4} parent=1 // pred_check_branch
      %2816 = sbr.rel (0) target = $region85
    $region84: #{fun_forward.4} parent=1 // pred_region
      _
    $region85: #{fun_forward.4} parent=1 // pred_fallthru
      _
    // Predicated region
    $region86: #{fun_forward.4} parent=1 // pred_check
      _
    $region87: #{fun_forward.4} parent=1 // pred_check_branch
      %2818 = sbr.rel (0) target = $region89
    $region88: #{fun_forward.4} parent=1 // pred_region
      %2819 = dma.done [#allocation4], 16
    $region89: #{fun_forward.4} parent=1 // pred_fallthru
      _
    // Predicated region
    $region90: #{fun_forward.4} parent=1 // pred_check
      _
    $region91: #{fun_forward.4} parent=1 // pred_check_branch
      %2821 = sbr.rel (0) target = $region93
    $region92: #{fun_forward.4} parent=1 // pred_region
      _
    $region93: #{fun_forward.4} parent=1 // pred_fallthru
      _
    // Predicated region
    $region94: #{fun_forward.4} parent=1 // pred_check
      _
    $region95: #{fun_forward.4} parent=1 // pred_check_branch
      %2823 = sbr.rel (0) target = $region97
    $region96: #{fun_forward.4} parent=1 // pred_region
      %2824 = dma.done [#allocation6], 16
    $region97: #{fun_forward.4} parent=1 // pred_fallthru
      _
    // Predicated region
    $region98: #{fun_forward.4} parent=1 // pred_check
      _
    $region99: #{fun_forward.4} parent=1 // pred_check_branch
      %2826 = sbr.rel (0) target = $region101
    $region100: #{fun_forward.4} parent=1 // pred_region
      %2827 = dma.done [#allocation6], 16
    $region101: #{fun_forward.4} parent=1 // pred_fallthru
      _
    // Predicated region
    $region102: #{fun_forward.4} parent=1 // pred_check
      _
    $region103: #{fun_forward.4} parent=1 // pred_check_branch
      %2829 = sbr.rel (0) target = $region105
    $region104: #{fun_forward.4} parent=1 // pred_region
      %2830 = dma.done [#allocation9], 16
    $region105: #{fun_forward.4} parent=1 // pred_fallthru
      _
    %2831 = vsyncpa [#allocation4], 1
    %2832 = vsyncpa [#allocation6], 1
    %2833 = vsyncpa [#allocation9], 1

// kernel: fun_forward.5
$region0: #{fun_forward.5}
  #allocation0 [shape = 'u32[]', space=smem, size = 0x4, offset = 0x4, fixed_abs, tag = 'smem constant byte address 0x4 - core index']
  #allocation1 [shape = 'u32[144,128]{1,0:T(1,128)}', space=vmem, size = 0x12000, scoped, tag = 'internal scratch']
  #allocation2 [shape = 'f32[1,1]{1,0:T(1,128)S(1)}', space=vmem, size = 0x200, scoped, tag = 'scoped memory for fun_forward.5']
  %s0 = inlined_call_operand.vmem [shape: f32[1,64], index: 0, kind: input, shape index: {}]
  %s1 = inlined_call_operand.vmem [shape: f32[1,64], index: 1, kind: input, shape index: {}]
  %s2 = inlined_call_operand.vmem [shape: f32[1,64], index: 2, kind: input, shape index: {}]
  %s3 = inlined_call_operand.vmem [shape: bf16[4,64,64], index: 3, kind: input, shape index: {}]
  %s4 = inlined_call_operand.vmem [shape: bf16[4,64,64], index: 4, kind: input, shape index: {}]
  %s5 = inlined_call_operand.vmem [shape: f32[4,1,64], index: 5, kind: input, shape index: {}]
  %s6 = inlined_call_operand.vmem [shape: bf16[64,50], index: 6, kind: input, shape index: {}]
  %s7 = inlined_call_operand.vmem [shape: f32[1,50], index: 7, kind: input, shape index: {}]
  %s8 = inlined_call_operand.vmem [shape: f32[1,50], index: 8, kind: input, shape index: {}]
  %s9 = inlined_call_operand.<no memory space> [shape: f32[1,1], index: 9, kind: input, shape index: {}]
  %s10 = inlined_call_operand.vmem [shape: f32[1,64], index: 10, kind: input, shape index: {}]
  %s11 = inlined_call_operand.vmem [shape: f32[3,64], index: 11, kind: input, shape index: {}]
  %s12 = inlined_call_operand.vmem [shape: f32[3,3], index: 12, kind: input, shape index: {}]
  %s13 = inlined_call_operand.vmem [shape: f32[3,1], index: 13, kind: input, shape index: {}]
  %s14 = inlined_call_operand.vmem [shape: bf16[64,16], index: 14, kind: input, shape index: {}]
  %s15 = inlined_call_operand.vmem [shape: f32[1,16], index: 15, kind: input, shape index: {}]
  %s16 = inlined_call_operand.vmem [shape: f32[16,64], index: 16, kind: input, shape index: {}]
  %s17 = inlined_call_operand.vmem [shape: f32[64,4], index: 17, kind: input, shape index: {}]
  %s18 = inlined_call_operand.hbm [shape: f32[1,4], index: 18, kind: output, shape index: {0}]
  %s19 = inlined_call_operand.hbm [shape: f32[1,64], index: 19, kind: output, shape index: {1}]
  %s20 = inlined_call_operand.hbm [shape: f32[1,64], index: 20, kind: output, shape index: {2}]
  %s21 = inlined_call_operand.hbm [shape: f32[1,1], index: 21, kind: output, shape index: {3}]
  %s22 = inlined_call_operand.vmem [shape: f32[3,64], index: 22, kind: output, shape index: {4}]
  %23 = xla_tuple %s18, %s19, %s20, %s21, %s22
  %s24 = sld [smem:[#allocation0]]
  $region114: #{fun_forward.5} parent=0
    _
  %s26 = ssub.s32 1, %s24
  %s27 = scalar_select 0, %s26, %s24
  %v28 = vstv %s9
  %29 = vst [vmem:[#allocation2] sm:$0x1] %v28
  $region1: #{fun_forward.5} parent=0
    #allocation3 [shape = 'u8[512]{0}', space=vmem, size = 0x400, scoped, tag = 'output window, operand 0, single buffered']
    #allocation4 [shape = 's32[1]{0}', space=sflag, size = 0x4, scoped, tag = 'scoped memory for fun_forward.5']
    #allocation5 [shape = 'u8[512]{0}', space=vmem, size = 0x400, scoped, tag = 'output window, operand 1, single buffered']
    #allocation6 [shape = 's32[1]{0}', space=sflag, size = 0x4, scoped, tag = 'scoped memory for fun_forward.5']
    #allocation7 [shape = 'u8[512]{0}', space=vmem, size = 0x400, scoped, tag = 'output window, operand 2, single buffered']
    #allocation8 [shape = 'u8[512]{0}', space=vmem, size = 0x400, scoped, tag = 'output window, operand 3, single buffered']
    #allocation9 [shape = 's32[1]{0}', space=sflag, size = 0x4, scoped, tag = 'scoped memory for fun_forward.5']
    %30 = vsyncpa [#allocation4], 0
    %31 = vsyncpa [#allocation6], 0
    %32 = vsyncpa [#allocation9], 0
    // Predicated region
    $region2: #{fun_forward.5} parent=1 // pred_check
      _
    $region3: #{fun_forward.5} parent=1 // pred_check_branch
      %34 = sbr.rel (0) target = $region5
    $region4: #{fun_forward.5} parent=1 // pred_region
      _
    $region5: #{fun_forward.5} parent=1 // pred_fallthru
      _
    // Predicated region
    $region6: #{fun_forward.5} parent=1 // pred_check
      _
    $region7: #{fun_forward.5} parent=1 // pred_check_branch
      %36 = sbr.rel (0) target = $region9
    $region8: #{fun_forward.5} parent=1 // pred_region
      _
    $region9: #{fun_forward.5} parent=1 // pred_fallthru
      _
    // Predicated region
    $region10: #{fun_forward.5} parent=1 // pred_check
      _
    $region11: #{fun_forward.5} parent=1 // pred_check_branch
      %38 = sbr.rel (0) target = $region13
    $region12: #{fun_forward.5} parent=1 // pred_region
      _
    $region13: #{fun_forward.5} parent=1 // pred_fallthru
      _
    // Predicated region
    $region14: #{fun_forward.5} parent=1 // pred_check
      _
    $region15: #{fun_forward.5} parent=1 // pred_check_branch
      %40 = sbr.rel (0) target = $region17
    $region16: #{fun_forward.5} parent=1 // pred_region
      _
    $region17: #{fun_forward.5} parent=1 // pred_fallthru
      _
    // Predicated region
    $region18: #{fun_forward.5} parent=1 // pred_check
      _
    $region19: #{fun_forward.5} parent=1 // pred_check_branch
      %42 = sbr.rel (0) target = $region21
    $region20: #{fun_forward.5} parent=1 // pred_region
      _
    $region21: #{fun_forward.5} parent=1 // pred_fallthru
      _
    // Predicated region
    $region22: #{fun_forward.5} parent=1 // pred_check
      _
    $region23: #{fun_forward.5} parent=1 // pred_check_branch
      %44 = sbr.rel (0) target = $region25
    $region24: #{fun_forward.5} parent=1 // pred_region
      _
    $region25: #{fun_forward.5} parent=1 // pred_fallthru
      _
    // Predicated region
    $region26: #{fun_forward.5} parent=1 // pred_check
      _
    $region27: #{fun_forward.5} parent=1 // pred_check_branch
      %46 = sbr.rel (0) target = $region29
    $region28: #{fun_forward.5} parent=1 // pred_region
      _
    $region29: #{fun_forward.5} parent=1 // pred_fallthru
      _
    // Predicated region
    $region30: #{fun_forward.5} parent=1 // pred_check
      _
    $region31: #{fun_forward.5} parent=1 // pred_check_branch
      %48 = sbr.rel (0) target = $region33
    $region32: #{fun_forward.5} parent=1 // pred_region
      _
    $region33: #{fun_forward.5} parent=1 // pred_fallthru
      _
    // Predicated region
    $region34: #{fun_forward.5} parent=1 // pred_check
      _
    $region35: #{fun_forward.5} parent=1 // pred_check_branch
      %50 = sbr.rel (0) target = $region37
    $region36: #{fun_forward.5} parent=1 // pred_region
      _
    $region37: #{fun_forward.5} parent=1 // pred_fallthru
      _
    // Predicated region
    $region38: #{fun_forward.5} parent=1 // pred_check
      _
    $region39: #{fun_forward.5} parent=1 // pred_check_branch
      %52 = sbr.rel (0) target = $region41
    $region40: #{fun_forward.5} parent=1 // pred_region
      _
    $region41: #{fun_forward.5} parent=1 // pred_fallthru
      _
    // Predicated region
    $region42: #{fun_forward.5} parent=1 // pred_check
      _
    $region43: #{fun_forward.5} parent=1 // pred_check_branch
      %54 = sbr.rel (0) target = $region45
    $region44: #{fun_forward.5} parent=1 // pred_region
      _
    $region45: #{fun_forward.5} parent=1 // pred_fallthru
      _
    // Predicated region
    $region46: #{fun_forward.5} parent=1 // pred_check
      _
    $region47: #{fun_forward.5} parent=1 // pred_check_branch
      %56 = sbr.rel (0) target = $region49
    $region48: #{fun_forward.5} parent=1 // pred_region
      _
    $region49: #{fun_forward.5} parent=1 // pred_fallthru
      _
    // Predicated region
    $region50: #{fun_forward.5} parent=1 // pred_check
      _
    $region51: #{fun_forward.5} parent=1 // pred_check_branch
      %58 = sbr.rel (0) target = $region53
    $region52: #{fun_forward.5} parent=1 // pred_region
      _
    $region53: #{fun_forward.5} parent=1 // pred_fallthru
      _
    // Predicated region
    $region54: #{fun_forward.5} parent=1 // pred_check
      _
    $region55: #{fun_forward.5} parent=1 // pred_check_branch
      %60 = sbr.rel (0) target = $region57
    $region56: #{fun_forward.5} parent=1 // pred_region
      _
    $region57: #{fun_forward.5} parent=1 // pred_fallthru
      _
    // Predicated region
    $region58: #{fun_forward.5} parent=1 // pred_check
      _
    $region59: #{fun_forward.5} parent=1 // pred_check_branch
      %62 = sbr.rel (0) target = $region61
    $region60: #{fun_forward.5} parent=1 // pred_region
      _
    $region61: #{fun_forward.5} parent=1 // pred_fallthru
      _
    // Predicated region
    $region62: #{fun_forward.5} parent=1 // pred_check
      _
    $region63: #{fun_forward.5} parent=1 // pred_check_branch
      %64 = sbr.rel (0) target = $region65
    $region64: #{fun_forward.5} parent=1 // pred_region
      _
    $region65: #{fun_forward.5} parent=1 // pred_fallthru
      _
    // Predicated region
    $region66: #{fun_forward.5} parent=1 // pred_check
      _
    $region67: #{fun_forward.5} parent=1 // pred_check_branch
      %66 = sbr.rel (0) target = $region69
    $region68: #{fun_forward.5} parent=1 // pred_region
      _
    $region69: #{fun_forward.5} parent=1 // pred_fallthru
      _
    // Predicated region
    $region70: #{fun_forward.5} parent=1 // pred_check
      _
    $region71: #{fun_forward.5} parent=1 // pred_check_branch
      %68 = sbr.rel (0) target = $region73
    $region72: #{fun_forward.5} parent=1 // pred_region
      _
    $region73: #{fun_forward.5} parent=1 // pred_fallthru
      _
    %v70 = vld [vmem:[%s0] sm:$0x1]
    %v71 = vpack.c.bf16 %v70, %v70
    %v72 = vld [vmem:[%s1] sm:$0x1]
    %v73 = vpack.c.bf16 %v72, %v72
    %v74 = vld [vmem:[%s2] sm:$0x1]
    %v75 = vld [vmem:[%s3] sm:$0xf]
    %v76 = vld [vmem:[%s3 + $0x4] sm:$0xf]
    %v77 = vld [vmem:[%s3 + $0x8] sm:$0xf]
    %v78 = vld [vmem:[%s3 + $0xc] sm:$0xf]
    %v79 = vld [vmem:[%s3 + $0x10] sm:$0xf]
    %v80 = vld [vmem:[%s3 + $0x14] sm:$0xf]
    %v81 = vld [vmem:[%s3 + $0x18] sm:$0xf]
    %v82 = vld [vmem:[%s3 + $0x1c] sm:$0xf]
    %v83 = vld [vmem:[%s4] sm:$0xf]
    %v84 = vld [vmem:[%s4 + $0x4] sm:$0xf]
    %v85 = vld [vmem:[%s4 + $0x8] sm:$0xf]
    %v86 = vld [vmem:[%s4 + $0xc] sm:$0xf]
    %v87 = vld [vmem:[%s4 + $0x10] sm:$0xf]
    %v88 = vld [vmem:[%s4 + $0x14] sm:$0xf]
    %v89 = vld [vmem:[%s4 + $0x18] sm:$0xf]
    %v90 = vld [vmem:[%s4 + $0x1c] sm:$0xf]
    %v99 = vunpack.c.l.b16 %v83
    %v100 = vunpack.c.l.b16 %v84
    %v101 = vunpack.c.l.b16 %v85
    %v102 = vunpack.c.l.b16 %v86
    %v103 = vunpack.c.l.b16 %v87
    %v104 = vunpack.c.l.b16 %v88
    %v105 = vunpack.c.l.b16 %v89
    %v106 = vunpack.c.l.b16 %v90
    %v107 = vpack.c.b16 %v100, %v99
    %v108 = vpack.c.b16 %v102, %v101
    %v109 = vpack.c.b16 %v104, %v103
    %v110 = vpack.c.b16 %v106, %v105
    %vm115 = vcmask 523264
    %v117 = vsel %vm115, %v73, 0
    %119 = vmatprep.subr.bf16.mxu0 0
    %120 = vmatpush1.bf16.msra.mxu0 %v107
    %121 = vmatprep.subr.bf16.mxu0 0
    %122 = vmatpush1.bf16.msra.mxu0 %v108
    %123 = vmatprep.subr.bf16.mxu0 0
    %124 = vmatpush1.bf16.msra.mxu0 %v109
    %125 = vmatprep.subr.bf16.mxu0 0
    %126 = vmatpush1.bf16.msra.mxu0 %v110
    %127 = vmatprep.subr.bf16.mxu0 0
    %128 = vmatpush1.bf16.msra.mxu0 0
    %129 = vmatprep.subr.bf16.mxu0 0
    %130 = vmatpush1.bf16.msra.mxu0 0
    %131 = vmatprep.subr.bf16.mxu0 0
    %132 = vmatpush1.bf16.msra.mxu0 0
    %133 = vmatprep.subr.bf16.mxu0 0
    %134 = vmatpush1.bf16.msra.mxu0 0
    %135 = vmatprep.subr.bf16.mxu0 0
    %136 = vmatpush1.bf16.msra.mxu0 0
    %137 = vmatprep.subr.bf16.mxu0 0
    %138 = vmatpush1.bf16.msra.mxu0 0
    %139 = vmatprep.subr.bf16.mxu0 0
    %140 = vmatpush1.bf16.msra.mxu0 0
    %141 = vmatprep.subr.bf16.mxu0 0
    %142 = vmatpush1.bf16.msra.mxu0 0
    %143 = vmatprep.subr.bf16.mxu0 0
    %144 = vmatpush1.bf16.msra.mxu0 0
    %145 = vmatprep.subr.bf16.mxu0 0
    %146 = vmatpush1.bf16.msra.mxu0 0
    %147 = vmatprep.subr.bf16.mxu0 0
    %148 = vmatpush1.bf16.msra.mxu0 0
    %149 = vmatprep.subr.bf16.mxu0 0
    %150 = vmatpush1.bf16.msra.mxu0 0
    %151 = vmatprep.mubr.bf16.mxu0 0
    %152 = vmatmul.mubr.bf16.gmra.mrb[0].mxu0 %v117
    %v153 = vpop.f32.mrb[0].mxu0
    %v154 = vadd.f32 0.0, %v153
    %v155 = vpop.f32.mrb[0].mxu0
    %v156 = vpop.f32.mrb[0].mxu0
    %v157 = vpop.f32.mrb[0].mxu0
    %158 = vdwg.mxu0
    %v167 = vunpack.c.l.b16 %v75
    %v168 = vunpack.c.l.b16 %v76
    %v169 = vunpack.c.l.b16 %v77
    %v170 = vunpack.c.l.b16 %v78
    %v171 = vunpack.c.l.b16 %v79
    %v172 = vunpack.c.l.b16 %v80
    %v173 = vunpack.c.l.b16 %v81
    %v174 = vunpack.c.l.b16 %v82
    %v175 = vpack.c.b16 %v168, %v167
    %v176 = vpack.c.b16 %v170, %v169
    %v177 = vpack.c.b16 %v172, %v171
    %v178 = vpack.c.b16 %v174, %v173
    %v184 = vsel %vm115, %v71, 0
    %186 = vmatprep.subr.bf16.mxu0 0
    %187 = vmatpush1.bf16.msra.mxu0 %v175
    %188 = vmatprep.subr.bf16.mxu0 0
    %189 = vmatpush1.bf16.msra.mxu0 %v176
    %190 = vmatprep.subr.bf16.mxu0 0
    %191 = vmatpush1.bf16.msra.mxu0 %v177
    %192 = vmatprep.subr.bf16.mxu0 0
    %193 = vmatpush1.bf16.msra.mxu0 %v178
    %194 = vmatprep.subr.bf16.mxu0 0
    %195 = vmatpush1.bf16.msra.mxu0 0
    %196 = vmatprep.subr.bf16.mxu0 0
    %197 = vmatpush1.bf16.msra.mxu0 0
    %198 = vmatprep.subr.bf16.mxu0 0
    %199 = vmatpush1.bf16.msra.mxu0 0
    %200 = vmatprep.subr.bf16.mxu0 0
    %201 = vmatpush1.bf16.msra.mxu0 0
    %202 = vmatprep.subr.bf16.mxu0 0
    %203 = vmatpush1.bf16.msra.mxu0 0
    %204 = vmatprep.subr.bf16.mxu0 0
    %205 = vmatpush1.bf16.msra.mxu0 0
    %206 = vmatprep.subr.bf16.mxu0 0
    %207 = vmatpush1.bf16.msra.mxu0 0
    %208 = vmatprep.subr.bf16.mxu0 0
    %209 = vmatpush1.bf16.msra.mxu0 0
    %210 = vmatprep.subr.bf16.mxu0 0
    %211 = vmatpush1.bf16.msra.mxu0 0
    %212 = vmatprep.subr.bf16.mxu0 0
    %213 = vmatpush1.bf16.msra.mxu0 0
    %214 = vmatprep.subr.bf16.mxu0 0
    %215 = vmatpush1.bf16.msra.mxu0 0
    %216 = vmatprep.subr.bf16.mxu0 0
    %217 = vmatpush1.bf16.msra.mxu0 0
    %218 = vmatprep.mubr.bf16.mxu0 0
    %219 = vmatmul.mubr.bf16.gmra.mrb[0].mxu0 %v184
    %v220 = vpop.f32.mrb[0].mxu0
    %v221 = vadd.f32 %v154, %v220
    %v222 = vpop.f32.mrb[0].mxu0
    %v223 = vpop.f32.mrb[0].mxu0
    %v224 = vpop.f32.mrb[0].mxu0
    %225 = vdwg.mxu0
    %v226 = vld [vmem:[%s5] sm:$0x1]
    %v227 = vadd.f32 %v221, %v226
    %s228 = scalar_lea.vmem %s3, 32
    %v229 = vld [vmem:[%s228] sm:$0xf]
    %v230 = vld [vmem:[%s228 + $0x4] sm:$0xf]
    %v231 = vld [vmem:[%s228 + $0x8] sm:$0xf]
    %v232 = vld [vmem:[%s228 + $0xc] sm:$0xf]
    %v233 = vld [vmem:[%s228 + $0x10] sm:$0xf]
    %v234 = vld [vmem:[%s228 + $0x14] sm:$0xf]
    %v235 = vld [vmem:[%s228 + $0x18] sm:$0xf]
    %v236 = vld [vmem:[%s228 + $0x1c] sm:$0xf]
    %s237 = scalar_lea.vmem %s4, 32
    %v238 = vld [vmem:[%s237] sm:$0xf]
    %v239 = vld [vmem:[%s237 + $0x4] sm:$0xf]
    %v240 = vld [vmem:[%s237 + $0x8] sm:$0xf]
    %v241 = vld [vmem:[%s237 + $0xc] sm:$0xf]
    %v242 = vld [vmem:[%s237 + $0x10] sm:$0xf]
    %v243 = vld [vmem:[%s237 + $0x14] sm:$0xf]
    %v244 = vld [vmem:[%s237 + $0x18] sm:$0xf]
    %v245 = vld [vmem:[%s237 + $0x1c] sm:$0xf]
    %v254 = vunpack.c.l.b16 %v238
    %v255 = vunpack.c.l.b16 %v239
    %v256 = vunpack.c.l.b16 %v240
    %v257 = vunpack.c.l.b16 %v241
    %v258 = vunpack.c.l.b16 %v242
    %v259 = vunpack.c.l.b16 %v243
    %v260 = vunpack.c.l.b16 %v244
    %v261 = vunpack.c.l.b16 %v245
    %v262 = vpack.c.b16 %v255, %v254
    %v263 = vpack.c.b16 %v257, %v256
    %v264 = vpack.c.b16 %v259, %v258
    %v265 = vpack.c.b16 %v261, %v260
    %270 = vmatprep.subr.bf16.mxu0 0
    %271 = vmatpush1.bf16.msra.mxu0 %v262
    %272 = vmatprep.subr.bf16.mxu0 0
    %273 = vmatpush1.bf16.msra.mxu0 %v263
    %274 = vmatprep.subr.bf16.mxu0 0
    %275 = vmatpush1.bf16.msra.mxu0 %v264
    %276 = vmatprep.subr.bf16.mxu0 0
    %277 = vmatpush1.bf16.msra.mxu0 %v265
    %278 = vmatprep.subr.bf16.mxu0 0
    %279 = vmatpush1.bf16.msra.mxu0 0
    %280 = vmatprep.subr.bf16.mxu0 0
    %281 = vmatpush1.bf16.msra.mxu0 0
    %282 = vmatprep.subr.bf16.mxu0 0
    %283 = vmatpush1.bf16.msra.mxu0 0
    %284 = vmatprep.subr.bf16.mxu0 0
    %285 = vmatpush1.bf16.msra.mxu0 0
    %286 = vmatprep.subr.bf16.mxu0 0
    %287 = vmatpush1.bf16.msra.mxu0 0
    %288 = vmatprep.subr.bf16.mxu0 0
    %289 = vmatpush1.bf16.msra.mxu0 0
    %290 = vmatprep.subr.bf16.mxu0 0
    %291 = vmatpush1.bf16.msra.mxu0 0
    %292 = vmatprep.subr.bf16.mxu0 0
    %293 = vmatpush1.bf16.msra.mxu0 0
    %294 = vmatprep.subr.bf16.mxu0 0
    %295 = vmatpush1.bf16.msra.mxu0 0
    %296 = vmatprep.subr.bf16.mxu0 0
    %297 = vmatpush1.bf16.msra.mxu0 0
    %298 = vmatprep.subr.bf16.mxu0 0
    %299 = vmatpush1.bf16.msra.mxu0 0
    %300 = vmatprep.subr.bf16.mxu0 0
    %301 = vmatpush1.bf16.msra.mxu0 0
    %302 = vmatprep.mubr.bf16.mxu0 0
    %303 = vmatmul.mubr.bf16.gmra.mrb[0].mxu0 %v117
    %v304 = vpop.f32.mrb[0].mxu0
    %v305 = vadd.f32 0.0, %v304
    %v306 = vpop.f32.mrb[0].mxu0
    %v307 = vpop.f32.mrb[0].mxu0
    %v308 = vpop.f32.mrb[0].mxu0
    %309 = vdwg.mxu0
    %v318 = vunpack.c.l.b16 %v229
    %v319 = vunpack.c.l.b16 %v230
    %v320 = vunpack.c.l.b16 %v231
    %v321 = vunpack.c.l.b16 %v232
    %v322 = vunpack.c.l.b16 %v233
    %v323 = vunpack.c.l.b16 %v234
    %v324 = vunpack.c.l.b16 %v235
    %v325 = vunpack.c.l.b16 %v236
    %v326 = vpack.c.b16 %v319, %v318
    %v327 = vpack.c.b16 %v321, %v320
    %v328 = vpack.c.b16 %v323, %v322
    %v329 = vpack.c.b16 %v325, %v324
    %334 = vmatprep.subr.bf16.mxu0 0
    %335 = vmatpush1.bf16.msra.mxu0 %v326
    %336 = vmatprep.subr.bf16.mxu0 0
    %337 = vmatpush1.bf16.msra.mxu0 %v327
    %338 = vmatprep.subr.bf16.mxu0 0
    %339 = vmatpush1.bf16.msra.mxu0 %v328
    %340 = vmatprep.subr.bf16.mxu0 0
    %341 = vmatpush1.bf16.msra.mxu0 %v329
    %342 = vmatprep.subr.bf16.mxu0 0
    %343 = vmatpush1.bf16.msra.mxu0 0
    %344 = vmatprep.subr.bf16.mxu0 0
    %345 = vmatpush1.bf16.msra.mxu0 0
    %346 = vmatprep.subr.bf16.mxu0 0
    %347 = vmatpush1.bf16.msra.mxu0 0
    %348 = vmatprep.subr.bf16.mxu0 0
    %349 = vmatpush1.bf16.msra.mxu0 0
    %350 = vmatprep.subr.bf16.mxu0 0
    %351 = vmatpush1.bf16.msra.mxu0 0
    %352 = vmatprep.subr.bf16.mxu0 0
    %353 = vmatpush1.bf16.msra.mxu0 0
    %354 = vmatprep.subr.bf16.mxu0 0
    %355 = vmatpush1.bf16.msra.mxu0 0
    %356 = vmatprep.subr.bf16.mxu0 0
    %357 = vmatpush1.bf16.msra.mxu0 0
    %358 = vmatprep.subr.bf16.mxu0 0
    %359 = vmatpush1.bf16.msra.mxu0 0
    %360 = vmatprep.subr.bf16.mxu0 0
    %361 = vmatpush1.bf16.msra.mxu0 0
    %362 = vmatprep.subr.bf16.mxu0 0
    %363 = vmatpush1.bf16.msra.mxu0 0
    %364 = vmatprep.subr.bf16.mxu0 0
    %365 = vmatpush1.bf16.msra.mxu0 0
    %366 = vmatprep.mubr.bf16.mxu0 0
    %367 = vmatmul.mubr.bf16.gmra.mrb[0].mxu0 %v184
    %v368 = vpop.f32.mrb[0].mxu0
    %v369 = vadd.f32 %v305, %v368
    %v370 = vpop.f32.mrb[0].mxu0
    %v371 = vpop.f32.mrb[0].mxu0
    %v372 = vpop.f32.mrb[0].mxu0
    %373 = vdwg.mxu0
    %s374 = scalar_lea.vmem %s5, 1
    %v375 = vld [vmem:[%s374] sm:$0x1]
    %v376 = vadd.f32 %v369, %v375
    %s377 = scalar_lea.vmem %s3, 64
    %v378 = vld [vmem:[%s377] sm:$0xf]
    %v379 = vld [vmem:[%s377 + $0x4] sm:$0xf]
    %v380 = vld [vmem:[%s377 + $0x8] sm:$0xf]
    %v381 = vld [vmem:[%s377 + $0xc] sm:$0xf]
    %v382 = vld [vmem:[%s377 + $0x10] sm:$0xf]
    %v383 = vld [vmem:[%s377 + $0x14] sm:$0xf]
    %v384 = vld [vmem:[%s377 + $0x18] sm:$0xf]
    %v385 = vld [vmem:[%s377 + $0x1c] sm:$0xf]
    %s386 = scalar_lea.vmem %s4, 64
    %v387 = vld [vmem:[%s386] sm:$0xf]
    %v388 = vld [vmem:[%s386 + $0x4] sm:$0xf]
    %v389 = vld [vmem:[%s386 + $0x8] sm:$0xf]
    %v390 = vld [vmem:[%s386 + $0xc] sm:$0xf]
    %v391 = vld [vmem:[%s386 + $0x10] sm:$0xf]
    %v392 = vld [vmem:[%s386 + $0x14] sm:$0xf]
    %v393 = vld [vmem:[%s386 + $0x18] sm:$0xf]
    %v394 = vld [vmem:[%s386 + $0x1c] sm:$0xf]
    %v403 = vunpack.c.l.b16 %v387
    %v404 = vunpack.c.l.b16 %v388
    %v405 = vunpack.c.l.b16 %v389
    %v406 = vunpack.c.l.b16 %v390
    %v407 = vunpack.c.l.b16 %v391
    %v408 = vunpack.c.l.b16 %v392
    %v409 = vunpack.c.l.b16 %v393
    %v410 = vunpack.c.l.b16 %v394
    %v411 = vpack.c.b16 %v404, %v403
    %v412 = vpack.c.b16 %v406, %v405
    %v413 = vpack.c.b16 %v408, %v407
    %v414 = vpack.c.b16 %v410, %v409
    %419 = vmatprep.subr.bf16.mxu0 0
    %420 = vmatpush1.bf16.msra.mxu0 %v411
    %421 = vmatprep.subr.bf16.mxu0 0
    %422 = vmatpush1.bf16.msra.mxu0 %v412
    %423 = vmatprep.subr.bf16.mxu0 0
    %424 = vmatpush1.bf16.msra.mxu0 %v413
    %425 = vmatprep.subr.bf16.mxu0 0
    %426 = vmatpush1.bf16.msra.mxu0 %v414
    %427 = vmatprep.subr.bf16.mxu0 0
    %428 = vmatpush1.bf16.msra.mxu0 0
    %429 = vmatprep.subr.bf16.mxu0 0
    %430 = vmatpush1.bf16.msra.mxu0 0
    %431 = vmatprep.subr.bf16.mxu0 0
    %432 = vmatpush1.bf16.msra.mxu0 0
    %433 = vmatprep.subr.bf16.mxu0 0
    %434 = vmatpush1.bf16.msra.mxu0 0
    %435 = vmatprep.subr.bf16.mxu0 0
    %436 = vmatpush1.bf16.msra.mxu0 0
    %437 = vmatprep.subr.bf16.mxu0 0
    %438 = vmatpush1.bf16.msra.mxu0 0
    %439 = vmatprep.subr.bf16.mxu0 0
    %440 = vmatpush1.bf16.msra.mxu0 0
    %441 = vmatprep.subr.bf16.mxu0 0
    %442 = vmatpush1.bf16.msra.mxu0 0
    %443 = vmatprep.subr.bf16.mxu0 0
    %444 = vmatpush1.bf16.msra.mxu0 0
    %445 = vmatprep.subr.bf16.mxu0 0
    %446 = vmatpush1.bf16.msra.mxu0 0
    %447 = vmatprep.subr.bf16.mxu0 0
    %448 = vmatpush1.bf16.msra.mxu0 0
    %449 = vmatprep.subr.bf16.mxu0 0
    %450 = vmatpush1.bf16.msra.mxu0 0
    %451 = vmatprep.mubr.bf16.mxu0 0
    %452 = vmatmul.mubr.bf16.gmra.mrb[0].mxu0 %v117
    %v453 = vpop.f32.mrb[0].mxu0
    %v454 = vadd.f32 0.0, %v453
    %v455 = vpop.f32.mrb[0].mxu0
    %v456 = vpop.f32.mrb[0].mxu0
    %v457 = vpop.f32.mrb[0].mxu0
    %458 = vdwg.mxu0
    %v467 = vunpack.c.l.b16 %v378
    %v468 = vunpack.c.l.b16 %v379
    %v469 = vunpack.c.l.b16 %v380
    %v470 = vunpack.c.l.b16 %v381
    %v471 = vunpack.c.l.b16 %v382
    %v472 = vunpack.c.l.b16 %v383
    %v473 = vunpack.c.l.b16 %v384
    %v474 = vunpack.c.l.b16 %v385
    %v475 = vpack.c.b16 %v468, %v467
    %v476 = vpack.c.b16 %v470, %v469
    %v477 = vpack.c.b16 %v472, %v471
    %v478 = vpack.c.b16 %v474, %v473
    %483 = vmatprep.subr.bf16.mxu0 0
    %484 = vmatpush1.bf16.msra.mxu0 %v475
    %485 = vmatprep.subr.bf16.mxu0 0
    %486 = vmatpush1.bf16.msra.mxu0 %v476
    %487 = vmatprep.subr.bf16.mxu0 0
    %488 = vmatpush1.bf16.msra.mxu0 %v477
    %489 = vmatprep.subr.bf16.mxu0 0
    %490 = vmatpush1.bf16.msra.mxu0 %v478
    %491 = vmatprep.subr.bf16.mxu0 0
    %492 = vmatpush1.bf16.msra.mxu0 0
    %493 = vmatprep.subr.bf16.mxu0 0
    %494 = vmatpush1.bf16.msra.mxu0 0
    %495 = vmatprep.subr.bf16.mxu0 0
    %496 = vmatpush1.bf16.msra.mxu0 0
    %497 = vmatprep.subr.bf16.mxu0 0
    %498 = vmatpush1.bf16.msra.mxu0 0
    %499 = vmatprep.subr.bf16.mxu0 0
    %500 = vmatpush1.bf16.msra.mxu0 0
    %501 = vmatprep.subr.bf16.mxu0 0
    %502 = vmatpush1.bf16.msra.mxu0 0
    %503 = vmatprep.subr.bf16.mxu0 0
    %504 = vmatpush1.bf16.msra.mxu0 0
    %505 = vmatprep.subr.bf16.mxu0 0
    %506 = vmatpush1.bf16.msra.mxu0 0
    %507 = vmatprep.subr.bf16.mxu0 0
    %508 = vmatpush1.bf16.msra.mxu0 0
    %509 = vmatprep.subr.bf16.mxu0 0
    %510 = vmatpush1.bf16.msra.mxu0 0
    %511 = vmatprep.subr.bf16.mxu0 0
    %512 = vmatpush1.bf16.msra.mxu0 0
    %513 = vmatprep.subr.bf16.mxu0 0
    %514 = vmatpush1.bf16.msra.mxu0 0
    %515 = vmatprep.mubr.bf16.mxu0 0
    %516 = vmatmul.mubr.bf16.gmra.mrb[0].mxu0 %v184
    %v517 = vpop.f32.mrb[0].mxu0
    %v518 = vadd.f32 %v454, %v517
    %v519 = vpop.f32.mrb[0].mxu0
    %v520 = vpop.f32.mrb[0].mxu0
    %v521 = vpop.f32.mrb[0].mxu0
    %522 = vdwg.mxu0
    %s523 = scalar_lea.vmem %s5, 2
    %v524 = vld [vmem:[%s523] sm:$0x1]
    %v525 = vadd.f32 %v518, %v524
    %s526 = scalar_lea.vmem %s3, 96
    %v527 = vld [vmem:[%s526] sm:$0xf]
    %v528 = vld [vmem:[%s526 + $0x4] sm:$0xf]
    %v529 = vld [vmem:[%s526 + $0x8] sm:$0xf]
    %v530 = vld [vmem:[%s526 + $0xc] sm:$0xf]
    %v531 = vld [vmem:[%s526 + $0x10] sm:$0xf]
    %v532 = vld [vmem:[%s526 + $0x14] sm:$0xf]
    %v533 = vld [vmem:[%s526 + $0x18] sm:$0xf]
    %v534 = vld [vmem:[%s526 + $0x1c] sm:$0xf]
    %s535 = scalar_lea.vmem %s4, 96
    %v536 = vld [vmem:[%s535] sm:$0xf]
    %v537 = vld [vmem:[%s535 + $0x4] sm:$0xf]
    %v538 = vld [vmem:[%s535 + $0x8] sm:$0xf]
    %v539 = vld [vmem:[%s535 + $0xc] sm:$0xf]
    %v540 = vld [vmem:[%s535 + $0x10] sm:$0xf]
    %v541 = vld [vmem:[%s535 + $0x14] sm:$0xf]
    %v542 = vld [vmem:[%s535 + $0x18] sm:$0xf]
    %v543 = vld [vmem:[%s535 + $0x1c] sm:$0xf]
    %v552 = vunpack.c.l.b16 %v536
    %v553 = vunpack.c.l.b16 %v537
    %v554 = vunpack.c.l.b16 %v538
    %v555 = vunpack.c.l.b16 %v539
    %v556 = vunpack.c.l.b16 %v540
    %v557 = vunpack.c.l.b16 %v541
    %v558 = vunpack.c.l.b16 %v542
    %v559 = vunpack.c.l.b16 %v543
    %v560 = vpack.c.b16 %v553, %v552
    %v561 = vpack.c.b16 %v555, %v554
    %v562 = vpack.c.b16 %v557, %v556
    %v563 = vpack.c.b16 %v559, %v558
    %568 = vmatprep.subr.bf16.mxu0 0
    %569 = vmatpush1.bf16.msra.mxu0 %v560
    %570 = vmatprep.subr.bf16.mxu0 0
    %571 = vmatpush1.bf16.msra.mxu0 %v561
    %572 = vmatprep.subr.bf16.mxu0 0
    %573 = vmatpush1.bf16.msra.mxu0 %v562
    %574 = vmatprep.subr.bf16.mxu0 0
    %575 = vmatpush1.bf16.msra.mxu0 %v563
    %576 = vmatprep.subr.bf16.mxu0 0
    %577 = vmatpush1.bf16.msra.mxu0 0
    %578 = vmatprep.subr.bf16.mxu0 0
    %579 = vmatpush1.bf16.msra.mxu0 0
    %580 = vmatprep.subr.bf16.mxu0 0
    %581 = vmatpush1.bf16.msra.mxu0 0
    %582 = vmatprep.subr.bf16.mxu0 0
    %583 = vmatpush1.bf16.msra.mxu0 0
    %584 = vmatprep.subr.bf16.mxu0 0
    %585 = vmatpush1.bf16.msra.mxu0 0
    %586 = vmatprep.subr.bf16.mxu0 0
    %587 = vmatpush1.bf16.msra.mxu0 0
    %588 = vmatprep.subr.bf16.mxu0 0
    %589 = vmatpush1.bf16.msra.mxu0 0
    %590 = vmatprep.subr.bf16.mxu0 0
    %591 = vmatpush1.bf16.msra.mxu0 0
    %592 = vmatprep.subr.bf16.mxu0 0
    %593 = vmatpush1.bf16.msra.mxu0 0
    %594 = vmatprep.subr.bf16.mxu0 0
    %595 = vmatpush1.bf16.msra.mxu0 0
    %596 = vmatprep.subr.bf16.mxu0 0
    %597 = vmatpush1.bf16.msra.mxu0 0
    %598 = vmatprep.subr.bf16.mxu0 0
    %599 = vmatpush1.bf16.msra.mxu0 0
    %600 = vmatprep.mubr.bf16.mxu0 0
    %601 = vmatmul.mubr.bf16.gmra.mrb[0].mxu0 %v117
    %v602 = vpop.f32.mrb[0].mxu0
    %v603 = vadd.f32 0.0, %v602
    %v604 = vpop.f32.mrb[0].mxu0
    %v605 = vpop.f32.mrb[0].mxu0
    %v606 = vpop.f32.mrb[0].mxu0
    %607 = vdwg.mxu0
    %v616 = vunpack.c.l.b16 %v527
    %v617 = vunpack.c.l.b16 %v528
    %v618 = vunpack.c.l.b16 %v529
    %v619 = vunpack.c.l.b16 %v530
    %v620 = vunpack.c.l.b16 %v531
    %v621 = vunpack.c.l.b16 %v532
    %v622 = vunpack.c.l.b16 %v533
    %v623 = vunpack.c.l.b16 %v534
    %v624 = vpack.c.b16 %v617, %v616
    %v625 = vpack.c.b16 %v619, %v618
    %v626 = vpack.c.b16 %v621, %v620
    %v627 = vpack.c.b16 %v623, %v622
    %632 = vmatprep.subr.bf16.mxu0 0
    %633 = vmatpush1.bf16.msra.mxu0 %v624
    %634 = vmatprep.subr.bf16.mxu0 0
    %635 = vmatpush1.bf16.msra.mxu0 %v625
    %636 = vmatprep.subr.bf16.mxu0 0
    %637 = vmatpush1.bf16.msra.mxu0 %v626
    %638 = vmatprep.subr.bf16.mxu0 0
    %639 = vmatpush1.bf16.msra.mxu0 %v627
    %640 = vmatprep.subr.bf16.mxu0 0
    %641 = vmatpush1.bf16.msra.mxu0 0
    %642 = vmatprep.subr.bf16.mxu0 0
    %643 = vmatpush1.bf16.msra.mxu0 0
    %644 = vmatprep.subr.bf16.mxu0 0
    %645 = vmatpush1.bf16.msra.mxu0 0
    %646 = vmatprep.subr.bf16.mxu0 0
    %647 = vmatpush1.bf16.msra.mxu0 0
    %648 = vmatprep.subr.bf16.mxu0 0
    %649 = vmatpush1.bf16.msra.mxu0 0
    %650 = vmatprep.subr.bf16.mxu0 0
    %651 = vmatpush1.bf16.msra.mxu0 0
    %652 = vmatprep.subr.bf16.mxu0 0
    %653 = vmatpush1.bf16.msra.mxu0 0
    %654 = vmatprep.subr.bf16.mxu0 0
    %655 = vmatpush1.bf16.msra.mxu0 0
    %656 = vmatprep.subr.bf16.mxu0 0
    %657 = vmatpush1.bf16.msra.mxu0 0
    %658 = vmatprep.subr.bf16.mxu0 0
    %659 = vmatpush1.bf16.msra.mxu0 0
    %660 = vmatprep.subr.bf16.mxu0 0
    %661 = vmatpush1.bf16.msra.mxu0 0
    %662 = vmatprep.subr.bf16.mxu0 0
    %663 = vmatpush1.bf16.msra.mxu0 0
    %664 = vmatprep.mubr.bf16.mxu0 0
    %665 = vmatmul.mubr.bf16.gmra.mrb[0].mxu0 %v184
    %v666 = vpop.f32.mrb[0].mxu0
    %v667 = vadd.f32 %v603, %v666
    %v668 = vpop.f32.mrb[0].mxu0
    %v669 = vpop.f32.mrb[0].mxu0
    %v670 = vpop.f32.mrb[0].mxu0
    %671 = vdwg.mxu0
    %s672 = scalar_lea.vmem %s5, 3
    %v673 = vld [vmem:[%s672] sm:$0x1]
    %v674 = vadd.f32 %v667, %v673
    %v675 = vxor.u32 %v227, 2147483648
    %v676 = vmul.f32 %v675, 1.442695
    %v677 = vpow.pop %v676
    %v678 = vadd.f32 %v677, 1.0
    %v679 = vrcp.pop %v678
    %v680 = vmul.f32 1.0, %v679
    %v681 = vxor.u32 %v376, 2147483648
    %v682 = vmul.f32 %v681, 1.442695
    %v683 = vpow.pop %v682
    %v684 = vadd.f32 %v683, 1.0
    %v685 = vrcp.pop %v684
    %v686 = vmul.f32 1.0, %v685
    %v687 = vtanh.pop %v525
    %v688 = vxor.u32 %v674, 2147483648
    %v689 = vmul.f32 %v688, 1.442695
    %v690 = vpow.pop %v689
    %v691 = vadd.f32 %v690, 1.0
    %v692 = vrcp.pop %v691
    %v693 = vmul.f32 1.0, %v692
    %v694 = vmul.f32 %v686, %v74
    %v695 = vmul.f32 %v680, %v687
    %v696 = vadd.f32 %v694, %v695
    %v697 = vtanh.pop %v696
    %v698 = vmul.f32 %v693, %v697
    %vm699 = vcmask 516096
    %700 = vst.msk [vmem:[#allocation5] sm:$0x1] %vm699, %v698
    %701 = vst.msk [vmem:[#allocation7] sm:$0x1] %vm699, %v696
    %v702 = vpack.c.bf16 %v698, %v698
    %v703 = vld [vmem:[%s6] sm:$0xf]
    %v704 = vld [vmem:[%s6 + $0x4] sm:$0xf]
    %v705 = vld [vmem:[%s6 + $0x8] sm:$0xf]
    %v706 = vld [vmem:[%s6 + $0xc] sm:$0xf]
    %v707 = vld [vmem:[%s6 + $0x10] sm:$0xf]
    %v708 = vld [vmem:[%s6 + $0x14] sm:$0xf]
    %v709 = vld [vmem:[%s6 + $0x18] sm:$0xf]
    %v710 = vld [vmem:[%s6 + $0x1c] sm:$0xf]
    %v711 = vld [vmem:[%s7] sm:$0x1]
    %v720 = vunpack.c.l.b16 %v703
    %v721 = vunpack.c.l.b16 %v704
    %v722 = vunpack.c.l.b16 %v705
    %v723 = vunpack.c.l.b16 %v706
    %v724 = vunpack.c.l.b16 %v707
    %v725 = vunpack.c.l.b16 %v708
    %v726 = vunpack.c.l.b16 %v709
    %v727 = vunpack.c.l.b16 %v710
    %v728 = vpack.c.b16 %v721, %v720
    %v729 = vpack.c.b16 %v723, %v722
    %v730 = vpack.c.b16 %v725, %v724
    %v731 = vpack.c.b16 %v727, %v726
    %v737 = vsel %vm115, %v702, 0
    %739 = vmatprep.subr.bf16.mxu0 0
    %740 = vmatpush1.bf16.msra.mxu0 %v728
    %741 = vmatprep.subr.bf16.mxu0 0
    %742 = vmatpush1.bf16.msra.mxu0 %v729
    %743 = vmatprep.subr.bf16.mxu0 0
    %744 = vmatpush1.bf16.msra.mxu0 %v730
    %745 = vmatprep.subr.bf16.mxu0 0
    %746 = vmatpush1.bf16.msra.mxu0 %v731
    %747 = vmatprep.subr.bf16.mxu0 0
    %748 = vmatpush1.bf16.msra.mxu0 0
    %749 = vmatprep.subr.bf16.mxu0 0
    %750 = vmatpush1.bf16.msra.mxu0 0
    %751 = vmatprep.subr.bf16.mxu0 0
    %752 = vmatpush1.bf16.msra.mxu0 0
    %753 = vmatprep.subr.bf16.mxu0 0
    %754 = vmatpush1.bf16.msra.mxu0 0
    %755 = vmatprep.subr.bf16.mxu0 0
    %756 = vmatpush1.bf16.msra.mxu0 0
    %757 = vmatprep.subr.bf16.mxu0 0
    %758 = vmatpush1.bf16.msra.mxu0 0
    %759 = vmatprep.subr.bf16.mxu0 0
    %760 = vmatpush1.bf16.msra.mxu0 0
    %761 = vmatprep.subr.bf16.mxu0 0
    %762 = vmatpush1.bf16.msra.mxu0 0
    %763 = vmatprep.subr.bf16.mxu0 0
    %764 = vmatpush1.bf16.msra.mxu0 0
    %765 = vmatprep.subr.bf16.mxu0 0
    %766 = vmatpush1.bf16.msra.mxu0 0
    %767 = vmatprep.subr.bf16.mxu0 0
    %768 = vmatpush1.bf16.msra.mxu0 0
    %769 = vmatprep.subr.bf16.mxu0 0
    %770 = vmatpush1.bf16.msra.mxu0 0
    %771 = vmatprep.mubr.bf16.mxu0 0
    %772 = vmatmul.mubr.bf16.gmra.mrb[0].mxu0 %v737
    %v773 = vpop.f32.mrb[0].mxu0
    %v774 = vadd.f32 %v711, %v773
    %v775 = vpop.f32.mrb[0].mxu0
    %v776 = vpop.f32.mrb[0].mxu0
    %v777 = vpop.f32.mrb[0].mxu0
    %778 = vdwg.mxu0
    %v779 = vmax.f32 %v774, 0.0
    %v780 = vld [vmem:[%s8] sm:$0x1]
    %v781 = vmul.f32 %v779, %v780
    %vm782 = vcmask 401408
    %v783 = vsel %vm782, %v781, 0.0
    %784 = vadd.xlane.f32.xlu0 %v783
    %v785 = vpop.xlane.xlu0 %784
    %v786 = vld [vmem:[#allocation2] sm:$0x1]
    %v787 = vadd.f32 %v785, %v786
    %vm788 = vcmask 0
    %789 = vst.msk [vmem:[#allocation8] sm:$0x1] %vm788, %v787
    %v790 = vld [vmem:[%s11] sm:$0x7]
    %v791 = vld [vmem:[%s10] sm:$0x1]
    %v792 = vld [vmem:[%s13] sm:$0x7]
    %v793 = vld [vmem:[%s12] sm:$0x7]
    %v795 = vlaneseq
    %v796 = vshrl.u32 %v795, 7
    %v797 = vsub.s32 0, %v796
    %v798 = vrot.slane %v791, %v797
    %801 = vset.pattern.permute.xlu0 0
    %802 = vperm.xlu0 %801, %v792
    %v803 = vpop.permute.xlu0 %802
    %v805 = vmul.f32 %v798, %v803
    %vm806 = vcmask 23552
    %v808 = vsel %vm806, %v793, 0
    %vm810 = vcmask 1042432
    %v812 = vsel %vm810, %v790, 0
    %814 = vmatprep.subr.mxu0 0.0
    %815 = vmatpush1.msra.mxu0 %v812
    %816 = vmatprep.subr.mxu0 0.0
    %817 = vmatpush1.msra.mxu0 0.0
    %818 = vmatprep.subr.mxu0 0.0
    %819 = vmatpush1.msra.mxu0 0.0
    %820 = vmatprep.subr.mxu0 0.0
    %821 = vmatpush1.msra.mxu0 0.0
    %822 = vmatprep.subr.mxu0 0.0
    %823 = vmatpush1.msra.mxu0 0.0
    %824 = vmatprep.subr.mxu0 0.0
    %825 = vmatpush1.msra.mxu0 0.0
    %826 = vmatprep.subr.mxu0 0.0
    %827 = vmatpush1.msra.mxu0 0.0
    %828 = vmatprep.subr.mxu0 0.0
    %829 = vmatpush1.msra.mxu0 0.0
    %830 = vmatprep.subr.mxu0 0.0
    %831 = vmatpush1.msra.mxu0 0.0
    %832 = vmatprep.subr.mxu0 0.0
    %833 = vmatpush1.msra.mxu0 0.0
    %834 = vmatprep.subr.mxu0 0.0
    %835 = vmatpush1.msra.mxu0 0.0
    %836 = vmatprep.subr.mxu0 0.0
    %837 = vmatpush1.msra.mxu0 0.0
    %838 = vmatprep.subr.mxu0 0.0
    %839 = vmatpush1.msra.mxu0 0.0
    %840 = vmatprep.subr.mxu0 0.0
    %841 = vmatpush1.msra.mxu0 0.0
    %842 = vmatprep.subr.mxu0 0.0
    %843 = vmatpush1.msra.mxu0 0.0
    %844 = vmatprep.subr.mxu0 0.0
    %845 = vmatpush1.msra.mxu0 0.0
    %846 = vmatprep.subr.mxu0 0.0
    %847 = vmatpush1.msra.mxu0 0.0
    %848 = vmatprep.subr.mxu0 0.0
    %849 = vmatpush1.msra.mxu0 0.0
    %850 = vmatprep.subr.mxu0 0.0
    %851 = vmatpush1.msra.mxu0 0.0
    %852 = vmatprep.subr.mxu0 0.0
    %853 = vmatpush1.msra.mxu0 0.0
    %854 = vmatprep.subr.mxu0 0.0
    %855 = vmatpush1.msra.mxu0 0.0
    %856 = vmatprep.subr.mxu0 0.0
    %857 = vmatpush1.msra.mxu0 0.0
    %858 = vmatprep.subr.mxu0 0.0
    %859 = vmatpush1.msra.mxu0 0.0
    %860 = vmatprep.subr.mxu0 0.0
    %861 = vmatpush1.msra.mxu0 0.0
    %862 = vmatprep.subr.mxu0 0.0
    %863 = vmatpush1.msra.mxu0 0.0
    %864 = vmatprep.subr.mxu0 0.0
    %865 = vmatpush1.msra.mxu0 0.0
    %866 = vmatprep.subr.mxu0 0.0
    %867 = vmatpush1.msra.mxu0 0.0
    %868 = vmatprep.subr.mxu0 0.0
    %869 = vmatpush1.msra.mxu0 0.0
    %870 = vmatprep.subr.mxu0 0.0
    %871 = vmatpush1.msra.mxu0 0.0
    %872 = vmatprep.subr.mxu0 0.0
    %873 = vmatpush1.msra.mxu0 0.0
    %874 = vmatprep.subr.mxu0 0.0
    %875 = vmatpush1.msra.mxu0 0.0
    %876 = vmatprep.subr.mxu0 0.0
    %877 = vmatpush1.msra.mxu0 0.0
    %878 = vmatprep.mubr.f32.mxu0 0.0
    %879 = vmatmul.mubr.f32.gmra.mrb[0].mxu0 %v808
    %v880 = vpop.f32.mrb[0].mxu0
    %v881 = vadd.f32 %v805, %v880
    %v882 = vpop.f32.mrb[0].mxu0
    %883 = vdwg.mxu0
    %vm884 = vcmask 518144
    %v885 = vsel %vm884, %v790, 0.0
    %886 = vadd.xlane.f32.xlu0 %v885
    %v887 = vpop.xlane.xlu0 %886
    %v888 = vrot.slane %v887, 4
    %v889 = vadd.f32 %v887, %v888
    %v890 = vrot.slane %v889, 2
    %v891 = vadd.f32 %v889, %v890
    %v892 = vrot.slane %v891, 1
    %v893 = vadd.f32 %v891, %v892
    %s894 = vtos %v893
    %p895 = scmp.eq.f32.partialorder %s894, 0.0
    %s896 = scalar_select %p895, 1, 0
    %s897 = scvt.s32.f32 %s896
    %v898 = vand.u32 2147483647, %v790
    %v900 = vrot.slane %v898, 2
    %v902 = vsel %vm699, %v900, 0.0
    %903 = vadd.xlane.f32.xlu0 %v902
    %v904 = vpop.xlane.xlu0 %903
    %v905 = vrot.slane %v904, 4
    %v906 = vadd.f32 %v904, %v905
    %v907 = vrot.slane %v906, 2
    %v908 = vadd.f32 %v906, %v907
    %v909 = vrot.slane %v908, 1
    %v910 = vadd.f32 %v908, %v909
    %s911 = vtos %v910
    %p912 = scmp.gt.f32.partialorder %s911, 0.0
    %s913 = scalar_select %p912, 1, 0
    %s914 = scvt.s32.f32 %s913
    %v915 = vstv %s914
    %v916 = vmul.f32 %v915, %v790
    %s917 = ssub.f32 1.0, %s914
    %v918 = vstv %s917
    %v919 = vmul.f32 %v918, %v881
    %v920 = vadd.f32 %v916, %v919
    %v921 = vstv %s897
    %v922 = vmul.f32 %v921, %v805
    %s923 = ssub.f32 1.0, %s897
    %v924 = vstv %s923
    %v925 = vmul.f32 %v924, %v920
    %v926 = vadd.f32 %v922, %v925
    %927 = vst.msk [vmem:[%s22] sm:$0x7] %vm884, %v926
    %v928 = vsel %vm884, %v926, 0.0
    %v929 = vrot.slane %v928, 4
    %v930 = vadd.f32 %v928, %v929
    %v931 = vrot.slane %v930, 2
    %v932 = vadd.f32 %v930, %v931
    %v933 = vrot.slane %v932, 1
    %v934 = vadd.f32 %v932, %v933
    %v935 = vpack.c.bf16 %v934, %v934
    %v936 = vld [vmem:[%s14] sm:$0xf]
    %v937 = vld [vmem:[%s14 + $0x4] sm:$0xf]
    %v938 = vld [vmem:[%s14 + $0x8] sm:$0xf]
    %v939 = vld [vmem:[%s14 + $0xc] sm:$0xf]
    %v940 = vld [vmem:[%s14 + $0x10] sm:$0xf]
    %v941 = vld [vmem:[%s14 + $0x14] sm:$0xf]
    %v942 = vld [vmem:[%s14 + $0x18] sm:$0xf]
    %v943 = vld [vmem:[%s14 + $0x1c] sm:$0xf]
    %v944 = vld [vmem:[%s15] sm:$0x1]
    %v953 = vunpack.c.l.b16 %v936
    %v954 = vunpack.c.l.b16 %v937
    %v955 = vunpack.c.l.b16 %v938
    %v956 = vunpack.c.l.b16 %v939
    %v957 = vunpack.c.l.b16 %v940
    %v958 = vunpack.c.l.b16 %v941
    %v959 = vunpack.c.l.b16 %v942
    %v960 = vunpack.c.l.b16 %v943
    %v961 = vpack.c.b16 %v954, %v953
    %v962 = vpack.c.b16 %v956, %v955
    %v963 = vpack.c.b16 %v958, %v957
    %v964 = vpack.c.b16 %v960, %v959
    %v970 = vsel %vm115, %v935, 0
    %972 = vmatprep.subr.bf16.mxu0 0
    %973 = vmatpush1.bf16.msra.mxu0 %v961
    %974 = vmatprep.subr.bf16.mxu0 0
    %975 = vmatpush1.bf16.msra.mxu0 %v962
    %976 = vmatprep.subr.bf16.mxu0 0
    %977 = vmatpush1.bf16.msra.mxu0 %v963
    %978 = vmatprep.subr.bf16.mxu0 0
    %979 = vmatpush1.bf16.msra.mxu0 %v964
    %980 = vmatprep.subr.bf16.mxu0 0
    %981 = vmatpush1.bf16.msra.mxu0 0
    %982 = vmatprep.subr.bf16.mxu0 0
    %983 = vmatpush1.bf16.msra.mxu0 0
    %984 = vmatprep.subr.bf16.mxu0 0
    %985 = vmatpush1.bf16.msra.mxu0 0
    %986 = vmatprep.subr.bf16.mxu0 0
    %987 = vmatpush1.bf16.msra.mxu0 0
    %988 = vmatprep.subr.bf16.mxu0 0
    %989 = vmatpush1.bf16.msra.mxu0 0
    %990 = vmatprep.subr.bf16.mxu0 0
    %991 = vmatpush1.bf16.msra.mxu0 0
    %992 = vmatprep.subr.bf16.mxu0 0
    %993 = vmatpush1.bf16.msra.mxu0 0
    %994 = vmatprep.subr.bf16.mxu0 0
    %995 = vmatpush1.bf16.msra.mxu0 0
    %996 = vmatprep.subr.bf16.mxu0 0
    %997 = vmatpush1.bf16.msra.mxu0 0
    %998 = vmatprep.subr.bf16.mxu0 0
    %999 = vmatpush1.bf16.msra.mxu0 0
    %1000 = vmatprep.subr.bf16.mxu0 0
    %1001 = vmatpush1.bf16.msra.mxu0 0
    %1002 = vmatprep.subr.bf16.mxu0 0
    %1003 = vmatpush1.bf16.msra.mxu0 0
    %1004 = vmatprep.mubr.bf16.mxu0 0
    %1005 = vmatmul.mubr.bf16.gmra.mrb[0].mxu0 %v970
    %v1006 = vpop.f32.mrb[0].mxu0
    %v1007 = vadd.f32 %v944, %v1006
    %v1008 = vpop.f32.mrb[0].mxu0
    %v1009 = vpop.f32.mrb[0].mxu0
    %v1010 = vpop.f32.mrb[0].mxu0
    %1011 = vdwg.mxu0
    %v1012 = vld [vmem:[%s16] sm:$0xff]
    %v1013 = vld [vmem:[%s16 + $0x8] sm:$0xff]
    %vm1014 = vcmask 130048
    %v1016 = vsel %vm1014, %v1007, 0
    %1018 = vmatprep.subr.mxu0 0.0
    %1019 = vmatpush1.msra.mxu0 %v1012
    %1020 = vmatprep.subr.mxu0 0.0
    %1021 = vmatpush1.msra.mxu0 %v1013
    %1022 = vmatprep.subr.mxu0 0.0
    %1023 = vmatpush1.msra.mxu0 0.0
    %1024 = vmatprep.subr.mxu0 0.0
    %1025 = vmatpush1.msra.mxu0 0.0
    %1026 = vmatprep.subr.mxu0 0.0
    %1027 = vmatpush1.msra.mxu0 0.0
    %1028 = vmatprep.subr.mxu0 0.0
    %1029 = vmatpush1.msra.mxu0 0.0
    %1030 = vmatprep.subr.mxu0 0.0
    %1031 = vmatpush1.msra.mxu0 0.0
    %1032 = vmatprep.subr.mxu0 0.0
    %1033 = vmatpush1.msra.mxu0 0.0
    %1034 = vmatprep.subr.mxu0 0.0
    %1035 = vmatpush1.msra.mxu0 0.0
    %1036 = vmatprep.subr.mxu0 0.0
    %1037 = vmatpush1.msra.mxu0 0.0
    %1038 = vmatprep.subr.mxu0 0.0
    %1039 = vmatpush1.msra.mxu0 0.0
    %1040 = vmatprep.subr.mxu0 0.0
    %1041 = vmatpush1.msra.mxu0 0.0
    %1042 = vmatprep.subr.mxu0 0.0
    %1043 = vmatpush1.msra.mxu0 0.0
    %1044 = vmatprep.subr.mxu0 0.0
    %1045 = vmatpush1.msra.mxu0 0.0
    %1046 = vmatprep.subr.mxu0 0.0
    %1047 = vmatpush1.msra.mxu0 0.0
    %1048 = vmatprep.subr.mxu0 0.0
    %1049 = vmatpush1.msra.mxu0 0.0
    %1050 = vmatprep.subr.mxu0 0.0
    %1051 = vmatpush1.msra.mxu0 0.0
    %1052 = vmatprep.subr.mxu0 0.0
    %1053 = vmatpush1.msra.mxu0 0.0
    %1054 = vmatprep.subr.mxu0 0.0
    %1055 = vmatpush1.msra.mxu0 0.0
    %1056 = vmatprep.subr.mxu0 0.0
    %1057 = vmatpush1.msra.mxu0 0.0
    %1058 = vmatprep.subr.mxu0 0.0
    %1059 = vmatpush1.msra.mxu0 0.0
    %1060 = vmatprep.subr.mxu0 0.0
    %1061 = vmatpush1.msra.mxu0 0.0
    %1062 = vmatprep.subr.mxu0 0.0
    %1063 = vmatpush1.msra.mxu0 0.0
    %1064 = vmatprep.subr.mxu0 0.0
    %1065 = vmatpush1.msra.mxu0 0.0
    %1066 = vmatprep.subr.mxu0 0.0
    %1067 = vmatpush1.msra.mxu0 0.0
    %1068 = vmatprep.subr.mxu0 0.0
    %1069 = vmatpush1.msra.mxu0 0.0
    %1070 = vmatprep.subr.mxu0 0.0
    %1071 = vmatpush1.msra.mxu0 0.0
    %1072 = vmatprep.subr.mxu0 0.0
    %1073 = vmatpush1.msra.mxu0 0.0
    %1074 = vmatprep.subr.mxu0 0.0
    %1075 = vmatpush1.msra.mxu0 0.0
    %1076 = vmatprep.subr.mxu0 0.0
    %1077 = vmatpush1.msra.mxu0 0.0
    %1078 = vmatprep.subr.mxu0 0.0
    %1079 = vmatpush1.msra.mxu0 0.0
    %1080 = vmatprep.subr.mxu0 0.0
    %1081 = vmatpush1.msra.mxu0 0.0
    %1082 = vmatprep.mubr.f32.mxu0 0.0
    %1083 = vmatmul.mubr.f32.gmra.mrb[0].mxu0 %v1016
    %v1084 = vpop.f32.mrb[0].mxu0
    %v1085 = vadd.f32 0.0, %v1084
    %v1086 = vpop.f32.mrb[0].mxu0
    %1087 = vdwg.mxu0
    %v1088 = vmul.f32 %v698, %v1085
    %v1089 = vld [vmem:[%s17] sm:$0xff]
    %v1090 = vld [vmem:[%s17 + $0x8] sm:$0xff]
    %v1091 = vld [vmem:[%s17 + $0x10] sm:$0xff]
    %v1092 = vld [vmem:[%s17 + $0x18] sm:$0xff]
    %v1093 = vld [vmem:[%s17 + $0x20] sm:$0xff]
    %v1094 = vld [vmem:[%s17 + $0x28] sm:$0xff]
    %v1095 = vld [vmem:[%s17 + $0x30] sm:$0xff]
    %v1096 = vld [vmem:[%s17 + $0x38] sm:$0xff]
    %v1098 = vsel %vm115, %v1088, 0
    %1100 = vmatprep.subr.mxu0 0.0
    %1101 = vmatpush1.msra.mxu0 %v1089
    %1102 = vmatprep.subr.mxu0 0.0
    %1103 = vmatpush1.msra.mxu0 %v1090
    %1104 = vmatprep.subr.mxu0 0.0
    %1105 = vmatpush1.msra.mxu0 %v1091
    %1106 = vmatprep.subr.mxu0 0.0
    %1107 = vmatpush1.msra.mxu0 %v1092
    %1108 = vmatprep.subr.mxu0 0.0
    %1109 = vmatpush1.msra.mxu0 %v1093
    %1110 = vmatprep.subr.mxu0 0.0
    %1111 = vmatpush1.msra.mxu0 %v1094
    %1112 = vmatprep.subr.mxu0 0.0
    %1113 = vmatpush1.msra.mxu0 %v1095
    %1114 = vmatprep.subr.mxu0 0.0
    %1115 = vmatpush1.msra.mxu0 %v1096
    %1116 = vmatprep.subr.mxu0 0.0
    %1117 = vmatpush1.msra.mxu0 0.0
    %1118 = vmatprep.subr.mxu0 0.0
    %1119 = vmatpush1.msra.mxu0 0.0
    %1120 = vmatprep.subr.mxu0 0.0
    %1121 = vmatpush1.msra.mxu0 0.0
    %1122 = vmatprep.subr.mxu0 0.0
    %1123 = vmatpush1.msra.mxu0 0.0
    %1124 = vmatprep.subr.mxu0 0.0
    %1125 = vmatpush1.msra.mxu0 0.0
    %1126 = vmatprep.subr.mxu0 0.0
    %1127 = vmatpush1.msra.mxu0 0.0
    %1128 = vmatprep.subr.mxu0 0.0
    %1129 = vmatpush1.msra.mxu0 0.0
    %1130 = vmatprep.subr.mxu0 0.0
    %1131 = vmatpush1.msra.mxu0 0.0
    %1132 = vmatprep.subr.mxu0 0.0
    %1133 = vmatpush1.msra.mxu0 0.0
    %1134 = vmatprep.subr.mxu0 0.0
    %1135 = vmatpush1.msra.mxu0 0.0
    %1136 = vmatprep.subr.mxu0 0.0
    %1137 = vmatpush1.msra.mxu0 0.0
    %1138 = vmatprep.subr.mxu0 0.0
    %1139 = vmatpush1.msra.mxu0 0.0
    %1140 = vmatprep.subr.mxu0 0.0
    %1141 = vmatpush1.msra.mxu0 0.0
    %1142 = vmatprep.subr.mxu0 0.0
    %1143 = vmatpush1.msra.mxu0 0.0
    %1144 = vmatprep.subr.mxu0 0.0
    %1145 = vmatpush1.msra.mxu0 0.0
    %1146 = vmatprep.subr.mxu0 0.0
    %1147 = vmatpush1.msra.mxu0 0.0
    %1148 = vmatprep.subr.mxu0 0.0
    %1149 = vmatpush1.msra.mxu0 0.0
    %1150 = vmatprep.subr.mxu0 0.0
    %1151 = vmatpush1.msra.mxu0 0.0
    %1152 = vmatprep.subr.mxu0 0.0
    %1153 = vmatpush1.msra.mxu0 0.0
    %1154 = vmatprep.subr.mxu0 0.0
    %1155 = vmatpush1.msra.mxu0 0.0
    %1156 = vmatprep.subr.mxu0 0.0
    %1157 = vmatpush1.msra.mxu0 0.0
    %1158 = vmatprep.subr.mxu0 0.0
    %1159 = vmatpush1.msra.mxu0 0.0
    %1160 = vmatprep.subr.mxu0 0.0
    %1161 = vmatpush1.msra.mxu0 0.0
    %1162 = vmatprep.subr.mxu0 0.0
    %1163 = vmatpush1.msra.mxu0 0.0
    %1164 = vmatprep.mubr.f32.mxu0 0.0
    %1165 = vmatmul.mubr.f32.gmra.mrb[0].mxu0 %v1098
    %v1166 = vpop.f32.mrb[0].mxu0
    %v1167 = vadd.f32 0.0, %v1166
    %v1168 = vpop.f32.mrb[0].mxu0
    %1169 = vdwg.mxu0
    %vm1170 = vcmask 24576
    %v1171 = vsel %vm1170, %v1167, -inf
    %1172 = vmax.xlane.f32.xlu0 %v1171
    %v1173 = vpop.xlane.xlu0 %1172
    %v1174 = vsub.f32 %v1167, %v1173
    %v1175 = vmul.f32 %v1174, 1.442695
    %v1176 = vpow.pop %v1175
    %v1177 = vsel %vm1170, %v1176, 0.0
    %1178 = vadd.xlane.f32.xlu0 %v1177
    %v1179 = vpop.xlane.xlu0 %1178
    %v1180 = vrcp.pop %v1179
    %v1181 = vmul.f32 %v1176, %v1180
    %1182 = vst.msk [vmem:[#allocation3] sm:$0x1] %vm1170, %v1181
    // Predicated region
    $region74: #{fun_forward.5} parent=1 // pred_check
      _
    $region75: #{fun_forward.5} parent=1 // pred_check_branch
      %1184 = sbr.rel (0) target = $region77
    $region76: #{fun_forward.5} parent=1 // pred_region
      %s1186 = ssub.s32 16, 16
      %1187 = vsyncadd [#allocation4], %s1186
      %s1189 = sshll.u32 [#allocation3], 4
      %s1190 = int_to_ptr.vmem [resolvable:$true] %s1189
      %1192 = dma.vmem_to_hbm [thread:$0]  %s1190, 16, %s18, [#allocation4]
    $region77: #{fun_forward.5} parent=1 // pred_fallthru
      _
    // Predicated region
    $region78: #{fun_forward.5} parent=1 // pred_check
      _
    $region79: #{fun_forward.5} parent=1 // pred_check_branch
      %1194 = sbr.rel (0) target = $region81
    $region80: #{fun_forward.5} parent=1 // pred_region
      %s1196 = ssub.s32 16, 16
      %1197 = vsyncadd [#allocation6], %s1196
      %s1199 = sshll.u32 [#allocation5], 4
      %s1200 = int_to_ptr.vmem [resolvable:$true] %s1199
      %1202 = dma.vmem_to_hbm [thread:$0]  %s1200, 16, %s19, [#allocation6]
    $region81: #{fun_forward.5} parent=1 // pred_fallthru
      _
    // Predicated region
    $region82: #{fun_forward.5} parent=1 // pred_check
      _
    $region83: #{fun_forward.5} parent=1 // pred_check_branch
      %1204 = sbr.rel (0) target = $region85
    $region84: #{fun_forward.5} parent=1 // pred_region
      %s1206 = ssub.s32 16, 16
      %1207 = vsyncadd [#allocation6], %s1206
      %s1209 = sshll.u32 [#allocation7], 4
      %s1210 = int_to_ptr.vmem [resolvable:$true] %s1209
      %1212 = dma.vmem_to_hbm [thread:$0]  %s1210, 16, %s20, [#allocation6]
    $region85: #{fun_forward.5} parent=1 // pred_fallthru
      _
    // Predicated region
    $region86: #{fun_forward.5} parent=1 // pred_check
      _
    $region87: #{fun_forward.5} parent=1 // pred_check_branch
      %1214 = sbr.rel (0) target = $region89
    $region88: #{fun_forward.5} parent=1 // pred_region
      %s1216 = ssub.s32 16, 16
      %1217 = vsyncadd [#allocation9], %s1216
      %s1219 = sshll.u32 [#allocation8], 4
      %s1220 = int_to_ptr.vmem [resolvable:$true] %s1219
      %1222 = dma.vmem_to_hbm [thread:$0]  %s1220, 16, %s21, [#allocation9]
    $region89: #{fun_forward.5} parent=1 // pred_fallthru
      _
    // Predicated region
    $region90: #{fun_forward.5} parent=1 // pred_check
      _
    $region91: #{fun_forward.5} parent=1 // pred_check_branch
      %1224 = sbr.rel (0) target = $region93
    $region92: #{fun_forward.5} parent=1 // pred_region
      _
    $region93: #{fun_forward.5} parent=1 // pred_fallthru
      _
    // Predicated region
    $region94: #{fun_forward.5} parent=1 // pred_check
      _
    $region95: #{fun_forward.5} parent=1 // pred_check_branch
      %1226 = sbr.rel (0) target = $region97
    $region96: #{fun_forward.5} parent=1 // pred_region
      %1227 = dma.done [#allocation4], 16
    $region97: #{fun_forward.5} parent=1 // pred_fallthru
      _
    // Predicated region
    $region98: #{fun_forward.5} parent=1 // pred_check
      _
    $region99: #{fun_forward.5} parent=1 // pred_check_branch
      %1229 = sbr.rel (0) target = $region101
    $region100: #{fun_forward.5} parent=1 // pred_region
      %1230 = dma.done [#allocation6], 16
    $region101: #{fun_forward.5} parent=1 // pred_fallthru
      _
    // Predicated region
    $region102: #{fun_forward.5} parent=1 // pred_check
      _
    $region103: #{fun_forward.5} parent=1 // pred_check_branch
      %1232 = sbr.rel (0) target = $region105
    $region104: #{fun_forward.5} parent=1 // pred_region
      %1233 = dma.done [#allocation6], 16
    $region105: #{fun_forward.5} parent=1 // pred_fallthru
      _
    // Predicated region
    $region106: #{fun_forward.5} parent=1 // pred_check
      _
    $region107: #{fun_forward.5} parent=1 // pred_check_branch
      %1235 = sbr.rel (0) target = $region109
    $region108: #{fun_forward.5} parent=1 // pred_region
      %1236 = dma.done [#allocation9], 16
    $region109: #{fun_forward.5} parent=1 // pred_fallthru
      _
    // Predicated region
    $region110: #{fun_forward.5} parent=1 // pred_check
      _
    $region111: #{fun_forward.5} parent=1 // pred_check_branch
      %1238 = sbr.rel (0) target = $region113
    $region112: #{fun_forward.5} parent=1 // pred_region
      _
    $region113: #{fun_forward.5} parent=1 // pred_fallthru
      _
    %1239 = vsyncpa [#allocation4], 1
    %1240 = vsyncpa [#allocation6], 1
    %1241 = vsyncpa [#allocation9], 1

</llo_original>
